<compile_context>
chip_gen: v7x
topology: tpu7x:2x2x1
jax: 0.10.0
libtpu: 0.0.40
codegen_flags: <defaults>
</compile_context>

<pallas_src>
import jax
import jax.numpy as jnp
from jax.experimental import pallas as pl
from jax.experimental.pallas import tpu as pltpu


def _round_up(n, m):
    return ((n + m - 1) // m) * m


# ---------------------------------------------------------------------------
# Pallas kernels
# ---------------------------------------------------------------------------
def _conv_relu_pool_kernel(p_ref, w_ref, b_ref, o_ref):
    """Fused conv (4 pool-offset matmuls) + bias + ReLU + 2x2 max pool.

    p_ref: [4, RB, Kp] bf16   im2col patches, one tall slab per 2x2 pool offset
                              (RB = images_per_step * pooled_pixels rows)
    w_ref: [Kp, 128]   bf16   conv weights as K x Cout (zero-padded, VMEM resident)
    b_ref: [1, 128]    f32    bias (zero-padded)
    o_ref: [RB, Cn]    bf16   pooled + ReLU'd features, lanes narrowed to Cn channels
    """
    w = w_ref[...]
    # relu(max_o(y_o) + b) == max_o(relu(y_o + b)) == maxpool(relu(conv + b)).
    y = jnp.dot(p_ref[0], w, preferred_element_type=jnp.float32)
    for o in range(1, 4):
        y = jnp.maximum(y, jnp.dot(p_ref[o], w, preferred_element_type=jnp.float32))
    y = jnp.maximum(y + b_ref[...], 0.0)
    cn = o_ref.shape[-1]
    o_ref[...] = y[:, :cn].astype(o_ref.dtype)


def _mlp_kernel(x_ref, w1_ref, b1_ref, w2_ref, b2_ref, w3_ref, b3_ref, o_ref):
    """Fused fc1 -> ReLU -> fc2 -> ReLU -> fc3; all weight panels VMEM-resident."""
    h = jnp.dot(x_ref[...], w1_ref[...], preferred_element_type=jnp.float32)
    h = jnp.maximum(h + b1_ref[...], 0.0).astype(jnp.bfloat16)
    h = jnp.dot(h, w2_ref[...], preferred_element_type=jnp.float32)
    h = jnp.maximum(h + b2_ref[...], 0.0).astype(jnp.bfloat16)
    h = jnp.dot(h, w3_ref[...], preferred_element_type=jnp.float32)
    o_ref[...] = h + b3_ref[...]


# ---------------------------------------------------------------------------
# Pallas wrappers
# ---------------------------------------------------------------------------
def build_pooled_patches(x_nhwc, kh, kw):
    """im2col patches arranged offset-major for the fused conv+pool kernel.

    patches[2*dh+dw, b*ph*pw + py*pw + px, k] = x[b, 2*py+dh+i, 2*px+dw+j, c]
    with k = c*kh*kw + i*kw + j (matching torch conv_w.reshape(Cout, -1)),
    K zero-padded to a multiple of 128, bf16.
    """
    B, H, W, C = x_nhwc.shape
    oh, ow = H - kh + 1, W - kw + 1
    ph, pw = oh // 2, ow // 2
    K = C * kh * kw
    cols = []
    for i in range(kh):
        for j in range(kw):
            cols.append(x_nhwc[:, i:i + oh, j:j + ow, :])          # [B, oh, ow, C]
    p = jnp.stack(cols, axis=3)                                    # [B, oh, ow, kh*kw, C]
    p = p.transpose(0, 1, 2, 4, 3).reshape(B, oh, ow, K)           # K order = (c, i, j)
    p = p.reshape(B, ph, 2, pw, 2, K).transpose(2, 4, 0, 1, 3, 5)  # [2, 2, B, ph, pw, K]
    p = p.reshape(4, B * ph * pw, K)
    Kp = _round_up(K, 128)
    if Kp != K:
        p = jnp.pad(p, ((0, 0), (0, 0), (0, Kp - K)))
    return p.astype(jnp.bfloat16), ph, pw


def conv_relu_pool_pallas(x_nhwc, w, b, cn, bb_target):
    """Fused conv(5x5, valid) + bias + ReLU + 2x2 maxpool.

    x_nhwc: [B, H, W, C] -> [B, (H-4)//2, (W-4)//2, cn] bf16.
    w: [Kp, 128] bf16 (K = C*25, zero-padded), b: [1, 128] f32.
    """
    B = x_nhwc.shape[0]
    # Images per grid step: multiple of 8 so RB = bb*P stays sublane-aligned; bb_target is
    # sized so the double-buffered patch tile stays well under VMEM limits (incl. v7x) and
    # realistic batches still give >=2 "parallel" grid steps for megacore.
    bb = min(bb_target, _round_up(B, 8))
    Bp = _round_up(B, bb)
    if Bp != B:
        x_nhwc = jnp.pad(x_nhwc, ((0, Bp - B), (0, 0), (0, 0), (0, 0)))
    patches, ph, pw = build_pooled_patches(x_nhwc, 5, 5)           # [4, Bp*P, Kp]
    P = ph * pw
    RB = bb * P
    Kp = patches.shape[-1]
    Nw = w.shape[1]
    flops = 2 * 4 * (Bp * P) * Kp * Nw
    bytes_accessed = patches.size * 2 + w.size * 2 + b.size * 4 + Bp * P * cn * 2
    out = pl.pallas_call(
        _conv_relu_pool_kernel,
        grid=(Bp // bb,),
        out_shape=jax.ShapeDtypeStruct((Bp * P, cn), jnp.bfloat16),
        in_specs=[
            pl.BlockSpec((4, RB, Kp), lambda i: (0, i, 0)),
            pl.BlockSpec((Kp, Nw), lambda i: (0, 0)),              # resident weight panel
            pl.BlockSpec((1, Nw), lambda i: (0, 0)),               # resident bias
        ],
        out_specs=pl.BlockSpec((RB, cn), lambda i: (i, 0)),
        compiler_params=pltpu.CompilerParams(
            dimension_semantics=("parallel",),
            vmem_limit_bytes=32 * 1024 * 1024),
        cost_estimate=pl.CostEstimate(flops=flops, transcendentals=0,
                                      bytes_accessed=bytes_accessed),
    )(patches, w, b)
    return out.reshape(Bp, ph, pw, cn)[:B]


def mlp_pallas(x, w1, b1, w2, b2, w3, b3):
    """x:[B,512] bf16 -> logits panel [B,128] f32 (fused 3-layer MLP)."""
    B, K = x.shape
    N1, N2, N3 = w1.shape[1], w2.shape[1], w3.shape[1]
    bm = min(512, _round_up(B, 16))
    Bp = _round_up(B, bm)
    if Bp != B:
        x = jnp.pad(x, ((0, Bp - B), (0, 0)))
    flops = 2 * Bp * (K * N1 + N1 * N2 + N2 * N3)
    bytes_accessed = (x.size * 2 + (w1.size + w2.size + w3.size) * 2
                      + (b1.size + b2.size + b3.size) * 4 + Bp * N3 * 4)
    out = pl.pallas_call(
        _mlp_kernel,
        grid=(Bp // bm,),
        out_shape=jax.ShapeDtypeStruct((Bp, N3), jnp.float32),
        in_specs=[
            pl.BlockSpec((bm, K), lambda i: (i, 0)),
            pl.BlockSpec((K, N1), lambda i: (0, 0)),
            pl.BlockSpec((1, N1), lambda i: (0, 0)),
            pl.BlockSpec((N1, N2), lambda i: (0, 0)),
            pl.BlockSpec((1, N2), lambda i: (0, 0)),
            pl.BlockSpec((N2, N3), lambda i: (0, 0)),
            pl.BlockSpec((1, N3), lambda i: (0, 0)),
        ],
        out_specs=pl.BlockSpec((bm, N3), lambda i: (i, 0)),
        compiler_params=pltpu.CompilerParams(dimension_semantics=("parallel",)),
        cost_estimate=pl.CostEstimate(flops=flops, transcendentals=0,
                                      bytes_accessed=bytes_accessed),
    )(x, w1, b1, w2, b2, w3, b3)
    return out[:B]


# ---------------------------------------------------------------------------
# Parameter prep / init / forward (plain JAX glue)
# ---------------------------------------------------------------------------
def prepare_params(params):
    """One-time weight prep: transpose / permute / zero-pad to lane-dense panels, bf16."""
    def pad2(m, rows, cols):
        r, c = m.shape
        return jnp.pad(m, ((0, rows - r), (0, cols - c))).astype(jnp.bfloat16)

    def pad_bias(v, n):
        return jnp.pad(v, (0, n - v.shape[0])).astype(jnp.float32).reshape(1, n)

    CN = 128                                                      # conv out-channel panel
    # conv1: K order = (c, kh, kw), C=3 -> K=75, matching conv1_w.reshape(6, -1).
    w1 = params["conv1_w"].reshape(6, -1).T                       # [75, 6]
    # conv2: its input now carries 8 channels (6 real + 2 zero pad), so pad the weight's
    # channel axis to 8 BEFORE flattening -> K = 8*25 = 200 (extra rows are zero).
    c2 = jnp.pad(params["conv2_w"], ((0, 0), (0, 2), (0, 0), (0, 0)))   # [16, 8, 5, 5]
    w2 = c2.reshape(16, -1).T                                     # [200, 16]
    # fc1: permute K from torch's NCHW (c, h, w) flatten order to our NHWC (h, w, c)
    # order, then pad K 400 -> 512 so the MLP x tile is lane-dense.
    fc1 = (params["fc1_w"].reshape(120, 16, 5, 5)
           .transpose(0, 2, 3, 1).reshape(120, 400).T)            # [400, 120]
    fc2 = params["fc2_w"].T                                       # [120, 84]
    fc3 = params["fc3_w"].T                                       # [84, 10]
    return {
        "c1_w": pad2(w1, _round_up(75, 128), CN),                 # [128, 128]
        "c1_b": pad_bias(params["conv1_b"], CN),
        "c2_w": pad2(w2, _round_up(200, 128), CN),                # [256, 128]
        "c2_b": pad_bias(params["conv2_b"], CN),
        "fc1_w": pad2(fc1, 512, 128), "fc1_b": pad_bias(params["fc1_b"], 128),
        "fc2_w": pad2(fc2, 128, 128), "fc2_b": pad_bias(params["fc2_b"], 128),
        "fc3_w": pad2(fc3, 128, 128), "fc3_b": pad_bias(params["fc3_b"], 128),
    }


def init_params(key):
    ks = jax.random.split(key, 10)
    s = 0.1
    return {
        "conv1_w": s * jax.random.normal(ks[0], (6, 3, 5, 5), jnp.float32),
        "conv1_b": s * jax.random.normal(ks[1], (6,), jnp.float32),
        "conv2_w": s * jax.random.normal(ks[2], (16, 6, 5, 5), jnp.float32),
        "conv2_b": s * jax.random.normal(ks[3], (16,), jnp.float32),
        "fc1_w": s * jax.random.normal(ks[4], (120, 400), jnp.float32),  # [out, in] like torch
        "fc1_b": s * jax.random.normal(ks[5], (120,), jnp.float32),
        "fc2_w": s * jax.random.normal(ks[6], (84, 120), jnp.float32),
        "fc2_b": s * jax.random.normal(ks[7], (84,), jnp.float32),
        "fc3_w": s * jax.random.normal(ks[8], (10, 84), jnp.float32),
        "fc3_b": s * jax.random.normal(ks[9], (10,), jnp.float32),
    }


def net_forward(prepped, x_nchw):
    """x: NCHW f32 [B, 3, 32, 32] -> logits [B, 10] (matches torch Net.forward)."""
    B = x_nchw.shape[0]
    x = jnp.transpose(x_nchw, (0, 2, 3, 1))                       # NHWC [B, 32, 32, 3]

    # conv1 (3->6, 5x5) + ReLU + 2x2 pool; output narrowed to 8 lanes (6 real channels).
    y1 = conv_relu_pool_pallas(x, prepped["c1_w"], prepped["c1_b"], cn=8, bb_target=16)
    # y1: [B, 14, 14, 8] bf16 (channels 6..7 are exactly zero).

    # conv2 (6->16, 5x5) + ReLU + 2x2 pool; weights were channel-padded to match cn=8.
    y2 = conv_relu_pool_pallas(y1, prepped["c2_w"], prepped["c2_b"], cn=16, bb_target=32)
    # y2: [B, 5, 5, 16] bf16.

    # Flatten in (h, w, c) order -- fc1's weight columns were permuted to match torch's
    # x.view(-1, 400) on NCHW -- then pad K 400 -> 512 (fc1_w rows 400.. are zero).
    feat = y2.reshape(B, 400)
    feat = jnp.pad(feat, ((0, 0), (0, 112)))

    logits = mlp_pallas(feat,
                        prepped["fc1_w"], prepped["fc1_b"],
                        prepped["fc2_w"], prepped["fc2_b"],
                        prepped["fc3_w"], prepped["fc3_b"])       # [B, 128]
    return logits[:, :10]


def net_reference(params, x_nchw):
    """Pure-JAX f32 reference matching the torch module (for a parity check)."""
    def conv(x, w, b):
        y = jax.lax.conv_general_dilated(
            x, w, window_strides=(1, 1), padding="VALID",
            dimension_numbers=("NCHW", "OIHW", "NCHW"))
        return y + b.reshape(1, -1, 1, 1)

    def pool(x):
        return jax.lax.reduce_window(x, -jnp.inf, jax.lax.max,
                                     (1, 1, 2, 2), (1, 1, 2, 2), "VALID")

    x = pool(jax.nn.relu(conv(x_nchw, params["conv1_w"], params["conv1_b"])))
    x = pool(jax.nn.relu(conv(x, params["conv2_w"], params["conv2_b"])))
    x = x.reshape(x.shape[0], -1)
    x = jax.nn.relu(x @ params["fc1_w"].T + params["fc1_b"])
    x = jax.nn.relu(x @ params["fc2_w"].T + params["fc2_b"])
    return x @ params["fc3_w"].T + params["fc3_b"]


if __name__ == "__main__":
    key = jax.random.PRNGKey(0)
    pkey, xkey = jax.random.split(key)
    params = init_params(pkey)
    prepped = prepare_params(params)                              # one-time weight prep
    # Input must be 32x32 so two (5x5 valid conv + 2x2 pool) stages give 16 * 5 * 5 = 400.
    x = jax.random.normal(xkey, (2, 3, 32, 32), jnp.float32)

    out = jax.jit(net_forward)(prepped, x)
    out = jax.block_until_ready(out)
    assert out.shape == (2, 10), out.shape
    assert bool(jnp.all(jnp.isfinite(out)))

    # Parity vs. pure-JAX f32 reference (loose tolerance: MXU operands are bf16).
    ref = net_reference(params, x)
    err = float(jnp.max(jnp.abs(out - ref)))
    assert err < 0.25, f"max abs diff vs reference = {err}"
    print("KERNEL_OK")
</pallas_src>

<mosaic_0001>
module attributes {stable_mosaic.version = 11 : i64} {
  func.func @_conv_relu_pool_kernel(%arg0: i32, %arg1: memref<4x1568x128xbf16, #tpu.memory_space<vmem>>, %arg2: memref<128x128xbf16, #tpu.memory_space<vmem>>, %arg3: memref<1x128xf32, #tpu.memory_space<vmem>>, %arg4: memref<1568x8xbf16, #tpu.memory_space<vmem>>) attributes {dimension_semantics = [#tpu.dimension_semantics<parallel>], iteration_bounds = array<i64: 1>, scalar_prefetch = 0 : i64, scratch_operands = 0 : i64, tpu.core_type = #tpu.core_type<tc>, window_params = [{transform_indices = @transform_0, window_bounds = array<i64: 4, 1568, 128>}, {pipeline_mode = #tpu.pipeline_mode<synchronous>, transform_indices = @transform_1, window_bounds = array<i64: 128, 128>}, {pipeline_mode = #tpu.pipeline_mode<synchronous>, transform_indices = @transform_2, window_bounds = array<i64: 1, 128>}, {transform_indices = @transform_3, window_bounds = array<i64: 1568, 8>}]} {
    %c0 = arith.constant 0 : index
    %c0_0 = arith.constant 0 : index
    %0 = vector.load %arg2[%c0, %c0_0] : memref<128x128xbf16, #tpu.memory_space<vmem>>, vector<128x128xbf16>
    %c0_1 = arith.constant 0 : index
    %c0_2 = arith.constant 0 : index
    %c0_3 = arith.constant 0 : index
    %1 = vector.load %arg1[%c0_1, %c0_2, %c0_3] : memref<4x1568x128xbf16, #tpu.memory_space<vmem>>, vector<1x1568x128xbf16>
    %2 = vector.shape_cast %1 : vector<1x1568x128xbf16> to vector<1568x128xbf16>
    %cst = arith.constant dense<0.000000e+00> : vector<1568x128xf32>
    %3 = tpu.matmul %2, %0, %cst {dimension_numbers = #tpu.dot_dimension_numbers<[1], [0], [0], [1], [0, 0, 1, 1], [], []>} : vector<1568x128xbf16>, vector<128x128xbf16>, vector<1568x128xf32> -> vector<1568x128xf32>
    %c1 = arith.constant 1 : index
    %c0_4 = arith.constant 0 : index
    %c0_5 = arith.constant 0 : index
    %4 = vector.load %arg1[%c1, %c0_4, %c0_5] : memref<4x1568x128xbf16, #tpu.memory_space<vmem>>, vector<1x1568x128xbf16>
    %5 = vector.shape_cast %4 : vector<1x1568x128xbf16> to vector<1568x128xbf16>
    %cst_6 = arith.constant dense<0.000000e+00> : vector<1568x128xf32>
    %6 = tpu.matmul %5, %0, %cst_6 {dimension_numbers = #tpu.dot_dimension_numbers<[1], [0], [0], [1], [0, 0, 1, 1], [], []>} : vector<1568x128xbf16>, vector<128x128xbf16>, vector<1568x128xf32> -> vector<1568x128xf32>
    %7 = arith.maximumf %3, %6 : vector<1568x128xf32>
    %c2 = arith.constant 2 : index
    %c0_7 = arith.constant 0 : index
    %c0_8 = arith.constant 0 : index
    %8 = vector.load %arg1[%c2, %c0_7, %c0_8] : memref<4x1568x128xbf16, #tpu.memory_space<vmem>>, vector<1x1568x128xbf16>
    %9 = vector.shape_cast %8 : vector<1x1568x128xbf16> to vector<1568x128xbf16>
    %cst_9 = arith.constant dense<0.000000e+00> : vector<1568x128xf32>
    %10 = tpu.matmul %9, %0, %cst_9 {dimension_numbers = #tpu.dot_dimension_numbers<[1], [0], [0], [1], [0, 0, 1, 1], [], []>} : vector<1568x128xbf16>, vector<128x128xbf16>, vector<1568x128xf32> -> vector<1568x128xf32>
    %11 = arith.maximumf %7, %10 : vector<1568x128xf32>
    %c3 = arith.constant 3 : index
    %c0_10 = arith.constant 0 : index
    %c0_11 = arith.constant 0 : index
    %12 = vector.load %arg1[%c3, %c0_10, %c0_11] : memref<4x1568x128xbf16, #tpu.memory_space<vmem>>, vector<1x1568x128xbf16>
    %13 = vector.shape_cast %12 : vector<1x1568x128xbf16> to vector<1568x128xbf16>
    %cst_12 = arith.constant dense<0.000000e+00> : vector<1568x128xf32>
    %14 = tpu.matmul %13, %0, %cst_12 {dimension_numbers = #tpu.dot_dimension_numbers<[1], [0], [0], [1], [0, 0, 1, 1], [], []>} : vector<1568x128xbf16>, vector<128x128xbf16>, vector<1568x128xf32> -> vector<1568x128xf32>
    %15 = arith.maximumf %11, %14 : vector<1568x128xf32>
    %c0_13 = arith.constant 0 : index
    %c0_14 = arith.constant 0 : index
    %16 = vector.load %arg3[%c0_13, %c0_14] : memref<1x128xf32, #tpu.memory_space<vmem>>, vector<1x128xf32>
    %17 = vector.broadcast %16 : vector<1x128xf32> to vector<1568x128xf32>
    %18 = arith.addf %15, %17 : vector<1568x128xf32>
    %cst_15 = arith.constant 0.000000e+00 : f32
    %19 = vector.broadcast %cst_15 : f32 to vector<1568x128xf32>
    %20 = arith.maximumf %18, %19 : vector<1568x128xf32>
    %21 = vector.extract_strided_slice %20 {offsets = [0, 0], sizes = [1568, 8], strides = [1, 1]} : vector<1568x128xf32> to vector<1568x8xf32>
    %22 = arith.truncf %21 : vector<1568x8xf32> to vector<1568x8xbf16>
    %c0_16 = arith.constant 0 : index
    %c0_17 = arith.constant 0 : index
    %23 = vector.load %arg4[%c0_16, %c0_17] : memref<1568x8xbf16, #tpu.memory_space<vmem>>, vector<1568x8xbf16>
    tpu.vector_store %arg4[%c0_16, %c0_17], %22 {strides = array<i32>} : memref<1568x8xbf16, #tpu.memory_space<vmem>>, vector<1568x8xbf16>,
    return
  }
  func.func @transform_0(%arg0: i32) -> (i32, i32, i32) {
    %c0_i32 = arith.constant 0 : i32
    %c0_i32_0 = arith.constant 0 : i32
    %c0_i32_1 = arith.constant 0 : i32
    return %c0_i32, %arg0, %c0_i32_0 : i32, i32, i32
  }
  func.func @transform_1(%arg0: i32) -> (i32, i32) {
    %c0_i32 = arith.constant 0 : i32
    %c0_i32_0 = arith.constant 0 : i32
    %c0_i32_1 = arith.constant 0 : i32
    return %c0_i32, %c0_i32_0 : i32, i32
  }
  func.func @transform_2(%arg0: i32) -> (i32, i32) {
    %c0_i32 = arith.constant 0 : i32
    %c0_i32_0 = arith.constant 0 : i32
    %c0_i32_1 = arith.constant 0 : i32
    return %c0_i32, %c0_i32_0 : i32, i32
  }
  func.func @transform_3(%arg0: i32) -> (i32, i32) {
    %c0_i32 = arith.constant 0 : i32
    %c0_i32_0 = arith.constant 0 : i32
    return %arg0, %c0_i32 : i32, i32
  }
}

module attributes {stable_mosaic.version = 11 : i64} {
  func.func @_conv_relu_pool_kernel(%arg0: i32, %arg1: memref<4x200x256xbf16, #tpu.memory_space<vmem>>, %arg2: memref<256x128xbf16, #tpu.memory_space<vmem>>, %arg3: memref<1x128xf32, #tpu.memory_space<vmem>>, %arg4: memref<200x16xbf16, #tpu.memory_space<vmem>>) attributes {dimension_semantics = [#tpu.dimension_semantics<parallel>], iteration_bounds = array<i64: 1>, scalar_prefetch = 0 : i64, scratch_operands = 0 : i64, tpu.core_type = #tpu.core_type<tc>, window_params = [{transform_indices = @transform_0, window_bounds = array<i64: 4, 200, 256>}, {pipeline_mode = #tpu.pipeline_mode<synchronous>, transform_indices = @transform_1, window_bounds = array<i64: 256, 128>}, {pipeline_mode = #tpu.pipeline_mode<synchronous>, transform_indices = @transform_2, window_bounds = array<i64: 1, 128>}, {transform_indices = @transform_3, window_bounds = array<i64: 200, 16>}]} {
    %c0 = arith.constant 0 : index
    %c0_0 = arith.constant 0 : index
    %0 = vector.load %arg2[%c0, %c0_0] : memref<256x128xbf16, #tpu.memory_space<vmem>>, vector<256x128xbf16>
    %c0_1 = arith.constant 0 : index
    %c0_2 = arith.constant 0 : index
    %c0_3 = arith.constant 0 : index
    %1 = vector.load %arg1[%c0_1, %c0_2, %c0_3] : memref<4x200x256xbf16, #tpu.memory_space<vmem>>, vector<1x200x256xbf16>
    %2 = vector.shape_cast %1 : vector<1x200x256xbf16> to vector<200x256xbf16>
    %cst = arith.constant dense<0.000000e+00> : vector<200x128xf32>
    %3 = tpu.matmul %2, %0, %cst {dimension_numbers = #tpu.dot_dimension_numbers<[1], [0], [0], [1], [0, 0, 1, 1], [], []>} : vector<200x256xbf16>, vector<256x128xbf16>, vector<200x128xf32> -> vector<200x128xf32>
    %c1 = arith.constant 1 : index
    %c0_4 = arith.constant 0 : index
    %c0_5 = arith.constant 0 : index
    %4 = vector.load %arg1[%c1, %c0_4, %c0_5] : memref<4x200x256xbf16, #tpu.memory_space<vmem>>, vector<1x200x256xbf16>
    %5 = vector.shape_cast %4 : vector<1x200x256xbf16> to vector<200x256xbf16>
    %cst_6 = arith.constant dense<0.000000e+00> : vector<200x128xf32>
    %6 = tpu.matmul %5, %0, %cst_6 {dimension_numbers = #tpu.dot_dimension_numbers<[1], [0], [0], [1], [0, 0, 1, 1], [], []>} : vector<200x256xbf16>, vector<256x128xbf16>, vector<200x128xf32> -> vector<200x128xf32>
    %7 = arith.maximumf %3, %6 : vector<200x128xf32>
    %c2 = arith.constant 2 : index
    %c0_7 = arith.constant 0 : index
    %c0_8 = arith.constant 0 : index
    %8 = vector.load %arg1[%c2, %c0_7, %c0_8] : memref<4x200x256xbf16, #tpu.memory_space<vmem>>, vector<1x200x256xbf16>
    %9 = vector.shape_cast %8 : vector<1x200x256xbf16> to vector<200x256xbf16>
    %cst_9 = arith.constant dense<0.000000e+00> : vector<200x128xf32>
    %10 = tpu.matmul %9, %0, %cst_9 {dimension_numbers = #tpu.dot_dimension_numbers<[1], [0], [0], [1], [0, 0, 1, 1], [], []>} : vector<200x256xbf16>, vector<256x128xbf16>, vector<200x128xf32> -> vector<200x128xf32>
    %11 = arith.maximumf %7, %10 : vector<200x128xf32>
    %c3 = arith.constant 3 : index
    %c0_10 = arith.constant 0 : index
    %c0_11 = arith.constant 0 : index
    %12 = vector.load %arg1[%c3, %c0_10, %c0_11] : memref<4x200x256xbf16, #tpu.memory_space<vmem>>, vector<1x200x256xbf16>
    %13 = vector.shape_cast %12 : vector<1x200x256xbf16> to vector<200x256xbf16>
    %cst_12 = arith.constant dense<0.000000e+00> : vector<200x128xf32>
    %14 = tpu.matmul %13, %0, %cst_12 {dimension_numbers = #tpu.dot_dimension_numbers<[1], [0], [0], [1], [0, 0, 1, 1], [], []>} : vector<200x256xbf16>, vector<256x128xbf16>, vector<200x128xf32> -> vector<200x128xf32>
    %15 = arith.maximumf %11, %14 : vector<200x128xf32>
    %c0_13 = arith.constant 0 : index
    %c0_14 = arith.constant 0 : index
    %16 = vector.load %arg3[%c0_13, %c0_14] : memref<1x128xf32, #tpu.memory_space<vmem>>, vector<1x128xf32>
    %17 = vector.broadcast %16 : vector<1x128xf32> to vector<200x128xf32>
    %18 = arith.addf %15, %17 : vector<200x128xf32>
    %cst_15 = arith.constant 0.000000e+00 : f32
    %19 = vector.broadcast %cst_15 : f32 to vector<200x128xf32>
    %20 = arith.maximumf %18, %19 : vector<200x128xf32>
    %21 = vector.extract_strided_slice %20 {offsets = [0, 0], sizes = [200, 16], strides = [1, 1]} : vector<200x128xf32> to vector<200x16xf32>
    %22 = arith.truncf %21 : vector<200x16xf32> to vector<200x16xbf16>
    %c0_16 = arith.constant 0 : index
    %c0_17 = arith.constant 0 : index
    %23 = vector.load %arg4[%c0_16, %c0_17] : memref<200x16xbf16, #tpu.memory_space<vmem>>, vector<200x16xbf16>
    tpu.vector_store %arg4[%c0_16, %c0_17], %22 {strides = array<i32>} : memref<200x16xbf16, #tpu.memory_space<vmem>>, vector<200x16xbf16>,
    return
  }
  func.func @transform_0(%arg0: i32) -> (i32, i32, i32) {
    %c0_i32 = arith.constant 0 : i32
    %c0_i32_0 = arith.constant 0 : i32
    %c0_i32_1 = arith.constant 0 : i32
    return %c0_i32, %arg0, %c0_i32_0 : i32, i32, i32
  }
  func.func @transform_1(%arg0: i32) -> (i32, i32) {
    %c0_i32 = arith.constant 0 : i32
    %c0_i32_0 = arith.constant 0 : i32
    %c0_i32_1 = arith.constant 0 : i32
    return %c0_i32, %c0_i32_0 : i32, i32
  }
  func.func @transform_2(%arg0: i32) -> (i32, i32) {
    %c0_i32 = arith.constant 0 : i32
    %c0_i32_0 = arith.constant 0 : i32
    %c0_i32_1 = arith.constant 0 : i32
    return %c0_i32, %c0_i32_0 : i32, i32
  }
  func.func @transform_3(%arg0: i32) -> (i32, i32) {
    %c0_i32 = arith.constant 0 : i32
    %c0_i32_0 = arith.constant 0 : i32
    return %arg0, %c0_i32 : i32, i32
  }
}

module attributes {stable_mosaic.version = 11 : i64} {
  func.func @_mlp_kernel(%arg0: i32, %arg1: memref<16x512xbf16, #tpu.memory_space<vmem>>, %arg2: memref<512x128xbf16, #tpu.memory_space<vmem>>, %arg3: memref<1x128xf32, #tpu.memory_space<vmem>>, %arg4: memref<128x128xbf16, #tpu.memory_space<vmem>>, %arg5: memref<1x128xf32, #tpu.memory_space<vmem>>, %arg6: memref<128x128xbf16, #tpu.memory_space<vmem>>, %arg7: memref<1x128xf32, #tpu.memory_space<vmem>>, %arg8: memref<16x128xf32, #tpu.memory_space<vmem>>) attributes {dimension_semantics = [#tpu.dimension_semantics<parallel>], iteration_bounds = array<i64: 1>, scalar_prefetch = 0 : i64, scratch_operands = 0 : i64, tpu.core_type = #tpu.core_type<tc>, window_params = [{transform_indices = @transform_0, window_bounds = array<i64: 16, 512>}, {pipeline_mode = #tpu.pipeline_mode<synchronous>, transform_indices = @transform_1, window_bounds = array<i64: 512, 128>}, {pipeline_mode = #tpu.pipeline_mode<synchronous>, transform_indices = @transform_2, window_bounds = array<i64: 1, 128>}, {pipeline_mode = #tpu.pipeline_mode<synchronous>, transform_indices = @transform_3, window_bounds = array<i64: 128, 128>}, {pipeline_mode = #tpu.pipeline_mode<synchronous>, transform_indices = @transform_4, window_bounds = array<i64: 1, 128>}, {pipeline_mode = #tpu.pipeline_mode<synchronous>, transform_indices = @transform_5, window_bounds = array<i64: 128, 128>}, {pipeline_mode = #tpu.pipeline_mode<synchronous>, transform_indices = @transform_6, window_bounds = array<i64: 1, 128>}, {transform_indices = @transform_7, window_bounds = array<i64: 16, 128>}]} {
    %c0 = arith.constant 0 : index
    %c0_0 = arith.constant 0 : index
    %0 = vector.load %arg1[%c0, %c0_0] : memref<16x512xbf16, #tpu.memory_space<vmem>>, vector<16x512xbf16>
    %c0_1 = arith.constant 0 : index
    %c0_2 = arith.constant 0 : index
    %1 = vector.load %arg2[%c0_1, %c0_2] : memref<512x128xbf16, #tpu.memory_space<vmem>>, vector<512x128xbf16>
    %cst = arith.constant dense<0.000000e+00> : vector<16x128xf32>
    %2 = tpu.matmul %0, %1, %cst {dimension_numbers = #tpu.dot_dimension_numbers<[1], [0], [0], [1], [0, 0, 1, 1], [], []>} : vector<16x512xbf16>, vector<512x128xbf16>, vector<16x128xf32> -> vector<16x128xf32>
    %c0_3 = arith.constant 0 : index
    %c0_4 = arith.constant 0 : index
    %3 = vector.load %arg3[%c0_3, %c0_4] : memref<1x128xf32, #tpu.memory_space<vmem>>, vector<1x128xf32>
    %4 = vector.broadcast %3 : vector<1x128xf32> to vector<16x128xf32>
    %5 = arith.addf %2, %4 : vector<16x128xf32>
    %cst_5 = arith.constant 0.000000e+00 : f32
    %6 = vector.broadcast %cst_5 : f32 to vector<16x128xf32>
    %7 = arith.maximumf %5, %6 : vector<16x128xf32>
    %8 = arith.truncf %7 : vector<16x128xf32> to vector<16x128xbf16>
    %c0_6 = arith.constant 0 : index
    %c0_7 = arith.constant 0 : index
    %9 = vector.load %arg4[%c0_6, %c0_7] : memref<128x128xbf16, #tpu.memory_space<vmem>>, vector<128x128xbf16>
    %cst_8 = arith.constant dense<0.000000e+00> : vector<16x128xf32>
    %10 = tpu.matmul %8, %9, %cst_8 {dimension_numbers = #tpu.dot_dimension_numbers<[1], [0], [0], [1], [0, 0, 1, 1], [], []>} : vector<16x128xbf16>, vector<128x128xbf16>, vector<16x128xf32> -> vector<16x128xf32>
    %c0_9 = arith.constant 0 : index
    %c0_10 = arith.constant 0 : index
    %11 = vector.load %arg5[%c0_9, %c0_10] : memref<1x128xf32, #tpu.memory_space<vmem>>, vector<1x128xf32>
    %12 = vector.broadcast %11 : vector<1x128xf32> to vector<16x128xf32>
    %13 = arith.addf %10, %12 : vector<16x128xf32>
    %cst_11 = arith.constant 0.000000e+00 : f32
    %14 = vector.broadcast %cst_11 : f32 to vector<16x128xf32>
    %15 = arith.maximumf %13, %14 : vector<16x128xf32>
    %16 = arith.truncf %15 : vector<16x128xf32> to vector<16x128xbf16>
    %c0_12 = arith.constant 0 : index
    %c0_13 = arith.constant 0 : index
    %17 = vector.load %arg6[%c0_12, %c0_13] : memref<128x128xbf16, #tpu.memory_space<vmem>>, vector<128x128xbf16>
    %cst_14 = arith.constant dense<0.000000e+00> : vector<16x128xf32>
    %18 = tpu.matmul %16, %17, %cst_14 {dimension_numbers = #tpu.dot_dimension_numbers<[1], [0], [0], [1], [0, 0, 1, 1], [], []>} : vector<16x128xbf16>, vector<128x128xbf16>, vector<16x128xf32> -> vector<16x128xf32>
    %c0_15 = arith.constant 0 : index
    %c0_16 = arith.constant 0 : index
    %19 = vector.load %arg7[%c0_15, %c0_16] : memref<1x128xf32, #tpu.memory_space<vmem>>, vector<1x128xf32>
    %20 = vector.broadcast %19 : vector<1x128xf32> to vector<16x128xf32>
    %21 = arith.addf %18, %20 : vector<16x128xf32>
    %c0_17 = arith.constant 0 : index
    %c0_18 = arith.constant 0 : index
    %22 = vector.load %arg8[%c0_17, %c0_18] : memref<16x128xf32, #tpu.memory_space<vmem>>, vector<16x128xf32>
    tpu.vector_store %arg8[%c0_17, %c0_18], %21 {strides = array<i32>} : memref<16x128xf32, #tpu.memory_space<vmem>>, vector<16x128xf32>,
    return
  }
  func.func @transform_0(%arg0: i32) -> (i32, i32) {
    %c0_i32 = arith.constant 0 : i32
    %c0_i32_0 = arith.constant 0 : i32
    return %arg0, %c0_i32 : i32, i32
  }
  func.func @transform_1(%arg0: i32) -> (i32, i32) {
    %c0_i32 = arith.constant 0 : i32
    %c0_i32_0 = arith.constant 0 : i32
    %c0_i32_1 = arith.constant 0 : i32
    return %c0_i32, %c0_i32_0 : i32, i32
  }
  func.func @transform_2(%arg0: i32) -> (i32, i32) {
    %c0_i32 = arith.constant 0 : i32
    %c0_i32_0 = arith.constant 0 : i32
    %c0_i32_1 = arith.constant 0 : i32
    return %c0_i32, %c0_i32_0 : i32, i32
  }
  func.func @transform_3(%arg0: i32) -> (i32, i32) {
    %c0_i32 = arith.constant 0 : i32
    %c0_i32_0 = arith.constant 0 : i32
    %c0_i32_1 = arith.constant 0 : i32
    return %c0_i32, %c0_i32_0 : i32, i32
  }
  func.func @transform_4(%arg0: i32) -> (i32, i32) {
    %c0_i32 = arith.constant 0 : i32
    %c0_i32_0 = arith.constant 0 : i32
    %c0_i32_1 = arith.constant 0 : i32
    return %c0_i32, %c0_i32_0 : i32, i32
  }
  func.func @transform_5(%arg0: i32) -> (i32, i32) {
    %c0_i32 = arith.constant 0 : i32
    %c0_i32_0 = arith.constant 0 : i32
    %c0_i32_1 = arith.constant 0 : i32
    return %c0_i32, %c0_i32_0 : i32, i32
  }
  func.func @transform_6(%arg0: i32) -> (i32, i32) {
    %c0_i32 = arith.constant 0 : i32
    %c0_i32_0 = arith.constant 0 : i32
    %c0_i32_1 = arith.constant 0 : i32
    return %c0_i32, %c0_i32_0 : i32, i32
  }
  func.func @transform_7(%arg0: i32) -> (i32, i32) {
    %c0_i32 = arith.constant 0 : i32
    %c0_i32_0 = arith.constant 0 : i32
    return %arg0, %c0_i32 : i32, i32
  }
}

</mosaic_0001>

<llo_original>
// kernel: net_forward.3
$region0: #{net_forward.3}
  #allocation0 [shape = 'u32[]', space=smem, size = 0x4, offset = 0x4, fixed_abs, tag = 'smem constant byte address 0x4 - core index']
  #allocation1 [shape = 'u32[144,128]{1,0:T(1,128)}', space=vmem, size = 0x12000, scoped, tag = 'internal scratch']
  %s0 = inlined_call_operand.vmem [shape: bf16[4,1568,128], index: 0, kind: input, shape index: {}]
  %s1 = inlined_call_operand.vmem [shape: bf16[128,128], index: 1, kind: input, shape index: {}]
  %s2 = inlined_call_operand.vmem [shape: f32[1,128], index: 2, kind: input, shape index: {}]
  %s3 = inlined_call_operand.vmem [shape: bf16[1568,8], index: 3, kind: output, shape index: {}]
  %s4 = sld [smem:[#allocation0]]
  $region22: #{net_forward.3} parent=0
    _
  %s6 = ssub.s32 1, %s4
  %s7 = scalar_select 0, %s6, %s4
  // Predicated region
  $region2: #{net_forward.3} parent=0 // pred_check
    _
  $region3: #{net_forward.3} parent=0 // pred_check_branch
    %9 = sbr.rel (0) target = $region5
  $region4: #{net_forward.3} parent=0 // pred_region
    _
  $region5: #{net_forward.3} parent=0 // pred_fallthru
    _
  // Predicated region
  $region6: #{net_forward.3} parent=0 // pred_check
    _
  $region7: #{net_forward.3} parent=0 // pred_check_branch
    %11 = sbr.rel (0) target = $region9
  $region8: #{net_forward.3} parent=0 // pred_region
    _
  $region9: #{net_forward.3} parent=0 // pred_fallthru
    _
  // Predicated region
  $region10: #{net_forward.3} parent=0 // pred_check
    _
  $region11: #{net_forward.3} parent=0 // pred_check_branch
    %13 = sbr.rel (0) target = $region13
  $region12: #{net_forward.3} parent=0 // pred_region
    _
  $region13: #{net_forward.3} parent=0 // pred_fallthru
    _
  %v15 = vld [vmem:[%s1] sm:$0xf]
  %v16 = vld [vmem:[%s1 + $0x4] sm:$0xf]
  %v17 = vld [vmem:[%s1 + $0x8] sm:$0xf]
  %v18 = vld [vmem:[%s1 + $0xc] sm:$0xf]
  %v19 = vld [vmem:[%s1 + $0x10] sm:$0xf]
  %v20 = vld [vmem:[%s1 + $0x14] sm:$0xf]
  %v21 = vld [vmem:[%s1 + $0x18] sm:$0xf]
  %v22 = vld [vmem:[%s1 + $0x1c] sm:$0xf]
  %v23 = vld [vmem:[%s1 + $0x20] sm:$0xf]
  %v24 = vld [vmem:[%s1 + $0x24] sm:$0xf]
  %v25 = vld [vmem:[%s1 + $0x28] sm:$0xf]
  %v26 = vld [vmem:[%s1 + $0x2c] sm:$0xf]
  %v27 = vld [vmem:[%s1 + $0x30] sm:$0xf]
  %v28 = vld [vmem:[%s1 + $0x34] sm:$0xf]
  %v29 = vld [vmem:[%s1 + $0x38] sm:$0xf]
  %v30 = vld [vmem:[%s1 + $0x3c] sm:$0xf]
  %v31 = vld [vmem:[%s0] sm:$0xf]
  %v32 = vld [vmem:[%s0 + $0x4] sm:$0xf]
  %v33 = vld [vmem:[%s0 + $0x8] sm:$0xf]
  %v34 = vld [vmem:[%s0 + $0xc] sm:$0xf]
  %v35 = vld [vmem:[%s0 + $0x10] sm:$0xf]
  %v36 = vld [vmem:[%s0 + $0x14] sm:$0xf]
  %v37 = vld [vmem:[%s0 + $0x18] sm:$0xf]
  %v38 = vld [vmem:[%s0 + $0x1c] sm:$0xf]
  %v39 = vld [vmem:[%s0 + $0x20] sm:$0xf]
  %v40 = vld [vmem:[%s0 + $0x24] sm:$0xf]
  %v41 = vld [vmem:[%s0 + $0x28] sm:$0xf]
  %v42 = vld [vmem:[%s0 + $0x2c] sm:$0xf]
  %v43 = vld [vmem:[%s0 + $0x30] sm:$0xf]
  %v44 = vld [vmem:[%s0 + $0x34] sm:$0xf]
  %v45 = vld [vmem:[%s0 + $0x38] sm:$0xf]
  %v46 = vld [vmem:[%s0 + $0x3c] sm:$0xf]
  %v47 = vld [vmem:[%s0 + $0x40] sm:$0xf]
  %v48 = vld [vmem:[%s0 + $0x44] sm:$0xf]
  %v49 = vld [vmem:[%s0 + $0x48] sm:$0xf]
  %v50 = vld [vmem:[%s0 + $0x4c] sm:$0xf]
  %v51 = vld [vmem:[%s0 + $0x50] sm:$0xf]
  %v52 = vld [vmem:[%s0 + $0x54] sm:$0xf]
  %v53 = vld [vmem:[%s0 + $0x58] sm:$0xf]
  %v54 = vld [vmem:[%s0 + $0x5c] sm:$0xf]
  %v55 = vld [vmem:[%s0 + $0x60] sm:$0xf]
  %v56 = vld [vmem:[%s0 + $0x64] sm:$0xf]
  %v57 = vld [vmem:[%s0 + $0x68] sm:$0xf]
  %v58 = vld [vmem:[%s0 + $0x6c] sm:$0xf]
  %v59 = vld [vmem:[%s0 + $0x70] sm:$0xf]
  %v60 = vld [vmem:[%s0 + $0x74] sm:$0xf]
  %v61 = vld [vmem:[%s0 + $0x78] sm:$0xf]
  %v62 = vld [vmem:[%s0 + $0x7c] sm:$0xf]
  %v63 = vld [vmem:[%s0 + $0x80] sm:$0xf]
  %v64 = vld [vmem:[%s0 + $0x84] sm:$0xf]
  %v65 = vld [vmem:[%s0 + $0x88] sm:$0xf]
  %v66 = vld [vmem:[%s0 + $0x8c] sm:$0xf]
  %v67 = vld [vmem:[%s0 + $0x90] sm:$0xf]
  %v68 = vld [vmem:[%s0 + $0x94] sm:$0xf]
  %v69 = vld [vmem:[%s0 + $0x98] sm:$0xf]
  %v70 = vld [vmem:[%s0 + $0x9c] sm:$0xf]
  %v71 = vld [vmem:[%s0 + $0xa0] sm:$0xf]
  %v72 = vld [vmem:[%s0 + $0xa4] sm:$0xf]
  %v73 = vld [vmem:[%s0 + $0xa8] sm:$0xf]
  %v74 = vld [vmem:[%s0 + $0xac] sm:$0xf]
  %v75 = vld [vmem:[%s0 + $0xb0] sm:$0xf]
  %v76 = vld [vmem:[%s0 + $0xb4] sm:$0xf]
  %v77 = vld [vmem:[%s0 + $0xb8] sm:$0xf]
  %v78 = vld [vmem:[%s0 + $0xbc] sm:$0xf]
  %v79 = vld [vmem:[%s0 + $0xc0] sm:$0xf]
  %v80 = vld [vmem:[%s0 + $0xc4] sm:$0xf]
  %v81 = vld [vmem:[%s0 + $0xc8] sm:$0xf]
  %v82 = vld [vmem:[%s0 + $0xcc] sm:$0xf]
  %v83 = vld [vmem:[%s0 + $0xd0] sm:$0xf]
  %v84 = vld [vmem:[%s0 + $0xd4] sm:$0xf]
  %v85 = vld [vmem:[%s0 + $0xd8] sm:$0xf]
  %v86 = vld [vmem:[%s0 + $0xdc] sm:$0xf]
  %v87 = vld [vmem:[%s0 + $0xe0] sm:$0xf]
  %v88 = vld [vmem:[%s0 + $0xe4] sm:$0xf]
  %v89 = vld [vmem:[%s0 + $0xe8] sm:$0xf]
  %v90 = vld [vmem:[%s0 + $0xec] sm:$0xf]
  %v91 = vld [vmem:[%s0 + $0xf0] sm:$0xf]
  %v92 = vld [vmem:[%s0 + $0xf4] sm:$0xf]
  %v93 = vld [vmem:[%s0 + $0xf8] sm:$0xf]
  %v94 = vld [vmem:[%s0 + $0xfc] sm:$0xf]
  %v95 = vld [vmem:[%s0 + $0x100] sm:$0xf]
  %v96 = vld [vmem:[%s0 + $0x104] sm:$0xf]
  %v97 = vld [vmem:[%s0 + $0x108] sm:$0xf]
  %v98 = vld [vmem:[%s0 + $0x10c] sm:$0xf]
  %v99 = vld [vmem:[%s0 + $0x110] sm:$0xf]
  %v100 = vld [vmem:[%s0 + $0x114] sm:$0xf]
  %v101 = vld [vmem:[%s0 + $0x118] sm:$0xf]
  %v102 = vld [vmem:[%s0 + $0x11c] sm:$0xf]
  %v103 = vld [vmem:[%s0 + $0x120] sm:$0xf]
  %v104 = vld [vmem:[%s0 + $0x124] sm:$0xf]
  %v105 = vld [vmem:[%s0 + $0x128] sm:$0xf]
  %v106 = vld [vmem:[%s0 + $0x12c] sm:$0xf]
  %v107 = vld [vmem:[%s0 + $0x130] sm:$0xf]
  %v108 = vld [vmem:[%s0 + $0x134] sm:$0xf]
  %v109 = vld [vmem:[%s0 + $0x138] sm:$0xf]
  %v110 = vld [vmem:[%s0 + $0x13c] sm:$0xf]
  %v111 = vld [vmem:[%s0 + $0x140] sm:$0xf]
  %v112 = vld [vmem:[%s0 + $0x144] sm:$0xf]
  %v113 = vld [vmem:[%s0 + $0x148] sm:$0xf]
  %v114 = vld [vmem:[%s0 + $0x14c] sm:$0xf]
  %v115 = vld [vmem:[%s0 + $0x150] sm:$0xf]
  %v116 = vld [vmem:[%s0 + $0x154] sm:$0xf]
  %v117 = vld [vmem:[%s0 + $0x158] sm:$0xf]
  %v118 = vld [vmem:[%s0 + $0x15c] sm:$0xf]
  %v119 = vld [vmem:[%s0 + $0x160] sm:$0xf]
  %v120 = vld [vmem:[%s0 + $0x164] sm:$0xf]
  %v121 = vld [vmem:[%s0 + $0x168] sm:$0xf]
  %v122 = vld [vmem:[%s0 + $0x16c] sm:$0xf]
  %v123 = vld [vmem:[%s0 + $0x170] sm:$0xf]
  %v124 = vld [vmem:[%s0 + $0x174] sm:$0xf]
  %v125 = vld [vmem:[%s0 + $0x178] sm:$0xf]
  %v126 = vld [vmem:[%s0 + $0x17c] sm:$0xf]
  %v127 = vld [vmem:[%s0 + $0x180] sm:$0xf]
  %v128 = vld [vmem:[%s0 + $0x184] sm:$0xf]
  %v129 = vld [vmem:[%s0 + $0x188] sm:$0xf]
  %v130 = vld [vmem:[%s0 + $0x18c] sm:$0xf]
  %v131 = vld [vmem:[%s0 + $0x190] sm:$0xf]
  %v132 = vld [vmem:[%s0 + $0x194] sm:$0xf]
  %v133 = vld [vmem:[%s0 + $0x198] sm:$0xf]
  %v134 = vld [vmem:[%s0 + $0x19c] sm:$0xf]
  %v135 = vld [vmem:[%s0 + $0x1a0] sm:$0xf]
  %v136 = vld [vmem:[%s0 + $0x1a4] sm:$0xf]
  %v137 = vld [vmem:[%s0 + $0x1a8] sm:$0xf]
  %v138 = vld [vmem:[%s0 + $0x1ac] sm:$0xf]
  %v139 = vld [vmem:[%s0 + $0x1b0] sm:$0xf]
  %v140 = vld [vmem:[%s0 + $0x1b4] sm:$0xf]
  %v141 = vld [vmem:[%s0 + $0x1b8] sm:$0xf]
  %v142 = vld [vmem:[%s0 + $0x1bc] sm:$0xf]
  %v143 = vld [vmem:[%s0 + $0x1c0] sm:$0xf]
  %v144 = vld [vmem:[%s0 + $0x1c4] sm:$0xf]
  %v145 = vld [vmem:[%s0 + $0x1c8] sm:$0xf]
  %v146 = vld [vmem:[%s0 + $0x1cc] sm:$0xf]
  %v147 = vld [vmem:[%s0 + $0x1d0] sm:$0xf]
  %v148 = vld [vmem:[%s0 + $0x1d4] sm:$0xf]
  %v149 = vld [vmem:[%s0 + $0x1d8] sm:$0xf]
  %v150 = vld [vmem:[%s0 + $0x1dc] sm:$0xf]
  %v151 = vld [vmem:[%s0 + $0x1e0] sm:$0xf]
  %v152 = vld [vmem:[%s0 + $0x1e4] sm:$0xf]
  %v153 = vld [vmem:[%s0 + $0x1e8] sm:$0xf]
  %v154 = vld [vmem:[%s0 + $0x1ec] sm:$0xf]
  %v155 = vld [vmem:[%s0 + $0x1f0] sm:$0xf]
  %v156 = vld [vmem:[%s0 + $0x1f4] sm:$0xf]
  %v157 = vld [vmem:[%s0 + $0x1f8] sm:$0xf]
  %v158 = vld [vmem:[%s0 + $0x1fc] sm:$0xf]
  %v159 = vld [vmem:[%s0 + $0x200] sm:$0xf]
  %v160 = vld [vmem:[%s0 + $0x204] sm:$0xf]
  %v161 = vld [vmem:[%s0 + $0x208] sm:$0xf]
  %v162 = vld [vmem:[%s0 + $0x20c] sm:$0xf]
  %v163 = vld [vmem:[%s0 + $0x210] sm:$0xf]
  %v164 = vld [vmem:[%s0 + $0x214] sm:$0xf]
  %v165 = vld [vmem:[%s0 + $0x218] sm:$0xf]
  %v166 = vld [vmem:[%s0 + $0x21c] sm:$0xf]
  %v167 = vld [vmem:[%s0 + $0x220] sm:$0xf]
  %v168 = vld [vmem:[%s0 + $0x224] sm:$0xf]
  %v169 = vld [vmem:[%s0 + $0x228] sm:$0xf]
  %v170 = vld [vmem:[%s0 + $0x22c] sm:$0xf]
  %v171 = vld [vmem:[%s0 + $0x230] sm:$0xf]
  %v172 = vld [vmem:[%s0 + $0x234] sm:$0xf]
  %v173 = vld [vmem:[%s0 + $0x238] sm:$0xf]
  %v174 = vld [vmem:[%s0 + $0x23c] sm:$0xf]
  %v175 = vld [vmem:[%s0 + $0x240] sm:$0xf]
  %v176 = vld [vmem:[%s0 + $0x244] sm:$0xf]
  %v177 = vld [vmem:[%s0 + $0x248] sm:$0xf]
  %v178 = vld [vmem:[%s0 + $0x24c] sm:$0xf]
  %v179 = vld [vmem:[%s0 + $0x250] sm:$0xf]
  %v180 = vld [vmem:[%s0 + $0x254] sm:$0xf]
  %v181 = vld [vmem:[%s0 + $0x258] sm:$0xf]
  %v182 = vld [vmem:[%s0 + $0x25c] sm:$0xf]
  %v183 = vld [vmem:[%s0 + $0x260] sm:$0xf]
  %v184 = vld [vmem:[%s0 + $0x264] sm:$0xf]
  %v185 = vld [vmem:[%s0 + $0x268] sm:$0xf]
  %v186 = vld [vmem:[%s0 + $0x26c] sm:$0xf]
  %v187 = vld [vmem:[%s0 + $0x270] sm:$0xf]
  %v188 = vld [vmem:[%s0 + $0x274] sm:$0xf]
  %v189 = vld [vmem:[%s0 + $0x278] sm:$0xf]
  %v190 = vld [vmem:[%s0 + $0x27c] sm:$0xf]
  %v191 = vld [vmem:[%s0 + $0x280] sm:$0xf]
  %v192 = vld [vmem:[%s0 + $0x284] sm:$0xf]
  %v193 = vld [vmem:[%s0 + $0x288] sm:$0xf]
  %v194 = vld [vmem:[%s0 + $0x28c] sm:$0xf]
  %v195 = vld [vmem:[%s0 + $0x290] sm:$0xf]
  %v196 = vld [vmem:[%s0 + $0x294] sm:$0xf]
  %v197 = vld [vmem:[%s0 + $0x298] sm:$0xf]
  %v198 = vld [vmem:[%s0 + $0x29c] sm:$0xf]
  %v199 = vld [vmem:[%s0 + $0x2a0] sm:$0xf]
  %v200 = vld [vmem:[%s0 + $0x2a4] sm:$0xf]
  %v201 = vld [vmem:[%s0 + $0x2a8] sm:$0xf]
  %v202 = vld [vmem:[%s0 + $0x2ac] sm:$0xf]
  %v203 = vld [vmem:[%s0 + $0x2b0] sm:$0xf]
  %v204 = vld [vmem:[%s0 + $0x2b4] sm:$0xf]
  %v205 = vld [vmem:[%s0 + $0x2b8] sm:$0xf]
  %v206 = vld [vmem:[%s0 + $0x2bc] sm:$0xf]
  %v207 = vld [vmem:[%s0 + $0x2c0] sm:$0xf]
  %v208 = vld [vmem:[%s0 + $0x2c4] sm:$0xf]
  %v209 = vld [vmem:[%s0 + $0x2c8] sm:$0xf]
  %v210 = vld [vmem:[%s0 + $0x2cc] sm:$0xf]
  %v211 = vld [vmem:[%s0 + $0x2d0] sm:$0xf]
  %v212 = vld [vmem:[%s0 + $0x2d4] sm:$0xf]
  %v213 = vld [vmem:[%s0 + $0x2d8] sm:$0xf]
  %v214 = vld [vmem:[%s0 + $0x2dc] sm:$0xf]
  %v215 = vld [vmem:[%s0 + $0x2e0] sm:$0xf]
  %v216 = vld [vmem:[%s0 + $0x2e4] sm:$0xf]
  %v217 = vld [vmem:[%s0 + $0x2e8] sm:$0xf]
  %v218 = vld [vmem:[%s0 + $0x2ec] sm:$0xf]
  %v219 = vld [vmem:[%s0 + $0x2f0] sm:$0xf]
  %v220 = vld [vmem:[%s0 + $0x2f4] sm:$0xf]
  %v221 = vld [vmem:[%s0 + $0x2f8] sm:$0xf]
  %v222 = vld [vmem:[%s0 + $0x2fc] sm:$0xf]
  %v223 = vld [vmem:[%s0 + $0x300] sm:$0xf]
  %v224 = vld [vmem:[%s0 + $0x304] sm:$0xf]
  %v225 = vld [vmem:[%s0 + $0x308] sm:$0xf]
  %v226 = vld [vmem:[%s0 + $0x30c] sm:$0xf]
  %v423 = vunpack.c.l.b16 %v31
  %v424 = vunpack.c.l.b16 %v32
  %v425 = vunpack.c.l.b16 %v33
  %v426 = vunpack.c.l.b16 %v34
  %v427 = vunpack.c.l.b16 %v35
  %v428 = vunpack.c.l.b16 %v36
  %v429 = vunpack.c.l.b16 %v37
  %v430 = vunpack.c.l.b16 %v38
  %v431 = vunpack.c.l.b16 %v39
  %v432 = vunpack.c.l.b16 %v40
  %v433 = vunpack.c.l.b16 %v41
  %v434 = vunpack.c.l.b16 %v42
  %v435 = vunpack.c.l.b16 %v43
  %v436 = vunpack.c.l.b16 %v44
  %v437 = vunpack.c.l.b16 %v45
  %v438 = vunpack.c.l.b16 %v46
  %v439 = vunpack.c.l.b16 %v47
  %v440 = vunpack.c.l.b16 %v48
  %v441 = vunpack.c.l.b16 %v49
  %v442 = vunpack.c.l.b16 %v50
  %v443 = vunpack.c.l.b16 %v51
  %v444 = vunpack.c.l.b16 %v52
  %v445 = vunpack.c.l.b16 %v53
  %v446 = vunpack.c.l.b16 %v54
  %v447 = vunpack.c.l.b16 %v55
  %v448 = vunpack.c.l.b16 %v56
  %v449 = vunpack.c.l.b16 %v57
  %v450 = vunpack.c.l.b16 %v58
  %v451 = vunpack.c.l.b16 %v59
  %v452 = vunpack.c.l.b16 %v60
  %v453 = vunpack.c.l.b16 %v61
  %v454 = vunpack.c.l.b16 %v62
  %v455 = vunpack.c.l.b16 %v63
  %v456 = vunpack.c.l.b16 %v64
  %v457 = vunpack.c.l.b16 %v65
  %v458 = vunpack.c.l.b16 %v66
  %v459 = vunpack.c.l.b16 %v67
  %v460 = vunpack.c.l.b16 %v68
  %v461 = vunpack.c.l.b16 %v69
  %v462 = vunpack.c.l.b16 %v70
  %v463 = vunpack.c.l.b16 %v71
  %v464 = vunpack.c.l.b16 %v72
  %v465 = vunpack.c.l.b16 %v73
  %v466 = vunpack.c.l.b16 %v74
  %v467 = vunpack.c.l.b16 %v75
  %v468 = vunpack.c.l.b16 %v76
  %v469 = vunpack.c.l.b16 %v77
  %v470 = vunpack.c.l.b16 %v78
  %v471 = vunpack.c.l.b16 %v79
  %v472 = vunpack.c.l.b16 %v80
  %v473 = vunpack.c.l.b16 %v81
  %v474 = vunpack.c.l.b16 %v82
  %v475 = vunpack.c.l.b16 %v83
  %v476 = vunpack.c.l.b16 %v84
  %v477 = vunpack.c.l.b16 %v85
  %v478 = vunpack.c.l.b16 %v86
  %v479 = vunpack.c.l.b16 %v87
  %v480 = vunpack.c.l.b16 %v88
  %v481 = vunpack.c.l.b16 %v89
  %v482 = vunpack.c.l.b16 %v90
  %v483 = vunpack.c.l.b16 %v91
  %v484 = vunpack.c.l.b16 %v92
  %v485 = vunpack.c.l.b16 %v93
  %v486 = vunpack.c.l.b16 %v94
  %v487 = vunpack.c.l.b16 %v95
  %v488 = vunpack.c.l.b16 %v96
  %v489 = vunpack.c.l.b16 %v97
  %v490 = vunpack.c.l.b16 %v98
  %v491 = vunpack.c.l.b16 %v99
  %v492 = vunpack.c.l.b16 %v100
  %v493 = vunpack.c.l.b16 %v101
  %v494 = vunpack.c.l.b16 %v102
  %v495 = vunpack.c.l.b16 %v103
  %v496 = vunpack.c.l.b16 %v104
  %v497 = vunpack.c.l.b16 %v105
  %v498 = vunpack.c.l.b16 %v106
  %v499 = vunpack.c.l.b16 %v107
  %v500 = vunpack.c.l.b16 %v108
  %v501 = vunpack.c.l.b16 %v109
  %v502 = vunpack.c.l.b16 %v110
  %v503 = vunpack.c.l.b16 %v111
  %v504 = vunpack.c.l.b16 %v112
  %v505 = vunpack.c.l.b16 %v113
  %v506 = vunpack.c.l.b16 %v114
  %v507 = vunpack.c.l.b16 %v115
  %v508 = vunpack.c.l.b16 %v116
  %v509 = vunpack.c.l.b16 %v117
  %v510 = vunpack.c.l.b16 %v118
  %v511 = vunpack.c.l.b16 %v119
  %v512 = vunpack.c.l.b16 %v120
  %v513 = vunpack.c.l.b16 %v121
  %v514 = vunpack.c.l.b16 %v122
  %v515 = vunpack.c.l.b16 %v123
  %v516 = vunpack.c.l.b16 %v124
  %v517 = vunpack.c.l.b16 %v125
  %v518 = vunpack.c.l.b16 %v126
  %v519 = vunpack.c.l.b16 %v127
  %v520 = vunpack.c.l.b16 %v128
  %v521 = vunpack.c.l.b16 %v129
  %v522 = vunpack.c.l.b16 %v130
  %v523 = vunpack.c.l.b16 %v131
  %v524 = vunpack.c.l.b16 %v132
  %v525 = vunpack.c.l.b16 %v133
  %v526 = vunpack.c.l.b16 %v134
  %v527 = vunpack.c.l.b16 %v135
  %v528 = vunpack.c.l.b16 %v136
  %v529 = vunpack.c.l.b16 %v137
  %v530 = vunpack.c.l.b16 %v138
  %v531 = vunpack.c.l.b16 %v139
  %v532 = vunpack.c.l.b16 %v140
  %v533 = vunpack.c.l.b16 %v141
  %v534 = vunpack.c.l.b16 %v142
  %v535 = vunpack.c.l.b16 %v143
  %v536 = vunpack.c.l.b16 %v144
  %v537 = vunpack.c.l.b16 %v145
  %v538 = vunpack.c.l.b16 %v146
  %v539 = vunpack.c.l.b16 %v147
  %v540 = vunpack.c.l.b16 %v148
  %v541 = vunpack.c.l.b16 %v149
  %v542 = vunpack.c.l.b16 %v150
  %v543 = vunpack.c.l.b16 %v151
  %v544 = vunpack.c.l.b16 %v152
  %v545 = vunpack.c.l.b16 %v153
  %v546 = vunpack.c.l.b16 %v154
  %v547 = vunpack.c.l.b16 %v155
  %v548 = vunpack.c.l.b16 %v156
  %v549 = vunpack.c.l.b16 %v157
  %v550 = vunpack.c.l.b16 %v158
  %v551 = vunpack.c.l.b16 %v159
  %v552 = vunpack.c.l.b16 %v160
  %v553 = vunpack.c.l.b16 %v161
  %v554 = vunpack.c.l.b16 %v162
  %v555 = vunpack.c.l.b16 %v163
  %v556 = vunpack.c.l.b16 %v164
  %v557 = vunpack.c.l.b16 %v165
  %v558 = vunpack.c.l.b16 %v166
  %v559 = vunpack.c.l.b16 %v167
  %v560 = vunpack.c.l.b16 %v168
  %v561 = vunpack.c.l.b16 %v169
  %v562 = vunpack.c.l.b16 %v170
  %v563 = vunpack.c.l.b16 %v171
  %v564 = vunpack.c.l.b16 %v172
  %v565 = vunpack.c.l.b16 %v173
  %v566 = vunpack.c.l.b16 %v174
  %v567 = vunpack.c.l.b16 %v175
  %v568 = vunpack.c.l.b16 %v176
  %v569 = vunpack.c.l.b16 %v177
  %v570 = vunpack.c.l.b16 %v178
  %v571 = vunpack.c.l.b16 %v179
  %v572 = vunpack.c.l.b16 %v180
  %v573 = vunpack.c.l.b16 %v181
  %v574 = vunpack.c.l.b16 %v182
  %v575 = vunpack.c.l.b16 %v183
  %v576 = vunpack.c.l.b16 %v184
  %v577 = vunpack.c.l.b16 %v185
  %v578 = vunpack.c.l.b16 %v186
  %v579 = vunpack.c.l.b16 %v187
  %v580 = vunpack.c.l.b16 %v188
  %v581 = vunpack.c.l.b16 %v189
  %v582 = vunpack.c.l.b16 %v190
  %v583 = vunpack.c.l.b16 %v191
  %v584 = vunpack.c.l.b16 %v192
  %v585 = vunpack.c.l.b16 %v193
  %v586 = vunpack.c.l.b16 %v194
  %v587 = vunpack.c.l.b16 %v195
  %v588 = vunpack.c.l.b16 %v196
  %v589 = vunpack.c.l.b16 %v197
  %v590 = vunpack.c.l.b16 %v198
  %v591 = vunpack.c.l.b16 %v199
  %v592 = vunpack.c.l.b16 %v200
  %v593 = vunpack.c.l.b16 %v201
  %v594 = vunpack.c.l.b16 %v202
  %v595 = vunpack.c.l.b16 %v203
  %v596 = vunpack.c.l.b16 %v204
  %v597 = vunpack.c.l.b16 %v205
  %v598 = vunpack.c.l.b16 %v206
  %v599 = vunpack.c.l.b16 %v207
  %v600 = vunpack.c.l.b16 %v208
  %v601 = vunpack.c.l.b16 %v209
  %v602 = vunpack.c.l.b16 %v210
  %v603 = vunpack.c.l.b16 %v211
  %v604 = vunpack.c.l.b16 %v212
  %v605 = vunpack.c.l.b16 %v213
  %v606 = vunpack.c.l.b16 %v214
  %v607 = vunpack.c.l.b16 %v215
  %v608 = vunpack.c.l.b16 %v216
  %v609 = vunpack.c.l.b16 %v217
  %v610 = vunpack.c.l.b16 %v218
  %v611 = vunpack.c.l.b16 %v219
  %v612 = vunpack.c.l.b16 %v220
  %v613 = vunpack.c.l.b16 %v221
  %v614 = vunpack.c.l.b16 %v222
  %v615 = vunpack.c.l.b16 %v223
  %v616 = vunpack.c.l.b16 %v224
  %v617 = vunpack.c.l.b16 %v225
  %v618 = vunpack.c.l.b16 %v226
  %v619 = vpack.c.b16 %v424, %v423
  %v620 = vpack.c.b16 %v426, %v425
  %v621 = vpack.c.b16 %v428, %v427
  %v622 = vpack.c.b16 %v430, %v429
  %v623 = vpack.c.b16 %v432, %v431
  %v624 = vpack.c.b16 %v434, %v433
  %v625 = vpack.c.b16 %v436, %v435
  %v626 = vpack.c.b16 %v438, %v437
  %v627 = vpack.c.b16 %v440, %v439
  %v628 = vpack.c.b16 %v442, %v441
  %v629 = vpack.c.b16 %v444, %v443
  %v630 = vpack.c.b16 %v446, %v445
  %v631 = vpack.c.b16 %v448, %v447
  %v632 = vpack.c.b16 %v450, %v449
  %v633 = vpack.c.b16 %v452, %v451
  %v634 = vpack.c.b16 %v454, %v453
  %v635 = vpack.c.b16 %v456, %v455
  %v636 = vpack.c.b16 %v458, %v457
  %v637 = vpack.c.b16 %v460, %v459
  %v638 = vpack.c.b16 %v462, %v461
  %v639 = vpack.c.b16 %v464, %v463
  %v640 = vpack.c.b16 %v466, %v465
  %v641 = vpack.c.b16 %v468, %v467
  %v642 = vpack.c.b16 %v470, %v469
  %v643 = vpack.c.b16 %v472, %v471
  %v644 = vpack.c.b16 %v474, %v473
  %v645 = vpack.c.b16 %v476, %v475
  %v646 = vpack.c.b16 %v478, %v477
  %v647 = vpack.c.b16 %v480, %v479
  %v648 = vpack.c.b16 %v482, %v481
  %v649 = vpack.c.b16 %v484, %v483
  %v650 = vpack.c.b16 %v486, %v485
  %v651 = vpack.c.b16 %v488, %v487
  %v652 = vpack.c.b16 %v490, %v489
  %v653 = vpack.c.b16 %v492, %v491
  %v654 = vpack.c.b16 %v494, %v493
  %v655 = vpack.c.b16 %v496, %v495
  %v656 = vpack.c.b16 %v498, %v497
  %v657 = vpack.c.b16 %v500, %v499
  %v658 = vpack.c.b16 %v502, %v501
  %v659 = vpack.c.b16 %v504, %v503
  %v660 = vpack.c.b16 %v506, %v505
  %v661 = vpack.c.b16 %v508, %v507
  %v662 = vpack.c.b16 %v510, %v509
  %v663 = vpack.c.b16 %v512, %v511
  %v664 = vpack.c.b16 %v514, %v513
  %v665 = vpack.c.b16 %v516, %v515
  %v666 = vpack.c.b16 %v518, %v517
  %v667 = vpack.c.b16 %v520, %v519
  %v668 = vpack.c.b16 %v522, %v521
  %v669 = vpack.c.b16 %v524, %v523
  %v670 = vpack.c.b16 %v526, %v525
  %v671 = vpack.c.b16 %v528, %v527
  %v672 = vpack.c.b16 %v530, %v529
  %v673 = vpack.c.b16 %v532, %v531
  %v674 = vpack.c.b16 %v534, %v533
  %v675 = vpack.c.b16 %v536, %v535
  %v676 = vpack.c.b16 %v538, %v537
  %v677 = vpack.c.b16 %v540, %v539
  %v678 = vpack.c.b16 %v542, %v541
  %v679 = vpack.c.b16 %v544, %v543
  %v680 = vpack.c.b16 %v546, %v545
  %v681 = vpack.c.b16 %v548, %v547
  %v682 = vpack.c.b16 %v550, %v549
  %v683 = vpack.c.b16 %v552, %v551
  %v684 = vpack.c.b16 %v554, %v553
  %v685 = vpack.c.b16 %v556, %v555
  %v686 = vpack.c.b16 %v558, %v557
  %v687 = vpack.c.b16 %v560, %v559
  %v688 = vpack.c.b16 %v562, %v561
  %v689 = vpack.c.b16 %v564, %v563
  %v690 = vpack.c.b16 %v566, %v565
  %v691 = vpack.c.b16 %v568, %v567
  %v692 = vpack.c.b16 %v570, %v569
  %v693 = vpack.c.b16 %v572, %v571
  %v694 = vpack.c.b16 %v574, %v573
  %v695 = vpack.c.b16 %v576, %v575
  %v696 = vpack.c.b16 %v578, %v577
  %v697 = vpack.c.b16 %v580, %v579
  %v698 = vpack.c.b16 %v582, %v581
  %v699 = vpack.c.b16 %v584, %v583
  %v700 = vpack.c.b16 %v586, %v585
  %v701 = vpack.c.b16 %v588, %v587
  %v702 = vpack.c.b16 %v590, %v589
  %v703 = vpack.c.b16 %v592, %v591
  %v704 = vpack.c.b16 %v594, %v593
  %v705 = vpack.c.b16 %v596, %v595
  %v706 = vpack.c.b16 %v598, %v597
  %v707 = vpack.c.b16 %v600, %v599
  %v708 = vpack.c.b16 %v602, %v601
  %v709 = vpack.c.b16 %v604, %v603
  %v710 = vpack.c.b16 %v606, %v605
  %v711 = vpack.c.b16 %v608, %v607
  %v712 = vpack.c.b16 %v610, %v609
  %v713 = vpack.c.b16 %v612, %v611
  %v714 = vpack.c.b16 %v614, %v613
  %v715 = vpack.c.b16 %v616, %v615
  %v716 = vpack.c.b16 %v618, %v617
  %v831 = vunpack.c.l.b16 %v15
  %v832 = vunpack.c.l.b16 %v16
  %v833 = vunpack.c.l.b16 %v17
  %v834 = vunpack.c.l.b16 %v18
  %v835 = vunpack.c.l.b16 %v19
  %v836 = vunpack.c.l.b16 %v20
  %v837 = vunpack.c.l.b16 %v21
  %v838 = vunpack.c.l.b16 %v22
  %v839 = vunpack.c.l.b16 %v23
  %v840 = vunpack.c.l.b16 %v24
  %v841 = vunpack.c.l.b16 %v25
  %v842 = vunpack.c.l.b16 %v26
  %v843 = vunpack.c.l.b16 %v27
  %v844 = vunpack.c.l.b16 %v28
  %v845 = vunpack.c.l.b16 %v29
  %v846 = vunpack.c.l.b16 %v30
  %v847 = vpack.c.b16 %v832, %v831
  %v848 = vpack.c.b16 %v834, %v833
  %v849 = vpack.c.b16 %v836, %v835
  %v850 = vpack.c.b16 %v838, %v837
  %v851 = vpack.c.b16 %v840, %v839
  %v852 = vpack.c.b16 %v842, %v841
  %v853 = vpack.c.b16 %v844, %v843
  %v854 = vpack.c.b16 %v846, %v845
  %863 = vmatprep.subr.bf16.mxu0 0
  %864 = vmatpush1.bf16.msra.mxu0 %v847
  %865 = vmatprep.subr.bf16.mxu0 0
  %866 = vmatpush1.bf16.msra.mxu0 %v848
  %867 = vmatprep.subr.bf16.mxu0 0
  %868 = vmatpush1.bf16.msra.mxu0 %v849
  %869 = vmatprep.subr.bf16.mxu0 0
  %870 = vmatpush1.bf16.msra.mxu0 %v850
  %871 = vmatprep.subr.bf16.mxu0 0
  %872 = vmatpush1.bf16.msra.mxu0 %v851
  %873 = vmatprep.subr.bf16.mxu0 0
  %874 = vmatpush1.bf16.msra.mxu0 %v852
  %875 = vmatprep.subr.bf16.mxu0 0
  %876 = vmatpush1.bf16.msra.mxu0 %v853
  %877 = vmatprep.subr.bf16.mxu0 0
  %878 = vmatpush1.bf16.msra.mxu0 %v854
  %879 = vmatprep.subr.bf16.mxu0 0
  %880 = vmatpush1.bf16.msra.mxu0 0
  %881 = vmatprep.subr.bf16.mxu0 0
  %882 = vmatpush1.bf16.msra.mxu0 0
  %883 = vmatprep.subr.bf16.mxu0 0
  %884 = vmatpush1.bf16.msra.mxu0 0
  %885 = vmatprep.subr.bf16.mxu0 0
  %886 = vmatpush1.bf16.msra.mxu0 0
  %887 = vmatprep.subr.bf16.mxu0 0
  %888 = vmatpush1.bf16.msra.mxu0 0
  %889 = vmatprep.subr.bf16.mxu0 0
  %890 = vmatpush1.bf16.msra.mxu0 0
  %891 = vmatprep.subr.bf16.mxu0 0
  %892 = vmatpush1.bf16.msra.mxu0 0
  %893 = vmatprep.subr.bf16.mxu0 0
  %894 = vmatpush1.bf16.msra.mxu0 0
  %895 = vmatprep.mubr.bf16.mxu0 0
  %896 = vmatmul.mubr.bf16.gmra.mrb[0].mxu0 %v619
  %v897 = vpop.f32.mrb[0].mxu0
  %v898 = vadd.f32 0.0, %v897
  %v899 = vpop.f32.mrb[0].mxu0
  %v900 = vpop.f32.mrb[0].mxu0
  %v901 = vadd.f32 0.0, %v900
  %v902 = vpop.f32.mrb[0].mxu0
  %903 = vmatprep.mubr.bf16.mxu0 0
  %904 = vmatmul.mubr.bf16.gmra.mrb[0].mxu0 %v620
  %v905 = vpop.f32.mrb[0].mxu0
  %v906 = vadd.f32 0.0, %v905
  %v907 = vpop.f32.mrb[0].mxu0
  %v908 = vpop.f32.mrb[0].mxu0
  %v909 = vadd.f32 0.0, %v908
  %v910 = vpop.f32.mrb[0].mxu0
  %911 = vmatprep.mubr.bf16.mxu0 0
  %912 = vmatmul.mubr.bf16.gmra.mrb[0].mxu0 %v621
  %v913 = vpop.f32.mrb[0].mxu0
  %v914 = vadd.f32 0.0, %v913
  %v915 = vpop.f32.mrb[0].mxu0
  %v916 = vpop.f32.mrb[0].mxu0
  %v917 = vadd.f32 0.0, %v916
  %v918 = vpop.f32.mrb[0].mxu0
  %919 = vmatprep.mubr.bf16.mxu0 0
  %920 = vmatmul.mubr.bf16.gmra.mrb[0].mxu0 %v622
  %v921 = vpop.f32.mrb[0].mxu0
  %v922 = vadd.f32 0.0, %v921
  %v923 = vpop.f32.mrb[0].mxu0
  %v924 = vpop.f32.mrb[0].mxu0
  %v925 = vadd.f32 0.0, %v924
  %v926 = vpop.f32.mrb[0].mxu0
  %927 = vmatprep.mubr.bf16.mxu0 0
  %928 = vmatmul.mubr.bf16.gmra.mrb[0].mxu0 %v623
  %v929 = vpop.f32.mrb[0].mxu0
  %v930 = vadd.f32 0.0, %v929
  %v931 = vpop.f32.mrb[0].mxu0
  %v932 = vpop.f32.mrb[0].mxu0
  %v933 = vadd.f32 0.0, %v932
  %v934 = vpop.f32.mrb[0].mxu0
  %935 = vmatprep.mubr.bf16.mxu0 0
  %936 = vmatmul.mubr.bf16.gmra.mrb[0].mxu0 %v624
  %v937 = vpop.f32.mrb[0].mxu0
  %v938 = vadd.f32 0.0, %v937
  %v939 = vpop.f32.mrb[0].mxu0
  %v940 = vpop.f32.mrb[0].mxu0
  %v941 = vadd.f32 0.0, %v940
  %v942 = vpop.f32.mrb[0].mxu0
  %943 = vmatprep.mubr.bf16.mxu0 0
  %944 = vmatmul.mubr.bf16.gmra.mrb[0].mxu0 %v625
  %v945 = vpop.f32.mrb[0].mxu0
  %v946 = vadd.f32 0.0, %v945
  %v947 = vpop.f32.mrb[0].mxu0
  %v948 = vpop.f32.mrb[0].mxu0
  %v949 = vadd.f32 0.0, %v948
  %v950 = vpop.f32.mrb[0].mxu0
  %951 = vmatprep.mubr.bf16.mxu0 0
  %952 = vmatmul.mubr.bf16.gmra.mrb[0].mxu0 %v626
  %v953 = vpop.f32.mrb[0].mxu0
  %v954 = vadd.f32 0.0, %v953
  %v955 = vpop.f32.mrb[0].mxu0
  %v956 = vpop.f32.mrb[0].mxu0
  %v957 = vadd.f32 0.0, %v956
  %v958 = vpop.f32.mrb[0].mxu0
  %959 = vmatprep.mubr.bf16.mxu0 0
  %960 = vmatmul.mubr.bf16.gmra.mrb[0].mxu0 %v627
  %v961 = vpop.f32.mrb[0].mxu0
  %v962 = vadd.f32 0.0, %v961
  %v963 = vpop.f32.mrb[0].mxu0
  %v964 = vpop.f32.mrb[0].mxu0
  %v965 = vadd.f32 0.0, %v964
  %v966 = vpop.f32.mrb[0].mxu0
  %967 = vmatprep.mubr.bf16.mxu0 0
  %968 = vmatmul.mubr.bf16.gmra.mrb[0].mxu0 %v628
  %v969 = vpop.f32.mrb[0].mxu0
  %v970 = vadd.f32 0.0, %v969
  %v971 = vpop.f32.mrb[0].mxu0
  %v972 = vpop.f32.mrb[0].mxu0
  %v973 = vadd.f32 0.0, %v972
  %v974 = vpop.f32.mrb[0].mxu0
  %975 = vmatprep.mubr.bf16.mxu0 0
  %976 = vmatmul.mubr.bf16.gmra.mrb[0].mxu0 %v629
  %v977 = vpop.f32.mrb[0].mxu0
  %v978 = vadd.f32 0.0, %v977
  %v979 = vpop.f32.mrb[0].mxu0
  %v980 = vpop.f32.mrb[0].mxu0
  %v981 = vadd.f32 0.0, %v980
  %v982 = vpop.f32.mrb[0].mxu0
  %983 = vmatprep.mubr.bf16.mxu0 0
  %984 = vmatmul.mubr.bf16.gmra.mrb[0].mxu0 %v630
  %v985 = vpop.f32.mrb[0].mxu0
  %v986 = vadd.f32 0.0, %v985
  %v987 = vpop.f32.mrb[0].mxu0
  %v988 = vpop.f32.mrb[0].mxu0
  %v989 = vadd.f32 0.0, %v988
  %v990 = vpop.f32.mrb[0].mxu0
  %991 = vmatprep.mubr.bf16.mxu0 0
  %992 = vmatmul.mubr.bf16.gmra.mrb[0].mxu0 %v631
  %v993 = vpop.f32.mrb[0].mxu0
  %v994 = vadd.f32 0.0, %v993
  %v995 = vpop.f32.mrb[0].mxu0
  %v996 = vpop.f32.mrb[0].mxu0
  %v997 = vadd.f32 0.0, %v996
  %v998 = vpop.f32.mrb[0].mxu0
  %999 = vmatprep.mubr.bf16.mxu0 0
  %1000 = vmatmul.mubr.bf16.gmra.mrb[0].mxu0 %v632
  %v1001 = vpop.f32.mrb[0].mxu0
  %v1002 = vadd.f32 0.0, %v1001
  %v1003 = vpop.f32.mrb[0].mxu0
  %v1004 = vpop.f32.mrb[0].mxu0
  %v1005 = vadd.f32 0.0, %v1004
  %v1006 = vpop.f32.mrb[0].mxu0
  %1007 = vmatprep.mubr.bf16.mxu0 0
  %1008 = vmatmul.mubr.bf16.gmra.mrb[0].mxu0 %v633
  %v1009 = vpop.f32.mrb[0].mxu0
  %v1010 = vadd.f32 0.0, %v1009
  %v1011 = vpop.f32.mrb[0].mxu0
  %v1012 = vpop.f32.mrb[0].mxu0
  %v1013 = vadd.f32 0.0, %v1012
  %v1014 = vpop.f32.mrb[0].mxu0
  %1015 = vmatprep.mubr.bf16.mxu0 0
  %1016 = vmatmul.mubr.bf16.gmra.mrb[0].mxu0 %v634
  %v1017 = vpop.f32.mrb[0].mxu0
  %v1018 = vadd.f32 0.0, %v1017
  %v1019 = vpop.f32.mrb[0].mxu0
  %v1020 = vpop.f32.mrb[0].mxu0
  %v1021 = vadd.f32 0.0, %v1020
  %v1022 = vpop.f32.mrb[0].mxu0
  %1023 = vmatprep.mubr.bf16.mxu0 0
  %1024 = vmatmul.mubr.bf16.gmra.mrb[0].mxu0 %v635
  %v1025 = vpop.f32.mrb[0].mxu0
  %v1026 = vadd.f32 0.0, %v1025
  %v1027 = vpop.f32.mrb[0].mxu0
  %v1028 = vpop.f32.mrb[0].mxu0
  %v1029 = vadd.f32 0.0, %v1028
  %v1030 = vpop.f32.mrb[0].mxu0
  %1031 = vmatprep.mubr.bf16.mxu0 0
  %1032 = vmatmul.mubr.bf16.gmra.mrb[0].mxu0 %v636
  %v1033 = vpop.f32.mrb[0].mxu0
  %v1034 = vadd.f32 0.0, %v1033
  %v1035 = vpop.f32.mrb[0].mxu0
  %v1036 = vpop.f32.mrb[0].mxu0
  %v1037 = vadd.f32 0.0, %v1036
  %v1038 = vpop.f32.mrb[0].mxu0
  %1039 = vmatprep.mubr.bf16.mxu0 0
  %1040 = vmatmul.mubr.bf16.gmra.mrb[0].mxu0 %v637
  %v1041 = vpop.f32.mrb[0].mxu0
  %v1042 = vadd.f32 0.0, %v1041
  %v1043 = vpop.f32.mrb[0].mxu0
  %v1044 = vpop.f32.mrb[0].mxu0
  %v1045 = vadd.f32 0.0, %v1044
  %v1046 = vpop.f32.mrb[0].mxu0
  %1047 = vmatprep.mubr.bf16.mxu0 0
  %1048 = vmatmul.mubr.bf16.gmra.mrb[0].mxu0 %v638
  %v1049 = vpop.f32.mrb[0].mxu0
  %v1050 = vadd.f32 0.0, %v1049
  %v1051 = vpop.f32.mrb[0].mxu0
  %v1052 = vpop.f32.mrb[0].mxu0
  %v1053 = vadd.f32 0.0, %v1052
  %v1054 = vpop.f32.mrb[0].mxu0
  %1055 = vmatprep.mubr.bf16.mxu0 0
  %1056 = vmatmul.mubr.bf16.gmra.mrb[0].mxu0 %v639
  %v1057 = vpop.f32.mrb[0].mxu0
  %v1058 = vadd.f32 0.0, %v1057
  %v1059 = vpop.f32.mrb[0].mxu0
  %v1060 = vpop.f32.mrb[0].mxu0
  %v1061 = vadd.f32 0.0, %v1060
  %v1062 = vpop.f32.mrb[0].mxu0
  %1063 = vmatprep.mubr.bf16.mxu0 0
  %1064 = vmatmul.mubr.bf16.gmra.mrb[0].mxu0 %v640
  %v1065 = vpop.f32.mrb[0].mxu0
  %v1066 = vadd.f32 0.0, %v1065
  %v1067 = vpop.f32.mrb[0].mxu0
  %v1068 = vpop.f32.mrb[0].mxu0
  %v1069 = vadd.f32 0.0, %v1068
  %v1070 = vpop.f32.mrb[0].mxu0
  %1071 = vmatprep.mubr.bf16.mxu0 0
  %1072 = vmatmul.mubr.bf16.gmra.mrb[0].mxu0 %v641
  %v1073 = vpop.f32.mrb[0].mxu0
  %v1074 = vadd.f32 0.0, %v1073
  %v1075 = vpop.f32.mrb[0].mxu0
  %v1076 = vpop.f32.mrb[0].mxu0
  %v1077 = vadd.f32 0.0, %v1076
  %v1078 = vpop.f32.mrb[0].mxu0
  %1079 = vmatprep.mubr.bf16.mxu0 0
  %1080 = vmatmul.mubr.bf16.gmra.mrb[0].mxu0 %v642
  %v1081 = vpop.f32.mrb[0].mxu0
  %v1082 = vadd.f32 0.0, %v1081
  %v1083 = vpop.f32.mrb[0].mxu0
  %v1084 = vpop.f32.mrb[0].mxu0
  %v1085 = vadd.f32 0.0, %v1084
  %v1086 = vpop.f32.mrb[0].mxu0
  %1087 = vmatprep.mubr.bf16.mxu0 0
  %1088 = vmatmul.mubr.bf16.gmra.mrb[0].mxu0 %v643
  %v1089 = vpop.f32.mrb[0].mxu0
  %v1090 = vadd.f32 0.0, %v1089
  %v1091 = vpop.f32.mrb[0].mxu0
  %v1092 = vpop.f32.mrb[0].mxu0
  %v1093 = vadd.f32 0.0, %v1092
  %v1094 = vpop.f32.mrb[0].mxu0
  %1095 = vmatprep.mubr.bf16.mxu0 0
  %1096 = vmatmul.mubr.bf16.gmra.mrb[0].mxu0 %v644
  %v1097 = vpop.f32.mrb[0].mxu0
  %v1098 = vadd.f32 0.0, %v1097
  %v1099 = vpop.f32.mrb[0].mxu0
  %v1100 = vpop.f32.mrb[0].mxu0
  %v1101 = vadd.f32 0.0, %v1100
  %v1102 = vpop.f32.mrb[0].mxu0
  %1103 = vmatprep.mubr.bf16.mxu0 0
  %1104 = vmatmul.mubr.bf16.gmra.mrb[0].mxu0 %v645
  %v1105 = vpop.f32.mrb[0].mxu0
  %v1106 = vadd.f32 0.0, %v1105
  %v1107 = vpop.f32.mrb[0].mxu0
  %v1108 = vpop.f32.mrb[0].mxu0
  %v1109 = vadd.f32 0.0, %v1108
  %v1110 = vpop.f32.mrb[0].mxu0
  %1111 = vmatprep.mubr.bf16.mxu0 0
  %1112 = vmatmul.mubr.bf16.gmra.mrb[0].mxu0 %v646
  %v1113 = vpop.f32.mrb[0].mxu0
  %v1114 = vadd.f32 0.0, %v1113
  %v1115 = vpop.f32.mrb[0].mxu0
  %v1116 = vpop.f32.mrb[0].mxu0
  %v1117 = vadd.f32 0.0, %v1116
  %v1118 = vpop.f32.mrb[0].mxu0
  %1119 = vmatprep.mubr.bf16.mxu0 0
  %1120 = vmatmul.mubr.bf16.gmra.mrb[0].mxu0 %v647
  %v1121 = vpop.f32.mrb[0].mxu0
  %v1122 = vadd.f32 0.0, %v1121
  %v1123 = vpop.f32.mrb[0].mxu0
  %v1124 = vpop.f32.mrb[0].mxu0
  %v1125 = vadd.f32 0.0, %v1124
  %v1126 = vpop.f32.mrb[0].mxu0
  %1127 = vmatprep.mubr.bf16.mxu0 0
  %1128 = vmatmul.mubr.bf16.gmra.mrb[0].mxu0 %v648
  %v1129 = vpop.f32.mrb[0].mxu0
  %v1130 = vadd.f32 0.0, %v1129
  %v1131 = vpop.f32.mrb[0].mxu0
  %v1132 = vpop.f32.mrb[0].mxu0
  %v1133 = vadd.f32 0.0, %v1132
  %v1134 = vpop.f32.mrb[0].mxu0
  %1135 = vmatprep.mubr.bf16.mxu0 0
  %1136 = vmatmul.mubr.bf16.gmra.mrb[0].mxu0 %v649
  %v1137 = vpop.f32.mrb[0].mxu0
  %v1138 = vadd.f32 0.0, %v1137
  %v1139 = vpop.f32.mrb[0].mxu0
  %v1140 = vpop.f32.mrb[0].mxu0
  %v1141 = vadd.f32 0.0, %v1140
  %v1142 = vpop.f32.mrb[0].mxu0
  %1143 = vmatprep.mubr.bf16.mxu0 0
  %1144 = vmatmul.mubr.bf16.gmra.mrb[0].mxu0 %v650
  %v1145 = vpop.f32.mrb[0].mxu0
  %v1146 = vadd.f32 0.0, %v1145
  %v1147 = vpop.f32.mrb[0].mxu0
  %v1148 = vpop.f32.mrb[0].mxu0
  %v1149 = vadd.f32 0.0, %v1148
  %v1150 = vpop.f32.mrb[0].mxu0
  %1151 = vmatprep.mubr.bf16.mxu0 0
  %1152 = vmatmul.mubr.bf16.gmra.mrb[0].mxu0 %v651
  %v1153 = vpop.f32.mrb[0].mxu0
  %v1154 = vadd.f32 0.0, %v1153
  %v1155 = vpop.f32.mrb[0].mxu0
  %v1156 = vpop.f32.mrb[0].mxu0
  %v1157 = vadd.f32 0.0, %v1156
  %v1158 = vpop.f32.mrb[0].mxu0
  %1159 = vmatprep.mubr.bf16.mxu0 0
  %1160 = vmatmul.mubr.bf16.gmra.mrb[0].mxu0 %v652
  %v1161 = vpop.f32.mrb[0].mxu0
  %v1162 = vadd.f32 0.0, %v1161
  %v1163 = vpop.f32.mrb[0].mxu0
  %v1164 = vpop.f32.mrb[0].mxu0
  %v1165 = vadd.f32 0.0, %v1164
  %v1166 = vpop.f32.mrb[0].mxu0
  %1167 = vmatprep.mubr.bf16.mxu0 0
  %1168 = vmatmul.mubr.bf16.gmra.mrb[0].mxu0 %v653
  %v1169 = vpop.f32.mrb[0].mxu0
  %v1170 = vadd.f32 0.0, %v1169
  %v1171 = vpop.f32.mrb[0].mxu0
  %v1172 = vpop.f32.mrb[0].mxu0
  %v1173 = vadd.f32 0.0, %v1172
  %v1174 = vpop.f32.mrb[0].mxu0
  %1175 = vmatprep.mubr.bf16.mxu0 0
  %1176 = vmatmul.mubr.bf16.gmra.mrb[0].mxu0 %v654
  %v1177 = vpop.f32.mrb[0].mxu0
  %v1178 = vadd.f32 0.0, %v1177
  %v1179 = vpop.f32.mrb[0].mxu0
  %v1180 = vpop.f32.mrb[0].mxu0
  %v1181 = vadd.f32 0.0, %v1180
  %v1182 = vpop.f32.mrb[0].mxu0
  %1183 = vmatprep.mubr.bf16.mxu0 0
  %1184 = vmatmul.mubr.bf16.gmra.mrb[0].mxu0 %v655
  %v1185 = vpop.f32.mrb[0].mxu0
  %v1186 = vadd.f32 0.0, %v1185
  %v1187 = vpop.f32.mrb[0].mxu0
  %v1188 = vpop.f32.mrb[0].mxu0
  %v1189 = vadd.f32 0.0, %v1188
  %v1190 = vpop.f32.mrb[0].mxu0
  %1191 = vmatprep.mubr.bf16.mxu0 0
  %1192 = vmatmul.mubr.bf16.gmra.mrb[0].mxu0 %v656
  %v1193 = vpop.f32.mrb[0].mxu0
  %v1194 = vadd.f32 0.0, %v1193
  %v1195 = vpop.f32.mrb[0].mxu0
  %v1196 = vpop.f32.mrb[0].mxu0
  %v1197 = vadd.f32 0.0, %v1196
  %v1198 = vpop.f32.mrb[0].mxu0
  %1199 = vmatprep.mubr.bf16.mxu0 0
  %1200 = vmatmul.mubr.bf16.gmra.mrb[0].mxu0 %v657
  %v1201 = vpop.f32.mrb[0].mxu0
  %v1202 = vadd.f32 0.0, %v1201
  %v1203 = vpop.f32.mrb[0].mxu0
  %v1204 = vpop.f32.mrb[0].mxu0
  %v1205 = vadd.f32 0.0, %v1204
  %v1206 = vpop.f32.mrb[0].mxu0
  %1207 = vmatprep.mubr.bf16.mxu0 0
  %1208 = vmatmul.mubr.bf16.gmra.mrb[0].mxu0 %v658
  %v1209 = vpop.f32.mrb[0].mxu0
  %v1210 = vadd.f32 0.0, %v1209
  %v1211 = vpop.f32.mrb[0].mxu0
  %v1212 = vpop.f32.mrb[0].mxu0
  %v1213 = vadd.f32 0.0, %v1212
  %v1214 = vpop.f32.mrb[0].mxu0
  %1215 = vmatprep.mubr.bf16.mxu0 0
  %1216 = vmatmul.mubr.bf16.gmra.mrb[0].mxu0 %v659
  %v1217 = vpop.f32.mrb[0].mxu0
  %v1218 = vadd.f32 0.0, %v1217
  %v1219 = vpop.f32.mrb[0].mxu0
  %v1220 = vpop.f32.mrb[0].mxu0
  %v1221 = vadd.f32 0.0, %v1220
  %v1222 = vpop.f32.mrb[0].mxu0
  %1223 = vmatprep.mubr.bf16.mxu0 0
  %1224 = vmatmul.mubr.bf16.gmra.mrb[0].mxu0 %v660
  %v1225 = vpop.f32.mrb[0].mxu0
  %v1226 = vadd.f32 0.0, %v1225
  %v1227 = vpop.f32.mrb[0].mxu0
  %v1228 = vpop.f32.mrb[0].mxu0
  %v1229 = vadd.f32 0.0, %v1228
  %v1230 = vpop.f32.mrb[0].mxu0
  %1231 = vmatprep.mubr.bf16.mxu0 0
  %1232 = vmatmul.mubr.bf16.gmra.mrb[0].mxu0 %v661
  %v1233 = vpop.f32.mrb[0].mxu0
  %v1234 = vadd.f32 0.0, %v1233
  %v1235 = vpop.f32.mrb[0].mxu0
  %v1236 = vpop.f32.mrb[0].mxu0
  %v1237 = vadd.f32 0.0, %v1236
  %v1238 = vpop.f32.mrb[0].mxu0
  %1239 = vmatprep.mubr.bf16.mxu0 0
  %1240 = vmatmul.mubr.bf16.gmra.mrb[0].mxu0 %v662
  %v1241 = vpop.f32.mrb[0].mxu0
  %v1242 = vadd.f32 0.0, %v1241
  %v1243 = vpop.f32.mrb[0].mxu0
  %v1244 = vpop.f32.mrb[0].mxu0
  %v1245 = vadd.f32 0.0, %v1244
  %v1246 = vpop.f32.mrb[0].mxu0
  %1247 = vmatprep.mubr.bf16.mxu0 0
  %1248 = vmatmul.mubr.bf16.gmra.mrb[0].mxu0 %v663
  %v1249 = vpop.f32.mrb[0].mxu0
  %v1250 = vadd.f32 0.0, %v1249
  %v1251 = vpop.f32.mrb[0].mxu0
  %v1252 = vpop.f32.mrb[0].mxu0
  %v1253 = vadd.f32 0.0, %v1252
  %v1254 = vpop.f32.mrb[0].mxu0
  %1255 = vmatprep.mubr.bf16.mxu0 0
  %1256 = vmatmul.mubr.bf16.gmra.mrb[0].mxu0 %v664
  %v1257 = vpop.f32.mrb[0].mxu0
  %v1258 = vadd.f32 0.0, %v1257
  %v1259 = vpop.f32.mrb[0].mxu0
  %v1260 = vpop.f32.mrb[0].mxu0
  %v1261 = vadd.f32 0.0, %v1260
  %v1262 = vpop.f32.mrb[0].mxu0
  %1263 = vmatprep.mubr.bf16.mxu0 0
  %1264 = vmatmul.mubr.bf16.gmra.mrb[0].mxu0 %v665
  %v1265 = vpop.f32.mrb[0].mxu0
  %v1266 = vadd.f32 0.0, %v1265
  %v1267 = vpop.f32.mrb[0].mxu0
  %v1268 = vpop.f32.mrb[0].mxu0
  %v1269 = vadd.f32 0.0, %v1268
  %v1270 = vpop.f32.mrb[0].mxu0
  %1271 = vmatprep.mubr.bf16.mxu0 0
  %1272 = vmatmul.mubr.bf16.gmra.mrb[0].mxu0 %v666
  %v1273 = vpop.f32.mrb[0].mxu0
  %v1274 = vadd.f32 0.0, %v1273
  %v1275 = vpop.f32.mrb[0].mxu0
  %v1276 = vpop.f32.mrb[0].mxu0
  %v1277 = vadd.f32 0.0, %v1276
  %v1278 = vpop.f32.mrb[0].mxu0
  %1279 = vmatprep.mubr.bf16.mxu0 0
  %1280 = vmatmul.mubr.bf16.gmra.mrb[0].mxu0 %v667
  %v1281 = vpop.f32.mrb[0].mxu0
  %v1282 = vadd.f32 0.0, %v1281
  %v1283 = vpop.f32.mrb[0].mxu0
  %v1284 = vpop.f32.mrb[0].mxu0
  %v1285 = vadd.f32 0.0, %v1284
  %v1286 = vpop.f32.mrb[0].mxu0
  %1287 = vmatprep.mubr.bf16.mxu0 0
  %1288 = vmatmul.mubr.bf16.gmra.mrb[0].mxu0 %v668
  %v1289 = vpop.f32.mrb[0].mxu0
  %v1290 = vadd.f32 0.0, %v1289
  %v1291 = vpop.f32.mrb[0].mxu0
  %v1292 = vpop.f32.mrb[0].mxu0
  %v1293 = vadd.f32 0.0, %v1292
  %v1294 = vpop.f32.mrb[0].mxu0
  %1295 = vmatprep.mubr.bf16.mxu0 0
  %1296 = vmatmul.mubr.bf16.gmra.mrb[0].mxu0 %v669
  %v1297 = vpop.f32.mrb[0].mxu0
  %v1298 = vadd.f32 0.0, %v1297
  %v1299 = vpop.f32.mrb[0].mxu0
  %v1300 = vpop.f32.mrb[0].mxu0
  %v1301 = vadd.f32 0.0, %v1300
  %v1302 = vpop.f32.mrb[0].mxu0
  %1303 = vmatprep.mubr.bf16.mxu0 0
  %1304 = vmatmul.mubr.bf16.gmra.mrb[0].mxu0 %v670
  %v1305 = vpop.f32.mrb[0].mxu0
  %v1306 = vadd.f32 0.0, %v1305
  %v1307 = vpop.f32.mrb[0].mxu0
  %v1308 = vpop.f32.mrb[0].mxu0
  %v1309 = vadd.f32 0.0, %v1308
  %v1310 = vpop.f32.mrb[0].mxu0
  %1311 = vmatprep.mubr.bf16.mxu0 0
  %1312 = vmatmul.mubr.bf16.gmra.mrb[0].mxu0 %v671
  %v1313 = vpop.f32.mrb[0].mxu0
  %v1314 = vadd.f32 0.0, %v1313
  %v1315 = vpop.f32.mrb[0].mxu0
  %v1316 = vpop.f32.mrb[0].mxu0
  %v1317 = vadd.f32 0.0, %v1316
  %v1318 = vpop.f32.mrb[0].mxu0
  %1319 = vmatprep.mubr.bf16.mxu0 0
  %1320 = vmatmul.mubr.bf16.gmra.mrb[0].mxu0 %v672
  %v1321 = vpop.f32.mrb[0].mxu0
  %v1322 = vadd.f32 0.0, %v1321
  %v1323 = vpop.f32.mrb[0].mxu0
  %v1324 = vpop.f32.mrb[0].mxu0
  %v1325 = vadd.f32 0.0, %v1324
  %v1326 = vpop.f32.mrb[0].mxu0
  %1327 = vmatprep.mubr.bf16.mxu0 0
  %1328 = vmatmul.mubr.bf16.gmra.mrb[0].mxu0 %v673
  %v1329 = vpop.f32.mrb[0].mxu0
  %v1330 = vadd.f32 0.0, %v1329
  %v1331 = vpop.f32.mrb[0].mxu0
  %v1332 = vpop.f32.mrb[0].mxu0
  %v1333 = vadd.f32 0.0, %v1332
  %v1334 = vpop.f32.mrb[0].mxu0
  %1335 = vmatprep.mubr.bf16.mxu0 0
  %1336 = vmatmul.mubr.bf16.gmra.mrb[0].mxu0 %v674
  %v1337 = vpop.f32.mrb[0].mxu0
  %v1338 = vadd.f32 0.0, %v1337
  %v1339 = vpop.f32.mrb[0].mxu0
  %v1340 = vpop.f32.mrb[0].mxu0
  %v1341 = vadd.f32 0.0, %v1340
  %v1342 = vpop.f32.mrb[0].mxu0
  %1343 = vmatprep.mubr.bf16.mxu0 0
  %1344 = vmatmul.mubr.bf16.gmra.mrb[0].mxu0 %v675
  %v1345 = vpop.f32.mrb[0].mxu0
  %v1346 = vadd.f32 0.0, %v1345
  %v1347 = vpop.f32.mrb[0].mxu0
  %v1348 = vpop.f32.mrb[0].mxu0
  %v1349 = vadd.f32 0.0, %v1348
  %v1350 = vpop.f32.mrb[0].mxu0
  %1351 = vmatprep.mubr.bf16.mxu0 0
  %1352 = vmatmul.mubr.bf16.gmra.mrb[0].mxu0 %v676
  %v1353 = vpop.f32.mrb[0].mxu0
  %v1354 = vadd.f32 0.0, %v1353
  %v1355 = vpop.f32.mrb[0].mxu0
  %v1356 = vpop.f32.mrb[0].mxu0
  %v1357 = vadd.f32 0.0, %v1356
  %v1358 = vpop.f32.mrb[0].mxu0
  %1359 = vmatprep.mubr.bf16.mxu0 0
  %1360 = vmatmul.mubr.bf16.gmra.mrb[0].mxu0 %v677
  %v1361 = vpop.f32.mrb[0].mxu0
  %v1362 = vadd.f32 0.0, %v1361
  %v1363 = vpop.f32.mrb[0].mxu0
  %v1364 = vpop.f32.mrb[0].mxu0
  %v1365 = vadd.f32 0.0, %v1364
  %v1366 = vpop.f32.mrb[0].mxu0
  %1367 = vmatprep.mubr.bf16.mxu0 0
  %1368 = vmatmul.mubr.bf16.gmra.mrb[0].mxu0 %v678
  %v1369 = vpop.f32.mrb[0].mxu0
  %v1370 = vadd.f32 0.0, %v1369
  %v1371 = vpop.f32.mrb[0].mxu0
  %v1372 = vpop.f32.mrb[0].mxu0
  %v1373 = vadd.f32 0.0, %v1372
  %v1374 = vpop.f32.mrb[0].mxu0
  %1375 = vmatprep.mubr.bf16.mxu0 0
  %1376 = vmatmul.mubr.bf16.gmra.mrb[0].mxu0 %v679
  %v1377 = vpop.f32.mrb[0].mxu0
  %v1378 = vadd.f32 0.0, %v1377
  %v1379 = vpop.f32.mrb[0].mxu0
  %v1380 = vpop.f32.mrb[0].mxu0
  %v1381 = vadd.f32 0.0, %v1380
  %v1382 = vpop.f32.mrb[0].mxu0
  %1383 = vmatprep.mubr.bf16.mxu0 0
  %1384 = vmatmul.mubr.bf16.gmra.mrb[0].mxu0 %v680
  %v1385 = vpop.f32.mrb[0].mxu0
  %v1386 = vadd.f32 0.0, %v1385
  %v1387 = vpop.f32.mrb[0].mxu0
  %v1388 = vpop.f32.mrb[0].mxu0
  %v1389 = vadd.f32 0.0, %v1388
  %v1390 = vpop.f32.mrb[0].mxu0
  %1391 = vmatprep.mubr.bf16.mxu0 0
  %1392 = vmatmul.mubr.bf16.gmra.mrb[0].mxu0 %v681
  %v1393 = vpop.f32.mrb[0].mxu0
  %v1394 = vadd.f32 0.0, %v1393
  %v1395 = vpop.f32.mrb[0].mxu0
  %v1396 = vpop.f32.mrb[0].mxu0
  %v1397 = vadd.f32 0.0, %v1396
  %v1398 = vpop.f32.mrb[0].mxu0
  %1399 = vmatprep.mubr.bf16.mxu0 0
  %1400 = vmatmul.mubr.bf16.gmra.mrb[0].mxu0 %v682
  %v1401 = vpop.f32.mrb[0].mxu0
  %v1402 = vadd.f32 0.0, %v1401
  %v1403 = vpop.f32.mrb[0].mxu0
  %v1404 = vpop.f32.mrb[0].mxu0
  %v1405 = vadd.f32 0.0, %v1404
  %v1406 = vpop.f32.mrb[0].mxu0
  %1407 = vmatprep.mubr.bf16.mxu0 0
  %1408 = vmatmul.mubr.bf16.gmra.mrb[0].mxu0 %v683
  %v1409 = vpop.f32.mrb[0].mxu0
  %v1410 = vadd.f32 0.0, %v1409
  %v1411 = vpop.f32.mrb[0].mxu0
  %v1412 = vpop.f32.mrb[0].mxu0
  %v1413 = vadd.f32 0.0, %v1412
  %v1414 = vpop.f32.mrb[0].mxu0
  %1415 = vmatprep.mubr.bf16.mxu0 0
  %1416 = vmatmul.mubr.bf16.gmra.mrb[0].mxu0 %v684
  %v1417 = vpop.f32.mrb[0].mxu0
  %v1418 = vadd.f32 0.0, %v1417
  %v1419 = vpop.f32.mrb[0].mxu0
  %v1420 = vpop.f32.mrb[0].mxu0
  %v1421 = vadd.f32 0.0, %v1420
  %v1422 = vpop.f32.mrb[0].mxu0
  %1423 = vmatprep.mubr.bf16.mxu0 0
  %1424 = vmatmul.mubr.bf16.gmra.mrb[0].mxu0 %v685
  %v1425 = vpop.f32.mrb[0].mxu0
  %v1426 = vadd.f32 0.0, %v1425
  %v1427 = vpop.f32.mrb[0].mxu0
  %v1428 = vpop.f32.mrb[0].mxu0
  %v1429 = vadd.f32 0.0, %v1428
  %v1430 = vpop.f32.mrb[0].mxu0
  %1431 = vmatprep.mubr.bf16.mxu0 0
  %1432 = vmatmul.mubr.bf16.gmra.mrb[0].mxu0 %v686
  %v1433 = vpop.f32.mrb[0].mxu0
  %v1434 = vadd.f32 0.0, %v1433
  %v1435 = vpop.f32.mrb[0].mxu0
  %v1436 = vpop.f32.mrb[0].mxu0
  %v1437 = vadd.f32 0.0, %v1436
  %v1438 = vpop.f32.mrb[0].mxu0
  %1439 = vmatprep.mubr.bf16.mxu0 0
  %1440 = vmatmul.mubr.bf16.gmra.mrb[0].mxu0 %v687
  %v1441 = vpop.f32.mrb[0].mxu0
  %v1442 = vadd.f32 0.0, %v1441
  %v1443 = vpop.f32.mrb[0].mxu0
  %v1444 = vpop.f32.mrb[0].mxu0
  %v1445 = vadd.f32 0.0, %v1444
  %v1446 = vpop.f32.mrb[0].mxu0
  %1447 = vmatprep.mubr.bf16.mxu0 0
  %1448 = vmatmul.mubr.bf16.gmra.mrb[0].mxu0 %v688
  %v1449 = vpop.f32.mrb[0].mxu0
  %v1450 = vadd.f32 0.0, %v1449
  %v1451 = vpop.f32.mrb[0].mxu0
  %v1452 = vpop.f32.mrb[0].mxu0
  %v1453 = vadd.f32 0.0, %v1452
  %v1454 = vpop.f32.mrb[0].mxu0
  %1455 = vmatprep.mubr.bf16.mxu0 0
  %1456 = vmatmul.mubr.bf16.gmra.mrb[0].mxu0 %v689
  %v1457 = vpop.f32.mrb[0].mxu0
  %v1458 = vadd.f32 0.0, %v1457
  %v1459 = vpop.f32.mrb[0].mxu0
  %v1460 = vpop.f32.mrb[0].mxu0
  %v1461 = vadd.f32 0.0, %v1460
  %v1462 = vpop.f32.mrb[0].mxu0
  %1463 = vmatprep.mubr.bf16.mxu0 0
  %1464 = vmatmul.mubr.bf16.gmra.mrb[0].mxu0 %v690
  %v1465 = vpop.f32.mrb[0].mxu0
  %v1466 = vadd.f32 0.0, %v1465
  %v1467 = vpop.f32.mrb[0].mxu0
  %v1468 = vpop.f32.mrb[0].mxu0
  %v1469 = vadd.f32 0.0, %v1468
  %v1470 = vpop.f32.mrb[0].mxu0
  %1471 = vmatprep.mubr.bf16.mxu0 0
  %1472 = vmatmul.mubr.bf16.gmra.mrb[0].mxu0 %v691
  %v1473 = vpop.f32.mrb[0].mxu0
  %v1474 = vadd.f32 0.0, %v1473
  %v1475 = vpop.f32.mrb[0].mxu0
  %v1476 = vpop.f32.mrb[0].mxu0
  %v1477 = vadd.f32 0.0, %v1476
  %v1478 = vpop.f32.mrb[0].mxu0
  %1479 = vmatprep.mubr.bf16.mxu0 0
  %1480 = vmatmul.mubr.bf16.gmra.mrb[0].mxu0 %v692
  %v1481 = vpop.f32.mrb[0].mxu0
  %v1482 = vadd.f32 0.0, %v1481
  %v1483 = vpop.f32.mrb[0].mxu0
  %v1484 = vpop.f32.mrb[0].mxu0
  %v1485 = vadd.f32 0.0, %v1484
  %v1486 = vpop.f32.mrb[0].mxu0
  %1487 = vmatprep.mubr.bf16.mxu0 0
  %1488 = vmatmul.mubr.bf16.gmra.mrb[0].mxu0 %v693
  %v1489 = vpop.f32.mrb[0].mxu0
  %v1490 = vadd.f32 0.0, %v1489
  %v1491 = vpop.f32.mrb[0].mxu0
  %v1492 = vpop.f32.mrb[0].mxu0
  %v1493 = vadd.f32 0.0, %v1492
  %v1494 = vpop.f32.mrb[0].mxu0
  %1495 = vmatprep.mubr.bf16.mxu0 0
  %1496 = vmatmul.mubr.bf16.gmra.mrb[0].mxu0 %v694
  %v1497 = vpop.f32.mrb[0].mxu0
  %v1498 = vadd.f32 0.0, %v1497
  %v1499 = vpop.f32.mrb[0].mxu0
  %v1500 = vpop.f32.mrb[0].mxu0
  %v1501 = vadd.f32 0.0, %v1500
  %v1502 = vpop.f32.mrb[0].mxu0
  %1503 = vmatprep.mubr.bf16.mxu0 0
  %1504 = vmatmul.mubr.bf16.gmra.mrb[0].mxu0 %v695
  %v1505 = vpop.f32.mrb[0].mxu0
  %v1506 = vadd.f32 0.0, %v1505
  %v1507 = vpop.f32.mrb[0].mxu0
  %v1508 = vpop.f32.mrb[0].mxu0
  %v1509 = vadd.f32 0.0, %v1508
  %v1510 = vpop.f32.mrb[0].mxu0
  %1511 = vmatprep.mubr.bf16.mxu0 0
  %1512 = vmatmul.mubr.bf16.gmra.mrb[0].mxu0 %v696
  %v1513 = vpop.f32.mrb[0].mxu0
  %v1514 = vadd.f32 0.0, %v1513
  %v1515 = vpop.f32.mrb[0].mxu0
  %v1516 = vpop.f32.mrb[0].mxu0
  %v1517 = vadd.f32 0.0, %v1516
  %v1518 = vpop.f32.mrb[0].mxu0
  %1519 = vmatprep.mubr.bf16.mxu0 0
  %1520 = vmatmul.mubr.bf16.gmra.mrb[0].mxu0 %v697
  %v1521 = vpop.f32.mrb[0].mxu0
  %v1522 = vadd.f32 0.0, %v1521
  %v1523 = vpop.f32.mrb[0].mxu0
  %v1524 = vpop.f32.mrb[0].mxu0
  %v1525 = vadd.f32 0.0, %v1524
  %v1526 = vpop.f32.mrb[0].mxu0
  %1527 = vmatprep.mubr.bf16.mxu0 0
  %1528 = vmatmul.mubr.bf16.gmra.mrb[0].mxu0 %v698
  %v1529 = vpop.f32.mrb[0].mxu0
  %v1530 = vadd.f32 0.0, %v1529
  %v1531 = vpop.f32.mrb[0].mxu0
  %v1532 = vpop.f32.mrb[0].mxu0
  %v1533 = vadd.f32 0.0, %v1532
  %v1534 = vpop.f32.mrb[0].mxu0
  %1535 = vmatprep.mubr.bf16.mxu0 0
  %1536 = vmatmul.mubr.bf16.gmra.mrb[0].mxu0 %v699
  %v1537 = vpop.f32.mrb[0].mxu0
  %v1538 = vadd.f32 0.0, %v1537
  %v1539 = vpop.f32.mrb[0].mxu0
  %v1540 = vpop.f32.mrb[0].mxu0
  %v1541 = vadd.f32 0.0, %v1540
  %v1542 = vpop.f32.mrb[0].mxu0
  %1543 = vmatprep.mubr.bf16.mxu0 0
  %1544 = vmatmul.mubr.bf16.gmra.mrb[0].mxu0 %v700
  %v1545 = vpop.f32.mrb[0].mxu0
  %v1546 = vadd.f32 0.0, %v1545
  %v1547 = vpop.f32.mrb[0].mxu0
  %v1548 = vpop.f32.mrb[0].mxu0
  %v1549 = vadd.f32 0.0, %v1548
  %v1550 = vpop.f32.mrb[0].mxu0
  %1551 = vmatprep.mubr.bf16.mxu0 0
  %1552 = vmatmul.mubr.bf16.gmra.mrb[0].mxu0 %v701
  %v1553 = vpop.f32.mrb[0].mxu0
  %v1554 = vadd.f32 0.0, %v1553
  %v1555 = vpop.f32.mrb[0].mxu0
  %v1556 = vpop.f32.mrb[0].mxu0
  %v1557 = vadd.f32 0.0, %v1556
  %v1558 = vpop.f32.mrb[0].mxu0
  %1559 = vmatprep.mubr.bf16.mxu0 0
  %1560 = vmatmul.mubr.bf16.gmra.mrb[0].mxu0 %v702
  %v1561 = vpop.f32.mrb[0].mxu0
  %v1562 = vadd.f32 0.0, %v1561
  %v1563 = vpop.f32.mrb[0].mxu0
  %v1564 = vpop.f32.mrb[0].mxu0
  %v1565 = vadd.f32 0.0, %v1564
  %v1566 = vpop.f32.mrb[0].mxu0
  %1567 = vmatprep.mubr.bf16.mxu0 0
  %1568 = vmatmul.mubr.bf16.gmra.mrb[0].mxu0 %v703
  %v1569 = vpop.f32.mrb[0].mxu0
  %v1570 = vadd.f32 0.0, %v1569
  %v1571 = vpop.f32.mrb[0].mxu0
  %v1572 = vpop.f32.mrb[0].mxu0
  %v1573 = vadd.f32 0.0, %v1572
  %v1574 = vpop.f32.mrb[0].mxu0
  %1575 = vmatprep.mubr.bf16.mxu0 0
  %1576 = vmatmul.mubr.bf16.gmra.mrb[0].mxu0 %v704
  %v1577 = vpop.f32.mrb[0].mxu0
  %v1578 = vadd.f32 0.0, %v1577
  %v1579 = vpop.f32.mrb[0].mxu0
  %v1580 = vpop.f32.mrb[0].mxu0
  %v1581 = vadd.f32 0.0, %v1580
  %v1582 = vpop.f32.mrb[0].mxu0
  %1583 = vmatprep.mubr.bf16.mxu0 0
  %1584 = vmatmul.mubr.bf16.gmra.mrb[0].mxu0 %v705
  %v1585 = vpop.f32.mrb[0].mxu0
  %v1586 = vadd.f32 0.0, %v1585
  %v1587 = vpop.f32.mrb[0].mxu0
  %v1588 = vpop.f32.mrb[0].mxu0
  %v1589 = vadd.f32 0.0, %v1588
  %v1590 = vpop.f32.mrb[0].mxu0
  %1591 = vmatprep.mubr.bf16.mxu0 0
  %1592 = vmatmul.mubr.bf16.gmra.mrb[0].mxu0 %v706
  %v1593 = vpop.f32.mrb[0].mxu0
  %v1594 = vadd.f32 0.0, %v1593
  %v1595 = vpop.f32.mrb[0].mxu0
  %v1596 = vpop.f32.mrb[0].mxu0
  %v1597 = vadd.f32 0.0, %v1596
  %v1598 = vpop.f32.mrb[0].mxu0
  %1599 = vmatprep.mubr.bf16.mxu0 0
  %1600 = vmatmul.mubr.bf16.gmra.mrb[0].mxu0 %v707
  %v1601 = vpop.f32.mrb[0].mxu0
  %v1602 = vadd.f32 0.0, %v1601
  %v1603 = vpop.f32.mrb[0].mxu0
  %v1604 = vpop.f32.mrb[0].mxu0
  %v1605 = vadd.f32 0.0, %v1604
  %v1606 = vpop.f32.mrb[0].mxu0
  %1607 = vmatprep.mubr.bf16.mxu0 0
  %1608 = vmatmul.mubr.bf16.gmra.mrb[0].mxu0 %v708
  %v1609 = vpop.f32.mrb[0].mxu0
  %v1610 = vadd.f32 0.0, %v1609
  %v1611 = vpop.f32.mrb[0].mxu0
  %v1612 = vpop.f32.mrb[0].mxu0
  %v1613 = vadd.f32 0.0, %v1612
  %v1614 = vpop.f32.mrb[0].mxu0
  %1615 = vmatprep.mubr.bf16.mxu0 0
  %1616 = vmatmul.mubr.bf16.gmra.mrb[0].mxu0 %v709
  %v1617 = vpop.f32.mrb[0].mxu0
  %v1618 = vadd.f32 0.0, %v1617
  %v1619 = vpop.f32.mrb[0].mxu0
  %v1620 = vpop.f32.mrb[0].mxu0
  %v1621 = vadd.f32 0.0, %v1620
  %v1622 = vpop.f32.mrb[0].mxu0
  %1623 = vmatprep.mubr.bf16.mxu0 0
  %1624 = vmatmul.mubr.bf16.gmra.mrb[0].mxu0 %v710
  %v1625 = vpop.f32.mrb[0].mxu0
  %v1626 = vadd.f32 0.0, %v1625
  %v1627 = vpop.f32.mrb[0].mxu0
  %v1628 = vpop.f32.mrb[0].mxu0
  %v1629 = vadd.f32 0.0, %v1628
  %v1630 = vpop.f32.mrb[0].mxu0
  %1631 = vmatprep.mubr.bf16.mxu0 0
  %1632 = vmatmul.mubr.bf16.gmra.mrb[0].mxu0 %v711
  %v1633 = vpop.f32.mrb[0].mxu0
  %v1634 = vadd.f32 0.0, %v1633
  %v1635 = vpop.f32.mrb[0].mxu0
  %v1636 = vpop.f32.mrb[0].mxu0
  %v1637 = vadd.f32 0.0, %v1636
  %v1638 = vpop.f32.mrb[0].mxu0
  %1639 = vmatprep.mubr.bf16.mxu0 0
  %1640 = vmatmul.mubr.bf16.gmra.mrb[0].mxu0 %v712
  %v1641 = vpop.f32.mrb[0].mxu0
  %v1642 = vadd.f32 0.0, %v1641
  %v1643 = vpop.f32.mrb[0].mxu0
  %v1644 = vpop.f32.mrb[0].mxu0
  %v1645 = vadd.f32 0.0, %v1644
  %v1646 = vpop.f32.mrb[0].mxu0
  %1647 = vmatprep.mubr.bf16.mxu0 0
  %1648 = vmatmul.mubr.bf16.gmra.mrb[0].mxu0 %v713
  %v1649 = vpop.f32.mrb[0].mxu0
  %v1650 = vadd.f32 0.0, %v1649
  %v1651 = vpop.f32.mrb[0].mxu0
  %v1652 = vpop.f32.mrb[0].mxu0
  %v1653 = vadd.f32 0.0, %v1652
  %v1654 = vpop.f32.mrb[0].mxu0
  %1655 = vmatprep.mubr.bf16.mxu0 0
  %1656 = vmatmul.mubr.bf16.gmra.mrb[0].mxu0 %v714
  %v1657 = vpop.f32.mrb[0].mxu0
  %v1658 = vadd.f32 0.0, %v1657
  %v1659 = vpop.f32.mrb[0].mxu0
  %v1660 = vpop.f32.mrb[0].mxu0
  %v1661 = vadd.f32 0.0, %v1660
  %v1662 = vpop.f32.mrb[0].mxu0
  %1663 = vmatprep.mubr.bf16.mxu0 0
  %1664 = vmatmul.mubr.bf16.gmra.mrb[0].mxu0 %v715
  %v1665 = vpop.f32.mrb[0].mxu0
  %v1666 = vadd.f32 0.0, %v1665
  %v1667 = vpop.f32.mrb[0].mxu0
  %v1668 = vpop.f32.mrb[0].mxu0
  %v1669 = vadd.f32 0.0, %v1668
  %v1670 = vpop.f32.mrb[0].mxu0
  %1671 = vmatprep.mubr.bf16.mxu0 0
  %1672 = vmatmul.mubr.bf16.gmra.mrb[0].mxu0 %v716
  %v1673 = vpop.f32.mrb[0].mxu0
  %v1674 = vadd.f32 0.0, %v1673
  %v1675 = vpop.f32.mrb[0].mxu0
  %v1676 = vpop.f32.mrb[0].mxu0
  %v1677 = vadd.f32 0.0, %v1676
  %v1678 = vpop.f32.mrb[0].mxu0
  %1679 = vdwg.mxu0
  %s1680 = scalar_lea.vmem %s0, 784
  %v1681 = vld [vmem:[%s1680] sm:$0xf]
  %v1682 = vld [vmem:[%s1680 + $0x4] sm:$0xf]
  %v1683 = vld [vmem:[%s1680 + $0x8] sm:$0xf]
  %v1684 = vld [vmem:[%s1680 + $0xc] sm:$0xf]
  %v1685 = vld [vmem:[%s1680 + $0x10] sm:$0xf]
  %v1686 = vld [vmem:[%s1680 + $0x14] sm:$0xf]
  %v1687 = vld [vmem:[%s1680 + $0x18] sm:$0xf]
  %v1688 = vld [vmem:[%s1680 + $0x1c] sm:$0xf]
  %v1689 = vld [vmem:[%s1680 + $0x20] sm:$0xf]
  %v1690 = vld [vmem:[%s1680 + $0x24] sm:$0xf]
  %v1691 = vld [vmem:[%s1680 + $0x28] sm:$0xf]
  %v1692 = vld [vmem:[%s1680 + $0x2c] sm:$0xf]
  %v1693 = vld [vmem:[%s1680 + $0x30] sm:$0xf]
  %v1694 = vld [vmem:[%s1680 + $0x34] sm:$0xf]
  %v1695 = vld [vmem:[%s1680 + $0x38] sm:$0xf]
  %v1696 = vld [vmem:[%s1680 + $0x3c] sm:$0xf]
  %v1697 = vld [vmem:[%s1680 + $0x40] sm:$0xf]
  %v1698 = vld [vmem:[%s1680 + $0x44] sm:$0xf]
  %v1699 = vld [vmem:[%s1680 + $0x48] sm:$0xf]
  %v1700 = vld [vmem:[%s1680 + $0x4c] sm:$0xf]
  %v1701 = vld [vmem:[%s1680 + $0x50] sm:$0xf]
  %v1702 = vld [vmem:[%s1680 + $0x54] sm:$0xf]
  %v1703 = vld [vmem:[%s1680 + $0x58] sm:$0xf]
  %v1704 = vld [vmem:[%s1680 + $0x5c] sm:$0xf]
  %v1705 = vld [vmem:[%s1680 + $0x60] sm:$0xf]
  %v1706 = vld [vmem:[%s1680 + $0x64] sm:$0xf]
  %v1707 = vld [vmem:[%s1680 + $0x68] sm:$0xf]
  %v1708 = vld [vmem:[%s1680 + $0x6c] sm:$0xf]
  %v1709 = vld [vmem:[%s1680 + $0x70] sm:$0xf]
  %v1710 = vld [vmem:[%s1680 + $0x74] sm:$0xf]
  %v1711 = vld [vmem:[%s1680 + $0x78] sm:$0xf]
  %v1712 = vld [vmem:[%s1680 + $0x7c] sm:$0xf]
  %v1713 = vld [vmem:[%s1680 + $0x80] sm:$0xf]
  %v1714 = vld [vmem:[%s1680 + $0x84] sm:$0xf]
  %v1715 = vld [vmem:[%s1680 + $0x88] sm:$0xf]
  %v1716 = vld [vmem:[%s1680 + $0x8c] sm:$0xf]
  %v1717 = vld [vmem:[%s1680 + $0x90] sm:$0xf]
  %v1718 = vld [vmem:[%s1680 + $0x94] sm:$0xf]
  %v1719 = vld [vmem:[%s1680 + $0x98] sm:$0xf]
  %v1720 = vld [vmem:[%s1680 + $0x9c] sm:$0xf]
  %v1721 = vld [vmem:[%s1680 + $0xa0] sm:$0xf]
  %v1722 = vld [vmem:[%s1680 + $0xa4] sm:$0xf]
  %v1723 = vld [vmem:[%s1680 + $0xa8] sm:$0xf]
  %v1724 = vld [vmem:[%s1680 + $0xac] sm:$0xf]
  %v1725 = vld [vmem:[%s1680 + $0xb0] sm:$0xf]
  %v1726 = vld [vmem:[%s1680 + $0xb4] sm:$0xf]
  %v1727 = vld [vmem:[%s1680 + $0xb8] sm:$0xf]
  %v1728 = vld [vmem:[%s1680 + $0xbc] sm:$0xf]
  %v1729 = vld [vmem:[%s1680 + $0xc0] sm:$0xf]
  %v1730 = vld [vmem:[%s1680 + $0xc4] sm:$0xf]
  %v1731 = vld [vmem:[%s1680 + $0xc8] sm:$0xf]
  %v1732 = vld [vmem:[%s1680 + $0xcc] sm:$0xf]
  %v1733 = vld [vmem:[%s1680 + $0xd0] sm:$0xf]
  %v1734 = vld [vmem:[%s1680 + $0xd4] sm:$0xf]
  %v1735 = vld [vmem:[%s1680 + $0xd8] sm:$0xf]
  %v1736 = vld [vmem:[%s1680 + $0xdc] sm:$0xf]
  %v1737 = vld [vmem:[%s1680 + $0xe0] sm:$0xf]
  %v1738 = vld [vmem:[%s1680 + $0xe4] sm:$0xf]
  %v1739 = vld [vmem:[%s1680 + $0xe8] sm:$0xf]
  %v1740 = vld [vmem:[%s1680 + $0xec] sm:$0xf]
  %v1741 = vld [vmem:[%s1680 + $0xf0] sm:$0xf]
  %v1742 = vld [vmem:[%s1680 + $0xf4] sm:$0xf]
  %v1743 = vld [vmem:[%s1680 + $0xf8] sm:$0xf]
  %v1744 = vld [vmem:[%s1680 + $0xfc] sm:$0xf]
  %v1745 = vld [vmem:[%s1680 + $0x100] sm:$0xf]
  %v1746 = vld [vmem:[%s1680 + $0x104] sm:$0xf]
  %v1747 = vld [vmem:[%s1680 + $0x108] sm:$0xf]
  %v1748 = vld [vmem:[%s1680 + $0x10c] sm:$0xf]
  %v1749 = vld [vmem:[%s1680 + $0x110] sm:$0xf]
  %v1750 = vld [vmem:[%s1680 + $0x114] sm:$0xf]
  %v1751 = vld [vmem:[%s1680 + $0x118] sm:$0xf]
  %v1752 = vld [vmem:[%s1680 + $0x11c] sm:$0xf]
  %v1753 = vld [vmem:[%s1680 + $0x120] sm:$0xf]
  %v1754 = vld [vmem:[%s1680 + $0x124] sm:$0xf]
  %v1755 = vld [vmem:[%s1680 + $0x128] sm:$0xf]
  %v1756 = vld [vmem:[%s1680 + $0x12c] sm:$0xf]
  %v1757 = vld [vmem:[%s1680 + $0x130] sm:$0xf]
  %v1758 = vld [vmem:[%s1680 + $0x134] sm:$0xf]
  %v1759 = vld [vmem:[%s1680 + $0x138] sm:$0xf]
  %v1760 = vld [vmem:[%s1680 + $0x13c] sm:$0xf]
  %v1761 = vld [vmem:[%s1680 + $0x140] sm:$0xf]
  %v1762 = vld [vmem:[%s1680 + $0x144] sm:$0xf]
  %v1763 = vld [vmem:[%s1680 + $0x148] sm:$0xf]
  %v1764 = vld [vmem:[%s1680 + $0x14c] sm:$0xf]
  %v1765 = vld [vmem:[%s1680 + $0x150] sm:$0xf]
  %v1766 = vld [vmem:[%s1680 + $0x154] sm:$0xf]
  %v1767 = vld [vmem:[%s1680 + $0x158] sm:$0xf]
  %v1768 = vld [vmem:[%s1680 + $0x15c] sm:$0xf]
  %v1769 = vld [vmem:[%s1680 + $0x160] sm:$0xf]
  %v1770 = vld [vmem:[%s1680 + $0x164] sm:$0xf]
  %v1771 = vld [vmem:[%s1680 + $0x168] sm:$0xf]
  %v1772 = vld [vmem:[%s1680 + $0x16c] sm:$0xf]
  %v1773 = vld [vmem:[%s1680 + $0x170] sm:$0xf]
  %v1774 = vld [vmem:[%s1680 + $0x174] sm:$0xf]
  %v1775 = vld [vmem:[%s1680 + $0x178] sm:$0xf]
  %v1776 = vld [vmem:[%s1680 + $0x17c] sm:$0xf]
  %v1777 = vld [vmem:[%s1680 + $0x180] sm:$0xf]
  %v1778 = vld [vmem:[%s1680 + $0x184] sm:$0xf]
  %v1779 = vld [vmem:[%s1680 + $0x188] sm:$0xf]
  %v1780 = vld [vmem:[%s1680 + $0x18c] sm:$0xf]
  %v1781 = vld [vmem:[%s1680 + $0x190] sm:$0xf]
  %v1782 = vld [vmem:[%s1680 + $0x194] sm:$0xf]
  %v1783 = vld [vmem:[%s1680 + $0x198] sm:$0xf]
  %v1784 = vld [vmem:[%s1680 + $0x19c] sm:$0xf]
  %v1785 = vld [vmem:[%s1680 + $0x1a0] sm:$0xf]
  %v1786 = vld [vmem:[%s1680 + $0x1a4] sm:$0xf]
  %v1787 = vld [vmem:[%s1680 + $0x1a8] sm:$0xf]
  %v1788 = vld [vmem:[%s1680 + $0x1ac] sm:$0xf]
  %v1789 = vld [vmem:[%s1680 + $0x1b0] sm:$0xf]
  %v1790 = vld [vmem:[%s1680 + $0x1b4] sm:$0xf]
  %v1791 = vld [vmem:[%s1680 + $0x1b8] sm:$0xf]
  %v1792 = vld [vmem:[%s1680 + $0x1bc] sm:$0xf]
  %v1793 = vld [vmem:[%s1680 + $0x1c0] sm:$0xf]
  %v1794 = vld [vmem:[%s1680 + $0x1c4] sm:$0xf]
  %v1795 = vld [vmem:[%s1680 + $0x1c8] sm:$0xf]
  %v1796 = vld [vmem:[%s1680 + $0x1cc] sm:$0xf]
  %v1797 = vld [vmem:[%s1680 + $0x1d0] sm:$0xf]
  %v1798 = vld [vmem:[%s1680 + $0x1d4] sm:$0xf]
  %v1799 = vld [vmem:[%s1680 + $0x1d8] sm:$0xf]
  %v1800 = vld [vmem:[%s1680 + $0x1dc] sm:$0xf]
  %v1801 = vld [vmem:[%s1680 + $0x1e0] sm:$0xf]
  %v1802 = vld [vmem:[%s1680 + $0x1e4] sm:$0xf]
  %v1803 = vld [vmem:[%s1680 + $0x1e8] sm:$0xf]
  %v1804 = vld [vmem:[%s1680 + $0x1ec] sm:$0xf]
  %v1805 = vld [vmem:[%s1680 + $0x1f0] sm:$0xf]
  %v1806 = vld [vmem:[%s1680 + $0x1f4] sm:$0xf]
  %v1807 = vld [vmem:[%s1680 + $0x1f8] sm:$0xf]
  %v1808 = vld [vmem:[%s1680 + $0x1fc] sm:$0xf]
  %v1809 = vld [vmem:[%s1680 + $0x200] sm:$0xf]
  %v1810 = vld [vmem:[%s1680 + $0x204] sm:$0xf]
  %v1811 = vld [vmem:[%s1680 + $0x208] sm:$0xf]
  %v1812 = vld [vmem:[%s1680 + $0x20c] sm:$0xf]
  %v1813 = vld [vmem:[%s1680 + $0x210] sm:$0xf]
  %v1814 = vld [vmem:[%s1680 + $0x214] sm:$0xf]
  %v1815 = vld [vmem:[%s1680 + $0x218] sm:$0xf]
  %v1816 = vld [vmem:[%s1680 + $0x21c] sm:$0xf]
  %v1817 = vld [vmem:[%s1680 + $0x220] sm:$0xf]
  %v1818 = vld [vmem:[%s1680 + $0x224] sm:$0xf]
  %v1819 = vld [vmem:[%s1680 + $0x228] sm:$0xf]
  %v1820 = vld [vmem:[%s1680 + $0x22c] sm:$0xf]
  %v1821 = vld [vmem:[%s1680 + $0x230] sm:$0xf]
  %v1822 = vld [vmem:[%s1680 + $0x234] sm:$0xf]
  %v1823 = vld [vmem:[%s1680 + $0x238] sm:$0xf]
  %v1824 = vld [vmem:[%s1680 + $0x23c] sm:$0xf]
  %v1825 = vld [vmem:[%s1680 + $0x240] sm:$0xf]
  %v1826 = vld [vmem:[%s1680 + $0x244] sm:$0xf]
  %v1827 = vld [vmem:[%s1680 + $0x248] sm:$0xf]
  %v1828 = vld [vmem:[%s1680 + $0x24c] sm:$0xf]
  %v1829 = vld [vmem:[%s1680 + $0x250] sm:$0xf]
  %v1830 = vld [vmem:[%s1680 + $0x254] sm:$0xf]
  %v1831 = vld [vmem:[%s1680 + $0x258] sm:$0xf]
  %v1832 = vld [vmem:[%s1680 + $0x25c] sm:$0xf]
  %v1833 = vld [vmem:[%s1680 + $0x260] sm:$0xf]
  %v1834 = vld [vmem:[%s1680 + $0x264] sm:$0xf]
  %v1835 = vld [vmem:[%s1680 + $0x268] sm:$0xf]
  %v1836 = vld [vmem:[%s1680 + $0x26c] sm:$0xf]
  %v1837 = vld [vmem:[%s1680 + $0x270] sm:$0xf]
  %v1838 = vld [vmem:[%s1680 + $0x274] sm:$0xf]
  %v1839 = vld [vmem:[%s1680 + $0x278] sm:$0xf]
  %v1840 = vld [vmem:[%s1680 + $0x27c] sm:$0xf]
  %v1841 = vld [vmem:[%s1680 + $0x280] sm:$0xf]
  %v1842 = vld [vmem:[%s1680 + $0x284] sm:$0xf]
  %v1843 = vld [vmem:[%s1680 + $0x288] sm:$0xf]
  %v1844 = vld [vmem:[%s1680 + $0x28c] sm:$0xf]
  %v1845 = vld [vmem:[%s1680 + $0x290] sm:$0xf]
  %v1846 = vld [vmem:[%s1680 + $0x294] sm:$0xf]
  %v1847 = vld [vmem:[%s1680 + $0x298] sm:$0xf]
  %v1848 = vld [vmem:[%s1680 + $0x29c] sm:$0xf]
  %v1849 = vld [vmem:[%s1680 + $0x2a0] sm:$0xf]
  %v1850 = vld [vmem:[%s1680 + $0x2a4] sm:$0xf]
  %v1851 = vld [vmem:[%s1680 + $0x2a8] sm:$0xf]
  %v1852 = vld [vmem:[%s1680 + $0x2ac] sm:$0xf]
  %v1853 = vld [vmem:[%s1680 + $0x2b0] sm:$0xf]
  %v1854 = vld [vmem:[%s1680 + $0x2b4] sm:$0xf]
  %v1855 = vld [vmem:[%s1680 + $0x2b8] sm:$0xf]
  %v1856 = vld [vmem:[%s1680 + $0x2bc] sm:$0xf]
  %v1857 = vld [vmem:[%s1680 + $0x2c0] sm:$0xf]
  %v1858 = vld [vmem:[%s1680 + $0x2c4] sm:$0xf]
  %v1859 = vld [vmem:[%s1680 + $0x2c8] sm:$0xf]
  %v1860 = vld [vmem:[%s1680 + $0x2cc] sm:$0xf]
  %v1861 = vld [vmem:[%s1680 + $0x2d0] sm:$0xf]
  %v1862 = vld [vmem:[%s1680 + $0x2d4] sm:$0xf]
  %v1863 = vld [vmem:[%s1680 + $0x2d8] sm:$0xf]
  %v1864 = vld [vmem:[%s1680 + $0x2dc] sm:$0xf]
  %v1865 = vld [vmem:[%s1680 + $0x2e0] sm:$0xf]
  %v1866 = vld [vmem:[%s1680 + $0x2e4] sm:$0xf]
  %v1867 = vld [vmem:[%s1680 + $0x2e8] sm:$0xf]
  %v1868 = vld [vmem:[%s1680 + $0x2ec] sm:$0xf]
  %v1869 = vld [vmem:[%s1680 + $0x2f0] sm:$0xf]
  %v1870 = vld [vmem:[%s1680 + $0x2f4] sm:$0xf]
  %v1871 = vld [vmem:[%s1680 + $0x2f8] sm:$0xf]
  %v1872 = vld [vmem:[%s1680 + $0x2fc] sm:$0xf]
  %v1873 = vld [vmem:[%s1680 + $0x300] sm:$0xf]
  %v1874 = vld [vmem:[%s1680 + $0x304] sm:$0xf]
  %v1875 = vld [vmem:[%s1680 + $0x308] sm:$0xf]
  %v1876 = vld [vmem:[%s1680 + $0x30c] sm:$0xf]
  %v2073 = vunpack.c.l.b16 %v1681
  %v2074 = vunpack.c.l.b16 %v1682
  %v2075 = vunpack.c.l.b16 %v1683
  %v2076 = vunpack.c.l.b16 %v1684
  %v2077 = vunpack.c.l.b16 %v1685
  %v2078 = vunpack.c.l.b16 %v1686
  %v2079 = vunpack.c.l.b16 %v1687
  %v2080 = vunpack.c.l.b16 %v1688
  %v2081 = vunpack.c.l.b16 %v1689
  %v2082 = vunpack.c.l.b16 %v1690
  %v2083 = vunpack.c.l.b16 %v1691
  %v2084 = vunpack.c.l.b16 %v1692
  %v2085 = vunpack.c.l.b16 %v1693
  %v2086 = vunpack.c.l.b16 %v1694
  %v2087 = vunpack.c.l.b16 %v1695
  %v2088 = vunpack.c.l.b16 %v1696
  %v2089 = vunpack.c.l.b16 %v1697
  %v2090 = vunpack.c.l.b16 %v1698
  %v2091 = vunpack.c.l.b16 %v1699
  %v2092 = vunpack.c.l.b16 %v1700
  %v2093 = vunpack.c.l.b16 %v1701
  %v2094 = vunpack.c.l.b16 %v1702
  %v2095 = vunpack.c.l.b16 %v1703
  %v2096 = vunpack.c.l.b16 %v1704
  %v2097 = vunpack.c.l.b16 %v1705
  %v2098 = vunpack.c.l.b16 %v1706
  %v2099 = vunpack.c.l.b16 %v1707
  %v2100 = vunpack.c.l.b16 %v1708
  %v2101 = vunpack.c.l.b16 %v1709
  %v2102 = vunpack.c.l.b16 %v1710
  %v2103 = vunpack.c.l.b16 %v1711
  %v2104 = vunpack.c.l.b16 %v1712
  %v2105 = vunpack.c.l.b16 %v1713
  %v2106 = vunpack.c.l.b16 %v1714
  %v2107 = vunpack.c.l.b16 %v1715
  %v2108 = vunpack.c.l.b16 %v1716
  %v2109 = vunpack.c.l.b16 %v1717
  %v2110 = vunpack.c.l.b16 %v1718
  %v2111 = vunpack.c.l.b16 %v1719
  %v2112 = vunpack.c.l.b16 %v1720
  %v2113 = vunpack.c.l.b16 %v1721
  %v2114 = vunpack.c.l.b16 %v1722
  %v2115 = vunpack.c.l.b16 %v1723
  %v2116 = vunpack.c.l.b16 %v1724
  %v2117 = vunpack.c.l.b16 %v1725
  %v2118 = vunpack.c.l.b16 %v1726
  %v2119 = vunpack.c.l.b16 %v1727
  %v2120 = vunpack.c.l.b16 %v1728
  %v2121 = vunpack.c.l.b16 %v1729
  %v2122 = vunpack.c.l.b16 %v1730
  %v2123 = vunpack.c.l.b16 %v1731
  %v2124 = vunpack.c.l.b16 %v1732
  %v2125 = vunpack.c.l.b16 %v1733
  %v2126 = vunpack.c.l.b16 %v1734
  %v2127 = vunpack.c.l.b16 %v1735
  %v2128 = vunpack.c.l.b16 %v1736
  %v2129 = vunpack.c.l.b16 %v1737
  %v2130 = vunpack.c.l.b16 %v1738
  %v2131 = vunpack.c.l.b16 %v1739
  %v2132 = vunpack.c.l.b16 %v1740
  %v2133 = vunpack.c.l.b16 %v1741
  %v2134 = vunpack.c.l.b16 %v1742
  %v2135 = vunpack.c.l.b16 %v1743
  %v2136 = vunpack.c.l.b16 %v1744
  %v2137 = vunpack.c.l.b16 %v1745
  %v2138 = vunpack.c.l.b16 %v1746
  %v2139 = vunpack.c.l.b16 %v1747
  %v2140 = vunpack.c.l.b16 %v1748
  %v2141 = vunpack.c.l.b16 %v1749
  %v2142 = vunpack.c.l.b16 %v1750
  %v2143 = vunpack.c.l.b16 %v1751
  %v2144 = vunpack.c.l.b16 %v1752
  %v2145 = vunpack.c.l.b16 %v1753
  %v2146 = vunpack.c.l.b16 %v1754
  %v2147 = vunpack.c.l.b16 %v1755
  %v2148 = vunpack.c.l.b16 %v1756
  %v2149 = vunpack.c.l.b16 %v1757
  %v2150 = vunpack.c.l.b16 %v1758
  %v2151 = vunpack.c.l.b16 %v1759
  %v2152 = vunpack.c.l.b16 %v1760
  %v2153 = vunpack.c.l.b16 %v1761
  %v2154 = vunpack.c.l.b16 %v1762
  %v2155 = vunpack.c.l.b16 %v1763
  %v2156 = vunpack.c.l.b16 %v1764
  %v2157 = vunpack.c.l.b16 %v1765
  %v2158 = vunpack.c.l.b16 %v1766
  %v2159 = vunpack.c.l.b16 %v1767
  %v2160 = vunpack.c.l.b16 %v1768
  %v2161 = vunpack.c.l.b16 %v1769
  %v2162 = vunpack.c.l.b16 %v1770
  %v2163 = vunpack.c.l.b16 %v1771
  %v2164 = vunpack.c.l.b16 %v1772
  %v2165 = vunpack.c.l.b16 %v1773
  %v2166 = vunpack.c.l.b16 %v1774
  %v2167 = vunpack.c.l.b16 %v1775
  %v2168 = vunpack.c.l.b16 %v1776
  %v2169 = vunpack.c.l.b16 %v1777
  %v2170 = vunpack.c.l.b16 %v1778
  %v2171 = vunpack.c.l.b16 %v1779
  %v2172 = vunpack.c.l.b16 %v1780
  %v2173 = vunpack.c.l.b16 %v1781
  %v2174 = vunpack.c.l.b16 %v1782
  %v2175 = vunpack.c.l.b16 %v1783
  %v2176 = vunpack.c.l.b16 %v1784
  %v2177 = vunpack.c.l.b16 %v1785
  %v2178 = vunpack.c.l.b16 %v1786
  %v2179 = vunpack.c.l.b16 %v1787
  %v2180 = vunpack.c.l.b16 %v1788
  %v2181 = vunpack.c.l.b16 %v1789
  %v2182 = vunpack.c.l.b16 %v1790
  %v2183 = vunpack.c.l.b16 %v1791
  %v2184 = vunpack.c.l.b16 %v1792
  %v2185 = vunpack.c.l.b16 %v1793
  %v2186 = vunpack.c.l.b16 %v1794
  %v2187 = vunpack.c.l.b16 %v1795
  %v2188 = vunpack.c.l.b16 %v1796
  %v2189 = vunpack.c.l.b16 %v1797
  %v2190 = vunpack.c.l.b16 %v1798
  %v2191 = vunpack.c.l.b16 %v1799
  %v2192 = vunpack.c.l.b16 %v1800
  %v2193 = vunpack.c.l.b16 %v1801
  %v2194 = vunpack.c.l.b16 %v1802
  %v2195 = vunpack.c.l.b16 %v1803
  %v2196 = vunpack.c.l.b16 %v1804
  %v2197 = vunpack.c.l.b16 %v1805
  %v2198 = vunpack.c.l.b16 %v1806
  %v2199 = vunpack.c.l.b16 %v1807
  %v2200 = vunpack.c.l.b16 %v1808
  %v2201 = vunpack.c.l.b16 %v1809
  %v2202 = vunpack.c.l.b16 %v1810
  %v2203 = vunpack.c.l.b16 %v1811
  %v2204 = vunpack.c.l.b16 %v1812
  %v2205 = vunpack.c.l.b16 %v1813
  %v2206 = vunpack.c.l.b16 %v1814
  %v2207 = vunpack.c.l.b16 %v1815
  %v2208 = vunpack.c.l.b16 %v1816
  %v2209 = vunpack.c.l.b16 %v1817
  %v2210 = vunpack.c.l.b16 %v1818
  %v2211 = vunpack.c.l.b16 %v1819
  %v2212 = vunpack.c.l.b16 %v1820
  %v2213 = vunpack.c.l.b16 %v1821
  %v2214 = vunpack.c.l.b16 %v1822
  %v2215 = vunpack.c.l.b16 %v1823
  %v2216 = vunpack.c.l.b16 %v1824
  %v2217 = vunpack.c.l.b16 %v1825
  %v2218 = vunpack.c.l.b16 %v1826
  %v2219 = vunpack.c.l.b16 %v1827
  %v2220 = vunpack.c.l.b16 %v1828
  %v2221 = vunpack.c.l.b16 %v1829
  %v2222 = vunpack.c.l.b16 %v1830
  %v2223 = vunpack.c.l.b16 %v1831
  %v2224 = vunpack.c.l.b16 %v1832
  %v2225 = vunpack.c.l.b16 %v1833
  %v2226 = vunpack.c.l.b16 %v1834
  %v2227 = vunpack.c.l.b16 %v1835
  %v2228 = vunpack.c.l.b16 %v1836
  %v2229 = vunpack.c.l.b16 %v1837
  %v2230 = vunpack.c.l.b16 %v1838
  %v2231 = vunpack.c.l.b16 %v1839
  %v2232 = vunpack.c.l.b16 %v1840
  %v2233 = vunpack.c.l.b16 %v1841
  %v2234 = vunpack.c.l.b16 %v1842
  %v2235 = vunpack.c.l.b16 %v1843
  %v2236 = vunpack.c.l.b16 %v1844
  %v2237 = vunpack.c.l.b16 %v1845
  %v2238 = vunpack.c.l.b16 %v1846
  %v2239 = vunpack.c.l.b16 %v1847
  %v2240 = vunpack.c.l.b16 %v1848
  %v2241 = vunpack.c.l.b16 %v1849
  %v2242 = vunpack.c.l.b16 %v1850
  %v2243 = vunpack.c.l.b16 %v1851
  %v2244 = vunpack.c.l.b16 %v1852
  %v2245 = vunpack.c.l.b16 %v1853
  %v2246 = vunpack.c.l.b16 %v1854
  %v2247 = vunpack.c.l.b16 %v1855
  %v2248 = vunpack.c.l.b16 %v1856
  %v2249 = vunpack.c.l.b16 %v1857
  %v2250 = vunpack.c.l.b16 %v1858
  %v2251 = vunpack.c.l.b16 %v1859
  %v2252 = vunpack.c.l.b16 %v1860
  %v2253 = vunpack.c.l.b16 %v1861
  %v2254 = vunpack.c.l.b16 %v1862
  %v2255 = vunpack.c.l.b16 %v1863
  %v2256 = vunpack.c.l.b16 %v1864
  %v2257 = vunpack.c.l.b16 %v1865
  %v2258 = vunpack.c.l.b16 %v1866
  %v2259 = vunpack.c.l.b16 %v1867
  %v2260 = vunpack.c.l.b16 %v1868
  %v2261 = vunpack.c.l.b16 %v1869
  %v2262 = vunpack.c.l.b16 %v1870
  %v2263 = vunpack.c.l.b16 %v1871
  %v2264 = vunpack.c.l.b16 %v1872
  %v2265 = vunpack.c.l.b16 %v1873
  %v2266 = vunpack.c.l.b16 %v1874
  %v2267 = vunpack.c.l.b16 %v1875
  %v2268 = vunpack.c.l.b16 %v1876
  %v2269 = vpack.c.b16 %v2074, %v2073
  %v2270 = vpack.c.b16 %v2076, %v2075
  %v2271 = vpack.c.b16 %v2078, %v2077
  %v2272 = vpack.c.b16 %v2080, %v2079
  %v2273 = vpack.c.b16 %v2082, %v2081
  %v2274 = vpack.c.b16 %v2084, %v2083
  %v2275 = vpack.c.b16 %v2086, %v2085
  %v2276 = vpack.c.b16 %v2088, %v2087
  %v2277 = vpack.c.b16 %v2090, %v2089
  %v2278 = vpack.c.b16 %v2092, %v2091
  %v2279 = vpack.c.b16 %v2094, %v2093
  %v2280 = vpack.c.b16 %v2096, %v2095
  %v2281 = vpack.c.b16 %v2098, %v2097
  %v2282 = vpack.c.b16 %v2100, %v2099
  %v2283 = vpack.c.b16 %v2102, %v2101
  %v2284 = vpack.c.b16 %v2104, %v2103
  %v2285 = vpack.c.b16 %v2106, %v2105
  %v2286 = vpack.c.b16 %v2108, %v2107
  %v2287 = vpack.c.b16 %v2110, %v2109
  %v2288 = vpack.c.b16 %v2112, %v2111
  %v2289 = vpack.c.b16 %v2114, %v2113
  %v2290 = vpack.c.b16 %v2116, %v2115
  %v2291 = vpack.c.b16 %v2118, %v2117
  %v2292 = vpack.c.b16 %v2120, %v2119
  %v2293 = vpack.c.b16 %v2122, %v2121
  %v2294 = vpack.c.b16 %v2124, %v2123
  %v2295 = vpack.c.b16 %v2126, %v2125
  %v2296 = vpack.c.b16 %v2128, %v2127
  %v2297 = vpack.c.b16 %v2130, %v2129
  %v2298 = vpack.c.b16 %v2132, %v2131
  %v2299 = vpack.c.b16 %v2134, %v2133
  %v2300 = vpack.c.b16 %v2136, %v2135
  %v2301 = vpack.c.b16 %v2138, %v2137
  %v2302 = vpack.c.b16 %v2140, %v2139
  %v2303 = vpack.c.b16 %v2142, %v2141
  %v2304 = vpack.c.b16 %v2144, %v2143
  %v2305 = vpack.c.b16 %v2146, %v2145
  %v2306 = vpack.c.b16 %v2148, %v2147
  %v2307 = vpack.c.b16 %v2150, %v2149
  %v2308 = vpack.c.b16 %v2152, %v2151
  %v2309 = vpack.c.b16 %v2154, %v2153
  %v2310 = vpack.c.b16 %v2156, %v2155
  %v2311 = vpack.c.b16 %v2158, %v2157
  %v2312 = vpack.c.b16 %v2160, %v2159
  %v2313 = vpack.c.b16 %v2162, %v2161
  %v2314 = vpack.c.b16 %v2164, %v2163
  %v2315 = vpack.c.b16 %v2166, %v2165
  %v2316 = vpack.c.b16 %v2168, %v2167
  %v2317 = vpack.c.b16 %v2170, %v2169
  %v2318 = vpack.c.b16 %v2172, %v2171
  %v2319 = vpack.c.b16 %v2174, %v2173
  %v2320 = vpack.c.b16 %v2176, %v2175
  %v2321 = vpack.c.b16 %v2178, %v2177
  %v2322 = vpack.c.b16 %v2180, %v2179
  %v2323 = vpack.c.b16 %v2182, %v2181
  %v2324 = vpack.c.b16 %v2184, %v2183
  %v2325 = vpack.c.b16 %v2186, %v2185
  %v2326 = vpack.c.b16 %v2188, %v2187
  %v2327 = vpack.c.b16 %v2190, %v2189
  %v2328 = vpack.c.b16 %v2192, %v2191
  %v2329 = vpack.c.b16 %v2194, %v2193
  %v2330 = vpack.c.b16 %v2196, %v2195
  %v2331 = vpack.c.b16 %v2198, %v2197
  %v2332 = vpack.c.b16 %v2200, %v2199
  %v2333 = vpack.c.b16 %v2202, %v2201
  %v2334 = vpack.c.b16 %v2204, %v2203
  %v2335 = vpack.c.b16 %v2206, %v2205
  %v2336 = vpack.c.b16 %v2208, %v2207
  %v2337 = vpack.c.b16 %v2210, %v2209
  %v2338 = vpack.c.b16 %v2212, %v2211
  %v2339 = vpack.c.b16 %v2214, %v2213
  %v2340 = vpack.c.b16 %v2216, %v2215
  %v2341 = vpack.c.b16 %v2218, %v2217
  %v2342 = vpack.c.b16 %v2220, %v2219
  %v2343 = vpack.c.b16 %v2222, %v2221
  %v2344 = vpack.c.b16 %v2224, %v2223
  %v2345 = vpack.c.b16 %v2226, %v2225
  %v2346 = vpack.c.b16 %v2228, %v2227
  %v2347 = vpack.c.b16 %v2230, %v2229
  %v2348 = vpack.c.b16 %v2232, %v2231
  %v2349 = vpack.c.b16 %v2234, %v2233
  %v2350 = vpack.c.b16 %v2236, %v2235
  %v2351 = vpack.c.b16 %v2238, %v2237
  %v2352 = vpack.c.b16 %v2240, %v2239
  %v2353 = vpack.c.b16 %v2242, %v2241
  %v2354 = vpack.c.b16 %v2244, %v2243
  %v2355 = vpack.c.b16 %v2246, %v2245
  %v2356 = vpack.c.b16 %v2248, %v2247
  %v2357 = vpack.c.b16 %v2250, %v2249
  %v2358 = vpack.c.b16 %v2252, %v2251
  %v2359 = vpack.c.b16 %v2254, %v2253
  %v2360 = vpack.c.b16 %v2256, %v2255
  %v2361 = vpack.c.b16 %v2258, %v2257
  %v2362 = vpack.c.b16 %v2260, %v2259
  %v2363 = vpack.c.b16 %v2262, %v2261
  %v2364 = vpack.c.b16 %v2264, %v2263
  %v2365 = vpack.c.b16 %v2266, %v2265
  %v2366 = vpack.c.b16 %v2268, %v2267
  %2465 = vmatprep.subr.bf16.mxu0 0
  %2466 = vmatpush1.bf16.msra.mxu0 %v847
  %2467 = vmatprep.subr.bf16.mxu0 0
  %2468 = vmatpush1.bf16.msra.mxu0 %v848
  %2469 = vmatprep.subr.bf16.mxu0 0
  %2470 = vmatpush1.bf16.msra.mxu0 %v849
  %2471 = vmatprep.subr.bf16.mxu0 0
  %2472 = vmatpush1.bf16.msra.mxu0 %v850
  %2473 = vmatprep.subr.bf16.mxu0 0
  %2474 = vmatpush1.bf16.msra.mxu0 %v851
  %2475 = vmatprep.subr.bf16.mxu0 0
  %2476 = vmatpush1.bf16.msra.mxu0 %v852
  %2477 = vmatprep.subr.bf16.mxu0 0
  %2478 = vmatpush1.bf16.msra.mxu0 %v853
  %2479 = vmatprep.subr.bf16.mxu0 0
  %2480 = vmatpush1.bf16.msra.mxu0 %v854
  %2481 = vmatprep.subr.bf16.mxu0 0
  %2482 = vmatpush1.bf16.msra.mxu0 0
  %2483 = vmatprep.subr.bf16.mxu0 0
  %2484 = vmatpush1.bf16.msra.mxu0 0
  %2485 = vmatprep.subr.bf16.mxu0 0
  %2486 = vmatpush1.bf16.msra.mxu0 0
  %2487 = vmatprep.subr.bf16.mxu0 0
  %2488 = vmatpush1.bf16.msra.mxu0 0
  %2489 = vmatprep.subr.bf16.mxu0 0
  %2490 = vmatpush1.bf16.msra.mxu0 0
  %2491 = vmatprep.subr.bf16.mxu0 0
  %2492 = vmatpush1.bf16.msra.mxu0 0
  %2493 = vmatprep.subr.bf16.mxu0 0
  %2494 = vmatpush1.bf16.msra.mxu0 0
  %2495 = vmatprep.subr.bf16.mxu0 0
  %2496 = vmatpush1.bf16.msra.mxu0 0
  %2497 = vmatprep.mubr.bf16.mxu0 0
  %2498 = vmatmul.mubr.bf16.gmra.mrb[0].mxu0 %v2269
  %v2499 = vpop.f32.mrb[0].mxu0
  %v2500 = vadd.f32 0.0, %v2499
  %v2501 = vpop.f32.mrb[0].mxu0
  %v2502 = vpop.f32.mrb[0].mxu0
  %v2503 = vadd.f32 0.0, %v2502
  %v2504 = vpop.f32.mrb[0].mxu0
  %2505 = vmatprep.mubr.bf16.mxu0 0
  %2506 = vmatmul.mubr.bf16.gmra.mrb[0].mxu0 %v2270
  %v2507 = vpop.f32.mrb[0].mxu0
  %v2508 = vadd.f32 0.0, %v2507
  %v2509 = vpop.f32.mrb[0].mxu0
  %v2510 = vpop.f32.mrb[0].mxu0
  %v2511 = vadd.f32 0.0, %v2510
  %v2512 = vpop.f32.mrb[0].mxu0
  %2513 = vmatprep.mubr.bf16.mxu0 0
  %2514 = vmatmul.mubr.bf16.gmra.mrb[0].mxu0 %v2271
  %v2515 = vpop.f32.mrb[0].mxu0
  %v2516 = vadd.f32 0.0, %v2515
  %v2517 = vpop.f32.mrb[0].mxu0
  %v2518 = vpop.f32.mrb[0].mxu0
  %v2519 = vadd.f32 0.0, %v2518
  %v2520 = vpop.f32.mrb[0].mxu0
  %2521 = vmatprep.mubr.bf16.mxu0 0
  %2522 = vmatmul.mubr.bf16.gmra.mrb[0].mxu0 %v2272
  %v2523 = vpop.f32.mrb[0].mxu0
  %v2524 = vadd.f32 0.0, %v2523
  %v2525 = vpop.f32.mrb[0].mxu0
  %v2526 = vpop.f32.mrb[0].mxu0
  %v2527 = vadd.f32 0.0, %v2526
  %v2528 = vpop.f32.mrb[0].mxu0
  %2529 = vmatprep.mubr.bf16.mxu0 0
  %2530 = vmatmul.mubr.bf16.gmra.mrb[0].mxu0 %v2273
  %v2531 = vpop.f32.mrb[0].mxu0
  %v2532 = vadd.f32 0.0, %v2531
  %v2533 = vpop.f32.mrb[0].mxu0
  %v2534 = vpop.f32.mrb[0].mxu0
  %v2535 = vadd.f32 0.0, %v2534
  %v2536 = vpop.f32.mrb[0].mxu0
  %2537 = vmatprep.mubr.bf16.mxu0 0
  %2538 = vmatmul.mubr.bf16.gmra.mrb[0].mxu0 %v2274
  %v2539 = vpop.f32.mrb[0].mxu0
  %v2540 = vadd.f32 0.0, %v2539
  %v2541 = vpop.f32.mrb[0].mxu0
  %v2542 = vpop.f32.mrb[0].mxu0
  %v2543 = vadd.f32 0.0, %v2542
  %v2544 = vpop.f32.mrb[0].mxu0
  %2545 = vmatprep.mubr.bf16.mxu0 0
  %2546 = vmatmul.mubr.bf16.gmra.mrb[0].mxu0 %v2275
  %v2547 = vpop.f32.mrb[0].mxu0
  %v2548 = vadd.f32 0.0, %v2547
  %v2549 = vpop.f32.mrb[0].mxu0
  %v2550 = vpop.f32.mrb[0].mxu0
  %v2551 = vadd.f32 0.0, %v2550
  %v2552 = vpop.f32.mrb[0].mxu0
  %2553 = vmatprep.mubr.bf16.mxu0 0
  %2554 = vmatmul.mubr.bf16.gmra.mrb[0].mxu0 %v2276
  %v2555 = vpop.f32.mrb[0].mxu0
  %v2556 = vadd.f32 0.0, %v2555
  %v2557 = vpop.f32.mrb[0].mxu0
  %v2558 = vpop.f32.mrb[0].mxu0
  %v2559 = vadd.f32 0.0, %v2558
  %v2560 = vpop.f32.mrb[0].mxu0
  %2561 = vmatprep.mubr.bf16.mxu0 0
  %2562 = vmatmul.mubr.bf16.gmra.mrb[0].mxu0 %v2277
  %v2563 = vpop.f32.mrb[0].mxu0
  %v2564 = vadd.f32 0.0, %v2563
  %v2565 = vpop.f32.mrb[0].mxu0
  %v2566 = vpop.f32.mrb[0].mxu0
  %v2567 = vadd.f32 0.0, %v2566
  %v2568 = vpop.f32.mrb[0].mxu0
  %2569 = vmatprep.mubr.bf16.mxu0 0
  %2570 = vmatmul.mubr.bf16.gmra.mrb[0].mxu0 %v2278
  %v2571 = vpop.f32.mrb[0].mxu0
  %v2572 = vadd.f32 0.0, %v2571
  %v2573 = vpop.f32.mrb[0].mxu0
  %v2574 = vpop.f32.mrb[0].mxu0
  %v2575 = vadd.f32 0.0, %v2574
  %v2576 = vpop.f32.mrb[0].mxu0
  %2577 = vmatprep.mubr.bf16.mxu0 0
  %2578 = vmatmul.mubr.bf16.gmra.mrb[0].mxu0 %v2279
  %v2579 = vpop.f32.mrb[0].mxu0
  %v2580 = vadd.f32 0.0, %v2579
  %v2581 = vpop.f32.mrb[0].mxu0
  %v2582 = vpop.f32.mrb[0].mxu0
  %v2583 = vadd.f32 0.0, %v2582
  %v2584 = vpop.f32.mrb[0].mxu0
  %2585 = vmatprep.mubr.bf16.mxu0 0
  %2586 = vmatmul.mubr.bf16.gmra.mrb[0].mxu0 %v2280
  %v2587 = vpop.f32.mrb[0].mxu0
  %v2588 = vadd.f32 0.0, %v2587
  %v2589 = vpop.f32.mrb[0].mxu0
  %v2590 = vpop.f32.mrb[0].mxu0
  %v2591 = vadd.f32 0.0, %v2590
  %v2592 = vpop.f32.mrb[0].mxu0
  %2593 = vmatprep.mubr.bf16.mxu0 0
  %2594 = vmatmul.mubr.bf16.gmra.mrb[0].mxu0 %v2281
  %v2595 = vpop.f32.mrb[0].mxu0
  %v2596 = vadd.f32 0.0, %v2595
  %v2597 = vpop.f32.mrb[0].mxu0
  %v2598 = vpop.f32.mrb[0].mxu0
  %v2599 = vadd.f32 0.0, %v2598
  %v2600 = vpop.f32.mrb[0].mxu0
  %2601 = vmatprep.mubr.bf16.mxu0 0
  %2602 = vmatmul.mubr.bf16.gmra.mrb[0].mxu0 %v2282
  %v2603 = vpop.f32.mrb[0].mxu0
  %v2604 = vadd.f32 0.0, %v2603
  %v2605 = vpop.f32.mrb[0].mxu0
  %v2606 = vpop.f32.mrb[0].mxu0
  %v2607 = vadd.f32 0.0, %v2606
  %v2608 = vpop.f32.mrb[0].mxu0
  %2609 = vmatprep.mubr.bf16.mxu0 0
  %2610 = vmatmul.mubr.bf16.gmra.mrb[0].mxu0 %v2283
  %v2611 = vpop.f32.mrb[0].mxu0
  %v2612 = vadd.f32 0.0, %v2611
  %v2613 = vpop.f32.mrb[0].mxu0
  %v2614 = vpop.f32.mrb[0].mxu0
  %v2615 = vadd.f32 0.0, %v2614
  %v2616 = vpop.f32.mrb[0].mxu0
  %2617 = vmatprep.mubr.bf16.mxu0 0
  %2618 = vmatmul.mubr.bf16.gmra.mrb[0].mxu0 %v2284
  %v2619 = vpop.f32.mrb[0].mxu0
  %v2620 = vadd.f32 0.0, %v2619
  %v2621 = vpop.f32.mrb[0].mxu0
  %v2622 = vpop.f32.mrb[0].mxu0
  %v2623 = vadd.f32 0.0, %v2622
  %v2624 = vpop.f32.mrb[0].mxu0
  %2625 = vmatprep.mubr.bf16.mxu0 0
  %2626 = vmatmul.mubr.bf16.gmra.mrb[0].mxu0 %v2285
  %v2627 = vpop.f32.mrb[0].mxu0
  %v2628 = vadd.f32 0.0, %v2627
  %v2629 = vpop.f32.mrb[0].mxu0
  %v2630 = vpop.f32.mrb[0].mxu0
  %v2631 = vadd.f32 0.0, %v2630
  %v2632 = vpop.f32.mrb[0].mxu0
  %2633 = vmatprep.mubr.bf16.mxu0 0
  %2634 = vmatmul.mubr.bf16.gmra.mrb[0].mxu0 %v2286
  %v2635 = vpop.f32.mrb[0].mxu0
  %v2636 = vadd.f32 0.0, %v2635
  %v2637 = vpop.f32.mrb[0].mxu0
  %v2638 = vpop.f32.mrb[0].mxu0
  %v2639 = vadd.f32 0.0, %v2638
  %v2640 = vpop.f32.mrb[0].mxu0
  %2641 = vmatprep.mubr.bf16.mxu0 0
  %2642 = vmatmul.mubr.bf16.gmra.mrb[0].mxu0 %v2287
  %v2643 = vpop.f32.mrb[0].mxu0
  %v2644 = vadd.f32 0.0, %v2643
  %v2645 = vpop.f32.mrb[0].mxu0
  %v2646 = vpop.f32.mrb[0].mxu0
  %v2647 = vadd.f32 0.0, %v2646
  %v2648 = vpop.f32.mrb[0].mxu0
  %2649 = vmatprep.mubr.bf16.mxu0 0
  %2650 = vmatmul.mubr.bf16.gmra.mrb[0].mxu0 %v2288
  %v2651 = vpop.f32.mrb[0].mxu0
  %v2652 = vadd.f32 0.0, %v2651
  %v2653 = vpop.f32.mrb[0].mxu0
  %v2654 = vpop.f32.mrb[0].mxu0
  %v2655 = vadd.f32 0.0, %v2654
  %v2656 = vpop.f32.mrb[0].mxu0
  %2657 = vmatprep.mubr.bf16.mxu0 0
  %2658 = vmatmul.mubr.bf16.gmra.mrb[0].mxu0 %v2289
  %v2659 = vpop.f32.mrb[0].mxu0
  %v2660 = vadd.f32 0.0, %v2659
  %v2661 = vpop.f32.mrb[0].mxu0
  %v2662 = vpop.f32.mrb[0].mxu0
  %v2663 = vadd.f32 0.0, %v2662
  %v2664 = vpop.f32.mrb[0].mxu0
  %2665 = vmatprep.mubr.bf16.mxu0 0
  %2666 = vmatmul.mubr.bf16.gmra.mrb[0].mxu0 %v2290
  %v2667 = vpop.f32.mrb[0].mxu0
  %v2668 = vadd.f32 0.0, %v2667
  %v2669 = vpop.f32.mrb[0].mxu0
  %v2670 = vpop.f32.mrb[0].mxu0
  %v2671 = vadd.f32 0.0, %v2670
  %v2672 = vpop.f32.mrb[0].mxu0
  %2673 = vmatprep.mubr.bf16.mxu0 0
  %2674 = vmatmul.mubr.bf16.gmra.mrb[0].mxu0 %v2291
  %v2675 = vpop.f32.mrb[0].mxu0
  %v2676 = vadd.f32 0.0, %v2675
  %v2677 = vpop.f32.mrb[0].mxu0
  %v2678 = vpop.f32.mrb[0].mxu0
  %v2679 = vadd.f32 0.0, %v2678
  %v2680 = vpop.f32.mrb[0].mxu0
  %2681 = vmatprep.mubr.bf16.mxu0 0
  %2682 = vmatmul.mubr.bf16.gmra.mrb[0].mxu0 %v2292
  %v2683 = vpop.f32.mrb[0].mxu0
  %v2684 = vadd.f32 0.0, %v2683
  %v2685 = vpop.f32.mrb[0].mxu0
  %v2686 = vpop.f32.mrb[0].mxu0
  %v2687 = vadd.f32 0.0, %v2686
  %v2688 = vpop.f32.mrb[0].mxu0
  %2689 = vmatprep.mubr.bf16.mxu0 0
  %2690 = vmatmul.mubr.bf16.gmra.mrb[0].mxu0 %v2293
  %v2691 = vpop.f32.mrb[0].mxu0
  %v2692 = vadd.f32 0.0, %v2691
  %v2693 = vpop.f32.mrb[0].mxu0
  %v2694 = vpop.f32.mrb[0].mxu0
  %v2695 = vadd.f32 0.0, %v2694
  %v2696 = vpop.f32.mrb[0].mxu0
  %2697 = vmatprep.mubr.bf16.mxu0 0
  %2698 = vmatmul.mubr.bf16.gmra.mrb[0].mxu0 %v2294
  %v2699 = vpop.f32.mrb[0].mxu0
  %v2700 = vadd.f32 0.0, %v2699
  %v2701 = vpop.f32.mrb[0].mxu0
  %v2702 = vpop.f32.mrb[0].mxu0
  %v2703 = vadd.f32 0.0, %v2702
  %v2704 = vpop.f32.mrb[0].mxu0
  %2705 = vmatprep.mubr.bf16.mxu0 0
  %2706 = vmatmul.mubr.bf16.gmra.mrb[0].mxu0 %v2295
  %v2707 = vpop.f32.mrb[0].mxu0
  %v2708 = vadd.f32 0.0, %v2707
  %v2709 = vpop.f32.mrb[0].mxu0
  %v2710 = vpop.f32.mrb[0].mxu0
  %v2711 = vadd.f32 0.0, %v2710
  %v2712 = vpop.f32.mrb[0].mxu0
  %2713 = vmatprep.mubr.bf16.mxu0 0
  %2714 = vmatmul.mubr.bf16.gmra.mrb[0].mxu0 %v2296
  %v2715 = vpop.f32.mrb[0].mxu0
  %v2716 = vadd.f32 0.0, %v2715
  %v2717 = vpop.f32.mrb[0].mxu0
  %v2718 = vpop.f32.mrb[0].mxu0
  %v2719 = vadd.f32 0.0, %v2718
  %v2720 = vpop.f32.mrb[0].mxu0
  %2721 = vmatprep.mubr.bf16.mxu0 0
  %2722 = vmatmul.mubr.bf16.gmra.mrb[0].mxu0 %v2297
  %v2723 = vpop.f32.mrb[0].mxu0
  %v2724 = vadd.f32 0.0, %v2723
  %v2725 = vpop.f32.mrb[0].mxu0
  %v2726 = vpop.f32.mrb[0].mxu0
  %v2727 = vadd.f32 0.0, %v2726
  %v2728 = vpop.f32.mrb[0].mxu0
  %2729 = vmatprep.mubr.bf16.mxu0 0
  %2730 = vmatmul.mubr.bf16.gmra.mrb[0].mxu0 %v2298
  %v2731 = vpop.f32.mrb[0].mxu0
  %v2732 = vadd.f32 0.0, %v2731
  %v2733 = vpop.f32.mrb[0].mxu0
  %v2734 = vpop.f32.mrb[0].mxu0
  %v2735 = vadd.f32 0.0, %v2734
  %v2736 = vpop.f32.mrb[0].mxu0
  %2737 = vmatprep.mubr.bf16.mxu0 0
  %2738 = vmatmul.mubr.bf16.gmra.mrb[0].mxu0 %v2299
  %v2739 = vpop.f32.mrb[0].mxu0
  %v2740 = vadd.f32 0.0, %v2739
  %v2741 = vpop.f32.mrb[0].mxu0
  %v2742 = vpop.f32.mrb[0].mxu0
  %v2743 = vadd.f32 0.0, %v2742
  %v2744 = vpop.f32.mrb[0].mxu0
  %2745 = vmatprep.mubr.bf16.mxu0 0
  %2746 = vmatmul.mubr.bf16.gmra.mrb[0].mxu0 %v2300
  %v2747 = vpop.f32.mrb[0].mxu0
  %v2748 = vadd.f32 0.0, %v2747
  %v2749 = vpop.f32.mrb[0].mxu0
  %v2750 = vpop.f32.mrb[0].mxu0
  %v2751 = vadd.f32 0.0, %v2750
  %v2752 = vpop.f32.mrb[0].mxu0
  %2753 = vmatprep.mubr.bf16.mxu0 0
  %2754 = vmatmul.mubr.bf16.gmra.mrb[0].mxu0 %v2301
  %v2755 = vpop.f32.mrb[0].mxu0
  %v2756 = vadd.f32 0.0, %v2755
  %v2757 = vpop.f32.mrb[0].mxu0
  %v2758 = vpop.f32.mrb[0].mxu0
  %v2759 = vadd.f32 0.0, %v2758
  %v2760 = vpop.f32.mrb[0].mxu0
  %2761 = vmatprep.mubr.bf16.mxu0 0
  %2762 = vmatmul.mubr.bf16.gmra.mrb[0].mxu0 %v2302
  %v2763 = vpop.f32.mrb[0].mxu0
  %v2764 = vadd.f32 0.0, %v2763
  %v2765 = vpop.f32.mrb[0].mxu0
  %v2766 = vpop.f32.mrb[0].mxu0
  %v2767 = vadd.f32 0.0, %v2766
  %v2768 = vpop.f32.mrb[0].mxu0
  %2769 = vmatprep.mubr.bf16.mxu0 0
  %2770 = vmatmul.mubr.bf16.gmra.mrb[0].mxu0 %v2303
  %v2771 = vpop.f32.mrb[0].mxu0
  %v2772 = vadd.f32 0.0, %v2771
  %v2773 = vpop.f32.mrb[0].mxu0
  %v2774 = vpop.f32.mrb[0].mxu0
  %v2775 = vadd.f32 0.0, %v2774
  %v2776 = vpop.f32.mrb[0].mxu0
  %2777 = vmatprep.mubr.bf16.mxu0 0
  %2778 = vmatmul.mubr.bf16.gmra.mrb[0].mxu0 %v2304
  %v2779 = vpop.f32.mrb[0].mxu0
  %v2780 = vadd.f32 0.0, %v2779
  %v2781 = vpop.f32.mrb[0].mxu0
  %v2782 = vpop.f32.mrb[0].mxu0
  %v2783 = vadd.f32 0.0, %v2782
  %v2784 = vpop.f32.mrb[0].mxu0
  %2785 = vmatprep.mubr.bf16.mxu0 0
  %2786 = vmatmul.mubr.bf16.gmra.mrb[0].mxu0 %v2305
  %v2787 = vpop.f32.mrb[0].mxu0
  %v2788 = vadd.f32 0.0, %v2787
  %v2789 = vpop.f32.mrb[0].mxu0
  %v2790 = vpop.f32.mrb[0].mxu0
  %v2791 = vadd.f32 0.0, %v2790
  %v2792 = vpop.f32.mrb[0].mxu0
  %2793 = vmatprep.mubr.bf16.mxu0 0
  %2794 = vmatmul.mubr.bf16.gmra.mrb[0].mxu0 %v2306
  %v2795 = vpop.f32.mrb[0].mxu0
  %v2796 = vadd.f32 0.0, %v2795
  %v2797 = vpop.f32.mrb[0].mxu0
  %v2798 = vpop.f32.mrb[0].mxu0
  %v2799 = vadd.f32 0.0, %v2798
  %v2800 = vpop.f32.mrb[0].mxu0
  %2801 = vmatprep.mubr.bf16.mxu0 0
  %2802 = vmatmul.mubr.bf16.gmra.mrb[0].mxu0 %v2307
  %v2803 = vpop.f32.mrb[0].mxu0
  %v2804 = vadd.f32 0.0, %v2803
  %v2805 = vpop.f32.mrb[0].mxu0
  %v2806 = vpop.f32.mrb[0].mxu0
  %v2807 = vadd.f32 0.0, %v2806
  %v2808 = vpop.f32.mrb[0].mxu0
  %2809 = vmatprep.mubr.bf16.mxu0 0
  %2810 = vmatmul.mubr.bf16.gmra.mrb[0].mxu0 %v2308
  %v2811 = vpop.f32.mrb[0].mxu0
  %v2812 = vadd.f32 0.0, %v2811
  %v2813 = vpop.f32.mrb[0].mxu0
  %v2814 = vpop.f32.mrb[0].mxu0
  %v2815 = vadd.f32 0.0, %v2814
  %v2816 = vpop.f32.mrb[0].mxu0
  %2817 = vmatprep.mubr.bf16.mxu0 0
  %2818 = vmatmul.mubr.bf16.gmra.mrb[0].mxu0 %v2309
  %v2819 = vpop.f32.mrb[0].mxu0
  %v2820 = vadd.f32 0.0, %v2819
  %v2821 = vpop.f32.mrb[0].mxu0
  %v2822 = vpop.f32.mrb[0].mxu0
  %v2823 = vadd.f32 0.0, %v2822
  %v2824 = vpop.f32.mrb[0].mxu0
  %2825 = vmatprep.mubr.bf16.mxu0 0
  %2826 = vmatmul.mubr.bf16.gmra.mrb[0].mxu0 %v2310
  %v2827 = vpop.f32.mrb[0].mxu0
  %v2828 = vadd.f32 0.0, %v2827
  %v2829 = vpop.f32.mrb[0].mxu0
  %v2830 = vpop.f32.mrb[0].mxu0
  %v2831 = vadd.f32 0.0, %v2830
  %v2832 = vpop.f32.mrb[0].mxu0
  %2833 = vmatprep.mubr.bf16.mxu0 0
  %2834 = vmatmul.mubr.bf16.gmra.mrb[0].mxu0 %v2311
  %v2835 = vpop.f32.mrb[0].mxu0
  %v2836 = vadd.f32 0.0, %v2835
  %v2837 = vpop.f32.mrb[0].mxu0
  %v2838 = vpop.f32.mrb[0].mxu0
  %v2839 = vadd.f32 0.0, %v2838
  %v2840 = vpop.f32.mrb[0].mxu0
  %2841 = vmatprep.mubr.bf16.mxu0 0
  %2842 = vmatmul.mubr.bf16.gmra.mrb[0].mxu0 %v2312
  %v2843 = vpop.f32.mrb[0].mxu0
  %v2844 = vadd.f32 0.0, %v2843
  %v2845 = vpop.f32.mrb[0].mxu0
  %v2846 = vpop.f32.mrb[0].mxu0
  %v2847 = vadd.f32 0.0, %v2846
  %v2848 = vpop.f32.mrb[0].mxu0
  %2849 = vmatprep.mubr.bf16.mxu0 0
  %2850 = vmatmul.mubr.bf16.gmra.mrb[0].mxu0 %v2313
  %v2851 = vpop.f32.mrb[0].mxu0
  %v2852 = vadd.f32 0.0, %v2851
  %v2853 = vpop.f32.mrb[0].mxu0
  %v2854 = vpop.f32.mrb[0].mxu0
  %v2855 = vadd.f32 0.0, %v2854
  %v2856 = vpop.f32.mrb[0].mxu0
  %2857 = vmatprep.mubr.bf16.mxu0 0
  %2858 = vmatmul.mubr.bf16.gmra.mrb[0].mxu0 %v2314
  %v2859 = vpop.f32.mrb[0].mxu0
  %v2860 = vadd.f32 0.0, %v2859
  %v2861 = vpop.f32.mrb[0].mxu0
  %v2862 = vpop.f32.mrb[0].mxu0
  %v2863 = vadd.f32 0.0, %v2862
  %v2864 = vpop.f32.mrb[0].mxu0
  %2865 = vmatprep.mubr.bf16.mxu0 0
  %2866 = vmatmul.mubr.bf16.gmra.mrb[0].mxu0 %v2315
  %v2867 = vpop.f32.mrb[0].mxu0
  %v2868 = vadd.f32 0.0, %v2867
  %v2869 = vpop.f32.mrb[0].mxu0
  %v2870 = vpop.f32.mrb[0].mxu0
  %v2871 = vadd.f32 0.0, %v2870
  %v2872 = vpop.f32.mrb[0].mxu0
  %2873 = vmatprep.mubr.bf16.mxu0 0
  %2874 = vmatmul.mubr.bf16.gmra.mrb[0].mxu0 %v2316
  %v2875 = vpop.f32.mrb[0].mxu0
  %v2876 = vadd.f32 0.0, %v2875
  %v2877 = vpop.f32.mrb[0].mxu0
  %v2878 = vpop.f32.mrb[0].mxu0
  %v2879 = vadd.f32 0.0, %v2878
  %v2880 = vpop.f32.mrb[0].mxu0
  %2881 = vmatprep.mubr.bf16.mxu0 0
  %2882 = vmatmul.mubr.bf16.gmra.mrb[0].mxu0 %v2317
  %v2883 = vpop.f32.mrb[0].mxu0
  %v2884 = vadd.f32 0.0, %v2883
  %v2885 = vpop.f32.mrb[0].mxu0
  %v2886 = vpop.f32.mrb[0].mxu0
  %v2887 = vadd.f32 0.0, %v2886
  %v2888 = vpop.f32.mrb[0].mxu0
  %2889 = vmatprep.mubr.bf16.mxu0 0
  %2890 = vmatmul.mubr.bf16.gmra.mrb[0].mxu0 %v2318
  %v2891 = vpop.f32.mrb[0].mxu0
  %v2892 = vadd.f32 0.0, %v2891
  %v2893 = vpop.f32.mrb[0].mxu0
  %v2894 = vpop.f32.mrb[0].mxu0
  %v2895 = vadd.f32 0.0, %v2894
  %v2896 = vpop.f32.mrb[0].mxu0
  %2897 = vmatprep.mubr.bf16.mxu0 0
  %2898 = vmatmul.mubr.bf16.gmra.mrb[0].mxu0 %v2319
  %v2899 = vpop.f32.mrb[0].mxu0
  %v2900 = vadd.f32 0.0, %v2899
  %v2901 = vpop.f32.mrb[0].mxu0
  %v2902 = vpop.f32.mrb[0].mxu0
  %v2903 = vadd.f32 0.0, %v2902
  %v2904 = vpop.f32.mrb[0].mxu0
  %2905 = vmatprep.mubr.bf16.mxu0 0
  %2906 = vmatmul.mubr.bf16.gmra.mrb[0].mxu0 %v2320
  %v2907 = vpop.f32.mrb[0].mxu0
  %v2908 = vadd.f32 0.0, %v2907
  %v2909 = vpop.f32.mrb[0].mxu0
  %v2910 = vpop.f32.mrb[0].mxu0
  %v2911 = vadd.f32 0.0, %v2910
  %v2912 = vpop.f32.mrb[0].mxu0
  %2913 = vmatprep.mubr.bf16.mxu0 0
  %2914 = vmatmul.mubr.bf16.gmra.mrb[0].mxu0 %v2321
  %v2915 = vpop.f32.mrb[0].mxu0
  %v2916 = vadd.f32 0.0, %v2915
  %v2917 = vpop.f32.mrb[0].mxu0
  %v2918 = vpop.f32.mrb[0].mxu0
  %v2919 = vadd.f32 0.0, %v2918
  %v2920 = vpop.f32.mrb[0].mxu0
  %2921 = vmatprep.mubr.bf16.mxu0 0
  %2922 = vmatmul.mubr.bf16.gmra.mrb[0].mxu0 %v2322
  %v2923 = vpop.f32.mrb[0].mxu0
  %v2924 = vadd.f32 0.0, %v2923
  %v2925 = vpop.f32.mrb[0].mxu0
  %v2926 = vpop.f32.mrb[0].mxu0
  %v2927 = vadd.f32 0.0, %v2926
  %v2928 = vpop.f32.mrb[0].mxu0
  %2929 = vmatprep.mubr.bf16.mxu0 0
  %2930 = vmatmul.mubr.bf16.gmra.mrb[0].mxu0 %v2323
  %v2931 = vpop.f32.mrb[0].mxu0
  %v2932 = vadd.f32 0.0, %v2931
  %v2933 = vpop.f32.mrb[0].mxu0
  %v2934 = vpop.f32.mrb[0].mxu0
  %v2935 = vadd.f32 0.0, %v2934
  %v2936 = vpop.f32.mrb[0].mxu0
  %2937 = vmatprep.mubr.bf16.mxu0 0
  %2938 = vmatmul.mubr.bf16.gmra.mrb[0].mxu0 %v2324
  %v2939 = vpop.f32.mrb[0].mxu0
  %v2940 = vadd.f32 0.0, %v2939
  %v2941 = vpop.f32.mrb[0].mxu0
  %v2942 = vpop.f32.mrb[0].mxu0
  %v2943 = vadd.f32 0.0, %v2942
  %v2944 = vpop.f32.mrb[0].mxu0
  %2945 = vmatprep.mubr.bf16.mxu0 0
  %2946 = vmatmul.mubr.bf16.gmra.mrb[0].mxu0 %v2325
  %v2947 = vpop.f32.mrb[0].mxu0
  %v2948 = vadd.f32 0.0, %v2947
  %v2949 = vpop.f32.mrb[0].mxu0
  %v2950 = vpop.f32.mrb[0].mxu0
  %v2951 = vadd.f32 0.0, %v2950
  %v2952 = vpop.f32.mrb[0].mxu0
  %2953 = vmatprep.mubr.bf16.mxu0 0
  %2954 = vmatmul.mubr.bf16.gmra.mrb[0].mxu0 %v2326
  %v2955 = vpop.f32.mrb[0].mxu0
  %v2956 = vadd.f32 0.0, %v2955
  %v2957 = vpop.f32.mrb[0].mxu0
  %v2958 = vpop.f32.mrb[0].mxu0
  %v2959 = vadd.f32 0.0, %v2958
  %v2960 = vpop.f32.mrb[0].mxu0
  %2961 = vmatprep.mubr.bf16.mxu0 0
  %2962 = vmatmul.mubr.bf16.gmra.mrb[0].mxu0 %v2327
  %v2963 = vpop.f32.mrb[0].mxu0
  %v2964 = vadd.f32 0.0, %v2963
  %v2965 = vpop.f32.mrb[0].mxu0
  %v2966 = vpop.f32.mrb[0].mxu0
  %v2967 = vadd.f32 0.0, %v2966
  %v2968 = vpop.f32.mrb[0].mxu0
  %2969 = vmatprep.mubr.bf16.mxu0 0
  %2970 = vmatmul.mubr.bf16.gmra.mrb[0].mxu0 %v2328
  %v2971 = vpop.f32.mrb[0].mxu0
  %v2972 = vadd.f32 0.0, %v2971
  %v2973 = vpop.f32.mrb[0].mxu0
  %v2974 = vpop.f32.mrb[0].mxu0
  %v2975 = vadd.f32 0.0, %v2974
  %v2976 = vpop.f32.mrb[0].mxu0
  %2977 = vmatprep.mubr.bf16.mxu0 0
  %2978 = vmatmul.mubr.bf16.gmra.mrb[0].mxu0 %v2329
  %v2979 = vpop.f32.mrb[0].mxu0
  %v2980 = vadd.f32 0.0, %v2979
  %v2981 = vpop.f32.mrb[0].mxu0
  %v2982 = vpop.f32.mrb[0].mxu0
  %v2983 = vadd.f32 0.0, %v2982
  %v2984 = vpop.f32.mrb[0].mxu0
  %2985 = vmatprep.mubr.bf16.mxu0 0
  %2986 = vmatmul.mubr.bf16.gmra.mrb[0].mxu0 %v2330
  %v2987 = vpop.f32.mrb[0].mxu0
  %v2988 = vadd.f32 0.0, %v2987
  %v2989 = vpop.f32.mrb[0].mxu0
  %v2990 = vpop.f32.mrb[0].mxu0
  %v2991 = vadd.f32 0.0, %v2990
  %v2992 = vpop.f32.mrb[0].mxu0
  %2993 = vmatprep.mubr.bf16.mxu0 0
  %2994 = vmatmul.mubr.bf16.gmra.mrb[0].mxu0 %v2331
  %v2995 = vpop.f32.mrb[0].mxu0
  %v2996 = vadd.f32 0.0, %v2995
  %v2997 = vpop.f32.mrb[0].mxu0
  %v2998 = vpop.f32.mrb[0].mxu0
  %v2999 = vadd.f32 0.0, %v2998
  %v3000 = vpop.f32.mrb[0].mxu0
  %3001 = vmatprep.mubr.bf16.mxu0 0
  %3002 = vmatmul.mubr.bf16.gmra.mrb[0].mxu0 %v2332
  %v3003 = vpop.f32.mrb[0].mxu0
  %v3004 = vadd.f32 0.0, %v3003
  %v3005 = vpop.f32.mrb[0].mxu0
  %v3006 = vpop.f32.mrb[0].mxu0
  %v3007 = vadd.f32 0.0, %v3006
  %v3008 = vpop.f32.mrb[0].mxu0
  %3009 = vmatprep.mubr.bf16.mxu0 0
  %3010 = vmatmul.mubr.bf16.gmra.mrb[0].mxu0 %v2333
  %v3011 = vpop.f32.mrb[0].mxu0
  %v3012 = vadd.f32 0.0, %v3011
  %v3013 = vpop.f32.mrb[0].mxu0
  %v3014 = vpop.f32.mrb[0].mxu0
  %v3015 = vadd.f32 0.0, %v3014
  %v3016 = vpop.f32.mrb[0].mxu0
  %3017 = vmatprep.mubr.bf16.mxu0 0
  %3018 = vmatmul.mubr.bf16.gmra.mrb[0].mxu0 %v2334
  %v3019 = vpop.f32.mrb[0].mxu0
  %v3020 = vadd.f32 0.0, %v3019
  %v3021 = vpop.f32.mrb[0].mxu0
  %v3022 = vpop.f32.mrb[0].mxu0
  %v3023 = vadd.f32 0.0, %v3022
  %v3024 = vpop.f32.mrb[0].mxu0
  %3025 = vmatprep.mubr.bf16.mxu0 0
  %3026 = vmatmul.mubr.bf16.gmra.mrb[0].mxu0 %v2335
  %v3027 = vpop.f32.mrb[0].mxu0
  %v3028 = vadd.f32 0.0, %v3027
  %v3029 = vpop.f32.mrb[0].mxu0
  %v3030 = vpop.f32.mrb[0].mxu0
  %v3031 = vadd.f32 0.0, %v3030
  %v3032 = vpop.f32.mrb[0].mxu0
  %3033 = vmatprep.mubr.bf16.mxu0 0
  %3034 = vmatmul.mubr.bf16.gmra.mrb[0].mxu0 %v2336
  %v3035 = vpop.f32.mrb[0].mxu0
  %v3036 = vadd.f32 0.0, %v3035
  %v3037 = vpop.f32.mrb[0].mxu0
  %v3038 = vpop.f32.mrb[0].mxu0
  %v3039 = vadd.f32 0.0, %v3038
  %v3040 = vpop.f32.mrb[0].mxu0
  %3041 = vmatprep.mubr.bf16.mxu0 0
  %3042 = vmatmul.mubr.bf16.gmra.mrb[0].mxu0 %v2337
  %v3043 = vpop.f32.mrb[0].mxu0
  %v3044 = vadd.f32 0.0, %v3043
  %v3045 = vpop.f32.mrb[0].mxu0
  %v3046 = vpop.f32.mrb[0].mxu0
  %v3047 = vadd.f32 0.0, %v3046
  %v3048 = vpop.f32.mrb[0].mxu0
  %3049 = vmatprep.mubr.bf16.mxu0 0
  %3050 = vmatmul.mubr.bf16.gmra.mrb[0].mxu0 %v2338
  %v3051 = vpop.f32.mrb[0].mxu0
  %v3052 = vadd.f32 0.0, %v3051
  %v3053 = vpop.f32.mrb[0].mxu0
  %v3054 = vpop.f32.mrb[0].mxu0
  %v3055 = vadd.f32 0.0, %v3054
  %v3056 = vpop.f32.mrb[0].mxu0
  %3057 = vmatprep.mubr.bf16.mxu0 0
  %3058 = vmatmul.mubr.bf16.gmra.mrb[0].mxu0 %v2339
  %v3059 = vpop.f32.mrb[0].mxu0
  %v3060 = vadd.f32 0.0, %v3059
  %v3061 = vpop.f32.mrb[0].mxu0
  %v3062 = vpop.f32.mrb[0].mxu0
  %v3063 = vadd.f32 0.0, %v3062
  %v3064 = vpop.f32.mrb[0].mxu0
  %3065 = vmatprep.mubr.bf16.mxu0 0
  %3066 = vmatmul.mubr.bf16.gmra.mrb[0].mxu0 %v2340
  %v3067 = vpop.f32.mrb[0].mxu0
  %v3068 = vadd.f32 0.0, %v3067
  %v3069 = vpop.f32.mrb[0].mxu0
  %v3070 = vpop.f32.mrb[0].mxu0
  %v3071 = vadd.f32 0.0, %v3070
  %v3072 = vpop.f32.mrb[0].mxu0
  %3073 = vmatprep.mubr.bf16.mxu0 0
  %3074 = vmatmul.mubr.bf16.gmra.mrb[0].mxu0 %v2341
  %v3075 = vpop.f32.mrb[0].mxu0
  %v3076 = vadd.f32 0.0, %v3075
  %v3077 = vpop.f32.mrb[0].mxu0
  %v3078 = vpop.f32.mrb[0].mxu0
  %v3079 = vadd.f32 0.0, %v3078
  %v3080 = vpop.f32.mrb[0].mxu0
  %3081 = vmatprep.mubr.bf16.mxu0 0
  %3082 = vmatmul.mubr.bf16.gmra.mrb[0].mxu0 %v2342
  %v3083 = vpop.f32.mrb[0].mxu0
  %v3084 = vadd.f32 0.0, %v3083
  %v3085 = vpop.f32.mrb[0].mxu0
  %v3086 = vpop.f32.mrb[0].mxu0
  %v3087 = vadd.f32 0.0, %v3086
  %v3088 = vpop.f32.mrb[0].mxu0
  %3089 = vmatprep.mubr.bf16.mxu0 0
  %3090 = vmatmul.mubr.bf16.gmra.mrb[0].mxu0 %v2343
  %v3091 = vpop.f32.mrb[0].mxu0
  %v3092 = vadd.f32 0.0, %v3091
  %v3093 = vpop.f32.mrb[0].mxu0
  %v3094 = vpop.f32.mrb[0].mxu0
  %v3095 = vadd.f32 0.0, %v3094
  %v3096 = vpop.f32.mrb[0].mxu0
  %3097 = vmatprep.mubr.bf16.mxu0 0
  %3098 = vmatmul.mubr.bf16.gmra.mrb[0].mxu0 %v2344
  %v3099 = vpop.f32.mrb[0].mxu0
  %v3100 = vadd.f32 0.0, %v3099
  %v3101 = vpop.f32.mrb[0].mxu0
  %v3102 = vpop.f32.mrb[0].mxu0
  %v3103 = vadd.f32 0.0, %v3102
  %v3104 = vpop.f32.mrb[0].mxu0
  %3105 = vmatprep.mubr.bf16.mxu0 0
  %3106 = vmatmul.mubr.bf16.gmra.mrb[0].mxu0 %v2345
  %v3107 = vpop.f32.mrb[0].mxu0
  %v3108 = vadd.f32 0.0, %v3107
  %v3109 = vpop.f32.mrb[0].mxu0
  %v3110 = vpop.f32.mrb[0].mxu0
  %v3111 = vadd.f32 0.0, %v3110
  %v3112 = vpop.f32.mrb[0].mxu0
  %3113 = vmatprep.mubr.bf16.mxu0 0
  %3114 = vmatmul.mubr.bf16.gmra.mrb[0].mxu0 %v2346
  %v3115 = vpop.f32.mrb[0].mxu0
  %v3116 = vadd.f32 0.0, %v3115
  %v3117 = vpop.f32.mrb[0].mxu0
  %v3118 = vpop.f32.mrb[0].mxu0
  %v3119 = vadd.f32 0.0, %v3118
  %v3120 = vpop.f32.mrb[0].mxu0
  %3121 = vmatprep.mubr.bf16.mxu0 0
  %3122 = vmatmul.mubr.bf16.gmra.mrb[0].mxu0 %v2347
  %v3123 = vpop.f32.mrb[0].mxu0
  %v3124 = vadd.f32 0.0, %v3123
  %v3125 = vpop.f32.mrb[0].mxu0
  %v3126 = vpop.f32.mrb[0].mxu0
  %v3127 = vadd.f32 0.0, %v3126
  %v3128 = vpop.f32.mrb[0].mxu0
  %3129 = vmatprep.mubr.bf16.mxu0 0
  %3130 = vmatmul.mubr.bf16.gmra.mrb[0].mxu0 %v2348
  %v3131 = vpop.f32.mrb[0].mxu0
  %v3132 = vadd.f32 0.0, %v3131
  %v3133 = vpop.f32.mrb[0].mxu0
  %v3134 = vpop.f32.mrb[0].mxu0
  %v3135 = vadd.f32 0.0, %v3134
  %v3136 = vpop.f32.mrb[0].mxu0
  %3137 = vmatprep.mubr.bf16.mxu0 0
  %3138 = vmatmul.mubr.bf16.gmra.mrb[0].mxu0 %v2349
  %v3139 = vpop.f32.mrb[0].mxu0
  %v3140 = vadd.f32 0.0, %v3139
  %v3141 = vpop.f32.mrb[0].mxu0
  %v3142 = vpop.f32.mrb[0].mxu0
  %v3143 = vadd.f32 0.0, %v3142
  %v3144 = vpop.f32.mrb[0].mxu0
  %3145 = vmatprep.mubr.bf16.mxu0 0
  %3146 = vmatmul.mubr.bf16.gmra.mrb[0].mxu0 %v2350
  %v3147 = vpop.f32.mrb[0].mxu0
  %v3148 = vadd.f32 0.0, %v3147
  %v3149 = vpop.f32.mrb[0].mxu0
  %v3150 = vpop.f32.mrb[0].mxu0
  %v3151 = vadd.f32 0.0, %v3150
  %v3152 = vpop.f32.mrb[0].mxu0
  %3153 = vmatprep.mubr.bf16.mxu0 0
  %3154 = vmatmul.mubr.bf16.gmra.mrb[0].mxu0 %v2351
  %v3155 = vpop.f32.mrb[0].mxu0
  %v3156 = vadd.f32 0.0, %v3155
  %v3157 = vpop.f32.mrb[0].mxu0
  %v3158 = vpop.f32.mrb[0].mxu0
  %v3159 = vadd.f32 0.0, %v3158
  %v3160 = vpop.f32.mrb[0].mxu0
  %3161 = vmatprep.mubr.bf16.mxu0 0
  %3162 = vmatmul.mubr.bf16.gmra.mrb[0].mxu0 %v2352
  %v3163 = vpop.f32.mrb[0].mxu0
  %v3164 = vadd.f32 0.0, %v3163
  %v3165 = vpop.f32.mrb[0].mxu0
  %v3166 = vpop.f32.mrb[0].mxu0
  %v3167 = vadd.f32 0.0, %v3166
  %v3168 = vpop.f32.mrb[0].mxu0
  %3169 = vmatprep.mubr.bf16.mxu0 0
  %3170 = vmatmul.mubr.bf16.gmra.mrb[0].mxu0 %v2353
  %v3171 = vpop.f32.mrb[0].mxu0
  %v3172 = vadd.f32 0.0, %v3171
  %v3173 = vpop.f32.mrb[0].mxu0
  %v3174 = vpop.f32.mrb[0].mxu0
  %v3175 = vadd.f32 0.0, %v3174
  %v3176 = vpop.f32.mrb[0].mxu0
  %3177 = vmatprep.mubr.bf16.mxu0 0
  %3178 = vmatmul.mubr.bf16.gmra.mrb[0].mxu0 %v2354
  %v3179 = vpop.f32.mrb[0].mxu0
  %v3180 = vadd.f32 0.0, %v3179
  %v3181 = vpop.f32.mrb[0].mxu0
  %v3182 = vpop.f32.mrb[0].mxu0
  %v3183 = vadd.f32 0.0, %v3182
  %v3184 = vpop.f32.mrb[0].mxu0
  %3185 = vmatprep.mubr.bf16.mxu0 0
  %3186 = vmatmul.mubr.bf16.gmra.mrb[0].mxu0 %v2355
  %v3187 = vpop.f32.mrb[0].mxu0
  %v3188 = vadd.f32 0.0, %v3187
  %v3189 = vpop.f32.mrb[0].mxu0
  %v3190 = vpop.f32.mrb[0].mxu0
  %v3191 = vadd.f32 0.0, %v3190
  %v3192 = vpop.f32.mrb[0].mxu0
  %3193 = vmatprep.mubr.bf16.mxu0 0
  %3194 = vmatmul.mubr.bf16.gmra.mrb[0].mxu0 %v2356
  %v3195 = vpop.f32.mrb[0].mxu0
  %v3196 = vadd.f32 0.0, %v3195
  %v3197 = vpop.f32.mrb[0].mxu0
  %v3198 = vpop.f32.mrb[0].mxu0
  %v3199 = vadd.f32 0.0, %v3198
  %v3200 = vpop.f32.mrb[0].mxu0
  %3201 = vmatprep.mubr.bf16.mxu0 0
  %3202 = vmatmul.mubr.bf16.gmra.mrb[0].mxu0 %v2357
  %v3203 = vpop.f32.mrb[0].mxu0
  %v3204 = vadd.f32 0.0, %v3203
  %v3205 = vpop.f32.mrb[0].mxu0
  %v3206 = vpop.f32.mrb[0].mxu0
  %v3207 = vadd.f32 0.0, %v3206
  %v3208 = vpop.f32.mrb[0].mxu0
  %3209 = vmatprep.mubr.bf16.mxu0 0
  %3210 = vmatmul.mubr.bf16.gmra.mrb[0].mxu0 %v2358
  %v3211 = vpop.f32.mrb[0].mxu0
  %v3212 = vadd.f32 0.0, %v3211
  %v3213 = vpop.f32.mrb[0].mxu0
  %v3214 = vpop.f32.mrb[0].mxu0
  %v3215 = vadd.f32 0.0, %v3214
  %v3216 = vpop.f32.mrb[0].mxu0
  %3217 = vmatprep.mubr.bf16.mxu0 0
  %3218 = vmatmul.mubr.bf16.gmra.mrb[0].mxu0 %v2359
  %v3219 = vpop.f32.mrb[0].mxu0
  %v3220 = vadd.f32 0.0, %v3219
  %v3221 = vpop.f32.mrb[0].mxu0
  %v3222 = vpop.f32.mrb[0].mxu0
  %v3223 = vadd.f32 0.0, %v3222
  %v3224 = vpop.f32.mrb[0].mxu0
  %3225 = vmatprep.mubr.bf16.mxu0 0
  %3226 = vmatmul.mubr.bf16.gmra.mrb[0].mxu0 %v2360
  %v3227 = vpop.f32.mrb[0].mxu0
  %v3228 = vadd.f32 0.0, %v3227
  %v3229 = vpop.f32.mrb[0].mxu0
  %v3230 = vpop.f32.mrb[0].mxu0
  %v3231 = vadd.f32 0.0, %v3230
  %v3232 = vpop.f32.mrb[0].mxu0
  %3233 = vmatprep.mubr.bf16.mxu0 0
  %3234 = vmatmul.mubr.bf16.gmra.mrb[0].mxu0 %v2361
  %v3235 = vpop.f32.mrb[0].mxu0
  %v3236 = vadd.f32 0.0, %v3235
  %v3237 = vpop.f32.mrb[0].mxu0
  %v3238 = vpop.f32.mrb[0].mxu0
  %v3239 = vadd.f32 0.0, %v3238
  %v3240 = vpop.f32.mrb[0].mxu0
  %3241 = vmatprep.mubr.bf16.mxu0 0
  %3242 = vmatmul.mubr.bf16.gmra.mrb[0].mxu0 %v2362
  %v3243 = vpop.f32.mrb[0].mxu0
  %v3244 = vadd.f32 0.0, %v3243
  %v3245 = vpop.f32.mrb[0].mxu0
  %v3246 = vpop.f32.mrb[0].mxu0
  %v3247 = vadd.f32 0.0, %v3246
  %v3248 = vpop.f32.mrb[0].mxu0
  %3249 = vmatprep.mubr.bf16.mxu0 0
  %3250 = vmatmul.mubr.bf16.gmra.mrb[0].mxu0 %v2363
  %v3251 = vpop.f32.mrb[0].mxu0
  %v3252 = vadd.f32 0.0, %v3251
  %v3253 = vpop.f32.mrb[0].mxu0
  %v3254 = vpop.f32.mrb[0].mxu0
  %v3255 = vadd.f32 0.0, %v3254
  %v3256 = vpop.f32.mrb[0].mxu0
  %3257 = vmatprep.mubr.bf16.mxu0 0
  %3258 = vmatmul.mubr.bf16.gmra.mrb[0].mxu0 %v2364
  %v3259 = vpop.f32.mrb[0].mxu0
  %v3260 = vadd.f32 0.0, %v3259
  %v3261 = vpop.f32.mrb[0].mxu0
  %v3262 = vpop.f32.mrb[0].mxu0
  %v3263 = vadd.f32 0.0, %v3262
  %v3264 = vpop.f32.mrb[0].mxu0
  %3265 = vmatprep.mubr.bf16.mxu0 0
  %3266 = vmatmul.mubr.bf16.gmra.mrb[0].mxu0 %v2365
  %v3267 = vpop.f32.mrb[0].mxu0
  %v3268 = vadd.f32 0.0, %v3267
  %v3269 = vpop.f32.mrb[0].mxu0
  %v3270 = vpop.f32.mrb[0].mxu0
  %v3271 = vadd.f32 0.0, %v3270
  %v3272 = vpop.f32.mrb[0].mxu0
  %3273 = vmatprep.mubr.bf16.mxu0 0
  %3274 = vmatmul.mubr.bf16.gmra.mrb[0].mxu0 %v2366
  %v3275 = vpop.f32.mrb[0].mxu0
  %v3276 = vadd.f32 0.0, %v3275
  %v3277 = vpop.f32.mrb[0].mxu0
  %v3278 = vpop.f32.mrb[0].mxu0
  %v3279 = vadd.f32 0.0, %v3278
  %v3280 = vpop.f32.mrb[0].mxu0
  %3281 = vdwg.mxu0
  %v3282 = vmax.f32 %v898, %v2500
  %v3283 = vmax.f32 %v901, %v2503
  %v3284 = vmax.f32 %v906, %v2508
  %v3285 = vmax.f32 %v909, %v2511
  %v3286 = vmax.f32 %v914, %v2516
  %v3287 = vmax.f32 %v917, %v2519
  %v3288 = vmax.f32 %v922, %v2524
  %v3289 = vmax.f32 %v925, %v2527
  %v3290 = vmax.f32 %v930, %v2532
  %v3291 = vmax.f32 %v933, %v2535
  %v3292 = vmax.f32 %v938, %v2540
  %v3293 = vmax.f32 %v941, %v2543
  %v3294 = vmax.f32 %v946, %v2548
  %v3295 = vmax.f32 %v949, %v2551
  %v3296 = vmax.f32 %v954, %v2556
  %v3297 = vmax.f32 %v957, %v2559
  %v3298 = vmax.f32 %v962, %v2564
  %v3299 = vmax.f32 %v965, %v2567
  %v3300 = vmax.f32 %v970, %v2572
  %v3301 = vmax.f32 %v973, %v2575
  %v3302 = vmax.f32 %v978, %v2580
  %v3303 = vmax.f32 %v981, %v2583
  %v3304 = vmax.f32 %v986, %v2588
  %v3305 = vmax.f32 %v989, %v2591
  %v3306 = vmax.f32 %v994, %v2596
  %v3307 = vmax.f32 %v997, %v2599
  %v3308 = vmax.f32 %v1002, %v2604
  %v3309 = vmax.f32 %v1005, %v2607
  %v3310 = vmax.f32 %v1010, %v2612
  %v3311 = vmax.f32 %v1013, %v2615
  %v3312 = vmax.f32 %v1018, %v2620
  %v3313 = vmax.f32 %v1021, %v2623
  %v3314 = vmax.f32 %v1026, %v2628
  %v3315 = vmax.f32 %v1029, %v2631
  %v3316 = vmax.f32 %v1034, %v2636
  %v3317 = vmax.f32 %v1037, %v2639
  %v3318 = vmax.f32 %v1042, %v2644
  %v3319 = vmax.f32 %v1045, %v2647
  %v3320 = vmax.f32 %v1050, %v2652
  %v3321 = vmax.f32 %v1053, %v2655
  %v3322 = vmax.f32 %v1058, %v2660
  %v3323 = vmax.f32 %v1061, %v2663
  %v3324 = vmax.f32 %v1066, %v2668
  %v3325 = vmax.f32 %v1069, %v2671
  %v3326 = vmax.f32 %v1074, %v2676
  %v3327 = vmax.f32 %v1077, %v2679
  %v3328 = vmax.f32 %v1082, %v2684
  %v3329 = vmax.f32 %v1085, %v2687
  %v3330 = vmax.f32 %v1090, %v2692
  %v3331 = vmax.f32 %v1093, %v2695
  %v3332 = vmax.f32 %v1098, %v2700
  %v3333 = vmax.f32 %v1101, %v2703
  %v3334 = vmax.f32 %v1106, %v2708
  %v3335 = vmax.f32 %v1109, %v2711
  %v3336 = vmax.f32 %v1114, %v2716
  %v3337 = vmax.f32 %v1117, %v2719
  %v3338 = vmax.f32 %v1122, %v2724
  %v3339 = vmax.f32 %v1125, %v2727
  %v3340 = vmax.f32 %v1130, %v2732
  %v3341 = vmax.f32 %v1133, %v2735
  %v3342 = vmax.f32 %v1138, %v2740
  %v3343 = vmax.f32 %v1141, %v2743
  %v3344 = vmax.f32 %v1146, %v2748
  %v3345 = vmax.f32 %v1149, %v2751
  %v3346 = vmax.f32 %v1154, %v2756
  %v3347 = vmax.f32 %v1157, %v2759
  %v3348 = vmax.f32 %v1162, %v2764
  %v3349 = vmax.f32 %v1165, %v2767
  %v3350 = vmax.f32 %v1170, %v2772
  %v3351 = vmax.f32 %v1173, %v2775
  %v3352 = vmax.f32 %v1178, %v2780
  %v3353 = vmax.f32 %v1181, %v2783
  %v3354 = vmax.f32 %v1186, %v2788
  %v3355 = vmax.f32 %v1189, %v2791
  %v3356 = vmax.f32 %v1194, %v2796
  %v3357 = vmax.f32 %v1197, %v2799
  %v3358 = vmax.f32 %v1202, %v2804
  %v3359 = vmax.f32 %v1205, %v2807
  %v3360 = vmax.f32 %v1210, %v2812
  %v3361 = vmax.f32 %v1213, %v2815
  %v3362 = vmax.f32 %v1218, %v2820
  %v3363 = vmax.f32 %v1221, %v2823
  %v3364 = vmax.f32 %v1226, %v2828
  %v3365 = vmax.f32 %v1229, %v2831
  %v3366 = vmax.f32 %v1234, %v2836
  %v3367 = vmax.f32 %v1237, %v2839
  %v3368 = vmax.f32 %v1242, %v2844
  %v3369 = vmax.f32 %v1245, %v2847
  %v3370 = vmax.f32 %v1250, %v2852
  %v3371 = vmax.f32 %v1253, %v2855
  %v3372 = vmax.f32 %v1258, %v2860
  %v3373 = vmax.f32 %v1261, %v2863
  %v3374 = vmax.f32 %v1266, %v2868
  %v3375 = vmax.f32 %v1269, %v2871
  %v3376 = vmax.f32 %v1274, %v2876
  %v3377 = vmax.f32 %v1277, %v2879
  %v3378 = vmax.f32 %v1282, %v2884
  %v3379 = vmax.f32 %v1285, %v2887
  %v3380 = vmax.f32 %v1290, %v2892
  %v3381 = vmax.f32 %v1293, %v2895
  %v3382 = vmax.f32 %v1298, %v2900
  %v3383 = vmax.f32 %v1301, %v2903
  %v3384 = vmax.f32 %v1306, %v2908
  %v3385 = vmax.f32 %v1309, %v2911
  %v3386 = vmax.f32 %v1314, %v2916
  %v3387 = vmax.f32 %v1317, %v2919
  %v3388 = vmax.f32 %v1322, %v2924
  %v3389 = vmax.f32 %v1325, %v2927
  %v3390 = vmax.f32 %v1330, %v2932
  %v3391 = vmax.f32 %v1333, %v2935
  %v3392 = vmax.f32 %v1338, %v2940
  %v3393 = vmax.f32 %v1341, %v2943
  %v3394 = vmax.f32 %v1346, %v2948
  %v3395 = vmax.f32 %v1349, %v2951
  %v3396 = vmax.f32 %v1354, %v2956
  %v3397 = vmax.f32 %v1357, %v2959
  %v3398 = vmax.f32 %v1362, %v2964
  %v3399 = vmax.f32 %v1365, %v2967
  %v3400 = vmax.f32 %v1370, %v2972
  %v3401 = vmax.f32 %v1373, %v2975
  %v3402 = vmax.f32 %v1378, %v2980
  %v3403 = vmax.f32 %v1381, %v2983
  %v3404 = vmax.f32 %v1386, %v2988
  %v3405 = vmax.f32 %v1389, %v2991
  %v3406 = vmax.f32 %v1394, %v2996
  %v3407 = vmax.f32 %v1397, %v2999
  %v3408 = vmax.f32 %v1402, %v3004
  %v3409 = vmax.f32 %v1405, %v3007
  %v3410 = vmax.f32 %v1410, %v3012
  %v3411 = vmax.f32 %v1413, %v3015
  %v3412 = vmax.f32 %v1418, %v3020
  %v3413 = vmax.f32 %v1421, %v3023
  %v3414 = vmax.f32 %v1426, %v3028
  %v3415 = vmax.f32 %v1429, %v3031
  %v3416 = vmax.f32 %v1434, %v3036
  %v3417 = vmax.f32 %v1437, %v3039
  %v3418 = vmax.f32 %v1442, %v3044
  %v3419 = vmax.f32 %v1445, %v3047
  %v3420 = vmax.f32 %v1450, %v3052
  %v3421 = vmax.f32 %v1453, %v3055
  %v3422 = vmax.f32 %v1458, %v3060
  %v3423 = vmax.f32 %v1461, %v3063
  %v3424 = vmax.f32 %v1466, %v3068
  %v3425 = vmax.f32 %v1469, %v3071
  %v3426 = vmax.f32 %v1474, %v3076
  %v3427 = vmax.f32 %v1477, %v3079
  %v3428 = vmax.f32 %v1482, %v3084
  %v3429 = vmax.f32 %v1485, %v3087
  %v3430 = vmax.f32 %v1490, %v3092
  %v3431 = vmax.f32 %v1493, %v3095
  %v3432 = vmax.f32 %v1498, %v3100
  %v3433 = vmax.f32 %v1501, %v3103
  %v3434 = vmax.f32 %v1506, %v3108
  %v3435 = vmax.f32 %v1509, %v3111
  %v3436 = vmax.f32 %v1514, %v3116
  %v3437 = vmax.f32 %v1517, %v3119
  %v3438 = vmax.f32 %v1522, %v3124
  %v3439 = vmax.f32 %v1525, %v3127
  %v3440 = vmax.f32 %v1530, %v3132
  %v3441 = vmax.f32 %v1533, %v3135
  %v3442 = vmax.f32 %v1538, %v3140
  %v3443 = vmax.f32 %v1541, %v3143
  %v3444 = vmax.f32 %v1546, %v3148
  %v3445 = vmax.f32 %v1549, %v3151
  %v3446 = vmax.f32 %v1554, %v3156
  %v3447 = vmax.f32 %v1557, %v3159
  %v3448 = vmax.f32 %v1562, %v3164
  %v3449 = vmax.f32 %v1565, %v3167
  %v3450 = vmax.f32 %v1570, %v3172
  %v3451 = vmax.f32 %v1573, %v3175
  %v3452 = vmax.f32 %v1578, %v3180
  %v3453 = vmax.f32 %v1581, %v3183
  %v3454 = vmax.f32 %v1586, %v3188
  %v3455 = vmax.f32 %v1589, %v3191
  %v3456 = vmax.f32 %v1594, %v3196
  %v3457 = vmax.f32 %v1597, %v3199
  %v3458 = vmax.f32 %v1602, %v3204
  %v3459 = vmax.f32 %v1605, %v3207
  %v3460 = vmax.f32 %v1610, %v3212
  %v3461 = vmax.f32 %v1613, %v3215
  %v3462 = vmax.f32 %v1618, %v3220
  %v3463 = vmax.f32 %v1621, %v3223
  %v3464 = vmax.f32 %v1626, %v3228
  %v3465 = vmax.f32 %v1629, %v3231
  %v3466 = vmax.f32 %v1634, %v3236
  %v3467 = vmax.f32 %v1637, %v3239
  %v3468 = vmax.f32 %v1642, %v3244
  %v3469 = vmax.f32 %v1645, %v3247
  %v3470 = vmax.f32 %v1650, %v3252
  %v3471 = vmax.f32 %v1653, %v3255
  %v3472 = vmax.f32 %v1658, %v3260
  %v3473 = vmax.f32 %v1661, %v3263
  %v3474 = vmax.f32 %v1666, %v3268
  %v3475 = vmax.f32 %v1669, %v3271
  %v3476 = vmax.f32 %v1674, %v3276
  %v3477 = vmax.f32 %v1677, %v3279
  %s3478 = scalar_lea.vmem %s0, 1568
  %v3479 = vld [vmem:[%s3478] sm:$0xf]
  %v3480 = vld [vmem:[%s3478 + $0x4] sm:$0xf]
  %v3481 = vld [vmem:[%s3478 + $0x8] sm:$0xf]
  %v3482 = vld [vmem:[%s3478 + $0xc] sm:$0xf]
  %v3483 = vld [vmem:[%s3478 + $0x10] sm:$0xf]
  %v3484 = vld [vmem:[%s3478 + $0x14] sm:$0xf]
  %v3485 = vld [vmem:[%s3478 + $0x18] sm:$0xf]
  %v3486 = vld [vmem:[%s3478 + $0x1c] sm:$0xf]
  %v3487 = vld [vmem:[%s3478 + $0x20] sm:$0xf]
  %v3488 = vld [vmem:[%s3478 + $0x24] sm:$0xf]
  %v3489 = vld [vmem:[%s3478 + $0x28] sm:$0xf]
  %v3490 = vld [vmem:[%s3478 + $0x2c] sm:$0xf]
  %v3491 = vld [vmem:[%s3478 + $0x30] sm:$0xf]
  %v3492 = vld [vmem:[%s3478 + $0x34] sm:$0xf]
  %v3493 = vld [vmem:[%s3478 + $0x38] sm:$0xf]
  %v3494 = vld [vmem:[%s3478 + $0x3c] sm:$0xf]
  %v3495 = vld [vmem:[%s3478 + $0x40] sm:$0xf]
  %v3496 = vld [vmem:[%s3478 + $0x44] sm:$0xf]
  %v3497 = vld [vmem:[%s3478 + $0x48] sm:$0xf]
  %v3498 = vld [vmem:[%s3478 + $0x4c] sm:$0xf]
  %v3499 = vld [vmem:[%s3478 + $0x50] sm:$0xf]
  %v3500 = vld [vmem:[%s3478 + $0x54] sm:$0xf]
  %v3501 = vld [vmem:[%s3478 + $0x58] sm:$0xf]
  %v3502 = vld [vmem:[%s3478 + $0x5c] sm:$0xf]
  %v3503 = vld [vmem:[%s3478 + $0x60] sm:$0xf]
  %v3504 = vld [vmem:[%s3478 + $0x64] sm:$0xf]
  %v3505 = vld [vmem:[%s3478 + $0x68] sm:$0xf]
  %v3506 = vld [vmem:[%s3478 + $0x6c] sm:$0xf]
  %v3507 = vld [vmem:[%s3478 + $0x70] sm:$0xf]
  %v3508 = vld [vmem:[%s3478 + $0x74] sm:$0xf]
  %v3509 = vld [vmem:[%s3478 + $0x78] sm:$0xf]
  %v3510 = vld [vmem:[%s3478 + $0x7c] sm:$0xf]
  %v3511 = vld [vmem:[%s3478 + $0x80] sm:$0xf]
  %v3512 = vld [vmem:[%s3478 + $0x84] sm:$0xf]
  %v3513 = vld [vmem:[%s3478 + $0x88] sm:$0xf]
  %v3514 = vld [vmem:[%s3478 + $0x8c] sm:$0xf]
  %v3515 = vld [vmem:[%s3478 + $0x90] sm:$0xf]
  %v3516 = vld [vmem:[%s3478 + $0x94] sm:$0xf]
  %v3517 = vld [vmem:[%s3478 + $0x98] sm:$0xf]
  %v3518 = vld [vmem:[%s3478 + $0x9c] sm:$0xf]
  %v3519 = vld [vmem:[%s3478 + $0xa0] sm:$0xf]
  %v3520 = vld [vmem:[%s3478 + $0xa4] sm:$0xf]
  %v3521 = vld [vmem:[%s3478 + $0xa8] sm:$0xf]
  %v3522 = vld [vmem:[%s3478 + $0xac] sm:$0xf]
  %v3523 = vld [vmem:[%s3478 + $0xb0] sm:$0xf]
  %v3524 = vld [vmem:[%s3478 + $0xb4] sm:$0xf]
  %v3525 = vld [vmem:[%s3478 + $0xb8] sm:$0xf]
  %v3526 = vld [vmem:[%s3478 + $0xbc] sm:$0xf]
  %v3527 = vld [vmem:[%s3478 + $0xc0] sm:$0xf]
  %v3528 = vld [vmem:[%s3478 + $0xc4] sm:$0xf]
  %v3529 = vld [vmem:[%s3478 + $0xc8] sm:$0xf]
  %v3530 = vld [vmem:[%s3478 + $0xcc] sm:$0xf]
  %v3531 = vld [vmem:[%s3478 + $0xd0] sm:$0xf]
  %v3532 = vld [vmem:[%s3478 + $0xd4] sm:$0xf]
  %v3533 = vld [vmem:[%s3478 + $0xd8] sm:$0xf]
  %v3534 = vld [vmem:[%s3478 + $0xdc] sm:$0xf]
  %v3535 = vld [vmem:[%s3478 + $0xe0] sm:$0xf]
  %v3536 = vld [vmem:[%s3478 + $0xe4] sm:$0xf]
  %v3537 = vld [vmem:[%s3478 + $0xe8] sm:$0xf]
  %v3538 = vld [vmem:[%s3478 + $0xec] sm:$0xf]
  %v3539 = vld [vmem:[%s3478 + $0xf0] sm:$0xf]
  %v3540 = vld [vmem:[%s3478 + $0xf4] sm:$0xf]
  %v3541 = vld [vmem:[%s3478 + $0xf8] sm:$0xf]
  %v3542 = vld [vmem:[%s3478 + $0xfc] sm:$0xf]
  %v3543 = vld [vmem:[%s3478 + $0x100] sm:$0xf]
  %v3544 = vld [vmem:[%s3478 + $0x104] sm:$0xf]
  %v3545 = vld [vmem:[%s3478 + $0x108] sm:$0xf]
  %v3546 = vld [vmem:[%s3478 + $0x10c] sm:$0xf]
  %v3547 = vld [vmem:[%s3478 + $0x110] sm:$0xf]
  %v3548 = vld [vmem:[%s3478 + $0x114] sm:$0xf]
  %v3549 = vld [vmem:[%s3478 + $0x118] sm:$0xf]
  %v3550 = vld [vmem:[%s3478 + $0x11c] sm:$0xf]
  %v3551 = vld [vmem:[%s3478 + $0x120] sm:$0xf]
  %v3552 = vld [vmem:[%s3478 + $0x124] sm:$0xf]
  %v3553 = vld [vmem:[%s3478 + $0x128] sm:$0xf]
  %v3554 = vld [vmem:[%s3478 + $0x12c] sm:$0xf]
  %v3555 = vld [vmem:[%s3478 + $0x130] sm:$0xf]
  %v3556 = vld [vmem:[%s3478 + $0x134] sm:$0xf]
  %v3557 = vld [vmem:[%s3478 + $0x138] sm:$0xf]
  %v3558 = vld [vmem:[%s3478 + $0x13c] sm:$0xf]
  %v3559 = vld [vmem:[%s3478 + $0x140] sm:$0xf]
  %v3560 = vld [vmem:[%s3478 + $0x144] sm:$0xf]
  %v3561 = vld [vmem:[%s3478 + $0x148] sm:$0xf]
  %v3562 = vld [vmem:[%s3478 + $0x14c] sm:$0xf]
  %v3563 = vld [vmem:[%s3478 + $0x150] sm:$0xf]
  %v3564 = vld [vmem:[%s3478 + $0x154] sm:$0xf]
  %v3565 = vld [vmem:[%s3478 + $0x158] sm:$0xf]
  %v3566 = vld [vmem:[%s3478 + $0x15c] sm:$0xf]
  %v3567 = vld [vmem:[%s3478 + $0x160] sm:$0xf]
  %v3568 = vld [vmem:[%s3478 + $0x164] sm:$0xf]
  %v3569 = vld [vmem:[%s3478 + $0x168] sm:$0xf]
  %v3570 = vld [vmem:[%s3478 + $0x16c] sm:$0xf]
  %v3571 = vld [vmem:[%s3478 + $0x170] sm:$0xf]
  %v3572 = vld [vmem:[%s3478 + $0x174] sm:$0xf]
  %v3573 = vld [vmem:[%s3478 + $0x178] sm:$0xf]
  %v3574 = vld [vmem:[%s3478 + $0x17c] sm:$0xf]
  %v3575 = vld [vmem:[%s3478 + $0x180] sm:$0xf]
  %v3576 = vld [vmem:[%s3478 + $0x184] sm:$0xf]
  %v3577 = vld [vmem:[%s3478 + $0x188] sm:$0xf]
  %v3578 = vld [vmem:[%s3478 + $0x18c] sm:$0xf]
  %v3579 = vld [vmem:[%s3478 + $0x190] sm:$0xf]
  %v3580 = vld [vmem:[%s3478 + $0x194] sm:$0xf]
  %v3581 = vld [vmem:[%s3478 + $0x198] sm:$0xf]
  %v3582 = vld [vmem:[%s3478 + $0x19c] sm:$0xf]
  %v3583 = vld [vmem:[%s3478 + $0x1a0] sm:$0xf]
  %v3584 = vld [vmem:[%s3478 + $0x1a4] sm:$0xf]
  %v3585 = vld [vmem:[%s3478 + $0x1a8] sm:$0xf]
  %v3586 = vld [vmem:[%s3478 + $0x1ac] sm:$0xf]
  %v3587 = vld [vmem:[%s3478 + $0x1b0] sm:$0xf]
  %v3588 = vld [vmem:[%s3478 + $0x1b4] sm:$0xf]
  %v3589 = vld [vmem:[%s3478 + $0x1b8] sm:$0xf]
  %v3590 = vld [vmem:[%s3478 + $0x1bc] sm:$0xf]
  %v3591 = vld [vmem:[%s3478 + $0x1c0] sm:$0xf]
  %v3592 = vld [vmem:[%s3478 + $0x1c4] sm:$0xf]
  %v3593 = vld [vmem:[%s3478 + $0x1c8] sm:$0xf]
  %v3594 = vld [vmem:[%s3478 + $0x1cc] sm:$0xf]
  %v3595 = vld [vmem:[%s3478 + $0x1d0] sm:$0xf]
  %v3596 = vld [vmem:[%s3478 + $0x1d4] sm:$0xf]
  %v3597 = vld [vmem:[%s3478 + $0x1d8] sm:$0xf]
  %v3598 = vld [vmem:[%s3478 + $0x1dc] sm:$0xf]
  %v3599 = vld [vmem:[%s3478 + $0x1e0] sm:$0xf]
  %v3600 = vld [vmem:[%s3478 + $0x1e4] sm:$0xf]
  %v3601 = vld [vmem:[%s3478 + $0x1e8] sm:$0xf]
  %v3602 = vld [vmem:[%s3478 + $0x1ec] sm:$0xf]
  %v3603 = vld [vmem:[%s3478 + $0x1f0] sm:$0xf]
  %v3604 = vld [vmem:[%s3478 + $0x1f4] sm:$0xf]
  %v3605 = vld [vmem:[%s3478 + $0x1f8] sm:$0xf]
  %v3606 = vld [vmem:[%s3478 + $0x1fc] sm:$0xf]
  %v3607 = vld [vmem:[%s3478 + $0x200] sm:$0xf]
  %v3608 = vld [vmem:[%s3478 + $0x204] sm:$0xf]
  %v3609 = vld [vmem:[%s3478 + $0x208] sm:$0xf]
  %v3610 = vld [vmem:[%s3478 + $0x20c] sm:$0xf]
  %v3611 = vld [vmem:[%s3478 + $0x210] sm:$0xf]
  %v3612 = vld [vmem:[%s3478 + $0x214] sm:$0xf]
  %v3613 = vld [vmem:[%s3478 + $0x218] sm:$0xf]
  %v3614 = vld [vmem:[%s3478 + $0x21c] sm:$0xf]
  %v3615 = vld [vmem:[%s3478 + $0x220] sm:$0xf]
  %v3616 = vld [vmem:[%s3478 + $0x224] sm:$0xf]
  %v3617 = vld [vmem:[%s3478 + $0x228] sm:$0xf]
  %v3618 = vld [vmem:[%s3478 + $0x22c] sm:$0xf]
  %v3619 = vld [vmem:[%s3478 + $0x230] sm:$0xf]
  %v3620 = vld [vmem:[%s3478 + $0x234] sm:$0xf]
  %v3621 = vld [vmem:[%s3478 + $0x238] sm:$0xf]
  %v3622 = vld [vmem:[%s3478 + $0x23c] sm:$0xf]
  %v3623 = vld [vmem:[%s3478 + $0x240] sm:$0xf]
  %v3624 = vld [vmem:[%s3478 + $0x244] sm:$0xf]
  %v3625 = vld [vmem:[%s3478 + $0x248] sm:$0xf]
  %v3626 = vld [vmem:[%s3478 + $0x24c] sm:$0xf]
  %v3627 = vld [vmem:[%s3478 + $0x250] sm:$0xf]
  %v3628 = vld [vmem:[%s3478 + $0x254] sm:$0xf]
  %v3629 = vld [vmem:[%s3478 + $0x258] sm:$0xf]
  %v3630 = vld [vmem:[%s3478 + $0x25c] sm:$0xf]
  %v3631 = vld [vmem:[%s3478 + $0x260] sm:$0xf]
  %v3632 = vld [vmem:[%s3478 + $0x264] sm:$0xf]
  %v3633 = vld [vmem:[%s3478 + $0x268] sm:$0xf]
  %v3634 = vld [vmem:[%s3478 + $0x26c] sm:$0xf]
  %v3635 = vld [vmem:[%s3478 + $0x270] sm:$0xf]
  %v3636 = vld [vmem:[%s3478 + $0x274] sm:$0xf]
  %v3637 = vld [vmem:[%s3478 + $0x278] sm:$0xf]
  %v3638 = vld [vmem:[%s3478 + $0x27c] sm:$0xf]
  %v3639 = vld [vmem:[%s3478 + $0x280] sm:$0xf]
  %v3640 = vld [vmem:[%s3478 + $0x284] sm:$0xf]
  %v3641 = vld [vmem:[%s3478 + $0x288] sm:$0xf]
  %v3642 = vld [vmem:[%s3478 + $0x28c] sm:$0xf]
  %v3643 = vld [vmem:[%s3478 + $0x290] sm:$0xf]
  %v3644 = vld [vmem:[%s3478 + $0x294] sm:$0xf]
  %v3645 = vld [vmem:[%s3478 + $0x298] sm:$0xf]
  %v3646 = vld [vmem:[%s3478 + $0x29c] sm:$0xf]
  %v3647 = vld [vmem:[%s3478 + $0x2a0] sm:$0xf]
  %v3648 = vld [vmem:[%s3478 + $0x2a4] sm:$0xf]
  %v3649 = vld [vmem:[%s3478 + $0x2a8] sm:$0xf]
  %v3650 = vld [vmem:[%s3478 + $0x2ac] sm:$0xf]
  %v3651 = vld [vmem:[%s3478 + $0x2b0] sm:$0xf]
  %v3652 = vld [vmem:[%s3478 + $0x2b4] sm:$0xf]
  %v3653 = vld [vmem:[%s3478 + $0x2b8] sm:$0xf]
  %v3654 = vld [vmem:[%s3478 + $0x2bc] sm:$0xf]
  %v3655 = vld [vmem:[%s3478 + $0x2c0] sm:$0xf]
  %v3656 = vld [vmem:[%s3478 + $0x2c4] sm:$0xf]
  %v3657 = vld [vmem:[%s3478 + $0x2c8] sm:$0xf]
  %v3658 = vld [vmem:[%s3478 + $0x2cc] sm:$0xf]
  %v3659 = vld [vmem:[%s3478 + $0x2d0] sm:$0xf]
  %v3660 = vld [vmem:[%s3478 + $0x2d4] sm:$0xf]
  %v3661 = vld [vmem:[%s3478 + $0x2d8] sm:$0xf]
  %v3662 = vld [vmem:[%s3478 + $0x2dc] sm:$0xf]
  %v3663 = vld [vmem:[%s3478 + $0x2e0] sm:$0xf]
  %v3664 = vld [vmem:[%s3478 + $0x2e4] sm:$0xf]
  %v3665 = vld [vmem:[%s3478 + $0x2e8] sm:$0xf]
  %v3666 = vld [vmem:[%s3478 + $0x2ec] sm:$0xf]
  %v3667 = vld [vmem:[%s3478 + $0x2f0] sm:$0xf]
  %v3668 = vld [vmem:[%s3478 + $0x2f4] sm:$0xf]
  %v3669 = vld [vmem:[%s3478 + $0x2f8] sm:$0xf]
  %v3670 = vld [vmem:[%s3478 + $0x2fc] sm:$0xf]
  %v3671 = vld [vmem:[%s3478 + $0x300] sm:$0xf]
  %v3672 = vld [vmem:[%s3478 + $0x304] sm:$0xf]
  %v3673 = vld [vmem:[%s3478 + $0x308] sm:$0xf]
  %v3674 = vld [vmem:[%s3478 + $0x30c] sm:$0xf]
  %v3871 = vunpack.c.l.b16 %v3479
  %v3872 = vunpack.c.l.b16 %v3480
  %v3873 = vunpack.c.l.b16 %v3481
  %v3874 = vunpack.c.l.b16 %v3482
  %v3875 = vunpack.c.l.b16 %v3483
  %v3876 = vunpack.c.l.b16 %v3484
  %v3877 = vunpack.c.l.b16 %v3485
  %v3878 = vunpack.c.l.b16 %v3486
  %v3879 = vunpack.c.l.b16 %v3487
  %v3880 = vunpack.c.l.b16 %v3488
  %v3881 = vunpack.c.l.b16 %v3489
  %v3882 = vunpack.c.l.b16 %v3490
  %v3883 = vunpack.c.l.b16 %v3491
  %v3884 = vunpack.c.l.b16 %v3492
  %v3885 = vunpack.c.l.b16 %v3493
  %v3886 = vunpack.c.l.b16 %v3494
  %v3887 = vunpack.c.l.b16 %v3495
  %v3888 = vunpack.c.l.b16 %v3496
  %v3889 = vunpack.c.l.b16 %v3497
  %v3890 = vunpack.c.l.b16 %v3498
  %v3891 = vunpack.c.l.b16 %v3499
  %v3892 = vunpack.c.l.b16 %v3500
  %v3893 = vunpack.c.l.b16 %v3501
  %v3894 = vunpack.c.l.b16 %v3502
  %v3895 = vunpack.c.l.b16 %v3503
  %v3896 = vunpack.c.l.b16 %v3504
  %v3897 = vunpack.c.l.b16 %v3505
  %v3898 = vunpack.c.l.b16 %v3506
  %v3899 = vunpack.c.l.b16 %v3507
  %v3900 = vunpack.c.l.b16 %v3508
  %v3901 = vunpack.c.l.b16 %v3509
  %v3902 = vunpack.c.l.b16 %v3510
  %v3903 = vunpack.c.l.b16 %v3511
  %v3904 = vunpack.c.l.b16 %v3512
  %v3905 = vunpack.c.l.b16 %v3513
  %v3906 = vunpack.c.l.b16 %v3514
  %v3907 = vunpack.c.l.b16 %v3515
  %v3908 = vunpack.c.l.b16 %v3516
  %v3909 = vunpack.c.l.b16 %v3517
  %v3910 = vunpack.c.l.b16 %v3518
  %v3911 = vunpack.c.l.b16 %v3519
  %v3912 = vunpack.c.l.b16 %v3520
  %v3913 = vunpack.c.l.b16 %v3521
  %v3914 = vunpack.c.l.b16 %v3522
  %v3915 = vunpack.c.l.b16 %v3523
  %v3916 = vunpack.c.l.b16 %v3524
  %v3917 = vunpack.c.l.b16 %v3525
  %v3918 = vunpack.c.l.b16 %v3526
  %v3919 = vunpack.c.l.b16 %v3527
  %v3920 = vunpack.c.l.b16 %v3528
  %v3921 = vunpack.c.l.b16 %v3529
  %v3922 = vunpack.c.l.b16 %v3530
  %v3923 = vunpack.c.l.b16 %v3531
  %v3924 = vunpack.c.l.b16 %v3532
  %v3925 = vunpack.c.l.b16 %v3533
  %v3926 = vunpack.c.l.b16 %v3534
  %v3927 = vunpack.c.l.b16 %v3535
  %v3928 = vunpack.c.l.b16 %v3536
  %v3929 = vunpack.c.l.b16 %v3537
  %v3930 = vunpack.c.l.b16 %v3538
  %v3931 = vunpack.c.l.b16 %v3539
  %v3932 = vunpack.c.l.b16 %v3540
  %v3933 = vunpack.c.l.b16 %v3541
  %v3934 = vunpack.c.l.b16 %v3542
  %v3935 = vunpack.c.l.b16 %v3543
  %v3936 = vunpack.c.l.b16 %v3544
  %v3937 = vunpack.c.l.b16 %v3545
  %v3938 = vunpack.c.l.b16 %v3546
  %v3939 = vunpack.c.l.b16 %v3547
  %v3940 = vunpack.c.l.b16 %v3548
  %v3941 = vunpack.c.l.b16 %v3549
  %v3942 = vunpack.c.l.b16 %v3550
  %v3943 = vunpack.c.l.b16 %v3551
  %v3944 = vunpack.c.l.b16 %v3552
  %v3945 = vunpack.c.l.b16 %v3553
  %v3946 = vunpack.c.l.b16 %v3554
  %v3947 = vunpack.c.l.b16 %v3555
  %v3948 = vunpack.c.l.b16 %v3556
  %v3949 = vunpack.c.l.b16 %v3557
  %v3950 = vunpack.c.l.b16 %v3558
  %v3951 = vunpack.c.l.b16 %v3559
  %v3952 = vunpack.c.l.b16 %v3560
  %v3953 = vunpack.c.l.b16 %v3561
  %v3954 = vunpack.c.l.b16 %v3562
  %v3955 = vunpack.c.l.b16 %v3563
  %v3956 = vunpack.c.l.b16 %v3564
  %v3957 = vunpack.c.l.b16 %v3565
  %v3958 = vunpack.c.l.b16 %v3566
  %v3959 = vunpack.c.l.b16 %v3567
  %v3960 = vunpack.c.l.b16 %v3568
  %v3961 = vunpack.c.l.b16 %v3569
  %v3962 = vunpack.c.l.b16 %v3570
  %v3963 = vunpack.c.l.b16 %v3571
  %v3964 = vunpack.c.l.b16 %v3572
  %v3965 = vunpack.c.l.b16 %v3573
  %v3966 = vunpack.c.l.b16 %v3574
  %v3967 = vunpack.c.l.b16 %v3575
  %v3968 = vunpack.c.l.b16 %v3576
  %v3969 = vunpack.c.l.b16 %v3577
  %v3970 = vunpack.c.l.b16 %v3578
  %v3971 = vunpack.c.l.b16 %v3579
  %v3972 = vunpack.c.l.b16 %v3580
  %v3973 = vunpack.c.l.b16 %v3581
  %v3974 = vunpack.c.l.b16 %v3582
  %v3975 = vunpack.c.l.b16 %v3583
  %v3976 = vunpack.c.l.b16 %v3584
  %v3977 = vunpack.c.l.b16 %v3585
  %v3978 = vunpack.c.l.b16 %v3586
  %v3979 = vunpack.c.l.b16 %v3587
  %v3980 = vunpack.c.l.b16 %v3588
  %v3981 = vunpack.c.l.b16 %v3589
  %v3982 = vunpack.c.l.b16 %v3590
  %v3983 = vunpack.c.l.b16 %v3591
  %v3984 = vunpack.c.l.b16 %v3592
  %v3985 = vunpack.c.l.b16 %v3593
  %v3986 = vunpack.c.l.b16 %v3594
  %v3987 = vunpack.c.l.b16 %v3595
  %v3988 = vunpack.c.l.b16 %v3596
  %v3989 = vunpack.c.l.b16 %v3597
  %v3990 = vunpack.c.l.b16 %v3598
  %v3991 = vunpack.c.l.b16 %v3599
  %v3992 = vunpack.c.l.b16 %v3600
  %v3993 = vunpack.c.l.b16 %v3601
  %v3994 = vunpack.c.l.b16 %v3602
  %v3995 = vunpack.c.l.b16 %v3603
  %v3996 = vunpack.c.l.b16 %v3604
  %v3997 = vunpack.c.l.b16 %v3605
  %v3998 = vunpack.c.l.b16 %v3606
  %v3999 = vunpack.c.l.b16 %v3607
  %v4000 = vunpack.c.l.b16 %v3608
  %v4001 = vunpack.c.l.b16 %v3609
  %v4002 = vunpack.c.l.b16 %v3610
  %v4003 = vunpack.c.l.b16 %v3611
  %v4004 = vunpack.c.l.b16 %v3612
  %v4005 = vunpack.c.l.b16 %v3613
  %v4006 = vunpack.c.l.b16 %v3614
  %v4007 = vunpack.c.l.b16 %v3615
  %v4008 = vunpack.c.l.b16 %v3616
  %v4009 = vunpack.c.l.b16 %v3617
  %v4010 = vunpack.c.l.b16 %v3618
  %v4011 = vunpack.c.l.b16 %v3619
  %v4012 = vunpack.c.l.b16 %v3620
  %v4013 = vunpack.c.l.b16 %v3621
  %v4014 = vunpack.c.l.b16 %v3622
  %v4015 = vunpack.c.l.b16 %v3623
  %v4016 = vunpack.c.l.b16 %v3624
  %v4017 = vunpack.c.l.b16 %v3625
  %v4018 = vunpack.c.l.b16 %v3626
  %v4019 = vunpack.c.l.b16 %v3627
  %v4020 = vunpack.c.l.b16 %v3628
  %v4021 = vunpack.c.l.b16 %v3629
  %v4022 = vunpack.c.l.b16 %v3630
  %v4023 = vunpack.c.l.b16 %v3631
  %v4024 = vunpack.c.l.b16 %v3632
  %v4025 = vunpack.c.l.b16 %v3633
  %v4026 = vunpack.c.l.b16 %v3634
  %v4027 = vunpack.c.l.b16 %v3635
  %v4028 = vunpack.c.l.b16 %v3636
  %v4029 = vunpack.c.l.b16 %v3637
  %v4030 = vunpack.c.l.b16 %v3638
  %v4031 = vunpack.c.l.b16 %v3639
  %v4032 = vunpack.c.l.b16 %v3640
  %v4033 = vunpack.c.l.b16 %v3641
  %v4034 = vunpack.c.l.b16 %v3642
  %v4035 = vunpack.c.l.b16 %v3643
  %v4036 = vunpack.c.l.b16 %v3644
  %v4037 = vunpack.c.l.b16 %v3645
  %v4038 = vunpack.c.l.b16 %v3646
  %v4039 = vunpack.c.l.b16 %v3647
  %v4040 = vunpack.c.l.b16 %v3648
  %v4041 = vunpack.c.l.b16 %v3649
  %v4042 = vunpack.c.l.b16 %v3650
  %v4043 = vunpack.c.l.b16 %v3651
  %v4044 = vunpack.c.l.b16 %v3652
  %v4045 = vunpack.c.l.b16 %v3653
  %v4046 = vunpack.c.l.b16 %v3654
  %v4047 = vunpack.c.l.b16 %v3655
  %v4048 = vunpack.c.l.b16 %v3656
  %v4049 = vunpack.c.l.b16 %v3657
  %v4050 = vunpack.c.l.b16 %v3658
  %v4051 = vunpack.c.l.b16 %v3659
  %v4052 = vunpack.c.l.b16 %v3660
  %v4053 = vunpack.c.l.b16 %v3661
  %v4054 = vunpack.c.l.b16 %v3662
  %v4055 = vunpack.c.l.b16 %v3663
  %v4056 = vunpack.c.l.b16 %v3664
  %v4057 = vunpack.c.l.b16 %v3665
  %v4058 = vunpack.c.l.b16 %v3666
  %v4059 = vunpack.c.l.b16 %v3667
  %v4060 = vunpack.c.l.b16 %v3668
  %v4061 = vunpack.c.l.b16 %v3669
  %v4062 = vunpack.c.l.b16 %v3670
  %v4063 = vunpack.c.l.b16 %v3671
  %v4064 = vunpack.c.l.b16 %v3672
  %v4065 = vunpack.c.l.b16 %v3673
  %v4066 = vunpack.c.l.b16 %v3674
  %v4067 = vpack.c.b16 %v3872, %v3871
  %v4068 = vpack.c.b16 %v3874, %v3873
  %v4069 = vpack.c.b16 %v3876, %v3875
  %v4070 = vpack.c.b16 %v3878, %v3877
  %v4071 = vpack.c.b16 %v3880, %v3879
  %v4072 = vpack.c.b16 %v3882, %v3881
  %v4073 = vpack.c.b16 %v3884, %v3883
  %v4074 = vpack.c.b16 %v3886, %v3885
  %v4075 = vpack.c.b16 %v3888, %v3887
  %v4076 = vpack.c.b16 %v3890, %v3889
  %v4077 = vpack.c.b16 %v3892, %v3891
  %v4078 = vpack.c.b16 %v3894, %v3893
  %v4079 = vpack.c.b16 %v3896, %v3895
  %v4080 = vpack.c.b16 %v3898, %v3897
  %v4081 = vpack.c.b16 %v3900, %v3899
  %v4082 = vpack.c.b16 %v3902, %v3901
  %v4083 = vpack.c.b16 %v3904, %v3903
  %v4084 = vpack.c.b16 %v3906, %v3905
  %v4085 = vpack.c.b16 %v3908, %v3907
  %v4086 = vpack.c.b16 %v3910, %v3909
  %v4087 = vpack.c.b16 %v3912, %v3911
  %v4088 = vpack.c.b16 %v3914, %v3913
  %v4089 = vpack.c.b16 %v3916, %v3915
  %v4090 = vpack.c.b16 %v3918, %v3917
  %v4091 = vpack.c.b16 %v3920, %v3919
  %v4092 = vpack.c.b16 %v3922, %v3921
  %v4093 = vpack.c.b16 %v3924, %v3923
  %v4094 = vpack.c.b16 %v3926, %v3925
  %v4095 = vpack.c.b16 %v3928, %v3927
  %v4096 = vpack.c.b16 %v3930, %v3929
  %v4097 = vpack.c.b16 %v3932, %v3931
  %v4098 = vpack.c.b16 %v3934, %v3933
  %v4099 = vpack.c.b16 %v3936, %v3935
  %v4100 = vpack.c.b16 %v3938, %v3937
  %v4101 = vpack.c.b16 %v3940, %v3939
  %v4102 = vpack.c.b16 %v3942, %v3941
  %v4103 = vpack.c.b16 %v3944, %v3943
  %v4104 = vpack.c.b16 %v3946, %v3945
  %v4105 = vpack.c.b16 %v3948, %v3947
  %v4106 = vpack.c.b16 %v3950, %v3949
  %v4107 = vpack.c.b16 %v3952, %v3951
  %v4108 = vpack.c.b16 %v3954, %v3953
  %v4109 = vpack.c.b16 %v3956, %v3955
  %v4110 = vpack.c.b16 %v3958, %v3957
  %v4111 = vpack.c.b16 %v3960, %v3959
  %v4112 = vpack.c.b16 %v3962, %v3961
  %v4113 = vpack.c.b16 %v3964, %v3963
  %v4114 = vpack.c.b16 %v3966, %v3965
  %v4115 = vpack.c.b16 %v3968, %v3967
  %v4116 = vpack.c.b16 %v3970, %v3969
  %v4117 = vpack.c.b16 %v3972, %v3971
  %v4118 = vpack.c.b16 %v3974, %v3973
  %v4119 = vpack.c.b16 %v3976, %v3975
  %v4120 = vpack.c.b16 %v3978, %v3977
  %v4121 = vpack.c.b16 %v3980, %v3979
  %v4122 = vpack.c.b16 %v3982, %v3981
  %v4123 = vpack.c.b16 %v3984, %v3983
  %v4124 = vpack.c.b16 %v3986, %v3985
  %v4125 = vpack.c.b16 %v3988, %v3987
  %v4126 = vpack.c.b16 %v3990, %v3989
  %v4127 = vpack.c.b16 %v3992, %v3991
  %v4128 = vpack.c.b16 %v3994, %v3993
  %v4129 = vpack.c.b16 %v3996, %v3995
  %v4130 = vpack.c.b16 %v3998, %v3997
  %v4131 = vpack.c.b16 %v4000, %v3999
  %v4132 = vpack.c.b16 %v4002, %v4001
  %v4133 = vpack.c.b16 %v4004, %v4003
  %v4134 = vpack.c.b16 %v4006, %v4005
  %v4135 = vpack.c.b16 %v4008, %v4007
  %v4136 = vpack.c.b16 %v4010, %v4009
  %v4137 = vpack.c.b16 %v4012, %v4011
  %v4138 = vpack.c.b16 %v4014, %v4013
  %v4139 = vpack.c.b16 %v4016, %v4015
  %v4140 = vpack.c.b16 %v4018, %v4017
  %v4141 = vpack.c.b16 %v4020, %v4019
  %v4142 = vpack.c.b16 %v4022, %v4021
  %v4143 = vpack.c.b16 %v4024, %v4023
  %v4144 = vpack.c.b16 %v4026, %v4025
  %v4145 = vpack.c.b16 %v4028, %v4027
  %v4146 = vpack.c.b16 %v4030, %v4029
  %v4147 = vpack.c.b16 %v4032, %v4031
  %v4148 = vpack.c.b16 %v4034, %v4033
  %v4149 = vpack.c.b16 %v4036, %v4035
  %v4150 = vpack.c.b16 %v4038, %v4037
  %v4151 = vpack.c.b16 %v4040, %v4039
  %v4152 = vpack.c.b16 %v4042, %v4041
  %v4153 = vpack.c.b16 %v4044, %v4043
  %v4154 = vpack.c.b16 %v4046, %v4045
  %v4155 = vpack.c.b16 %v4048, %v4047
  %v4156 = vpack.c.b16 %v4050, %v4049
  %v4157 = vpack.c.b16 %v4052, %v4051
  %v4158 = vpack.c.b16 %v4054, %v4053
  %v4159 = vpack.c.b16 %v4056, %v4055
  %v4160 = vpack.c.b16 %v4058, %v4057
  %v4161 = vpack.c.b16 %v4060, %v4059
  %v4162 = vpack.c.b16 %v4062, %v4061
  %v4163 = vpack.c.b16 %v4064, %v4063
  %v4164 = vpack.c.b16 %v4066, %v4065
  %4263 = vmatprep.subr.bf16.mxu0 0
  %4264 = vmatpush1.bf16.msra.mxu0 %v847
  %4265 = vmatprep.subr.bf16.mxu0 0
  %4266 = vmatpush1.bf16.msra.mxu0 %v848
  %4267 = vmatprep.subr.bf16.mxu0 0
  %4268 = vmatpush1.bf16.msra.mxu0 %v849
  %4269 = vmatprep.subr.bf16.mxu0 0
  %4270 = vmatpush1.bf16.msra.mxu0 %v850
  %4271 = vmatprep.subr.bf16.mxu0 0
  %4272 = vmatpush1.bf16.msra.mxu0 %v851
  %4273 = vmatprep.subr.bf16.mxu0 0
  %4274 = vmatpush1.bf16.msra.mxu0 %v852
  %4275 = vmatprep.subr.bf16.mxu0 0
  %4276 = vmatpush1.bf16.msra.mxu0 %v853
  %4277 = vmatprep.subr.bf16.mxu0 0
  %4278 = vmatpush1.bf16.msra.mxu0 %v854
  %4279 = vmatprep.subr.bf16.mxu0 0
  %4280 = vmatpush1.bf16.msra.mxu0 0
  %4281 = vmatprep.subr.bf16.mxu0 0
  %4282 = vmatpush1.bf16.msra.mxu0 0
  %4283 = vmatprep.subr.bf16.mxu0 0
  %4284 = vmatpush1.bf16.msra.mxu0 0
  %4285 = vmatprep.subr.bf16.mxu0 0
  %4286 = vmatpush1.bf16.msra.mxu0 0
  %4287 = vmatprep.subr.bf16.mxu0 0
  %4288 = vmatpush1.bf16.msra.mxu0 0
  %4289 = vmatprep.subr.bf16.mxu0 0
  %4290 = vmatpush1.bf16.msra.mxu0 0
  %4291 = vmatprep.subr.bf16.mxu0 0
  %4292 = vmatpush1.bf16.msra.mxu0 0
  %4293 = vmatprep.subr.bf16.mxu0 0
  %4294 = vmatpush1.bf16.msra.mxu0 0
  %4295 = vmatprep.mubr.bf16.mxu0 0
  %4296 = vmatmul.mubr.bf16.gmra.mrb[0].mxu0 %v4067
  %v4297 = vpop.f32.mrb[0].mxu0
  %v4298 = vadd.f32 0.0, %v4297
  %v4299 = vpop.f32.mrb[0].mxu0
  %v4300 = vpop.f32.mrb[0].mxu0
  %v4301 = vadd.f32 0.0, %v4300
  %v4302 = vpop.f32.mrb[0].mxu0
  %4303 = vmatprep.mubr.bf16.mxu0 0
  %4304 = vmatmul.mubr.bf16.gmra.mrb[0].mxu0 %v4068
  %v4305 = vpop.f32.mrb[0].mxu0
  %v4306 = vadd.f32 0.0, %v4305
  %v4307 = vpop.f32.mrb[0].mxu0
  %v4308 = vpop.f32.mrb[0].mxu0
  %v4309 = vadd.f32 0.0, %v4308
  %v4310 = vpop.f32.mrb[0].mxu0
  %4311 = vmatprep.mubr.bf16.mxu0 0
  %4312 = vmatmul.mubr.bf16.gmra.mrb[0].mxu0 %v4069
  %v4313 = vpop.f32.mrb[0].mxu0
  %v4314 = vadd.f32 0.0, %v4313
  %v4315 = vpop.f32.mrb[0].mxu0
  %v4316 = vpop.f32.mrb[0].mxu0
  %v4317 = vadd.f32 0.0, %v4316
  %v4318 = vpop.f32.mrb[0].mxu0
  %4319 = vmatprep.mubr.bf16.mxu0 0
  %4320 = vmatmul.mubr.bf16.gmra.mrb[0].mxu0 %v4070
  %v4321 = vpop.f32.mrb[0].mxu0
  %v4322 = vadd.f32 0.0, %v4321
  %v4323 = vpop.f32.mrb[0].mxu0
  %v4324 = vpop.f32.mrb[0].mxu0
  %v4325 = vadd.f32 0.0, %v4324
  %v4326 = vpop.f32.mrb[0].mxu0
  %4327 = vmatprep.mubr.bf16.mxu0 0
  %4328 = vmatmul.mubr.bf16.gmra.mrb[0].mxu0 %v4071
  %v4329 = vpop.f32.mrb[0].mxu0
  %v4330 = vadd.f32 0.0, %v4329
  %v4331 = vpop.f32.mrb[0].mxu0
  %v4332 = vpop.f32.mrb[0].mxu0
  %v4333 = vadd.f32 0.0, %v4332
  %v4334 = vpop.f32.mrb[0].mxu0
  %4335 = vmatprep.mubr.bf16.mxu0 0
  %4336 = vmatmul.mubr.bf16.gmra.mrb[0].mxu0 %v4072
  %v4337 = vpop.f32.mrb[0].mxu0
  %v4338 = vadd.f32 0.0, %v4337
  %v4339 = vpop.f32.mrb[0].mxu0
  %v4340 = vpop.f32.mrb[0].mxu0
  %v4341 = vadd.f32 0.0, %v4340
  %v4342 = vpop.f32.mrb[0].mxu0
  %4343 = vmatprep.mubr.bf16.mxu0 0
  %4344 = vmatmul.mubr.bf16.gmra.mrb[0].mxu0 %v4073
  %v4345 = vpop.f32.mrb[0].mxu0
  %v4346 = vadd.f32 0.0, %v4345
  %v4347 = vpop.f32.mrb[0].mxu0
  %v4348 = vpop.f32.mrb[0].mxu0
  %v4349 = vadd.f32 0.0, %v4348
  %v4350 = vpop.f32.mrb[0].mxu0
  %4351 = vmatprep.mubr.bf16.mxu0 0
  %4352 = vmatmul.mubr.bf16.gmra.mrb[0].mxu0 %v4074
  %v4353 = vpop.f32.mrb[0].mxu0
  %v4354 = vadd.f32 0.0, %v4353
  %v4355 = vpop.f32.mrb[0].mxu0
  %v4356 = vpop.f32.mrb[0].mxu0
  %v4357 = vadd.f32 0.0, %v4356
  %v4358 = vpop.f32.mrb[0].mxu0
  %4359 = vmatprep.mubr.bf16.mxu0 0
  %4360 = vmatmul.mubr.bf16.gmra.mrb[0].mxu0 %v4075
  %v4361 = vpop.f32.mrb[0].mxu0
  %v4362 = vadd.f32 0.0, %v4361
  %v4363 = vpop.f32.mrb[0].mxu0
  %v4364 = vpop.f32.mrb[0].mxu0
  %v4365 = vadd.f32 0.0, %v4364
  %v4366 = vpop.f32.mrb[0].mxu0
  %4367 = vmatprep.mubr.bf16.mxu0 0
  %4368 = vmatmul.mubr.bf16.gmra.mrb[0].mxu0 %v4076
  %v4369 = vpop.f32.mrb[0].mxu0
  %v4370 = vadd.f32 0.0, %v4369
  %v4371 = vpop.f32.mrb[0].mxu0
  %v4372 = vpop.f32.mrb[0].mxu0
  %v4373 = vadd.f32 0.0, %v4372
  %v4374 = vpop.f32.mrb[0].mxu0
  %4375 = vmatprep.mubr.bf16.mxu0 0
  %4376 = vmatmul.mubr.bf16.gmra.mrb[0].mxu0 %v4077
  %v4377 = vpop.f32.mrb[0].mxu0
  %v4378 = vadd.f32 0.0, %v4377
  %v4379 = vpop.f32.mrb[0].mxu0
  %v4380 = vpop.f32.mrb[0].mxu0
  %v4381 = vadd.f32 0.0, %v4380
  %v4382 = vpop.f32.mrb[0].mxu0
  %4383 = vmatprep.mubr.bf16.mxu0 0
  %4384 = vmatmul.mubr.bf16.gmra.mrb[0].mxu0 %v4078
  %v4385 = vpop.f32.mrb[0].mxu0
  %v4386 = vadd.f32 0.0, %v4385
  %v4387 = vpop.f32.mrb[0].mxu0
  %v4388 = vpop.f32.mrb[0].mxu0
  %v4389 = vadd.f32 0.0, %v4388
  %v4390 = vpop.f32.mrb[0].mxu0
  %4391 = vmatprep.mubr.bf16.mxu0 0
  %4392 = vmatmul.mubr.bf16.gmra.mrb[0].mxu0 %v4079
  %v4393 = vpop.f32.mrb[0].mxu0
  %v4394 = vadd.f32 0.0, %v4393
  %v4395 = vpop.f32.mrb[0].mxu0
  %v4396 = vpop.f32.mrb[0].mxu0
  %v4397 = vadd.f32 0.0, %v4396
  %v4398 = vpop.f32.mrb[0].mxu0
  %4399 = vmatprep.mubr.bf16.mxu0 0
  %4400 = vmatmul.mubr.bf16.gmra.mrb[0].mxu0 %v4080
  %v4401 = vpop.f32.mrb[0].mxu0
  %v4402 = vadd.f32 0.0, %v4401
  %v4403 = vpop.f32.mrb[0].mxu0
  %v4404 = vpop.f32.mrb[0].mxu0
  %v4405 = vadd.f32 0.0, %v4404
  %v4406 = vpop.f32.mrb[0].mxu0
  %4407 = vmatprep.mubr.bf16.mxu0 0
  %4408 = vmatmul.mubr.bf16.gmra.mrb[0].mxu0 %v4081
  %v4409 = vpop.f32.mrb[0].mxu0
  %v4410 = vadd.f32 0.0, %v4409
  %v4411 = vpop.f32.mrb[0].mxu0
  %v4412 = vpop.f32.mrb[0].mxu0
  %v4413 = vadd.f32 0.0, %v4412
  %v4414 = vpop.f32.mrb[0].mxu0
  %4415 = vmatprep.mubr.bf16.mxu0 0
  %4416 = vmatmul.mubr.bf16.gmra.mrb[0].mxu0 %v4082
  %v4417 = vpop.f32.mrb[0].mxu0
  %v4418 = vadd.f32 0.0, %v4417
  %v4419 = vpop.f32.mrb[0].mxu0
  %v4420 = vpop.f32.mrb[0].mxu0
  %v4421 = vadd.f32 0.0, %v4420
  %v4422 = vpop.f32.mrb[0].mxu0
  %4423 = vmatprep.mubr.bf16.mxu0 0
  %4424 = vmatmul.mubr.bf16.gmra.mrb[0].mxu0 %v4083
  %v4425 = vpop.f32.mrb[0].mxu0
  %v4426 = vadd.f32 0.0, %v4425
  %v4427 = vpop.f32.mrb[0].mxu0
  %v4428 = vpop.f32.mrb[0].mxu0
  %v4429 = vadd.f32 0.0, %v4428
  %v4430 = vpop.f32.mrb[0].mxu0
  %4431 = vmatprep.mubr.bf16.mxu0 0
  %4432 = vmatmul.mubr.bf16.gmra.mrb[0].mxu0 %v4084
  %v4433 = vpop.f32.mrb[0].mxu0
  %v4434 = vadd.f32 0.0, %v4433
  %v4435 = vpop.f32.mrb[0].mxu0
  %v4436 = vpop.f32.mrb[0].mxu0
  %v4437 = vadd.f32 0.0, %v4436
  %v4438 = vpop.f32.mrb[0].mxu0
  %4439 = vmatprep.mubr.bf16.mxu0 0
  %4440 = vmatmul.mubr.bf16.gmra.mrb[0].mxu0 %v4085
  %v4441 = vpop.f32.mrb[0].mxu0
  %v4442 = vadd.f32 0.0, %v4441
  %v4443 = vpop.f32.mrb[0].mxu0
  %v4444 = vpop.f32.mrb[0].mxu0
  %v4445 = vadd.f32 0.0, %v4444
  %v4446 = vpop.f32.mrb[0].mxu0
  %4447 = vmatprep.mubr.bf16.mxu0 0
  %4448 = vmatmul.mubr.bf16.gmra.mrb[0].mxu0 %v4086
  %v4449 = vpop.f32.mrb[0].mxu0
  %v4450 = vadd.f32 0.0, %v4449
  %v4451 = vpop.f32.mrb[0].mxu0
  %v4452 = vpop.f32.mrb[0].mxu0
  %v4453 = vadd.f32 0.0, %v4452
  %v4454 = vpop.f32.mrb[0].mxu0
  %4455 = vmatprep.mubr.bf16.mxu0 0
  %4456 = vmatmul.mubr.bf16.gmra.mrb[0].mxu0 %v4087
  %v4457 = vpop.f32.mrb[0].mxu0
  %v4458 = vadd.f32 0.0, %v4457
  %v4459 = vpop.f32.mrb[0].mxu0
  %v4460 = vpop.f32.mrb[0].mxu0
  %v4461 = vadd.f32 0.0, %v4460
  %v4462 = vpop.f32.mrb[0].mxu0
  %4463 = vmatprep.mubr.bf16.mxu0 0
  %4464 = vmatmul.mubr.bf16.gmra.mrb[0].mxu0 %v4088
  %v4465 = vpop.f32.mrb[0].mxu0
  %v4466 = vadd.f32 0.0, %v4465
  %v4467 = vpop.f32.mrb[0].mxu0
  %v4468 = vpop.f32.mrb[0].mxu0
  %v4469 = vadd.f32 0.0, %v4468
  %v4470 = vpop.f32.mrb[0].mxu0
  %4471 = vmatprep.mubr.bf16.mxu0 0
  %4472 = vmatmul.mubr.bf16.gmra.mrb[0].mxu0 %v4089
  %v4473 = vpop.f32.mrb[0].mxu0
  %v4474 = vadd.f32 0.0, %v4473
  %v4475 = vpop.f32.mrb[0].mxu0
  %v4476 = vpop.f32.mrb[0].mxu0
  %v4477 = vadd.f32 0.0, %v4476
  %v4478 = vpop.f32.mrb[0].mxu0
  %4479 = vmatprep.mubr.bf16.mxu0 0
  %4480 = vmatmul.mubr.bf16.gmra.mrb[0].mxu0 %v4090
  %v4481 = vpop.f32.mrb[0].mxu0
  %v4482 = vadd.f32 0.0, %v4481
  %v4483 = vpop.f32.mrb[0].mxu0
  %v4484 = vpop.f32.mrb[0].mxu0
  %v4485 = vadd.f32 0.0, %v4484
  %v4486 = vpop.f32.mrb[0].mxu0
  %4487 = vmatprep.mubr.bf16.mxu0 0
  %4488 = vmatmul.mubr.bf16.gmra.mrb[0].mxu0 %v4091
  %v4489 = vpop.f32.mrb[0].mxu0
  %v4490 = vadd.f32 0.0, %v4489
  %v4491 = vpop.f32.mrb[0].mxu0
  %v4492 = vpop.f32.mrb[0].mxu0
  %v4493 = vadd.f32 0.0, %v4492
  %v4494 = vpop.f32.mrb[0].mxu0
  %4495 = vmatprep.mubr.bf16.mxu0 0
  %4496 = vmatmul.mubr.bf16.gmra.mrb[0].mxu0 %v4092
  %v4497 = vpop.f32.mrb[0].mxu0
  %v4498 = vadd.f32 0.0, %v4497
  %v4499 = vpop.f32.mrb[0].mxu0
  %v4500 = vpop.f32.mrb[0].mxu0
  %v4501 = vadd.f32 0.0, %v4500
  %v4502 = vpop.f32.mrb[0].mxu0
  %4503 = vmatprep.mubr.bf16.mxu0 0
  %4504 = vmatmul.mubr.bf16.gmra.mrb[0].mxu0 %v4093
  %v4505 = vpop.f32.mrb[0].mxu0
  %v4506 = vadd.f32 0.0, %v4505
  %v4507 = vpop.f32.mrb[0].mxu0
  %v4508 = vpop.f32.mrb[0].mxu0
  %v4509 = vadd.f32 0.0, %v4508
  %v4510 = vpop.f32.mrb[0].mxu0
  %4511 = vmatprep.mubr.bf16.mxu0 0
  %4512 = vmatmul.mubr.bf16.gmra.mrb[0].mxu0 %v4094
  %v4513 = vpop.f32.mrb[0].mxu0
  %v4514 = vadd.f32 0.0, %v4513
  %v4515 = vpop.f32.mrb[0].mxu0
  %v4516 = vpop.f32.mrb[0].mxu0
  %v4517 = vadd.f32 0.0, %v4516
  %v4518 = vpop.f32.mrb[0].mxu0
  %4519 = vmatprep.mubr.bf16.mxu0 0
  %4520 = vmatmul.mubr.bf16.gmra.mrb[0].mxu0 %v4095
  %v4521 = vpop.f32.mrb[0].mxu0
  %v4522 = vadd.f32 0.0, %v4521
  %v4523 = vpop.f32.mrb[0].mxu0
  %v4524 = vpop.f32.mrb[0].mxu0
  %v4525 = vadd.f32 0.0, %v4524
  %v4526 = vpop.f32.mrb[0].mxu0
  %4527 = vmatprep.mubr.bf16.mxu0 0
  %4528 = vmatmul.mubr.bf16.gmra.mrb[0].mxu0 %v4096
  %v4529 = vpop.f32.mrb[0].mxu0
  %v4530 = vadd.f32 0.0, %v4529
  %v4531 = vpop.f32.mrb[0].mxu0
  %v4532 = vpop.f32.mrb[0].mxu0
  %v4533 = vadd.f32 0.0, %v4532
  %v4534 = vpop.f32.mrb[0].mxu0
  %4535 = vmatprep.mubr.bf16.mxu0 0
  %4536 = vmatmul.mubr.bf16.gmra.mrb[0].mxu0 %v4097
  %v4537 = vpop.f32.mrb[0].mxu0
  %v4538 = vadd.f32 0.0, %v4537
  %v4539 = vpop.f32.mrb[0].mxu0
  %v4540 = vpop.f32.mrb[0].mxu0
  %v4541 = vadd.f32 0.0, %v4540
  %v4542 = vpop.f32.mrb[0].mxu0
  %4543 = vmatprep.mubr.bf16.mxu0 0
  %4544 = vmatmul.mubr.bf16.gmra.mrb[0].mxu0 %v4098
  %v4545 = vpop.f32.mrb[0].mxu0
  %v4546 = vadd.f32 0.0, %v4545
  %v4547 = vpop.f32.mrb[0].mxu0
  %v4548 = vpop.f32.mrb[0].mxu0
  %v4549 = vadd.f32 0.0, %v4548
  %v4550 = vpop.f32.mrb[0].mxu0
  %4551 = vmatprep.mubr.bf16.mxu0 0
  %4552 = vmatmul.mubr.bf16.gmra.mrb[0].mxu0 %v4099
  %v4553 = vpop.f32.mrb[0].mxu0
  %v4554 = vadd.f32 0.0, %v4553
  %v4555 = vpop.f32.mrb[0].mxu0
  %v4556 = vpop.f32.mrb[0].mxu0
  %v4557 = vadd.f32 0.0, %v4556
  %v4558 = vpop.f32.mrb[0].mxu0
  %4559 = vmatprep.mubr.bf16.mxu0 0
  %4560 = vmatmul.mubr.bf16.gmra.mrb[0].mxu0 %v4100
  %v4561 = vpop.f32.mrb[0].mxu0
  %v4562 = vadd.f32 0.0, %v4561
  %v4563 = vpop.f32.mrb[0].mxu0
  %v4564 = vpop.f32.mrb[0].mxu0
  %v4565 = vadd.f32 0.0, %v4564
  %v4566 = vpop.f32.mrb[0].mxu0
  %4567 = vmatprep.mubr.bf16.mxu0 0
  %4568 = vmatmul.mubr.bf16.gmra.mrb[0].mxu0 %v4101
  %v4569 = vpop.f32.mrb[0].mxu0
  %v4570 = vadd.f32 0.0, %v4569
  %v4571 = vpop.f32.mrb[0].mxu0
  %v4572 = vpop.f32.mrb[0].mxu0
  %v4573 = vadd.f32 0.0, %v4572
  %v4574 = vpop.f32.mrb[0].mxu0
  %4575 = vmatprep.mubr.bf16.mxu0 0
  %4576 = vmatmul.mubr.bf16.gmra.mrb[0].mxu0 %v4102
  %v4577 = vpop.f32.mrb[0].mxu0
  %v4578 = vadd.f32 0.0, %v4577
  %v4579 = vpop.f32.mrb[0].mxu0
  %v4580 = vpop.f32.mrb[0].mxu0
  %v4581 = vadd.f32 0.0, %v4580
  %v4582 = vpop.f32.mrb[0].mxu0
  %4583 = vmatprep.mubr.bf16.mxu0 0
  %4584 = vmatmul.mubr.bf16.gmra.mrb[0].mxu0 %v4103
  %v4585 = vpop.f32.mrb[0].mxu0
  %v4586 = vadd.f32 0.0, %v4585
  %v4587 = vpop.f32.mrb[0].mxu0
  %v4588 = vpop.f32.mrb[0].mxu0
  %v4589 = vadd.f32 0.0, %v4588
  %v4590 = vpop.f32.mrb[0].mxu0
  %4591 = vmatprep.mubr.bf16.mxu0 0
  %4592 = vmatmul.mubr.bf16.gmra.mrb[0].mxu0 %v4104
  %v4593 = vpop.f32.mrb[0].mxu0
  %v4594 = vadd.f32 0.0, %v4593
  %v4595 = vpop.f32.mrb[0].mxu0
  %v4596 = vpop.f32.mrb[0].mxu0
  %v4597 = vadd.f32 0.0, %v4596
  %v4598 = vpop.f32.mrb[0].mxu0
  %4599 = vmatprep.mubr.bf16.mxu0 0
  %4600 = vmatmul.mubr.bf16.gmra.mrb[0].mxu0 %v4105
  %v4601 = vpop.f32.mrb[0].mxu0
  %v4602 = vadd.f32 0.0, %v4601
  %v4603 = vpop.f32.mrb[0].mxu0
  %v4604 = vpop.f32.mrb[0].mxu0
  %v4605 = vadd.f32 0.0, %v4604
  %v4606 = vpop.f32.mrb[0].mxu0
  %4607 = vmatprep.mubr.bf16.mxu0 0
  %4608 = vmatmul.mubr.bf16.gmra.mrb[0].mxu0 %v4106
  %v4609 = vpop.f32.mrb[0].mxu0
  %v4610 = vadd.f32 0.0, %v4609
  %v4611 = vpop.f32.mrb[0].mxu0
  %v4612 = vpop.f32.mrb[0].mxu0
  %v4613 = vadd.f32 0.0, %v4612
  %v4614 = vpop.f32.mrb[0].mxu0
  %4615 = vmatprep.mubr.bf16.mxu0 0
  %4616 = vmatmul.mubr.bf16.gmra.mrb[0].mxu0 %v4107
  %v4617 = vpop.f32.mrb[0].mxu0
  %v4618 = vadd.f32 0.0, %v4617
  %v4619 = vpop.f32.mrb[0].mxu0
  %v4620 = vpop.f32.mrb[0].mxu0
  %v4621 = vadd.f32 0.0, %v4620
  %v4622 = vpop.f32.mrb[0].mxu0
  %4623 = vmatprep.mubr.bf16.mxu0 0
  %4624 = vmatmul.mubr.bf16.gmra.mrb[0].mxu0 %v4108
  %v4625 = vpop.f32.mrb[0].mxu0
  %v4626 = vadd.f32 0.0, %v4625
  %v4627 = vpop.f32.mrb[0].mxu0
  %v4628 = vpop.f32.mrb[0].mxu0
  %v4629 = vadd.f32 0.0, %v4628
  %v4630 = vpop.f32.mrb[0].mxu0
  %4631 = vmatprep.mubr.bf16.mxu0 0
  %4632 = vmatmul.mubr.bf16.gmra.mrb[0].mxu0 %v4109
  %v4633 = vpop.f32.mrb[0].mxu0
  %v4634 = vadd.f32 0.0, %v4633
  %v4635 = vpop.f32.mrb[0].mxu0
  %v4636 = vpop.f32.mrb[0].mxu0
  %v4637 = vadd.f32 0.0, %v4636
  %v4638 = vpop.f32.mrb[0].mxu0
  %4639 = vmatprep.mubr.bf16.mxu0 0
  %4640 = vmatmul.mubr.bf16.gmra.mrb[0].mxu0 %v4110
  %v4641 = vpop.f32.mrb[0].mxu0
  %v4642 = vadd.f32 0.0, %v4641
  %v4643 = vpop.f32.mrb[0].mxu0
  %v4644 = vpop.f32.mrb[0].mxu0
  %v4645 = vadd.f32 0.0, %v4644
  %v4646 = vpop.f32.mrb[0].mxu0
  %4647 = vmatprep.mubr.bf16.mxu0 0
  %4648 = vmatmul.mubr.bf16.gmra.mrb[0].mxu0 %v4111
  %v4649 = vpop.f32.mrb[0].mxu0
  %v4650 = vadd.f32 0.0, %v4649
  %v4651 = vpop.f32.mrb[0].mxu0
  %v4652 = vpop.f32.mrb[0].mxu0
  %v4653 = vadd.f32 0.0, %v4652
  %v4654 = vpop.f32.mrb[0].mxu0
  %4655 = vmatprep.mubr.bf16.mxu0 0
  %4656 = vmatmul.mubr.bf16.gmra.mrb[0].mxu0 %v4112
  %v4657 = vpop.f32.mrb[0].mxu0
  %v4658 = vadd.f32 0.0, %v4657
  %v4659 = vpop.f32.mrb[0].mxu0
  %v4660 = vpop.f32.mrb[0].mxu0
  %v4661 = vadd.f32 0.0, %v4660
  %v4662 = vpop.f32.mrb[0].mxu0
  %4663 = vmatprep.mubr.bf16.mxu0 0
  %4664 = vmatmul.mubr.bf16.gmra.mrb[0].mxu0 %v4113
  %v4665 = vpop.f32.mrb[0].mxu0
  %v4666 = vadd.f32 0.0, %v4665
  %v4667 = vpop.f32.mrb[0].mxu0
  %v4668 = vpop.f32.mrb[0].mxu0
  %v4669 = vadd.f32 0.0, %v4668
  %v4670 = vpop.f32.mrb[0].mxu0
  %4671 = vmatprep.mubr.bf16.mxu0 0
  %4672 = vmatmul.mubr.bf16.gmra.mrb[0].mxu0 %v4114
  %v4673 = vpop.f32.mrb[0].mxu0
  %v4674 = vadd.f32 0.0, %v4673
  %v4675 = vpop.f32.mrb[0].mxu0
  %v4676 = vpop.f32.mrb[0].mxu0
  %v4677 = vadd.f32 0.0, %v4676
  %v4678 = vpop.f32.mrb[0].mxu0
  %4679 = vmatprep.mubr.bf16.mxu0 0
  %4680 = vmatmul.mubr.bf16.gmra.mrb[0].mxu0 %v4115
  %v4681 = vpop.f32.mrb[0].mxu0
  %v4682 = vadd.f32 0.0, %v4681
  %v4683 = vpop.f32.mrb[0].mxu0
  %v4684 = vpop.f32.mrb[0].mxu0
  %v4685 = vadd.f32 0.0, %v4684
  %v4686 = vpop.f32.mrb[0].mxu0
  %4687 = vmatprep.mubr.bf16.mxu0 0
  %4688 = vmatmul.mubr.bf16.gmra.mrb[0].mxu0 %v4116
  %v4689 = vpop.f32.mrb[0].mxu0
  %v4690 = vadd.f32 0.0, %v4689
  %v4691 = vpop.f32.mrb[0].mxu0
  %v4692 = vpop.f32.mrb[0].mxu0
  %v4693 = vadd.f32 0.0, %v4692
  %v4694 = vpop.f32.mrb[0].mxu0
  %4695 = vmatprep.mubr.bf16.mxu0 0
  %4696 = vmatmul.mubr.bf16.gmra.mrb[0].mxu0 %v4117
  %v4697 = vpop.f32.mrb[0].mxu0
  %v4698 = vadd.f32 0.0, %v4697
  %v4699 = vpop.f32.mrb[0].mxu0
  %v4700 = vpop.f32.mrb[0].mxu0
  %v4701 = vadd.f32 0.0, %v4700
  %v4702 = vpop.f32.mrb[0].mxu0
  %4703 = vmatprep.mubr.bf16.mxu0 0
  %4704 = vmatmul.mubr.bf16.gmra.mrb[0].mxu0 %v4118
  %v4705 = vpop.f32.mrb[0].mxu0
  %v4706 = vadd.f32 0.0, %v4705
  %v4707 = vpop.f32.mrb[0].mxu0
  %v4708 = vpop.f32.mrb[0].mxu0
  %v4709 = vadd.f32 0.0, %v4708
  %v4710 = vpop.f32.mrb[0].mxu0
  %4711 = vmatprep.mubr.bf16.mxu0 0
  %4712 = vmatmul.mubr.bf16.gmra.mrb[0].mxu0 %v4119
  %v4713 = vpop.f32.mrb[0].mxu0
  %v4714 = vadd.f32 0.0, %v4713
  %v4715 = vpop.f32.mrb[0].mxu0
  %v4716 = vpop.f32.mrb[0].mxu0
  %v4717 = vadd.f32 0.0, %v4716
  %v4718 = vpop.f32.mrb[0].mxu0
  %4719 = vmatprep.mubr.bf16.mxu0 0
  %4720 = vmatmul.mubr.bf16.gmra.mrb[0].mxu0 %v4120
  %v4721 = vpop.f32.mrb[0].mxu0
  %v4722 = vadd.f32 0.0, %v4721
  %v4723 = vpop.f32.mrb[0].mxu0
  %v4724 = vpop.f32.mrb[0].mxu0
  %v4725 = vadd.f32 0.0, %v4724
  %v4726 = vpop.f32.mrb[0].mxu0
  %4727 = vmatprep.mubr.bf16.mxu0 0
  %4728 = vmatmul.mubr.bf16.gmra.mrb[0].mxu0 %v4121
  %v4729 = vpop.f32.mrb[0].mxu0
  %v4730 = vadd.f32 0.0, %v4729
  %v4731 = vpop.f32.mrb[0].mxu0
  %v4732 = vpop.f32.mrb[0].mxu0
  %v4733 = vadd.f32 0.0, %v4732
  %v4734 = vpop.f32.mrb[0].mxu0
  %4735 = vmatprep.mubr.bf16.mxu0 0
  %4736 = vmatmul.mubr.bf16.gmra.mrb[0].mxu0 %v4122
  %v4737 = vpop.f32.mrb[0].mxu0
  %v4738 = vadd.f32 0.0, %v4737
  %v4739 = vpop.f32.mrb[0].mxu0
  %v4740 = vpop.f32.mrb[0].mxu0
  %v4741 = vadd.f32 0.0, %v4740
  %v4742 = vpop.f32.mrb[0].mxu0
  %4743 = vmatprep.mubr.bf16.mxu0 0
  %4744 = vmatmul.mubr.bf16.gmra.mrb[0].mxu0 %v4123
  %v4745 = vpop.f32.mrb[0].mxu0
  %v4746 = vadd.f32 0.0, %v4745
  %v4747 = vpop.f32.mrb[0].mxu0
  %v4748 = vpop.f32.mrb[0].mxu0
  %v4749 = vadd.f32 0.0, %v4748
  %v4750 = vpop.f32.mrb[0].mxu0
  %4751 = vmatprep.mubr.bf16.mxu0 0
  %4752 = vmatmul.mubr.bf16.gmra.mrb[0].mxu0 %v4124
  %v4753 = vpop.f32.mrb[0].mxu0
  %v4754 = vadd.f32 0.0, %v4753
  %v4755 = vpop.f32.mrb[0].mxu0
  %v4756 = vpop.f32.mrb[0].mxu0
  %v4757 = vadd.f32 0.0, %v4756
  %v4758 = vpop.f32.mrb[0].mxu0
  %4759 = vmatprep.mubr.bf16.mxu0 0
  %4760 = vmatmul.mubr.bf16.gmra.mrb[0].mxu0 %v4125
  %v4761 = vpop.f32.mrb[0].mxu0
  %v4762 = vadd.f32 0.0, %v4761
  %v4763 = vpop.f32.mrb[0].mxu0
  %v4764 = vpop.f32.mrb[0].mxu0
  %v4765 = vadd.f32 0.0, %v4764
  %v4766 = vpop.f32.mrb[0].mxu0
  %4767 = vmatprep.mubr.bf16.mxu0 0
  %4768 = vmatmul.mubr.bf16.gmra.mrb[0].mxu0 %v4126
  %v4769 = vpop.f32.mrb[0].mxu0
  %v4770 = vadd.f32 0.0, %v4769
  %v4771 = vpop.f32.mrb[0].mxu0
  %v4772 = vpop.f32.mrb[0].mxu0
  %v4773 = vadd.f32 0.0, %v4772
  %v4774 = vpop.f32.mrb[0].mxu0
  %4775 = vmatprep.mubr.bf16.mxu0 0
  %4776 = vmatmul.mubr.bf16.gmra.mrb[0].mxu0 %v4127
  %v4777 = vpop.f32.mrb[0].mxu0
  %v4778 = vadd.f32 0.0, %v4777
  %v4779 = vpop.f32.mrb[0].mxu0
  %v4780 = vpop.f32.mrb[0].mxu0
  %v4781 = vadd.f32 0.0, %v4780
  %v4782 = vpop.f32.mrb[0].mxu0
  %4783 = vmatprep.mubr.bf16.mxu0 0
  %4784 = vmatmul.mubr.bf16.gmra.mrb[0].mxu0 %v4128
  %v4785 = vpop.f32.mrb[0].mxu0
  %v4786 = vadd.f32 0.0, %v4785
  %v4787 = vpop.f32.mrb[0].mxu0
  %v4788 = vpop.f32.mrb[0].mxu0
  %v4789 = vadd.f32 0.0, %v4788
  %v4790 = vpop.f32.mrb[0].mxu0
  %4791 = vmatprep.mubr.bf16.mxu0 0
  %4792 = vmatmul.mubr.bf16.gmra.mrb[0].mxu0 %v4129
  %v4793 = vpop.f32.mrb[0].mxu0
  %v4794 = vadd.f32 0.0, %v4793
  %v4795 = vpop.f32.mrb[0].mxu0
  %v4796 = vpop.f32.mrb[0].mxu0
  %v4797 = vadd.f32 0.0, %v4796
  %v4798 = vpop.f32.mrb[0].mxu0
  %4799 = vmatprep.mubr.bf16.mxu0 0
  %4800 = vmatmul.mubr.bf16.gmra.mrb[0].mxu0 %v4130
  %v4801 = vpop.f32.mrb[0].mxu0
  %v4802 = vadd.f32 0.0, %v4801
  %v4803 = vpop.f32.mrb[0].mxu0
  %v4804 = vpop.f32.mrb[0].mxu0
  %v4805 = vadd.f32 0.0, %v4804
  %v4806 = vpop.f32.mrb[0].mxu0
  %4807 = vmatprep.mubr.bf16.mxu0 0
  %4808 = vmatmul.mubr.bf16.gmra.mrb[0].mxu0 %v4131
  %v4809 = vpop.f32.mrb[0].mxu0
  %v4810 = vadd.f32 0.0, %v4809
  %v4811 = vpop.f32.mrb[0].mxu0
  %v4812 = vpop.f32.mrb[0].mxu0
  %v4813 = vadd.f32 0.0, %v4812
  %v4814 = vpop.f32.mrb[0].mxu0
  %4815 = vmatprep.mubr.bf16.mxu0 0
  %4816 = vmatmul.mubr.bf16.gmra.mrb[0].mxu0 %v4132
  %v4817 = vpop.f32.mrb[0].mxu0
  %v4818 = vadd.f32 0.0, %v4817
  %v4819 = vpop.f32.mrb[0].mxu0
  %v4820 = vpop.f32.mrb[0].mxu0
  %v4821 = vadd.f32 0.0, %v4820
  %v4822 = vpop.f32.mrb[0].mxu0
  %4823 = vmatprep.mubr.bf16.mxu0 0
  %4824 = vmatmul.mubr.bf16.gmra.mrb[0].mxu0 %v4133
  %v4825 = vpop.f32.mrb[0].mxu0
  %v4826 = vadd.f32 0.0, %v4825
  %v4827 = vpop.f32.mrb[0].mxu0
  %v4828 = vpop.f32.mrb[0].mxu0
  %v4829 = vadd.f32 0.0, %v4828
  %v4830 = vpop.f32.mrb[0].mxu0
  %4831 = vmatprep.mubr.bf16.mxu0 0
  %4832 = vmatmul.mubr.bf16.gmra.mrb[0].mxu0 %v4134
  %v4833 = vpop.f32.mrb[0].mxu0
  %v4834 = vadd.f32 0.0, %v4833
  %v4835 = vpop.f32.mrb[0].mxu0
  %v4836 = vpop.f32.mrb[0].mxu0
  %v4837 = vadd.f32 0.0, %v4836
  %v4838 = vpop.f32.mrb[0].mxu0
  %4839 = vmatprep.mubr.bf16.mxu0 0
  %4840 = vmatmul.mubr.bf16.gmra.mrb[0].mxu0 %v4135
  %v4841 = vpop.f32.mrb[0].mxu0
  %v4842 = vadd.f32 0.0, %v4841
  %v4843 = vpop.f32.mrb[0].mxu0
  %v4844 = vpop.f32.mrb[0].mxu0
  %v4845 = vadd.f32 0.0, %v4844
  %v4846 = vpop.f32.mrb[0].mxu0
  %4847 = vmatprep.mubr.bf16.mxu0 0
  %4848 = vmatmul.mubr.bf16.gmra.mrb[0].mxu0 %v4136
  %v4849 = vpop.f32.mrb[0].mxu0
  %v4850 = vadd.f32 0.0, %v4849
  %v4851 = vpop.f32.mrb[0].mxu0
  %v4852 = vpop.f32.mrb[0].mxu0
  %v4853 = vadd.f32 0.0, %v4852
  %v4854 = vpop.f32.mrb[0].mxu0
  %4855 = vmatprep.mubr.bf16.mxu0 0
  %4856 = vmatmul.mubr.bf16.gmra.mrb[0].mxu0 %v4137
  %v4857 = vpop.f32.mrb[0].mxu0
  %v4858 = vadd.f32 0.0, %v4857
  %v4859 = vpop.f32.mrb[0].mxu0
  %v4860 = vpop.f32.mrb[0].mxu0
  %v4861 = vadd.f32 0.0, %v4860
  %v4862 = vpop.f32.mrb[0].mxu0
  %4863 = vmatprep.mubr.bf16.mxu0 0
  %4864 = vmatmul.mubr.bf16.gmra.mrb[0].mxu0 %v4138
  %v4865 = vpop.f32.mrb[0].mxu0
  %v4866 = vadd.f32 0.0, %v4865
  %v4867 = vpop.f32.mrb[0].mxu0
  %v4868 = vpop.f32.mrb[0].mxu0
  %v4869 = vadd.f32 0.0, %v4868
  %v4870 = vpop.f32.mrb[0].mxu0
  %4871 = vmatprep.mubr.bf16.mxu0 0
  %4872 = vmatmul.mubr.bf16.gmra.mrb[0].mxu0 %v4139
  %v4873 = vpop.f32.mrb[0].mxu0
  %v4874 = vadd.f32 0.0, %v4873
  %v4875 = vpop.f32.mrb[0].mxu0
  %v4876 = vpop.f32.mrb[0].mxu0
  %v4877 = vadd.f32 0.0, %v4876
  %v4878 = vpop.f32.mrb[0].mxu0
  %4879 = vmatprep.mubr.bf16.mxu0 0
  %4880 = vmatmul.mubr.bf16.gmra.mrb[0].mxu0 %v4140
  %v4881 = vpop.f32.mrb[0].mxu0
  %v4882 = vadd.f32 0.0, %v4881
  %v4883 = vpop.f32.mrb[0].mxu0
  %v4884 = vpop.f32.mrb[0].mxu0
  %v4885 = vadd.f32 0.0, %v4884
  %v4886 = vpop.f32.mrb[0].mxu0
  %4887 = vmatprep.mubr.bf16.mxu0 0
  %4888 = vmatmul.mubr.bf16.gmra.mrb[0].mxu0 %v4141
  %v4889 = vpop.f32.mrb[0].mxu0
  %v4890 = vadd.f32 0.0, %v4889
  %v4891 = vpop.f32.mrb[0].mxu0
  %v4892 = vpop.f32.mrb[0].mxu0
  %v4893 = vadd.f32 0.0, %v4892
  %v4894 = vpop.f32.mrb[0].mxu0
  %4895 = vmatprep.mubr.bf16.mxu0 0
  %4896 = vmatmul.mubr.bf16.gmra.mrb[0].mxu0 %v4142
  %v4897 = vpop.f32.mrb[0].mxu0
  %v4898 = vadd.f32 0.0, %v4897
  %v4899 = vpop.f32.mrb[0].mxu0
  %v4900 = vpop.f32.mrb[0].mxu0
  %v4901 = vadd.f32 0.0, %v4900
  %v4902 = vpop.f32.mrb[0].mxu0
  %4903 = vmatprep.mubr.bf16.mxu0 0
  %4904 = vmatmul.mubr.bf16.gmra.mrb[0].mxu0 %v4143
  %v4905 = vpop.f32.mrb[0].mxu0
  %v4906 = vadd.f32 0.0, %v4905
  %v4907 = vpop.f32.mrb[0].mxu0
  %v4908 = vpop.f32.mrb[0].mxu0
  %v4909 = vadd.f32 0.0, %v4908
  %v4910 = vpop.f32.mrb[0].mxu0
  %4911 = vmatprep.mubr.bf16.mxu0 0
  %4912 = vmatmul.mubr.bf16.gmra.mrb[0].mxu0 %v4144
  %v4913 = vpop.f32.mrb[0].mxu0
  %v4914 = vadd.f32 0.0, %v4913
  %v4915 = vpop.f32.mrb[0].mxu0
  %v4916 = vpop.f32.mrb[0].mxu0
  %v4917 = vadd.f32 0.0, %v4916
  %v4918 = vpop.f32.mrb[0].mxu0
  %4919 = vmatprep.mubr.bf16.mxu0 0
  %4920 = vmatmul.mubr.bf16.gmra.mrb[0].mxu0 %v4145
  %v4921 = vpop.f32.mrb[0].mxu0
  %v4922 = vadd.f32 0.0, %v4921
  %v4923 = vpop.f32.mrb[0].mxu0
  %v4924 = vpop.f32.mrb[0].mxu0
  %v4925 = vadd.f32 0.0, %v4924
  %v4926 = vpop.f32.mrb[0].mxu0
  %4927 = vmatprep.mubr.bf16.mxu0 0
  %4928 = vmatmul.mubr.bf16.gmra.mrb[0].mxu0 %v4146
  %v4929 = vpop.f32.mrb[0].mxu0
  %v4930 = vadd.f32 0.0, %v4929
  %v4931 = vpop.f32.mrb[0].mxu0
  %v4932 = vpop.f32.mrb[0].mxu0
  %v4933 = vadd.f32 0.0, %v4932
  %v4934 = vpop.f32.mrb[0].mxu0
  %4935 = vmatprep.mubr.bf16.mxu0 0
  %4936 = vmatmul.mubr.bf16.gmra.mrb[0].mxu0 %v4147
  %v4937 = vpop.f32.mrb[0].mxu0
  %v4938 = vadd.f32 0.0, %v4937
  %v4939 = vpop.f32.mrb[0].mxu0
  %v4940 = vpop.f32.mrb[0].mxu0
  %v4941 = vadd.f32 0.0, %v4940
  %v4942 = vpop.f32.mrb[0].mxu0
  %4943 = vmatprep.mubr.bf16.mxu0 0
  %4944 = vmatmul.mubr.bf16.gmra.mrb[0].mxu0 %v4148
  %v4945 = vpop.f32.mrb[0].mxu0
  %v4946 = vadd.f32 0.0, %v4945
  %v4947 = vpop.f32.mrb[0].mxu0
  %v4948 = vpop.f32.mrb[0].mxu0
  %v4949 = vadd.f32 0.0, %v4948
  %v4950 = vpop.f32.mrb[0].mxu0
  %4951 = vmatprep.mubr.bf16.mxu0 0
  %4952 = vmatmul.mubr.bf16.gmra.mrb[0].mxu0 %v4149
  %v4953 = vpop.f32.mrb[0].mxu0
  %v4954 = vadd.f32 0.0, %v4953
  %v4955 = vpop.f32.mrb[0].mxu0
  %v4956 = vpop.f32.mrb[0].mxu0
  %v4957 = vadd.f32 0.0, %v4956
  %v4958 = vpop.f32.mrb[0].mxu0
  %4959 = vmatprep.mubr.bf16.mxu0 0
  %4960 = vmatmul.mubr.bf16.gmra.mrb[0].mxu0 %v4150
  %v4961 = vpop.f32.mrb[0].mxu0
  %v4962 = vadd.f32 0.0, %v4961
  %v4963 = vpop.f32.mrb[0].mxu0
  %v4964 = vpop.f32.mrb[0].mxu0
  %v4965 = vadd.f32 0.0, %v4964
  %v4966 = vpop.f32.mrb[0].mxu0
  %4967 = vmatprep.mubr.bf16.mxu0 0
  %4968 = vmatmul.mubr.bf16.gmra.mrb[0].mxu0 %v4151
  %v4969 = vpop.f32.mrb[0].mxu0
  %v4970 = vadd.f32 0.0, %v4969
  %v4971 = vpop.f32.mrb[0].mxu0
  %v4972 = vpop.f32.mrb[0].mxu0
  %v4973 = vadd.f32 0.0, %v4972
  %v4974 = vpop.f32.mrb[0].mxu0
  %4975 = vmatprep.mubr.bf16.mxu0 0
  %4976 = vmatmul.mubr.bf16.gmra.mrb[0].mxu0 %v4152
  %v4977 = vpop.f32.mrb[0].mxu0
  %v4978 = vadd.f32 0.0, %v4977
  %v4979 = vpop.f32.mrb[0].mxu0
  %v4980 = vpop.f32.mrb[0].mxu0
  %v4981 = vadd.f32 0.0, %v4980
  %v4982 = vpop.f32.mrb[0].mxu0
  %4983 = vmatprep.mubr.bf16.mxu0 0
  %4984 = vmatmul.mubr.bf16.gmra.mrb[0].mxu0 %v4153
  %v4985 = vpop.f32.mrb[0].mxu0
  %v4986 = vadd.f32 0.0, %v4985
  %v4987 = vpop.f32.mrb[0].mxu0
  %v4988 = vpop.f32.mrb[0].mxu0
  %v4989 = vadd.f32 0.0, %v4988
  %v4990 = vpop.f32.mrb[0].mxu0
  %4991 = vmatprep.mubr.bf16.mxu0 0
  %4992 = vmatmul.mubr.bf16.gmra.mrb[0].mxu0 %v4154
  %v4993 = vpop.f32.mrb[0].mxu0
  %v4994 = vadd.f32 0.0, %v4993
  %v4995 = vpop.f32.mrb[0].mxu0
  %v4996 = vpop.f32.mrb[0].mxu0
  %v4997 = vadd.f32 0.0, %v4996
  %v4998 = vpop.f32.mrb[0].mxu0
  %4999 = vmatprep.mubr.bf16.mxu0 0
  %5000 = vmatmul.mubr.bf16.gmra.mrb[0].mxu0 %v4155
  %v5001 = vpop.f32.mrb[0].mxu0
  %v5002 = vadd.f32 0.0, %v5001
  %v5003 = vpop.f32.mrb[0].mxu0
  %v5004 = vpop.f32.mrb[0].mxu0
  %v5005 = vadd.f32 0.0, %v5004
  %v5006 = vpop.f32.mrb[0].mxu0
  %5007 = vmatprep.mubr.bf16.mxu0 0
  %5008 = vmatmul.mubr.bf16.gmra.mrb[0].mxu0 %v4156
  %v5009 = vpop.f32.mrb[0].mxu0
  %v5010 = vadd.f32 0.0, %v5009
  %v5011 = vpop.f32.mrb[0].mxu0
  %v5012 = vpop.f32.mrb[0].mxu0
  %v5013 = vadd.f32 0.0, %v5012
  %v5014 = vpop.f32.mrb[0].mxu0
  %5015 = vmatprep.mubr.bf16.mxu0 0
  %5016 = vmatmul.mubr.bf16.gmra.mrb[0].mxu0 %v4157
  %v5017 = vpop.f32.mrb[0].mxu0
  %v5018 = vadd.f32 0.0, %v5017
  %v5019 = vpop.f32.mrb[0].mxu0
  %v5020 = vpop.f32.mrb[0].mxu0
  %v5021 = vadd.f32 0.0, %v5020
  %v5022 = vpop.f32.mrb[0].mxu0
  %5023 = vmatprep.mubr.bf16.mxu0 0
  %5024 = vmatmul.mubr.bf16.gmra.mrb[0].mxu0 %v4158
  %v5025 = vpop.f32.mrb[0].mxu0
  %v5026 = vadd.f32 0.0, %v5025
  %v5027 = vpop.f32.mrb[0].mxu0
  %v5028 = vpop.f32.mrb[0].mxu0
  %v5029 = vadd.f32 0.0, %v5028
  %v5030 = vpop.f32.mrb[0].mxu0
  %5031 = vmatprep.mubr.bf16.mxu0 0
  %5032 = vmatmul.mubr.bf16.gmra.mrb[0].mxu0 %v4159
  %v5033 = vpop.f32.mrb[0].mxu0
  %v5034 = vadd.f32 0.0, %v5033
  %v5035 = vpop.f32.mrb[0].mxu0
  %v5036 = vpop.f32.mrb[0].mxu0
  %v5037 = vadd.f32 0.0, %v5036
  %v5038 = vpop.f32.mrb[0].mxu0
  %5039 = vmatprep.mubr.bf16.mxu0 0
  %5040 = vmatmul.mubr.bf16.gmra.mrb[0].mxu0 %v4160
  %v5041 = vpop.f32.mrb[0].mxu0
  %v5042 = vadd.f32 0.0, %v5041
  %v5043 = vpop.f32.mrb[0].mxu0
  %v5044 = vpop.f32.mrb[0].mxu0
  %v5045 = vadd.f32 0.0, %v5044
  %v5046 = vpop.f32.mrb[0].mxu0
  %5047 = vmatprep.mubr.bf16.mxu0 0
  %5048 = vmatmul.mubr.bf16.gmra.mrb[0].mxu0 %v4161
  %v5049 = vpop.f32.mrb[0].mxu0
  %v5050 = vadd.f32 0.0, %v5049
  %v5051 = vpop.f32.mrb[0].mxu0
  %v5052 = vpop.f32.mrb[0].mxu0
  %v5053 = vadd.f32 0.0, %v5052
  %v5054 = vpop.f32.mrb[0].mxu0
  %5055 = vmatprep.mubr.bf16.mxu0 0
  %5056 = vmatmul.mubr.bf16.gmra.mrb[0].mxu0 %v4162
  %v5057 = vpop.f32.mrb[0].mxu0
  %v5058 = vadd.f32 0.0, %v5057
  %v5059 = vpop.f32.mrb[0].mxu0
  %v5060 = vpop.f32.mrb[0].mxu0
  %v5061 = vadd.f32 0.0, %v5060
  %v5062 = vpop.f32.mrb[0].mxu0
  %5063 = vmatprep.mubr.bf16.mxu0 0
  %5064 = vmatmul.mubr.bf16.gmra.mrb[0].mxu0 %v4163
  %v5065 = vpop.f32.mrb[0].mxu0
  %v5066 = vadd.f32 0.0, %v5065
  %v5067 = vpop.f32.mrb[0].mxu0
  %v5068 = vpop.f32.mrb[0].mxu0
  %v5069 = vadd.f32 0.0, %v5068
  %v5070 = vpop.f32.mrb[0].mxu0
  %5071 = vmatprep.mubr.bf16.mxu0 0
  %5072 = vmatmul.mubr.bf16.gmra.mrb[0].mxu0 %v4164
  %v5073 = vpop.f32.mrb[0].mxu0
  %v5074 = vadd.f32 0.0, %v5073
  %v5075 = vpop.f32.mrb[0].mxu0
  %v5076 = vpop.f32.mrb[0].mxu0
  %v5077 = vadd.f32 0.0, %v5076
  %v5078 = vpop.f32.mrb[0].mxu0
  %5079 = vdwg.mxu0
  %v5080 = vmax.f32 %v3282, %v4298
  %v5081 = vmax.f32 %v3283, %v4301
  %v5082 = vmax.f32 %v3284, %v4306
  %v5083 = vmax.f32 %v3285, %v4309
  %v5084 = vmax.f32 %v3286, %v4314
  %v5085 = vmax.f32 %v3287, %v4317
  %v5086 = vmax.f32 %v3288, %v4322
  %v5087 = vmax.f32 %v3289, %v4325
  %v5088 = vmax.f32 %v3290, %v4330
  %v5089 = vmax.f32 %v3291, %v4333
  %v5090 = vmax.f32 %v3292, %v4338
  %v5091 = vmax.f32 %v3293, %v4341
  %v5092 = vmax.f32 %v3294, %v4346
  %v5093 = vmax.f32 %v3295, %v4349
  %v5094 = vmax.f32 %v3296, %v4354
  %v5095 = vmax.f32 %v3297, %v4357
  %v5096 = vmax.f32 %v3298, %v4362
  %v5097 = vmax.f32 %v3299, %v4365
  %v5098 = vmax.f32 %v3300, %v4370
  %v5099 = vmax.f32 %v3301, %v4373
  %v5100 = vmax.f32 %v3302, %v4378
  %v5101 = vmax.f32 %v3303, %v4381
  %v5102 = vmax.f32 %v3304, %v4386
  %v5103 = vmax.f32 %v3305, %v4389
  %v5104 = vmax.f32 %v3306, %v4394
  %v5105 = vmax.f32 %v3307, %v4397
  %v5106 = vmax.f32 %v3308, %v4402
  %v5107 = vmax.f32 %v3309, %v4405
  %v5108 = vmax.f32 %v3310, %v4410
  %v5109 = vmax.f32 %v3311, %v4413
  %v5110 = vmax.f32 %v3312, %v4418
  %v5111 = vmax.f32 %v3313, %v4421
  %v5112 = vmax.f32 %v3314, %v4426
  %v5113 = vmax.f32 %v3315, %v4429
  %v5114 = vmax.f32 %v3316, %v4434
  %v5115 = vmax.f32 %v3317, %v4437
  %v5116 = vmax.f32 %v3318, %v4442
  %v5117 = vmax.f32 %v3319, %v4445
  %v5118 = vmax.f32 %v3320, %v4450
  %v5119 = vmax.f32 %v3321, %v4453
  %v5120 = vmax.f32 %v3322, %v4458
  %v5121 = vmax.f32 %v3323, %v4461
  %v5122 = vmax.f32 %v3324, %v4466
  %v5123 = vmax.f32 %v3325, %v4469
  %v5124 = vmax.f32 %v3326, %v4474
  %v5125 = vmax.f32 %v3327, %v4477
  %v5126 = vmax.f32 %v3328, %v4482
  %v5127 = vmax.f32 %v3329, %v4485
  %v5128 = vmax.f32 %v3330, %v4490
  %v5129 = vmax.f32 %v3331, %v4493
  %v5130 = vmax.f32 %v3332, %v4498
  %v5131 = vmax.f32 %v3333, %v4501
  %v5132 = vmax.f32 %v3334, %v4506
  %v5133 = vmax.f32 %v3335, %v4509
  %v5134 = vmax.f32 %v3336, %v4514
  %v5135 = vmax.f32 %v3337, %v4517
  %v5136 = vmax.f32 %v3338, %v4522
  %v5137 = vmax.f32 %v3339, %v4525
  %v5138 = vmax.f32 %v3340, %v4530
  %v5139 = vmax.f32 %v3341, %v4533
  %v5140 = vmax.f32 %v3342, %v4538
  %v5141 = vmax.f32 %v3343, %v4541
  %v5142 = vmax.f32 %v3344, %v4546
  %v5143 = vmax.f32 %v3345, %v4549
  %v5144 = vmax.f32 %v3346, %v4554
  %v5145 = vmax.f32 %v3347, %v4557
  %v5146 = vmax.f32 %v3348, %v4562
  %v5147 = vmax.f32 %v3349, %v4565
  %v5148 = vmax.f32 %v3350, %v4570
  %v5149 = vmax.f32 %v3351, %v4573
  %v5150 = vmax.f32 %v3352, %v4578
  %v5151 = vmax.f32 %v3353, %v4581
  %v5152 = vmax.f32 %v3354, %v4586
  %v5153 = vmax.f32 %v3355, %v4589
  %v5154 = vmax.f32 %v3356, %v4594
  %v5155 = vmax.f32 %v3357, %v4597
  %v5156 = vmax.f32 %v3358, %v4602
  %v5157 = vmax.f32 %v3359, %v4605
  %v5158 = vmax.f32 %v3360, %v4610
  %v5159 = vmax.f32 %v3361, %v4613
  %v5160 = vmax.f32 %v3362, %v4618
  %v5161 = vmax.f32 %v3363, %v4621
  %v5162 = vmax.f32 %v3364, %v4626
  %v5163 = vmax.f32 %v3365, %v4629
  %v5164 = vmax.f32 %v3366, %v4634
  %v5165 = vmax.f32 %v3367, %v4637
  %v5166 = vmax.f32 %v3368, %v4642
  %v5167 = vmax.f32 %v3369, %v4645
  %v5168 = vmax.f32 %v3370, %v4650
  %v5169 = vmax.f32 %v3371, %v4653
  %v5170 = vmax.f32 %v3372, %v4658
  %v5171 = vmax.f32 %v3373, %v4661
  %v5172 = vmax.f32 %v3374, %v4666
  %v5173 = vmax.f32 %v3375, %v4669
  %v5174 = vmax.f32 %v3376, %v4674
  %v5175 = vmax.f32 %v3377, %v4677
  %v5176 = vmax.f32 %v3378, %v4682
  %v5177 = vmax.f32 %v3379, %v4685
  %v5178 = vmax.f32 %v3380, %v4690
  %v5179 = vmax.f32 %v3381, %v4693
  %v5180 = vmax.f32 %v3382, %v4698
  %v5181 = vmax.f32 %v3383, %v4701
  %v5182 = vmax.f32 %v3384, %v4706
  %v5183 = vmax.f32 %v3385, %v4709
  %v5184 = vmax.f32 %v3386, %v4714
  %v5185 = vmax.f32 %v3387, %v4717
  %v5186 = vmax.f32 %v3388, %v4722
  %v5187 = vmax.f32 %v3389, %v4725
  %v5188 = vmax.f32 %v3390, %v4730
  %v5189 = vmax.f32 %v3391, %v4733
  %v5190 = vmax.f32 %v3392, %v4738
  %v5191 = vmax.f32 %v3393, %v4741
  %v5192 = vmax.f32 %v3394, %v4746
  %v5193 = vmax.f32 %v3395, %v4749
  %v5194 = vmax.f32 %v3396, %v4754
  %v5195 = vmax.f32 %v3397, %v4757
  %v5196 = vmax.f32 %v3398, %v4762
  %v5197 = vmax.f32 %v3399, %v4765
  %v5198 = vmax.f32 %v3400, %v4770
  %v5199 = vmax.f32 %v3401, %v4773
  %v5200 = vmax.f32 %v3402, %v4778
  %v5201 = vmax.f32 %v3403, %v4781
  %v5202 = vmax.f32 %v3404, %v4786
  %v5203 = vmax.f32 %v3405, %v4789
  %v5204 = vmax.f32 %v3406, %v4794
  %v5205 = vmax.f32 %v3407, %v4797
  %v5206 = vmax.f32 %v3408, %v4802
  %v5207 = vmax.f32 %v3409, %v4805
  %v5208 = vmax.f32 %v3410, %v4810
  %v5209 = vmax.f32 %v3411, %v4813
  %v5210 = vmax.f32 %v3412, %v4818
  %v5211 = vmax.f32 %v3413, %v4821
  %v5212 = vmax.f32 %v3414, %v4826
  %v5213 = vmax.f32 %v3415, %v4829
  %v5214 = vmax.f32 %v3416, %v4834
  %v5215 = vmax.f32 %v3417, %v4837
  %v5216 = vmax.f32 %v3418, %v4842
  %v5217 = vmax.f32 %v3419, %v4845
  %v5218 = vmax.f32 %v3420, %v4850
  %v5219 = vmax.f32 %v3421, %v4853
  %v5220 = vmax.f32 %v3422, %v4858
  %v5221 = vmax.f32 %v3423, %v4861
  %v5222 = vmax.f32 %v3424, %v4866
  %v5223 = vmax.f32 %v3425, %v4869
  %v5224 = vmax.f32 %v3426, %v4874
  %v5225 = vmax.f32 %v3427, %v4877
  %v5226 = vmax.f32 %v3428, %v4882
  %v5227 = vmax.f32 %v3429, %v4885
  %v5228 = vmax.f32 %v3430, %v4890
  %v5229 = vmax.f32 %v3431, %v4893
  %v5230 = vmax.f32 %v3432, %v4898
  %v5231 = vmax.f32 %v3433, %v4901
  %v5232 = vmax.f32 %v3434, %v4906
  %v5233 = vmax.f32 %v3435, %v4909
  %v5234 = vmax.f32 %v3436, %v4914
  %v5235 = vmax.f32 %v3437, %v4917
  %v5236 = vmax.f32 %v3438, %v4922
  %v5237 = vmax.f32 %v3439, %v4925
  %v5238 = vmax.f32 %v3440, %v4930
  %v5239 = vmax.f32 %v3441, %v4933
  %v5240 = vmax.f32 %v3442, %v4938
  %v5241 = vmax.f32 %v3443, %v4941
  %v5242 = vmax.f32 %v3444, %v4946
  %v5243 = vmax.f32 %v3445, %v4949
  %v5244 = vmax.f32 %v3446, %v4954
  %v5245 = vmax.f32 %v3447, %v4957
  %v5246 = vmax.f32 %v3448, %v4962
  %v5247 = vmax.f32 %v3449, %v4965
  %v5248 = vmax.f32 %v3450, %v4970
  %v5249 = vmax.f32 %v3451, %v4973
  %v5250 = vmax.f32 %v3452, %v4978
  %v5251 = vmax.f32 %v3453, %v4981
  %v5252 = vmax.f32 %v3454, %v4986
  %v5253 = vmax.f32 %v3455, %v4989
  %v5254 = vmax.f32 %v3456, %v4994
  %v5255 = vmax.f32 %v3457, %v4997
  %v5256 = vmax.f32 %v3458, %v5002
  %v5257 = vmax.f32 %v3459, %v5005
  %v5258 = vmax.f32 %v3460, %v5010
  %v5259 = vmax.f32 %v3461, %v5013
  %v5260 = vmax.f32 %v3462, %v5018
  %v5261 = vmax.f32 %v3463, %v5021
  %v5262 = vmax.f32 %v3464, %v5026
  %v5263 = vmax.f32 %v3465, %v5029
  %v5264 = vmax.f32 %v3466, %v5034
  %v5265 = vmax.f32 %v3467, %v5037
  %v5266 = vmax.f32 %v3468, %v5042
  %v5267 = vmax.f32 %v3469, %v5045
  %v5268 = vmax.f32 %v3470, %v5050
  %v5269 = vmax.f32 %v3471, %v5053
  %v5270 = vmax.f32 %v3472, %v5058
  %v5271 = vmax.f32 %v3473, %v5061
  %v5272 = vmax.f32 %v3474, %v5066
  %v5273 = vmax.f32 %v3475, %v5069
  %v5274 = vmax.f32 %v3476, %v5074
  %v5275 = vmax.f32 %v3477, %v5077
  %s5276 = scalar_lea.vmem %s0, 2352
  %v5277 = vld [vmem:[%s5276] sm:$0xf]
  %v5278 = vld [vmem:[%s5276 + $0x4] sm:$0xf]
  %v5279 = vld [vmem:[%s5276 + $0x8] sm:$0xf]
  %v5280 = vld [vmem:[%s5276 + $0xc] sm:$0xf]
  %v5281 = vld [vmem:[%s5276 + $0x10] sm:$0xf]
  %v5282 = vld [vmem:[%s5276 + $0x14] sm:$0xf]
  %v5283 = vld [vmem:[%s5276 + $0x18] sm:$0xf]
  %v5284 = vld [vmem:[%s5276 + $0x1c] sm:$0xf]
  %v5285 = vld [vmem:[%s5276 + $0x20] sm:$0xf]
  %v5286 = vld [vmem:[%s5276 + $0x24] sm:$0xf]
  %v5287 = vld [vmem:[%s5276 + $0x28] sm:$0xf]
  %v5288 = vld [vmem:[%s5276 + $0x2c] sm:$0xf]
  %v5289 = vld [vmem:[%s5276 + $0x30] sm:$0xf]
  %v5290 = vld [vmem:[%s5276 + $0x34] sm:$0xf]
  %v5291 = vld [vmem:[%s5276 + $0x38] sm:$0xf]
  %v5292 = vld [vmem:[%s5276 + $0x3c] sm:$0xf]
  %v5293 = vld [vmem:[%s5276 + $0x40] sm:$0xf]
  %v5294 = vld [vmem:[%s5276 + $0x44] sm:$0xf]
  %v5295 = vld [vmem:[%s5276 + $0x48] sm:$0xf]
  %v5296 = vld [vmem:[%s5276 + $0x4c] sm:$0xf]
  %v5297 = vld [vmem:[%s5276 + $0x50] sm:$0xf]
  %v5298 = vld [vmem:[%s5276 + $0x54] sm:$0xf]
  %v5299 = vld [vmem:[%s5276 + $0x58] sm:$0xf]
  %v5300 = vld [vmem:[%s5276 + $0x5c] sm:$0xf]
  %v5301 = vld [vmem:[%s5276 + $0x60] sm:$0xf]
  %v5302 = vld [vmem:[%s5276 + $0x64] sm:$0xf]
  %v5303 = vld [vmem:[%s5276 + $0x68] sm:$0xf]
  %v5304 = vld [vmem:[%s5276 + $0x6c] sm:$0xf]
  %v5305 = vld [vmem:[%s5276 + $0x70] sm:$0xf]
  %v5306 = vld [vmem:[%s5276 + $0x74] sm:$0xf]
  %v5307 = vld [vmem:[%s5276 + $0x78] sm:$0xf]
  %v5308 = vld [vmem:[%s5276 + $0x7c] sm:$0xf]
  %v5309 = vld [vmem:[%s5276 + $0x80] sm:$0xf]
  %v5310 = vld [vmem:[%s5276 + $0x84] sm:$0xf]
  %v5311 = vld [vmem:[%s5276 + $0x88] sm:$0xf]
  %v5312 = vld [vmem:[%s5276 + $0x8c] sm:$0xf]
  %v5313 = vld [vmem:[%s5276 + $0x90] sm:$0xf]
  %v5314 = vld [vmem:[%s5276 + $0x94] sm:$0xf]
  %v5315 = vld [vmem:[%s5276 + $0x98] sm:$0xf]
  %v5316 = vld [vmem:[%s5276 + $0x9c] sm:$0xf]
  %v5317 = vld [vmem:[%s5276 + $0xa0] sm:$0xf]
  %v5318 = vld [vmem:[%s5276 + $0xa4] sm:$0xf]
  %v5319 = vld [vmem:[%s5276 + $0xa8] sm:$0xf]
  %v5320 = vld [vmem:[%s5276 + $0xac] sm:$0xf]
  %v5321 = vld [vmem:[%s5276 + $0xb0] sm:$0xf]
  %v5322 = vld [vmem:[%s5276 + $0xb4] sm:$0xf]
  %v5323 = vld [vmem:[%s5276 + $0xb8] sm:$0xf]
  %v5324 = vld [vmem:[%s5276 + $0xbc] sm:$0xf]
  %v5325 = vld [vmem:[%s5276 + $0xc0] sm:$0xf]
  %v5326 = vld [vmem:[%s5276 + $0xc4] sm:$0xf]
  %v5327 = vld [vmem:[%s5276 + $0xc8] sm:$0xf]
  %v5328 = vld [vmem:[%s5276 + $0xcc] sm:$0xf]
  %v5329 = vld [vmem:[%s5276 + $0xd0] sm:$0xf]
  %v5330 = vld [vmem:[%s5276 + $0xd4] sm:$0xf]
  %v5331 = vld [vmem:[%s5276 + $0xd8] sm:$0xf]
  %v5332 = vld [vmem:[%s5276 + $0xdc] sm:$0xf]
  %v5333 = vld [vmem:[%s5276 + $0xe0] sm:$0xf]
  %v5334 = vld [vmem:[%s5276 + $0xe4] sm:$0xf]
  %v5335 = vld [vmem:[%s5276 + $0xe8] sm:$0xf]
  %v5336 = vld [vmem:[%s5276 + $0xec] sm:$0xf]
  %v5337 = vld [vmem:[%s5276 + $0xf0] sm:$0xf]
  %v5338 = vld [vmem:[%s5276 + $0xf4] sm:$0xf]
  %v5339 = vld [vmem:[%s5276 + $0xf8] sm:$0xf]
  %v5340 = vld [vmem:[%s5276 + $0xfc] sm:$0xf]
  %v5341 = vld [vmem:[%s5276 + $0x100] sm:$0xf]
  %v5342 = vld [vmem:[%s5276 + $0x104] sm:$0xf]
  %v5343 = vld [vmem:[%s5276 + $0x108] sm:$0xf]
  %v5344 = vld [vmem:[%s5276 + $0x10c] sm:$0xf]
  %v5345 = vld [vmem:[%s5276 + $0x110] sm:$0xf]
  %v5346 = vld [vmem:[%s5276 + $0x114] sm:$0xf]
  %v5347 = vld [vmem:[%s5276 + $0x118] sm:$0xf]
  %v5348 = vld [vmem:[%s5276 + $0x11c] sm:$0xf]
  %v5349 = vld [vmem:[%s5276 + $0x120] sm:$0xf]
  %v5350 = vld [vmem:[%s5276 + $0x124] sm:$0xf]
  %v5351 = vld [vmem:[%s5276 + $0x128] sm:$0xf]
  %v5352 = vld [vmem:[%s5276 + $0x12c] sm:$0xf]
  %v5353 = vld [vmem:[%s5276 + $0x130] sm:$0xf]
  %v5354 = vld [vmem:[%s5276 + $0x134] sm:$0xf]
  %v5355 = vld [vmem:[%s5276 + $0x138] sm:$0xf]
  %v5356 = vld [vmem:[%s5276 + $0x13c] sm:$0xf]
  %v5357 = vld [vmem:[%s5276 + $0x140] sm:$0xf]
  %v5358 = vld [vmem:[%s5276 + $0x144] sm:$0xf]
  %v5359 = vld [vmem:[%s5276 + $0x148] sm:$0xf]
  %v5360 = vld [vmem:[%s5276 + $0x14c] sm:$0xf]
  %v5361 = vld [vmem:[%s5276 + $0x150] sm:$0xf]
  %v5362 = vld [vmem:[%s5276 + $0x154] sm:$0xf]
  %v5363 = vld [vmem:[%s5276 + $0x158] sm:$0xf]
  %v5364 = vld [vmem:[%s5276 + $0x15c] sm:$0xf]
  %v5365 = vld [vmem:[%s5276 + $0x160] sm:$0xf]
  %v5366 = vld [vmem:[%s5276 + $0x164] sm:$0xf]
  %v5367 = vld [vmem:[%s5276 + $0x168] sm:$0xf]
  %v5368 = vld [vmem:[%s5276 + $0x16c] sm:$0xf]
  %v5369 = vld [vmem:[%s5276 + $0x170] sm:$0xf]
  %v5370 = vld [vmem:[%s5276 + $0x174] sm:$0xf]
  %v5371 = vld [vmem:[%s5276 + $0x178] sm:$0xf]
  %v5372 = vld [vmem:[%s5276 + $0x17c] sm:$0xf]
  %v5373 = vld [vmem:[%s5276 + $0x180] sm:$0xf]
  %v5374 = vld [vmem:[%s5276 + $0x184] sm:$0xf]
  %v5375 = vld [vmem:[%s5276 + $0x188] sm:$0xf]
  %v5376 = vld [vmem:[%s5276 + $0x18c] sm:$0xf]
  %v5377 = vld [vmem:[%s5276 + $0x190] sm:$0xf]
  %v5378 = vld [vmem:[%s5276 + $0x194] sm:$0xf]
  %v5379 = vld [vmem:[%s5276 + $0x198] sm:$0xf]
  %v5380 = vld [vmem:[%s5276 + $0x19c] sm:$0xf]
  %v5381 = vld [vmem:[%s5276 + $0x1a0] sm:$0xf]
  %v5382 = vld [vmem:[%s5276 + $0x1a4] sm:$0xf]
  %v5383 = vld [vmem:[%s5276 + $0x1a8] sm:$0xf]
  %v5384 = vld [vmem:[%s5276 + $0x1ac] sm:$0xf]
  %v5385 = vld [vmem:[%s5276 + $0x1b0] sm:$0xf]
  %v5386 = vld [vmem:[%s5276 + $0x1b4] sm:$0xf]
  %v5387 = vld [vmem:[%s5276 + $0x1b8] sm:$0xf]
  %v5388 = vld [vmem:[%s5276 + $0x1bc] sm:$0xf]
  %v5389 = vld [vmem:[%s5276 + $0x1c0] sm:$0xf]
  %v5390 = vld [vmem:[%s5276 + $0x1c4] sm:$0xf]
  %v5391 = vld [vmem:[%s5276 + $0x1c8] sm:$0xf]
  %v5392 = vld [vmem:[%s5276 + $0x1cc] sm:$0xf]
  %v5393 = vld [vmem:[%s5276 + $0x1d0] sm:$0xf]
  %v5394 = vld [vmem:[%s5276 + $0x1d4] sm:$0xf]
  %v5395 = vld [vmem:[%s5276 + $0x1d8] sm:$0xf]
  %v5396 = vld [vmem:[%s5276 + $0x1dc] sm:$0xf]
  %v5397 = vld [vmem:[%s5276 + $0x1e0] sm:$0xf]
  %v5398 = vld [vmem:[%s5276 + $0x1e4] sm:$0xf]
  %v5399 = vld [vmem:[%s5276 + $0x1e8] sm:$0xf]
  %v5400 = vld [vmem:[%s5276 + $0x1ec] sm:$0xf]
  %v5401 = vld [vmem:[%s5276 + $0x1f0] sm:$0xf]
  %v5402 = vld [vmem:[%s5276 + $0x1f4] sm:$0xf]
  %v5403 = vld [vmem:[%s5276 + $0x1f8] sm:$0xf]
  %v5404 = vld [vmem:[%s5276 + $0x1fc] sm:$0xf]
  %v5405 = vld [vmem:[%s5276 + $0x200] sm:$0xf]
  %v5406 = vld [vmem:[%s5276 + $0x204] sm:$0xf]
  %v5407 = vld [vmem:[%s5276 + $0x208] sm:$0xf]
  %v5408 = vld [vmem:[%s5276 + $0x20c] sm:$0xf]
  %v5409 = vld [vmem:[%s5276 + $0x210] sm:$0xf]
  %v5410 = vld [vmem:[%s5276 + $0x214] sm:$0xf]
  %v5411 = vld [vmem:[%s5276 + $0x218] sm:$0xf]
  %v5412 = vld [vmem:[%s5276 + $0x21c] sm:$0xf]
  %v5413 = vld [vmem:[%s5276 + $0x220] sm:$0xf]
  %v5414 = vld [vmem:[%s5276 + $0x224] sm:$0xf]
  %v5415 = vld [vmem:[%s5276 + $0x228] sm:$0xf]
  %v5416 = vld [vmem:[%s5276 + $0x22c] sm:$0xf]
  %v5417 = vld [vmem:[%s5276 + $0x230] sm:$0xf]
  %v5418 = vld [vmem:[%s5276 + $0x234] sm:$0xf]
  %v5419 = vld [vmem:[%s5276 + $0x238] sm:$0xf]
  %v5420 = vld [vmem:[%s5276 + $0x23c] sm:$0xf]
  %v5421 = vld [vmem:[%s5276 + $0x240] sm:$0xf]
  %v5422 = vld [vmem:[%s5276 + $0x244] sm:$0xf]
  %v5423 = vld [vmem:[%s5276 + $0x248] sm:$0xf]
  %v5424 = vld [vmem:[%s5276 + $0x24c] sm:$0xf]
  %v5425 = vld [vmem:[%s5276 + $0x250] sm:$0xf]
  %v5426 = vld [vmem:[%s5276 + $0x254] sm:$0xf]
  %v5427 = vld [vmem:[%s5276 + $0x258] sm:$0xf]
  %v5428 = vld [vmem:[%s5276 + $0x25c] sm:$0xf]
  %v5429 = vld [vmem:[%s5276 + $0x260] sm:$0xf]
  %v5430 = vld [vmem:[%s5276 + $0x264] sm:$0xf]
  %v5431 = vld [vmem:[%s5276 + $0x268] sm:$0xf]
  %v5432 = vld [vmem:[%s5276 + $0x26c] sm:$0xf]
  %v5433 = vld [vmem:[%s5276 + $0x270] sm:$0xf]
  %v5434 = vld [vmem:[%s5276 + $0x274] sm:$0xf]
  %v5435 = vld [vmem:[%s5276 + $0x278] sm:$0xf]
  %v5436 = vld [vmem:[%s5276 + $0x27c] sm:$0xf]
  %v5437 = vld [vmem:[%s5276 + $0x280] sm:$0xf]
  %v5438 = vld [vmem:[%s5276 + $0x284] sm:$0xf]
  %v5439 = vld [vmem:[%s5276 + $0x288] sm:$0xf]
  %v5440 = vld [vmem:[%s5276 + $0x28c] sm:$0xf]
  %v5441 = vld [vmem:[%s5276 + $0x290] sm:$0xf]
  %v5442 = vld [vmem:[%s5276 + $0x294] sm:$0xf]
  %v5443 = vld [vmem:[%s5276 + $0x298] sm:$0xf]
  %v5444 = vld [vmem:[%s5276 + $0x29c] sm:$0xf]
  %v5445 = vld [vmem:[%s5276 + $0x2a0] sm:$0xf]
  %v5446 = vld [vmem:[%s5276 + $0x2a4] sm:$0xf]
  %v5447 = vld [vmem:[%s5276 + $0x2a8] sm:$0xf]
  %v5448 = vld [vmem:[%s5276 + $0x2ac] sm:$0xf]
  %v5449 = vld [vmem:[%s5276 + $0x2b0] sm:$0xf]
  %v5450 = vld [vmem:[%s5276 + $0x2b4] sm:$0xf]
  %v5451 = vld [vmem:[%s5276 + $0x2b8] sm:$0xf]
  %v5452 = vld [vmem:[%s5276 + $0x2bc] sm:$0xf]
  %v5453 = vld [vmem:[%s5276 + $0x2c0] sm:$0xf]
  %v5454 = vld [vmem:[%s5276 + $0x2c4] sm:$0xf]
  %v5455 = vld [vmem:[%s5276 + $0x2c8] sm:$0xf]
  %v5456 = vld [vmem:[%s5276 + $0x2cc] sm:$0xf]
  %v5457 = vld [vmem:[%s5276 + $0x2d0] sm:$0xf]
  %v5458 = vld [vmem:[%s5276 + $0x2d4] sm:$0xf]
  %v5459 = vld [vmem:[%s5276 + $0x2d8] sm:$0xf]
  %v5460 = vld [vmem:[%s5276 + $0x2dc] sm:$0xf]
  %v5461 = vld [vmem:[%s5276 + $0x2e0] sm:$0xf]
  %v5462 = vld [vmem:[%s5276 + $0x2e4] sm:$0xf]
  %v5463 = vld [vmem:[%s5276 + $0x2e8] sm:$0xf]
  %v5464 = vld [vmem:[%s5276 + $0x2ec] sm:$0xf]
  %v5465 = vld [vmem:[%s5276 + $0x2f0] sm:$0xf]
  %v5466 = vld [vmem:[%s5276 + $0x2f4] sm:$0xf]
  %v5467 = vld [vmem:[%s5276 + $0x2f8] sm:$0xf]
  %v5468 = vld [vmem:[%s5276 + $0x2fc] sm:$0xf]
  %v5469 = vld [vmem:[%s5276 + $0x300] sm:$0xf]
  %v5470 = vld [vmem:[%s5276 + $0x304] sm:$0xf]
  %v5471 = vld [vmem:[%s5276 + $0x308] sm:$0xf]
  %v5472 = vld [vmem:[%s5276 + $0x30c] sm:$0xf]
  %v5669 = vunpack.c.l.b16 %v5277
  %v5670 = vunpack.c.l.b16 %v5278
  %v5671 = vunpack.c.l.b16 %v5279
  %v5672 = vunpack.c.l.b16 %v5280
  %v5673 = vunpack.c.l.b16 %v5281
  %v5674 = vunpack.c.l.b16 %v5282
  %v5675 = vunpack.c.l.b16 %v5283
  %v5676 = vunpack.c.l.b16 %v5284
  %v5677 = vunpack.c.l.b16 %v5285
  %v5678 = vunpack.c.l.b16 %v5286
  %v5679 = vunpack.c.l.b16 %v5287
  %v5680 = vunpack.c.l.b16 %v5288
  %v5681 = vunpack.c.l.b16 %v5289
  %v5682 = vunpack.c.l.b16 %v5290
  %v5683 = vunpack.c.l.b16 %v5291
  %v5684 = vunpack.c.l.b16 %v5292
  %v5685 = vunpack.c.l.b16 %v5293
  %v5686 = vunpack.c.l.b16 %v5294
  %v5687 = vunpack.c.l.b16 %v5295
  %v5688 = vunpack.c.l.b16 %v5296
  %v5689 = vunpack.c.l.b16 %v5297
  %v5690 = vunpack.c.l.b16 %v5298
  %v5691 = vunpack.c.l.b16 %v5299
  %v5692 = vunpack.c.l.b16 %v5300
  %v5693 = vunpack.c.l.b16 %v5301
  %v5694 = vunpack.c.l.b16 %v5302
  %v5695 = vunpack.c.l.b16 %v5303
  %v5696 = vunpack.c.l.b16 %v5304
  %v5697 = vunpack.c.l.b16 %v5305
  %v5698 = vunpack.c.l.b16 %v5306
  %v5699 = vunpack.c.l.b16 %v5307
  %v5700 = vunpack.c.l.b16 %v5308
  %v5701 = vunpack.c.l.b16 %v5309
  %v5702 = vunpack.c.l.b16 %v5310
  %v5703 = vunpack.c.l.b16 %v5311
  %v5704 = vunpack.c.l.b16 %v5312
  %v5705 = vunpack.c.l.b16 %v5313
  %v5706 = vunpack.c.l.b16 %v5314
  %v5707 = vunpack.c.l.b16 %v5315
  %v5708 = vunpack.c.l.b16 %v5316
  %v5709 = vunpack.c.l.b16 %v5317
  %v5710 = vunpack.c.l.b16 %v5318
  %v5711 = vunpack.c.l.b16 %v5319
  %v5712 = vunpack.c.l.b16 %v5320
  %v5713 = vunpack.c.l.b16 %v5321
  %v5714 = vunpack.c.l.b16 %v5322
  %v5715 = vunpack.c.l.b16 %v5323
  %v5716 = vunpack.c.l.b16 %v5324
  %v5717 = vunpack.c.l.b16 %v5325
  %v5718 = vunpack.c.l.b16 %v5326
  %v5719 = vunpack.c.l.b16 %v5327
  %v5720 = vunpack.c.l.b16 %v5328
  %v5721 = vunpack.c.l.b16 %v5329
  %v5722 = vunpack.c.l.b16 %v5330
  %v5723 = vunpack.c.l.b16 %v5331
  %v5724 = vunpack.c.l.b16 %v5332
  %v5725 = vunpack.c.l.b16 %v5333
  %v5726 = vunpack.c.l.b16 %v5334
  %v5727 = vunpack.c.l.b16 %v5335
  %v5728 = vunpack.c.l.b16 %v5336
  %v5729 = vunpack.c.l.b16 %v5337
  %v5730 = vunpack.c.l.b16 %v5338
  %v5731 = vunpack.c.l.b16 %v5339
  %v5732 = vunpack.c.l.b16 %v5340
  %v5733 = vunpack.c.l.b16 %v5341
  %v5734 = vunpack.c.l.b16 %v5342
  %v5735 = vunpack.c.l.b16 %v5343
  %v5736 = vunpack.c.l.b16 %v5344
  %v5737 = vunpack.c.l.b16 %v5345
  %v5738 = vunpack.c.l.b16 %v5346
  %v5739 = vunpack.c.l.b16 %v5347
  %v5740 = vunpack.c.l.b16 %v5348
  %v5741 = vunpack.c.l.b16 %v5349
  %v5742 = vunpack.c.l.b16 %v5350
  %v5743 = vunpack.c.l.b16 %v5351
  %v5744 = vunpack.c.l.b16 %v5352
  %v5745 = vunpack.c.l.b16 %v5353
  %v5746 = vunpack.c.l.b16 %v5354
  %v5747 = vunpack.c.l.b16 %v5355
  %v5748 = vunpack.c.l.b16 %v5356
  %v5749 = vunpack.c.l.b16 %v5357
  %v5750 = vunpack.c.l.b16 %v5358
  %v5751 = vunpack.c.l.b16 %v5359
  %v5752 = vunpack.c.l.b16 %v5360
  %v5753 = vunpack.c.l.b16 %v5361
  %v5754 = vunpack.c.l.b16 %v5362
  %v5755 = vunpack.c.l.b16 %v5363
  %v5756 = vunpack.c.l.b16 %v5364
  %v5757 = vunpack.c.l.b16 %v5365
  %v5758 = vunpack.c.l.b16 %v5366
  %v5759 = vunpack.c.l.b16 %v5367
  %v5760 = vunpack.c.l.b16 %v5368
  %v5761 = vunpack.c.l.b16 %v5369
  %v5762 = vunpack.c.l.b16 %v5370
  %v5763 = vunpack.c.l.b16 %v5371
  %v5764 = vunpack.c.l.b16 %v5372
  %v5765 = vunpack.c.l.b16 %v5373
  %v5766 = vunpack.c.l.b16 %v5374
  %v5767 = vunpack.c.l.b16 %v5375
  %v5768 = vunpack.c.l.b16 %v5376
  %v5769 = vunpack.c.l.b16 %v5377
  %v5770 = vunpack.c.l.b16 %v5378
  %v5771 = vunpack.c.l.b16 %v5379
  %v5772 = vunpack.c.l.b16 %v5380
  %v5773 = vunpack.c.l.b16 %v5381
  %v5774 = vunpack.c.l.b16 %v5382
  %v5775 = vunpack.c.l.b16 %v5383
  %v5776 = vunpack.c.l.b16 %v5384
  %v5777 = vunpack.c.l.b16 %v5385
  %v5778 = vunpack.c.l.b16 %v5386
  %v5779 = vunpack.c.l.b16 %v5387
  %v5780 = vunpack.c.l.b16 %v5388
  %v5781 = vunpack.c.l.b16 %v5389
  %v5782 = vunpack.c.l.b16 %v5390
  %v5783 = vunpack.c.l.b16 %v5391
  %v5784 = vunpack.c.l.b16 %v5392
  %v5785 = vunpack.c.l.b16 %v5393
  %v5786 = vunpack.c.l.b16 %v5394
  %v5787 = vunpack.c.l.b16 %v5395
  %v5788 = vunpack.c.l.b16 %v5396
  %v5789 = vunpack.c.l.b16 %v5397
  %v5790 = vunpack.c.l.b16 %v5398
  %v5791 = vunpack.c.l.b16 %v5399
  %v5792 = vunpack.c.l.b16 %v5400
  %v5793 = vunpack.c.l.b16 %v5401
  %v5794 = vunpack.c.l.b16 %v5402
  %v5795 = vunpack.c.l.b16 %v5403
  %v5796 = vunpack.c.l.b16 %v5404
  %v5797 = vunpack.c.l.b16 %v5405
  %v5798 = vunpack.c.l.b16 %v5406
  %v5799 = vunpack.c.l.b16 %v5407
  %v5800 = vunpack.c.l.b16 %v5408
  %v5801 = vunpack.c.l.b16 %v5409
  %v5802 = vunpack.c.l.b16 %v5410
  %v5803 = vunpack.c.l.b16 %v5411
  %v5804 = vunpack.c.l.b16 %v5412
  %v5805 = vunpack.c.l.b16 %v5413
  %v5806 = vunpack.c.l.b16 %v5414
  %v5807 = vunpack.c.l.b16 %v5415
  %v5808 = vunpack.c.l.b16 %v5416
  %v5809 = vunpack.c.l.b16 %v5417
  %v5810 = vunpack.c.l.b16 %v5418
  %v5811 = vunpack.c.l.b16 %v5419
  %v5812 = vunpack.c.l.b16 %v5420
  %v5813 = vunpack.c.l.b16 %v5421
  %v5814 = vunpack.c.l.b16 %v5422
  %v5815 = vunpack.c.l.b16 %v5423
  %v5816 = vunpack.c.l.b16 %v5424
  %v5817 = vunpack.c.l.b16 %v5425
  %v5818 = vunpack.c.l.b16 %v5426
  %v5819 = vunpack.c.l.b16 %v5427
  %v5820 = vunpack.c.l.b16 %v5428
  %v5821 = vunpack.c.l.b16 %v5429
  %v5822 = vunpack.c.l.b16 %v5430
  %v5823 = vunpack.c.l.b16 %v5431
  %v5824 = vunpack.c.l.b16 %v5432
  %v5825 = vunpack.c.l.b16 %v5433
  %v5826 = vunpack.c.l.b16 %v5434
  %v5827 = vunpack.c.l.b16 %v5435
  %v5828 = vunpack.c.l.b16 %v5436
  %v5829 = vunpack.c.l.b16 %v5437
  %v5830 = vunpack.c.l.b16 %v5438
  %v5831 = vunpack.c.l.b16 %v5439
  %v5832 = vunpack.c.l.b16 %v5440
  %v5833 = vunpack.c.l.b16 %v5441
  %v5834 = vunpack.c.l.b16 %v5442
  %v5835 = vunpack.c.l.b16 %v5443
  %v5836 = vunpack.c.l.b16 %v5444
  %v5837 = vunpack.c.l.b16 %v5445
  %v5838 = vunpack.c.l.b16 %v5446
  %v5839 = vunpack.c.l.b16 %v5447
  %v5840 = vunpack.c.l.b16 %v5448
  %v5841 = vunpack.c.l.b16 %v5449
  %v5842 = vunpack.c.l.b16 %v5450
  %v5843 = vunpack.c.l.b16 %v5451
  %v5844 = vunpack.c.l.b16 %v5452
  %v5845 = vunpack.c.l.b16 %v5453
  %v5846 = vunpack.c.l.b16 %v5454
  %v5847 = vunpack.c.l.b16 %v5455
  %v5848 = vunpack.c.l.b16 %v5456
  %v5849 = vunpack.c.l.b16 %v5457
  %v5850 = vunpack.c.l.b16 %v5458
  %v5851 = vunpack.c.l.b16 %v5459
  %v5852 = vunpack.c.l.b16 %v5460
  %v5853 = vunpack.c.l.b16 %v5461
  %v5854 = vunpack.c.l.b16 %v5462
  %v5855 = vunpack.c.l.b16 %v5463
  %v5856 = vunpack.c.l.b16 %v5464
  %v5857 = vunpack.c.l.b16 %v5465
  %v5858 = vunpack.c.l.b16 %v5466
  %v5859 = vunpack.c.l.b16 %v5467
  %v5860 = vunpack.c.l.b16 %v5468
  %v5861 = vunpack.c.l.b16 %v5469
  %v5862 = vunpack.c.l.b16 %v5470
  %v5863 = vunpack.c.l.b16 %v5471
  %v5864 = vunpack.c.l.b16 %v5472
  %v5865 = vpack.c.b16 %v5670, %v5669
  %v5866 = vpack.c.b16 %v5672, %v5671
  %v5867 = vpack.c.b16 %v5674, %v5673
  %v5868 = vpack.c.b16 %v5676, %v5675
  %v5869 = vpack.c.b16 %v5678, %v5677
  %v5870 = vpack.c.b16 %v5680, %v5679
  %v5871 = vpack.c.b16 %v5682, %v5681
  %v5872 = vpack.c.b16 %v5684, %v5683
  %v5873 = vpack.c.b16 %v5686, %v5685
  %v5874 = vpack.c.b16 %v5688, %v5687
  %v5875 = vpack.c.b16 %v5690, %v5689
  %v5876 = vpack.c.b16 %v5692, %v5691
  %v5877 = vpack.c.b16 %v5694, %v5693
  %v5878 = vpack.c.b16 %v5696, %v5695
  %v5879 = vpack.c.b16 %v5698, %v5697
  %v5880 = vpack.c.b16 %v5700, %v5699
  %v5881 = vpack.c.b16 %v5702, %v5701
  %v5882 = vpack.c.b16 %v5704, %v5703
  %v5883 = vpack.c.b16 %v5706, %v5705
  %v5884 = vpack.c.b16 %v5708, %v5707
  %v5885 = vpack.c.b16 %v5710, %v5709
  %v5886 = vpack.c.b16 %v5712, %v5711
  %v5887 = vpack.c.b16 %v5714, %v5713
  %v5888 = vpack.c.b16 %v5716, %v5715
  %v5889 = vpack.c.b16 %v5718, %v5717
  %v5890 = vpack.c.b16 %v5720, %v5719
  %v5891 = vpack.c.b16 %v5722, %v5721
  %v5892 = vpack.c.b16 %v5724, %v5723
  %v5893 = vpack.c.b16 %v5726, %v5725
  %v5894 = vpack.c.b16 %v5728, %v5727
  %v5895 = vpack.c.b16 %v5730, %v5729
  %v5896 = vpack.c.b16 %v5732, %v5731
  %v5897 = vpack.c.b16 %v5734, %v5733
  %v5898 = vpack.c.b16 %v5736, %v5735
  %v5899 = vpack.c.b16 %v5738, %v5737
  %v5900 = vpack.c.b16 %v5740, %v5739
  %v5901 = vpack.c.b16 %v5742, %v5741
  %v5902 = vpack.c.b16 %v5744, %v5743
  %v5903 = vpack.c.b16 %v5746, %v5745
  %v5904 = vpack.c.b16 %v5748, %v5747
  %v5905 = vpack.c.b16 %v5750, %v5749
  %v5906 = vpack.c.b16 %v5752, %v5751
  %v5907 = vpack.c.b16 %v5754, %v5753
  %v5908 = vpack.c.b16 %v5756, %v5755
  %v5909 = vpack.c.b16 %v5758, %v5757
  %v5910 = vpack.c.b16 %v5760, %v5759
  %v5911 = vpack.c.b16 %v5762, %v5761
  %v5912 = vpack.c.b16 %v5764, %v5763
  %v5913 = vpack.c.b16 %v5766, %v5765
  %v5914 = vpack.c.b16 %v5768, %v5767
  %v5915 = vpack.c.b16 %v5770, %v5769
  %v5916 = vpack.c.b16 %v5772, %v5771
  %v5917 = vpack.c.b16 %v5774, %v5773
  %v5918 = vpack.c.b16 %v5776, %v5775
  %v5919 = vpack.c.b16 %v5778, %v5777
  %v5920 = vpack.c.b16 %v5780, %v5779
  %v5921 = vpack.c.b16 %v5782, %v5781
  %v5922 = vpack.c.b16 %v5784, %v5783
  %v5923 = vpack.c.b16 %v5786, %v5785
  %v5924 = vpack.c.b16 %v5788, %v5787
  %v5925 = vpack.c.b16 %v5790, %v5789
  %v5926 = vpack.c.b16 %v5792, %v5791
  %v5927 = vpack.c.b16 %v5794, %v5793
  %v5928 = vpack.c.b16 %v5796, %v5795
  %v5929 = vpack.c.b16 %v5798, %v5797
  %v5930 = vpack.c.b16 %v5800, %v5799
  %v5931 = vpack.c.b16 %v5802, %v5801
  %v5932 = vpack.c.b16 %v5804, %v5803
  %v5933 = vpack.c.b16 %v5806, %v5805
  %v5934 = vpack.c.b16 %v5808, %v5807
  %v5935 = vpack.c.b16 %v5810, %v5809
  %v5936 = vpack.c.b16 %v5812, %v5811
  %v5937 = vpack.c.b16 %v5814, %v5813
  %v5938 = vpack.c.b16 %v5816, %v5815
  %v5939 = vpack.c.b16 %v5818, %v5817
  %v5940 = vpack.c.b16 %v5820, %v5819
  %v5941 = vpack.c.b16 %v5822, %v5821
  %v5942 = vpack.c.b16 %v5824, %v5823
  %v5943 = vpack.c.b16 %v5826, %v5825
  %v5944 = vpack.c.b16 %v5828, %v5827
  %v5945 = vpack.c.b16 %v5830, %v5829
  %v5946 = vpack.c.b16 %v5832, %v5831
  %v5947 = vpack.c.b16 %v5834, %v5833
  %v5948 = vpack.c.b16 %v5836, %v5835
  %v5949 = vpack.c.b16 %v5838, %v5837
  %v5950 = vpack.c.b16 %v5840, %v5839
  %v5951 = vpack.c.b16 %v5842, %v5841
  %v5952 = vpack.c.b16 %v5844, %v5843
  %v5953 = vpack.c.b16 %v5846, %v5845
  %v5954 = vpack.c.b16 %v5848, %v5847
  %v5955 = vpack.c.b16 %v5850, %v5849
  %v5956 = vpack.c.b16 %v5852, %v5851
  %v5957 = vpack.c.b16 %v5854, %v5853
  %v5958 = vpack.c.b16 %v5856, %v5855
  %v5959 = vpack.c.b16 %v5858, %v5857
  %v5960 = vpack.c.b16 %v5860, %v5859
  %v5961 = vpack.c.b16 %v5862, %v5861
  %v5962 = vpack.c.b16 %v5864, %v5863
  %6061 = vmatprep.subr.bf16.mxu0 0
  %6062 = vmatpush1.bf16.msra.mxu0 %v847
  %6063 = vmatprep.subr.bf16.mxu0 0
  %6064 = vmatpush1.bf16.msra.mxu0 %v848
  %6065 = vmatprep.subr.bf16.mxu0 0
  %6066 = vmatpush1.bf16.msra.mxu0 %v849
  %6067 = vmatprep.subr.bf16.mxu0 0
  %6068 = vmatpush1.bf16.msra.mxu0 %v850
  %6069 = vmatprep.subr.bf16.mxu0 0
  %6070 = vmatpush1.bf16.msra.mxu0 %v851
  %6071 = vmatprep.subr.bf16.mxu0 0
  %6072 = vmatpush1.bf16.msra.mxu0 %v852
  %6073 = vmatprep.subr.bf16.mxu0 0
  %6074 = vmatpush1.bf16.msra.mxu0 %v853
  %6075 = vmatprep.subr.bf16.mxu0 0
  %6076 = vmatpush1.bf16.msra.mxu0 %v854
  %6077 = vmatprep.subr.bf16.mxu0 0
  %6078 = vmatpush1.bf16.msra.mxu0 0
  %6079 = vmatprep.subr.bf16.mxu0 0
  %6080 = vmatpush1.bf16.msra.mxu0 0
  %6081 = vmatprep.subr.bf16.mxu0 0
  %6082 = vmatpush1.bf16.msra.mxu0 0
  %6083 = vmatprep.subr.bf16.mxu0 0
  %6084 = vmatpush1.bf16.msra.mxu0 0
  %6085 = vmatprep.subr.bf16.mxu0 0
  %6086 = vmatpush1.bf16.msra.mxu0 0
  %6087 = vmatprep.subr.bf16.mxu0 0
  %6088 = vmatpush1.bf16.msra.mxu0 0
  %6089 = vmatprep.subr.bf16.mxu0 0
  %6090 = vmatpush1.bf16.msra.mxu0 0
  %6091 = vmatprep.subr.bf16.mxu0 0
  %6092 = vmatpush1.bf16.msra.mxu0 0
  %6093 = vmatprep.mubr.bf16.mxu0 0
  %6094 = vmatmul.mubr.bf16.gmra.mrb[0].mxu0 %v5865
  %v6095 = vpop.f32.mrb[0].mxu0
  %v6096 = vadd.f32 0.0, %v6095
  %v6097 = vpop.f32.mrb[0].mxu0
  %v6098 = vpop.f32.mrb[0].mxu0
  %v6099 = vadd.f32 0.0, %v6098
  %v6100 = vpop.f32.mrb[0].mxu0
  %6101 = vmatprep.mubr.bf16.mxu0 0
  %6102 = vmatmul.mubr.bf16.gmra.mrb[0].mxu0 %v5866
  %v6103 = vpop.f32.mrb[0].mxu0
  %v6104 = vadd.f32 0.0, %v6103
  %v6105 = vpop.f32.mrb[0].mxu0
  %v6106 = vpop.f32.mrb[0].mxu0
  %v6107 = vadd.f32 0.0, %v6106
  %v6108 = vpop.f32.mrb[0].mxu0
  %6109 = vmatprep.mubr.bf16.mxu0 0
  %6110 = vmatmul.mubr.bf16.gmra.mrb[0].mxu0 %v5867
  %v6111 = vpop.f32.mrb[0].mxu0
  %v6112 = vadd.f32 0.0, %v6111
  %v6113 = vpop.f32.mrb[0].mxu0
  %v6114 = vpop.f32.mrb[0].mxu0
  %v6115 = vadd.f32 0.0, %v6114
  %v6116 = vpop.f32.mrb[0].mxu0
  %6117 = vmatprep.mubr.bf16.mxu0 0
  %6118 = vmatmul.mubr.bf16.gmra.mrb[0].mxu0 %v5868
  %v6119 = vpop.f32.mrb[0].mxu0
  %v6120 = vadd.f32 0.0, %v6119
  %v6121 = vpop.f32.mrb[0].mxu0
  %v6122 = vpop.f32.mrb[0].mxu0
  %v6123 = vadd.f32 0.0, %v6122
  %v6124 = vpop.f32.mrb[0].mxu0
  %6125 = vmatprep.mubr.bf16.mxu0 0
  %6126 = vmatmul.mubr.bf16.gmra.mrb[0].mxu0 %v5869
  %v6127 = vpop.f32.mrb[0].mxu0
  %v6128 = vadd.f32 0.0, %v6127
  %v6129 = vpop.f32.mrb[0].mxu0
  %v6130 = vpop.f32.mrb[0].mxu0
  %v6131 = vadd.f32 0.0, %v6130
  %v6132 = vpop.f32.mrb[0].mxu0
  %6133 = vmatprep.mubr.bf16.mxu0 0
  %6134 = vmatmul.mubr.bf16.gmra.mrb[0].mxu0 %v5870
  %v6135 = vpop.f32.mrb[0].mxu0
  %v6136 = vadd.f32 0.0, %v6135
  %v6137 = vpop.f32.mrb[0].mxu0
  %v6138 = vpop.f32.mrb[0].mxu0
  %v6139 = vadd.f32 0.0, %v6138
  %v6140 = vpop.f32.mrb[0].mxu0
  %6141 = vmatprep.mubr.bf16.mxu0 0
  %6142 = vmatmul.mubr.bf16.gmra.mrb[0].mxu0 %v5871
  %v6143 = vpop.f32.mrb[0].mxu0
  %v6144 = vadd.f32 0.0, %v6143
  %v6145 = vpop.f32.mrb[0].mxu0
  %v6146 = vpop.f32.mrb[0].mxu0
  %v6147 = vadd.f32 0.0, %v6146
  %v6148 = vpop.f32.mrb[0].mxu0
  %6149 = vmatprep.mubr.bf16.mxu0 0
  %6150 = vmatmul.mubr.bf16.gmra.mrb[0].mxu0 %v5872
  %v6151 = vpop.f32.mrb[0].mxu0
  %v6152 = vadd.f32 0.0, %v6151
  %v6153 = vpop.f32.mrb[0].mxu0
  %v6154 = vpop.f32.mrb[0].mxu0
  %v6155 = vadd.f32 0.0, %v6154
  %v6156 = vpop.f32.mrb[0].mxu0
  %6157 = vmatprep.mubr.bf16.mxu0 0
  %6158 = vmatmul.mubr.bf16.gmra.mrb[0].mxu0 %v5873
  %v6159 = vpop.f32.mrb[0].mxu0
  %v6160 = vadd.f32 0.0, %v6159
  %v6161 = vpop.f32.mrb[0].mxu0
  %v6162 = vpop.f32.mrb[0].mxu0
  %v6163 = vadd.f32 0.0, %v6162
  %v6164 = vpop.f32.mrb[0].mxu0
  %6165 = vmatprep.mubr.bf16.mxu0 0
  %6166 = vmatmul.mubr.bf16.gmra.mrb[0].mxu0 %v5874
  %v6167 = vpop.f32.mrb[0].mxu0
  %v6168 = vadd.f32 0.0, %v6167
  %v6169 = vpop.f32.mrb[0].mxu0
  %v6170 = vpop.f32.mrb[0].mxu0
  %v6171 = vadd.f32 0.0, %v6170
  %v6172 = vpop.f32.mrb[0].mxu0
  %6173 = vmatprep.mubr.bf16.mxu0 0
  %6174 = vmatmul.mubr.bf16.gmra.mrb[0].mxu0 %v5875
  %v6175 = vpop.f32.mrb[0].mxu0
  %v6176 = vadd.f32 0.0, %v6175
  %v6177 = vpop.f32.mrb[0].mxu0
  %v6178 = vpop.f32.mrb[0].mxu0
  %v6179 = vadd.f32 0.0, %v6178
  %v6180 = vpop.f32.mrb[0].mxu0
  %6181 = vmatprep.mubr.bf16.mxu0 0
  %6182 = vmatmul.mubr.bf16.gmra.mrb[0].mxu0 %v5876
  %v6183 = vpop.f32.mrb[0].mxu0
  %v6184 = vadd.f32 0.0, %v6183
  %v6185 = vpop.f32.mrb[0].mxu0
  %v6186 = vpop.f32.mrb[0].mxu0
  %v6187 = vadd.f32 0.0, %v6186
  %v6188 = vpop.f32.mrb[0].mxu0
  %6189 = vmatprep.mubr.bf16.mxu0 0
  %6190 = vmatmul.mubr.bf16.gmra.mrb[0].mxu0 %v5877
  %v6191 = vpop.f32.mrb[0].mxu0
  %v6192 = vadd.f32 0.0, %v6191
  %v6193 = vpop.f32.mrb[0].mxu0
  %v6194 = vpop.f32.mrb[0].mxu0
  %v6195 = vadd.f32 0.0, %v6194
  %v6196 = vpop.f32.mrb[0].mxu0
  %6197 = vmatprep.mubr.bf16.mxu0 0
  %6198 = vmatmul.mubr.bf16.gmra.mrb[0].mxu0 %v5878
  %v6199 = vpop.f32.mrb[0].mxu0
  %v6200 = vadd.f32 0.0, %v6199
  %v6201 = vpop.f32.mrb[0].mxu0
  %v6202 = vpop.f32.mrb[0].mxu0
  %v6203 = vadd.f32 0.0, %v6202
  %v6204 = vpop.f32.mrb[0].mxu0
  %6205 = vmatprep.mubr.bf16.mxu0 0
  %6206 = vmatmul.mubr.bf16.gmra.mrb[0].mxu0 %v5879
  %v6207 = vpop.f32.mrb[0].mxu0
  %v6208 = vadd.f32 0.0, %v6207
  %v6209 = vpop.f32.mrb[0].mxu0
  %v6210 = vpop.f32.mrb[0].mxu0
  %v6211 = vadd.f32 0.0, %v6210
  %v6212 = vpop.f32.mrb[0].mxu0
  %6213 = vmatprep.mubr.bf16.mxu0 0
  %6214 = vmatmul.mubr.bf16.gmra.mrb[0].mxu0 %v5880
  %v6215 = vpop.f32.mrb[0].mxu0
  %v6216 = vadd.f32 0.0, %v6215
  %v6217 = vpop.f32.mrb[0].mxu0
  %v6218 = vpop.f32.mrb[0].mxu0
  %v6219 = vadd.f32 0.0, %v6218
  %v6220 = vpop.f32.mrb[0].mxu0
  %6221 = vmatprep.mubr.bf16.mxu0 0
  %6222 = vmatmul.mubr.bf16.gmra.mrb[0].mxu0 %v5881
  %v6223 = vpop.f32.mrb[0].mxu0
  %v6224 = vadd.f32 0.0, %v6223
  %v6225 = vpop.f32.mrb[0].mxu0
  %v6226 = vpop.f32.mrb[0].mxu0
  %v6227 = vadd.f32 0.0, %v6226
  %v6228 = vpop.f32.mrb[0].mxu0
  %6229 = vmatprep.mubr.bf16.mxu0 0
  %6230 = vmatmul.mubr.bf16.gmra.mrb[0].mxu0 %v5882
  %v6231 = vpop.f32.mrb[0].mxu0
  %v6232 = vadd.f32 0.0, %v6231
  %v6233 = vpop.f32.mrb[0].mxu0
  %v6234 = vpop.f32.mrb[0].mxu0
  %v6235 = vadd.f32 0.0, %v6234
  %v6236 = vpop.f32.mrb[0].mxu0
  %6237 = vmatprep.mubr.bf16.mxu0 0
  %6238 = vmatmul.mubr.bf16.gmra.mrb[0].mxu0 %v5883
  %v6239 = vpop.f32.mrb[0].mxu0
  %v6240 = vadd.f32 0.0, %v6239
  %v6241 = vpop.f32.mrb[0].mxu0
  %v6242 = vpop.f32.mrb[0].mxu0
  %v6243 = vadd.f32 0.0, %v6242
  %v6244 = vpop.f32.mrb[0].mxu0
  %6245 = vmatprep.mubr.bf16.mxu0 0
  %6246 = vmatmul.mubr.bf16.gmra.mrb[0].mxu0 %v5884
  %v6247 = vpop.f32.mrb[0].mxu0
  %v6248 = vadd.f32 0.0, %v6247
  %v6249 = vpop.f32.mrb[0].mxu0
  %v6250 = vpop.f32.mrb[0].mxu0
  %v6251 = vadd.f32 0.0, %v6250
  %v6252 = vpop.f32.mrb[0].mxu0
  %6253 = vmatprep.mubr.bf16.mxu0 0
  %6254 = vmatmul.mubr.bf16.gmra.mrb[0].mxu0 %v5885
  %v6255 = vpop.f32.mrb[0].mxu0
  %v6256 = vadd.f32 0.0, %v6255
  %v6257 = vpop.f32.mrb[0].mxu0
  %v6258 = vpop.f32.mrb[0].mxu0
  %v6259 = vadd.f32 0.0, %v6258
  %v6260 = vpop.f32.mrb[0].mxu0
  %6261 = vmatprep.mubr.bf16.mxu0 0
  %6262 = vmatmul.mubr.bf16.gmra.mrb[0].mxu0 %v5886
  %v6263 = vpop.f32.mrb[0].mxu0
  %v6264 = vadd.f32 0.0, %v6263
  %v6265 = vpop.f32.mrb[0].mxu0
  %v6266 = vpop.f32.mrb[0].mxu0
  %v6267 = vadd.f32 0.0, %v6266
  %v6268 = vpop.f32.mrb[0].mxu0
  %6269 = vmatprep.mubr.bf16.mxu0 0
  %6270 = vmatmul.mubr.bf16.gmra.mrb[0].mxu0 %v5887
  %v6271 = vpop.f32.mrb[0].mxu0
  %v6272 = vadd.f32 0.0, %v6271
  %v6273 = vpop.f32.mrb[0].mxu0
  %v6274 = vpop.f32.mrb[0].mxu0
  %v6275 = vadd.f32 0.0, %v6274
  %v6276 = vpop.f32.mrb[0].mxu0
  %6277 = vmatprep.mubr.bf16.mxu0 0
  %6278 = vmatmul.mubr.bf16.gmra.mrb[0].mxu0 %v5888
  %v6279 = vpop.f32.mrb[0].mxu0
  %v6280 = vadd.f32 0.0, %v6279
  %v6281 = vpop.f32.mrb[0].mxu0
  %v6282 = vpop.f32.mrb[0].mxu0
  %v6283 = vadd.f32 0.0, %v6282
  %v6284 = vpop.f32.mrb[0].mxu0
  %6285 = vmatprep.mubr.bf16.mxu0 0
  %6286 = vmatmul.mubr.bf16.gmra.mrb[0].mxu0 %v5889
  %v6287 = vpop.f32.mrb[0].mxu0
  %v6288 = vadd.f32 0.0, %v6287
  %v6289 = vpop.f32.mrb[0].mxu0
  %v6290 = vpop.f32.mrb[0].mxu0
  %v6291 = vadd.f32 0.0, %v6290
  %v6292 = vpop.f32.mrb[0].mxu0
  %6293 = vmatprep.mubr.bf16.mxu0 0
  %6294 = vmatmul.mubr.bf16.gmra.mrb[0].mxu0 %v5890
  %v6295 = vpop.f32.mrb[0].mxu0
  %v6296 = vadd.f32 0.0, %v6295
  %v6297 = vpop.f32.mrb[0].mxu0
  %v6298 = vpop.f32.mrb[0].mxu0
  %v6299 = vadd.f32 0.0, %v6298
  %v6300 = vpop.f32.mrb[0].mxu0
  %6301 = vmatprep.mubr.bf16.mxu0 0
  %6302 = vmatmul.mubr.bf16.gmra.mrb[0].mxu0 %v5891
  %v6303 = vpop.f32.mrb[0].mxu0
  %v6304 = vadd.f32 0.0, %v6303
  %v6305 = vpop.f32.mrb[0].mxu0
  %v6306 = vpop.f32.mrb[0].mxu0
  %v6307 = vadd.f32 0.0, %v6306
  %v6308 = vpop.f32.mrb[0].mxu0
  %6309 = vmatprep.mubr.bf16.mxu0 0
  %6310 = vmatmul.mubr.bf16.gmra.mrb[0].mxu0 %v5892
  %v6311 = vpop.f32.mrb[0].mxu0
  %v6312 = vadd.f32 0.0, %v6311
  %v6313 = vpop.f32.mrb[0].mxu0
  %v6314 = vpop.f32.mrb[0].mxu0
  %v6315 = vadd.f32 0.0, %v6314
  %v6316 = vpop.f32.mrb[0].mxu0
  %6317 = vmatprep.mubr.bf16.mxu0 0
  %6318 = vmatmul.mubr.bf16.gmra.mrb[0].mxu0 %v5893
  %v6319 = vpop.f32.mrb[0].mxu0
  %v6320 = vadd.f32 0.0, %v6319
  %v6321 = vpop.f32.mrb[0].mxu0
  %v6322 = vpop.f32.mrb[0].mxu0
  %v6323 = vadd.f32 0.0, %v6322
  %v6324 = vpop.f32.mrb[0].mxu0
  %6325 = vmatprep.mubr.bf16.mxu0 0
  %6326 = vmatmul.mubr.bf16.gmra.mrb[0].mxu0 %v5894
  %v6327 = vpop.f32.mrb[0].mxu0
  %v6328 = vadd.f32 0.0, %v6327
  %v6329 = vpop.f32.mrb[0].mxu0
  %v6330 = vpop.f32.mrb[0].mxu0
  %v6331 = vadd.f32 0.0, %v6330
  %v6332 = vpop.f32.mrb[0].mxu0
  %6333 = vmatprep.mubr.bf16.mxu0 0
  %6334 = vmatmul.mubr.bf16.gmra.mrb[0].mxu0 %v5895
  %v6335 = vpop.f32.mrb[0].mxu0
  %v6336 = vadd.f32 0.0, %v6335
  %v6337 = vpop.f32.mrb[0].mxu0
  %v6338 = vpop.f32.mrb[0].mxu0
  %v6339 = vadd.f32 0.0, %v6338
  %v6340 = vpop.f32.mrb[0].mxu0
  %6341 = vmatprep.mubr.bf16.mxu0 0
  %6342 = vmatmul.mubr.bf16.gmra.mrb[0].mxu0 %v5896
  %v6343 = vpop.f32.mrb[0].mxu0
  %v6344 = vadd.f32 0.0, %v6343
  %v6345 = vpop.f32.mrb[0].mxu0
  %v6346 = vpop.f32.mrb[0].mxu0
  %v6347 = vadd.f32 0.0, %v6346
  %v6348 = vpop.f32.mrb[0].mxu0
  %6349 = vmatprep.mubr.bf16.mxu0 0
  %6350 = vmatmul.mubr.bf16.gmra.mrb[0].mxu0 %v5897
  %v6351 = vpop.f32.mrb[0].mxu0
  %v6352 = vadd.f32 0.0, %v6351
  %v6353 = vpop.f32.mrb[0].mxu0
  %v6354 = vpop.f32.mrb[0].mxu0
  %v6355 = vadd.f32 0.0, %v6354
  %v6356 = vpop.f32.mrb[0].mxu0
  %6357 = vmatprep.mubr.bf16.mxu0 0
  %6358 = vmatmul.mubr.bf16.gmra.mrb[0].mxu0 %v5898
  %v6359 = vpop.f32.mrb[0].mxu0
  %v6360 = vadd.f32 0.0, %v6359
  %v6361 = vpop.f32.mrb[0].mxu0
  %v6362 = vpop.f32.mrb[0].mxu0
  %v6363 = vadd.f32 0.0, %v6362
  %v6364 = vpop.f32.mrb[0].mxu0
  %6365 = vmatprep.mubr.bf16.mxu0 0
  %6366 = vmatmul.mubr.bf16.gmra.mrb[0].mxu0 %v5899
  %v6367 = vpop.f32.mrb[0].mxu0
  %v6368 = vadd.f32 0.0, %v6367
  %v6369 = vpop.f32.mrb[0].mxu0
  %v6370 = vpop.f32.mrb[0].mxu0
  %v6371 = vadd.f32 0.0, %v6370
  %v6372 = vpop.f32.mrb[0].mxu0
  %6373 = vmatprep.mubr.bf16.mxu0 0
  %6374 = vmatmul.mubr.bf16.gmra.mrb[0].mxu0 %v5900
  %v6375 = vpop.f32.mrb[0].mxu0
  %v6376 = vadd.f32 0.0, %v6375
  %v6377 = vpop.f32.mrb[0].mxu0
  %v6378 = vpop.f32.mrb[0].mxu0
  %v6379 = vadd.f32 0.0, %v6378
  %v6380 = vpop.f32.mrb[0].mxu0
  %6381 = vmatprep.mubr.bf16.mxu0 0
  %6382 = vmatmul.mubr.bf16.gmra.mrb[0].mxu0 %v5901
  %v6383 = vpop.f32.mrb[0].mxu0
  %v6384 = vadd.f32 0.0, %v6383
  %v6385 = vpop.f32.mrb[0].mxu0
  %v6386 = vpop.f32.mrb[0].mxu0
  %v6387 = vadd.f32 0.0, %v6386
  %v6388 = vpop.f32.mrb[0].mxu0
  %6389 = vmatprep.mubr.bf16.mxu0 0
  %6390 = vmatmul.mubr.bf16.gmra.mrb[0].mxu0 %v5902
  %v6391 = vpop.f32.mrb[0].mxu0
  %v6392 = vadd.f32 0.0, %v6391
  %v6393 = vpop.f32.mrb[0].mxu0
  %v6394 = vpop.f32.mrb[0].mxu0
  %v6395 = vadd.f32 0.0, %v6394
  %v6396 = vpop.f32.mrb[0].mxu0
  %6397 = vmatprep.mubr.bf16.mxu0 0
  %6398 = vmatmul.mubr.bf16.gmra.mrb[0].mxu0 %v5903
  %v6399 = vpop.f32.mrb[0].mxu0
  %v6400 = vadd.f32 0.0, %v6399
  %v6401 = vpop.f32.mrb[0].mxu0
  %v6402 = vpop.f32.mrb[0].mxu0
  %v6403 = vadd.f32 0.0, %v6402
  %v6404 = vpop.f32.mrb[0].mxu0
  %6405 = vmatprep.mubr.bf16.mxu0 0
  %6406 = vmatmul.mubr.bf16.gmra.mrb[0].mxu0 %v5904
  %v6407 = vpop.f32.mrb[0].mxu0
  %v6408 = vadd.f32 0.0, %v6407
  %v6409 = vpop.f32.mrb[0].mxu0
  %v6410 = vpop.f32.mrb[0].mxu0
  %v6411 = vadd.f32 0.0, %v6410
  %v6412 = vpop.f32.mrb[0].mxu0
  %6413 = vmatprep.mubr.bf16.mxu0 0
  %6414 = vmatmul.mubr.bf16.gmra.mrb[0].mxu0 %v5905
  %v6415 = vpop.f32.mrb[0].mxu0
  %v6416 = vadd.f32 0.0, %v6415
  %v6417 = vpop.f32.mrb[0].mxu0
  %v6418 = vpop.f32.mrb[0].mxu0
  %v6419 = vadd.f32 0.0, %v6418
  %v6420 = vpop.f32.mrb[0].mxu0
  %6421 = vmatprep.mubr.bf16.mxu0 0
  %6422 = vmatmul.mubr.bf16.gmra.mrb[0].mxu0 %v5906
  %v6423 = vpop.f32.mrb[0].mxu0
  %v6424 = vadd.f32 0.0, %v6423
  %v6425 = vpop.f32.mrb[0].mxu0
  %v6426 = vpop.f32.mrb[0].mxu0
  %v6427 = vadd.f32 0.0, %v6426
  %v6428 = vpop.f32.mrb[0].mxu0
  %6429 = vmatprep.mubr.bf16.mxu0 0
  %6430 = vmatmul.mubr.bf16.gmra.mrb[0].mxu0 %v5907
  %v6431 = vpop.f32.mrb[0].mxu0
  %v6432 = vadd.f32 0.0, %v6431
  %v6433 = vpop.f32.mrb[0].mxu0
  %v6434 = vpop.f32.mrb[0].mxu0
  %v6435 = vadd.f32 0.0, %v6434
  %v6436 = vpop.f32.mrb[0].mxu0
  %6437 = vmatprep.mubr.bf16.mxu0 0
  %6438 = vmatmul.mubr.bf16.gmra.mrb[0].mxu0 %v5908
  %v6439 = vpop.f32.mrb[0].mxu0
  %v6440 = vadd.f32 0.0, %v6439
  %v6441 = vpop.f32.mrb[0].mxu0
  %v6442 = vpop.f32.mrb[0].mxu0
  %v6443 = vadd.f32 0.0, %v6442
  %v6444 = vpop.f32.mrb[0].mxu0
  %6445 = vmatprep.mubr.bf16.mxu0 0
  %6446 = vmatmul.mubr.bf16.gmra.mrb[0].mxu0 %v5909
  %v6447 = vpop.f32.mrb[0].mxu0
  %v6448 = vadd.f32 0.0, %v6447
  %v6449 = vpop.f32.mrb[0].mxu0
  %v6450 = vpop.f32.mrb[0].mxu0
  %v6451 = vadd.f32 0.0, %v6450
  %v6452 = vpop.f32.mrb[0].mxu0
  %6453 = vmatprep.mubr.bf16.mxu0 0
  %6454 = vmatmul.mubr.bf16.gmra.mrb[0].mxu0 %v5910
  %v6455 = vpop.f32.mrb[0].mxu0
  %v6456 = vadd.f32 0.0, %v6455
  %v6457 = vpop.f32.mrb[0].mxu0
  %v6458 = vpop.f32.mrb[0].mxu0
  %v6459 = vadd.f32 0.0, %v6458
  %v6460 = vpop.f32.mrb[0].mxu0
  %6461 = vmatprep.mubr.bf16.mxu0 0
  %6462 = vmatmul.mubr.bf16.gmra.mrb[0].mxu0 %v5911
  %v6463 = vpop.f32.mrb[0].mxu0
  %v6464 = vadd.f32 0.0, %v6463
  %v6465 = vpop.f32.mrb[0].mxu0
  %v6466 = vpop.f32.mrb[0].mxu0
  %v6467 = vadd.f32 0.0, %v6466
  %v6468 = vpop.f32.mrb[0].mxu0
  %6469 = vmatprep.mubr.bf16.mxu0 0
  %6470 = vmatmul.mubr.bf16.gmra.mrb[0].mxu0 %v5912
  %v6471 = vpop.f32.mrb[0].mxu0
  %v6472 = vadd.f32 0.0, %v6471
  %v6473 = vpop.f32.mrb[0].mxu0
  %v6474 = vpop.f32.mrb[0].mxu0
  %v6475 = vadd.f32 0.0, %v6474
  %v6476 = vpop.f32.mrb[0].mxu0
  %6477 = vmatprep.mubr.bf16.mxu0 0
  %6478 = vmatmul.mubr.bf16.gmra.mrb[0].mxu0 %v5913
  %v6479 = vpop.f32.mrb[0].mxu0
  %v6480 = vadd.f32 0.0, %v6479
  %v6481 = vpop.f32.mrb[0].mxu0
  %v6482 = vpop.f32.mrb[0].mxu0
  %v6483 = vadd.f32 0.0, %v6482
  %v6484 = vpop.f32.mrb[0].mxu0
  %6485 = vmatprep.mubr.bf16.mxu0 0
  %6486 = vmatmul.mubr.bf16.gmra.mrb[0].mxu0 %v5914
  %v6487 = vpop.f32.mrb[0].mxu0
  %v6488 = vadd.f32 0.0, %v6487
  %v6489 = vpop.f32.mrb[0].mxu0
  %v6490 = vpop.f32.mrb[0].mxu0
  %v6491 = vadd.f32 0.0, %v6490
  %v6492 = vpop.f32.mrb[0].mxu0
  %6493 = vmatprep.mubr.bf16.mxu0 0
  %6494 = vmatmul.mubr.bf16.gmra.mrb[0].mxu0 %v5915
  %v6495 = vpop.f32.mrb[0].mxu0
  %v6496 = vadd.f32 0.0, %v6495
  %v6497 = vpop.f32.mrb[0].mxu0
  %v6498 = vpop.f32.mrb[0].mxu0
  %v6499 = vadd.f32 0.0, %v6498
  %v6500 = vpop.f32.mrb[0].mxu0
  %6501 = vmatprep.mubr.bf16.mxu0 0
  %6502 = vmatmul.mubr.bf16.gmra.mrb[0].mxu0 %v5916
  %v6503 = vpop.f32.mrb[0].mxu0
  %v6504 = vadd.f32 0.0, %v6503
  %v6505 = vpop.f32.mrb[0].mxu0
  %v6506 = vpop.f32.mrb[0].mxu0
  %v6507 = vadd.f32 0.0, %v6506
  %v6508 = vpop.f32.mrb[0].mxu0
  %6509 = vmatprep.mubr.bf16.mxu0 0
  %6510 = vmatmul.mubr.bf16.gmra.mrb[0].mxu0 %v5917
  %v6511 = vpop.f32.mrb[0].mxu0
  %v6512 = vadd.f32 0.0, %v6511
  %v6513 = vpop.f32.mrb[0].mxu0
  %v6514 = vpop.f32.mrb[0].mxu0
  %v6515 = vadd.f32 0.0, %v6514
  %v6516 = vpop.f32.mrb[0].mxu0
  %6517 = vmatprep.mubr.bf16.mxu0 0
  %6518 = vmatmul.mubr.bf16.gmra.mrb[0].mxu0 %v5918
  %v6519 = vpop.f32.mrb[0].mxu0
  %v6520 = vadd.f32 0.0, %v6519
  %v6521 = vpop.f32.mrb[0].mxu0
  %v6522 = vpop.f32.mrb[0].mxu0
  %v6523 = vadd.f32 0.0, %v6522
  %v6524 = vpop.f32.mrb[0].mxu0
  %6525 = vmatprep.mubr.bf16.mxu0 0
  %6526 = vmatmul.mubr.bf16.gmra.mrb[0].mxu0 %v5919
  %v6527 = vpop.f32.mrb[0].mxu0
  %v6528 = vadd.f32 0.0, %v6527
  %v6529 = vpop.f32.mrb[0].mxu0
  %v6530 = vpop.f32.mrb[0].mxu0
  %v6531 = vadd.f32 0.0, %v6530
  %v6532 = vpop.f32.mrb[0].mxu0
  %6533 = vmatprep.mubr.bf16.mxu0 0
  %6534 = vmatmul.mubr.bf16.gmra.mrb[0].mxu0 %v5920
  %v6535 = vpop.f32.mrb[0].mxu0
  %v6536 = vadd.f32 0.0, %v6535
  %v6537 = vpop.f32.mrb[0].mxu0
  %v6538 = vpop.f32.mrb[0].mxu0
  %v6539 = vadd.f32 0.0, %v6538
  %v6540 = vpop.f32.mrb[0].mxu0
  %6541 = vmatprep.mubr.bf16.mxu0 0
  %6542 = vmatmul.mubr.bf16.gmra.mrb[0].mxu0 %v5921
  %v6543 = vpop.f32.mrb[0].mxu0
  %v6544 = vadd.f32 0.0, %v6543
  %v6545 = vpop.f32.mrb[0].mxu0
  %v6546 = vpop.f32.mrb[0].mxu0
  %v6547 = vadd.f32 0.0, %v6546
  %v6548 = vpop.f32.mrb[0].mxu0
  %6549 = vmatprep.mubr.bf16.mxu0 0
  %6550 = vmatmul.mubr.bf16.gmra.mrb[0].mxu0 %v5922
  %v6551 = vpop.f32.mrb[0].mxu0
  %v6552 = vadd.f32 0.0, %v6551
  %v6553 = vpop.f32.mrb[0].mxu0
  %v6554 = vpop.f32.mrb[0].mxu0
  %v6555 = vadd.f32 0.0, %v6554
  %v6556 = vpop.f32.mrb[0].mxu0
  %6557 = vmatprep.mubr.bf16.mxu0 0
  %6558 = vmatmul.mubr.bf16.gmra.mrb[0].mxu0 %v5923
  %v6559 = vpop.f32.mrb[0].mxu0
  %v6560 = vadd.f32 0.0, %v6559
  %v6561 = vpop.f32.mrb[0].mxu0
  %v6562 = vpop.f32.mrb[0].mxu0
  %v6563 = vadd.f32 0.0, %v6562
  %v6564 = vpop.f32.mrb[0].mxu0
  %6565 = vmatprep.mubr.bf16.mxu0 0
  %6566 = vmatmul.mubr.bf16.gmra.mrb[0].mxu0 %v5924
  %v6567 = vpop.f32.mrb[0].mxu0
  %v6568 = vadd.f32 0.0, %v6567
  %v6569 = vpop.f32.mrb[0].mxu0
  %v6570 = vpop.f32.mrb[0].mxu0
  %v6571 = vadd.f32 0.0, %v6570
  %v6572 = vpop.f32.mrb[0].mxu0
  %6573 = vmatprep.mubr.bf16.mxu0 0
  %6574 = vmatmul.mubr.bf16.gmra.mrb[0].mxu0 %v5925
  %v6575 = vpop.f32.mrb[0].mxu0
  %v6576 = vadd.f32 0.0, %v6575
  %v6577 = vpop.f32.mrb[0].mxu0
  %v6578 = vpop.f32.mrb[0].mxu0
  %v6579 = vadd.f32 0.0, %v6578
  %v6580 = vpop.f32.mrb[0].mxu0
  %6581 = vmatprep.mubr.bf16.mxu0 0
  %6582 = vmatmul.mubr.bf16.gmra.mrb[0].mxu0 %v5926
  %v6583 = vpop.f32.mrb[0].mxu0
  %v6584 = vadd.f32 0.0, %v6583
  %v6585 = vpop.f32.mrb[0].mxu0
  %v6586 = vpop.f32.mrb[0].mxu0
  %v6587 = vadd.f32 0.0, %v6586
  %v6588 = vpop.f32.mrb[0].mxu0
  %6589 = vmatprep.mubr.bf16.mxu0 0
  %6590 = vmatmul.mubr.bf16.gmra.mrb[0].mxu0 %v5927
  %v6591 = vpop.f32.mrb[0].mxu0
  %v6592 = vadd.f32 0.0, %v6591
  %v6593 = vpop.f32.mrb[0].mxu0
  %v6594 = vpop.f32.mrb[0].mxu0
  %v6595 = vadd.f32 0.0, %v6594
  %v6596 = vpop.f32.mrb[0].mxu0
  %6597 = vmatprep.mubr.bf16.mxu0 0
  %6598 = vmatmul.mubr.bf16.gmra.mrb[0].mxu0 %v5928
  %v6599 = vpop.f32.mrb[0].mxu0
  %v6600 = vadd.f32 0.0, %v6599
  %v6601 = vpop.f32.mrb[0].mxu0
  %v6602 = vpop.f32.mrb[0].mxu0
  %v6603 = vadd.f32 0.0, %v6602
  %v6604 = vpop.f32.mrb[0].mxu0
  %6605 = vmatprep.mubr.bf16.mxu0 0
  %6606 = vmatmul.mubr.bf16.gmra.mrb[0].mxu0 %v5929
  %v6607 = vpop.f32.mrb[0].mxu0
  %v6608 = vadd.f32 0.0, %v6607
  %v6609 = vpop.f32.mrb[0].mxu0
  %v6610 = vpop.f32.mrb[0].mxu0
  %v6611 = vadd.f32 0.0, %v6610
  %v6612 = vpop.f32.mrb[0].mxu0
  %6613 = vmatprep.mubr.bf16.mxu0 0
  %6614 = vmatmul.mubr.bf16.gmra.mrb[0].mxu0 %v5930
  %v6615 = vpop.f32.mrb[0].mxu0
  %v6616 = vadd.f32 0.0, %v6615
  %v6617 = vpop.f32.mrb[0].mxu0
  %v6618 = vpop.f32.mrb[0].mxu0
  %v6619 = vadd.f32 0.0, %v6618
  %v6620 = vpop.f32.mrb[0].mxu0
  %6621 = vmatprep.mubr.bf16.mxu0 0
  %6622 = vmatmul.mubr.bf16.gmra.mrb[0].mxu0 %v5931
  %v6623 = vpop.f32.mrb[0].mxu0
  %v6624 = vadd.f32 0.0, %v6623
  %v6625 = vpop.f32.mrb[0].mxu0
  %v6626 = vpop.f32.mrb[0].mxu0
  %v6627 = vadd.f32 0.0, %v6626
  %v6628 = vpop.f32.mrb[0].mxu0
  %6629 = vmatprep.mubr.bf16.mxu0 0
  %6630 = vmatmul.mubr.bf16.gmra.mrb[0].mxu0 %v5932
  %v6631 = vpop.f32.mrb[0].mxu0
  %v6632 = vadd.f32 0.0, %v6631
  %v6633 = vpop.f32.mrb[0].mxu0
  %v6634 = vpop.f32.mrb[0].mxu0
  %v6635 = vadd.f32 0.0, %v6634
  %v6636 = vpop.f32.mrb[0].mxu0
  %6637 = vmatprep.mubr.bf16.mxu0 0
  %6638 = vmatmul.mubr.bf16.gmra.mrb[0].mxu0 %v5933
  %v6639 = vpop.f32.mrb[0].mxu0
  %v6640 = vadd.f32 0.0, %v6639
  %v6641 = vpop.f32.mrb[0].mxu0
  %v6642 = vpop.f32.mrb[0].mxu0
  %v6643 = vadd.f32 0.0, %v6642
  %v6644 = vpop.f32.mrb[0].mxu0
  %6645 = vmatprep.mubr.bf16.mxu0 0
  %6646 = vmatmul.mubr.bf16.gmra.mrb[0].mxu0 %v5934
  %v6647 = vpop.f32.mrb[0].mxu0
  %v6648 = vadd.f32 0.0, %v6647
  %v6649 = vpop.f32.mrb[0].mxu0
  %v6650 = vpop.f32.mrb[0].mxu0
  %v6651 = vadd.f32 0.0, %v6650
  %v6652 = vpop.f32.mrb[0].mxu0
  %6653 = vmatprep.mubr.bf16.mxu0 0
  %6654 = vmatmul.mubr.bf16.gmra.mrb[0].mxu0 %v5935
  %v6655 = vpop.f32.mrb[0].mxu0
  %v6656 = vadd.f32 0.0, %v6655
  %v6657 = vpop.f32.mrb[0].mxu0
  %v6658 = vpop.f32.mrb[0].mxu0
  %v6659 = vadd.f32 0.0, %v6658
  %v6660 = vpop.f32.mrb[0].mxu0
  %6661 = vmatprep.mubr.bf16.mxu0 0
  %6662 = vmatmul.mubr.bf16.gmra.mrb[0].mxu0 %v5936
  %v6663 = vpop.f32.mrb[0].mxu0
  %v6664 = vadd.f32 0.0, %v6663
  %v6665 = vpop.f32.mrb[0].mxu0
  %v6666 = vpop.f32.mrb[0].mxu0
  %v6667 = vadd.f32 0.0, %v6666
  %v6668 = vpop.f32.mrb[0].mxu0
  %6669 = vmatprep.mubr.bf16.mxu0 0
  %6670 = vmatmul.mubr.bf16.gmra.mrb[0].mxu0 %v5937
  %v6671 = vpop.f32.mrb[0].mxu0
  %v6672 = vadd.f32 0.0, %v6671
  %v6673 = vpop.f32.mrb[0].mxu0
  %v6674 = vpop.f32.mrb[0].mxu0
  %v6675 = vadd.f32 0.0, %v6674
  %v6676 = vpop.f32.mrb[0].mxu0
  %6677 = vmatprep.mubr.bf16.mxu0 0
  %6678 = vmatmul.mubr.bf16.gmra.mrb[0].mxu0 %v5938
  %v6679 = vpop.f32.mrb[0].mxu0
  %v6680 = vadd.f32 0.0, %v6679
  %v6681 = vpop.f32.mrb[0].mxu0
  %v6682 = vpop.f32.mrb[0].mxu0
  %v6683 = vadd.f32 0.0, %v6682
  %v6684 = vpop.f32.mrb[0].mxu0
  %6685 = vmatprep.mubr.bf16.mxu0 0
  %6686 = vmatmul.mubr.bf16.gmra.mrb[0].mxu0 %v5939
  %v6687 = vpop.f32.mrb[0].mxu0
  %v6688 = vadd.f32 0.0, %v6687
  %v6689 = vpop.f32.mrb[0].mxu0
  %v6690 = vpop.f32.mrb[0].mxu0
  %v6691 = vadd.f32 0.0, %v6690
  %v6692 = vpop.f32.mrb[0].mxu0
  %6693 = vmatprep.mubr.bf16.mxu0 0
  %6694 = vmatmul.mubr.bf16.gmra.mrb[0].mxu0 %v5940
  %v6695 = vpop.f32.mrb[0].mxu0
  %v6696 = vadd.f32 0.0, %v6695
  %v6697 = vpop.f32.mrb[0].mxu0
  %v6698 = vpop.f32.mrb[0].mxu0
  %v6699 = vadd.f32 0.0, %v6698
  %v6700 = vpop.f32.mrb[0].mxu0
  %6701 = vmatprep.mubr.bf16.mxu0 0
  %6702 = vmatmul.mubr.bf16.gmra.mrb[0].mxu0 %v5941
  %v6703 = vpop.f32.mrb[0].mxu0
  %v6704 = vadd.f32 0.0, %v6703
  %v6705 = vpop.f32.mrb[0].mxu0
  %v6706 = vpop.f32.mrb[0].mxu0
  %v6707 = vadd.f32 0.0, %v6706
  %v6708 = vpop.f32.mrb[0].mxu0
  %6709 = vmatprep.mubr.bf16.mxu0 0
  %6710 = vmatmul.mubr.bf16.gmra.mrb[0].mxu0 %v5942
  %v6711 = vpop.f32.mrb[0].mxu0
  %v6712 = vadd.f32 0.0, %v6711
  %v6713 = vpop.f32.mrb[0].mxu0
  %v6714 = vpop.f32.mrb[0].mxu0
  %v6715 = vadd.f32 0.0, %v6714
  %v6716 = vpop.f32.mrb[0].mxu0
  %6717 = vmatprep.mubr.bf16.mxu0 0
  %6718 = vmatmul.mubr.bf16.gmra.mrb[0].mxu0 %v5943
  %v6719 = vpop.f32.mrb[0].mxu0
  %v6720 = vadd.f32 0.0, %v6719
  %v6721 = vpop.f32.mrb[0].mxu0
  %v6722 = vpop.f32.mrb[0].mxu0
  %v6723 = vadd.f32 0.0, %v6722
  %v6724 = vpop.f32.mrb[0].mxu0
  %6725 = vmatprep.mubr.bf16.mxu0 0
  %6726 = vmatmul.mubr.bf16.gmra.mrb[0].mxu0 %v5944
  %v6727 = vpop.f32.mrb[0].mxu0
  %v6728 = vadd.f32 0.0, %v6727
  %v6729 = vpop.f32.mrb[0].mxu0
  %v6730 = vpop.f32.mrb[0].mxu0
  %v6731 = vadd.f32 0.0, %v6730
  %v6732 = vpop.f32.mrb[0].mxu0
  %6733 = vmatprep.mubr.bf16.mxu0 0
  %6734 = vmatmul.mubr.bf16.gmra.mrb[0].mxu0 %v5945
  %v6735 = vpop.f32.mrb[0].mxu0
  %v6736 = vadd.f32 0.0, %v6735
  %v6737 = vpop.f32.mrb[0].mxu0
  %v6738 = vpop.f32.mrb[0].mxu0
  %v6739 = vadd.f32 0.0, %v6738
  %v6740 = vpop.f32.mrb[0].mxu0
  %6741 = vmatprep.mubr.bf16.mxu0 0
  %6742 = vmatmul.mubr.bf16.gmra.mrb[0].mxu0 %v5946
  %v6743 = vpop.f32.mrb[0].mxu0
  %v6744 = vadd.f32 0.0, %v6743
  %v6745 = vpop.f32.mrb[0].mxu0
  %v6746 = vpop.f32.mrb[0].mxu0
  %v6747 = vadd.f32 0.0, %v6746
  %v6748 = vpop.f32.mrb[0].mxu0
  %6749 = vmatprep.mubr.bf16.mxu0 0
  %6750 = vmatmul.mubr.bf16.gmra.mrb[0].mxu0 %v5947
  %v6751 = vpop.f32.mrb[0].mxu0
  %v6752 = vadd.f32 0.0, %v6751
  %v6753 = vpop.f32.mrb[0].mxu0
  %v6754 = vpop.f32.mrb[0].mxu0
  %v6755 = vadd.f32 0.0, %v6754
  %v6756 = vpop.f32.mrb[0].mxu0
  %6757 = vmatprep.mubr.bf16.mxu0 0
  %6758 = vmatmul.mubr.bf16.gmra.mrb[0].mxu0 %v5948
  %v6759 = vpop.f32.mrb[0].mxu0
  %v6760 = vadd.f32 0.0, %v6759
  %v6761 = vpop.f32.mrb[0].mxu0
  %v6762 = vpop.f32.mrb[0].mxu0
  %v6763 = vadd.f32 0.0, %v6762
  %v6764 = vpop.f32.mrb[0].mxu0
  %6765 = vmatprep.mubr.bf16.mxu0 0
  %6766 = vmatmul.mubr.bf16.gmra.mrb[0].mxu0 %v5949
  %v6767 = vpop.f32.mrb[0].mxu0
  %v6768 = vadd.f32 0.0, %v6767
  %v6769 = vpop.f32.mrb[0].mxu0
  %v6770 = vpop.f32.mrb[0].mxu0
  %v6771 = vadd.f32 0.0, %v6770
  %v6772 = vpop.f32.mrb[0].mxu0
  %6773 = vmatprep.mubr.bf16.mxu0 0
  %6774 = vmatmul.mubr.bf16.gmra.mrb[0].mxu0 %v5950
  %v6775 = vpop.f32.mrb[0].mxu0
  %v6776 = vadd.f32 0.0, %v6775
  %v6777 = vpop.f32.mrb[0].mxu0
  %v6778 = vpop.f32.mrb[0].mxu0
  %v6779 = vadd.f32 0.0, %v6778
  %v6780 = vpop.f32.mrb[0].mxu0
  %6781 = vmatprep.mubr.bf16.mxu0 0
  %6782 = vmatmul.mubr.bf16.gmra.mrb[0].mxu0 %v5951
  %v6783 = vpop.f32.mrb[0].mxu0
  %v6784 = vadd.f32 0.0, %v6783
  %v6785 = vpop.f32.mrb[0].mxu0
  %v6786 = vpop.f32.mrb[0].mxu0
  %v6787 = vadd.f32 0.0, %v6786
  %v6788 = vpop.f32.mrb[0].mxu0
  %6789 = vmatprep.mubr.bf16.mxu0 0
  %6790 = vmatmul.mubr.bf16.gmra.mrb[0].mxu0 %v5952
  %v6791 = vpop.f32.mrb[0].mxu0
  %v6792 = vadd.f32 0.0, %v6791
  %v6793 = vpop.f32.mrb[0].mxu0
  %v6794 = vpop.f32.mrb[0].mxu0
  %v6795 = vadd.f32 0.0, %v6794
  %v6796 = vpop.f32.mrb[0].mxu0
  %6797 = vmatprep.mubr.bf16.mxu0 0
  %6798 = vmatmul.mubr.bf16.gmra.mrb[0].mxu0 %v5953
  %v6799 = vpop.f32.mrb[0].mxu0
  %v6800 = vadd.f32 0.0, %v6799
  %v6801 = vpop.f32.mrb[0].mxu0
  %v6802 = vpop.f32.mrb[0].mxu0
  %v6803 = vadd.f32 0.0, %v6802
  %v6804 = vpop.f32.mrb[0].mxu0
  %6805 = vmatprep.mubr.bf16.mxu0 0
  %6806 = vmatmul.mubr.bf16.gmra.mrb[0].mxu0 %v5954
  %v6807 = vpop.f32.mrb[0].mxu0
  %v6808 = vadd.f32 0.0, %v6807
  %v6809 = vpop.f32.mrb[0].mxu0
  %v6810 = vpop.f32.mrb[0].mxu0
  %v6811 = vadd.f32 0.0, %v6810
  %v6812 = vpop.f32.mrb[0].mxu0
  %6813 = vmatprep.mubr.bf16.mxu0 0
  %6814 = vmatmul.mubr.bf16.gmra.mrb[0].mxu0 %v5955
  %v6815 = vpop.f32.mrb[0].mxu0
  %v6816 = vadd.f32 0.0, %v6815
  %v6817 = vpop.f32.mrb[0].mxu0
  %v6818 = vpop.f32.mrb[0].mxu0
  %v6819 = vadd.f32 0.0, %v6818
  %v6820 = vpop.f32.mrb[0].mxu0
  %6821 = vmatprep.mubr.bf16.mxu0 0
  %6822 = vmatmul.mubr.bf16.gmra.mrb[0].mxu0 %v5956
  %v6823 = vpop.f32.mrb[0].mxu0
  %v6824 = vadd.f32 0.0, %v6823
  %v6825 = vpop.f32.mrb[0].mxu0
  %v6826 = vpop.f32.mrb[0].mxu0
  %v6827 = vadd.f32 0.0, %v6826
  %v6828 = vpop.f32.mrb[0].mxu0
  %6829 = vmatprep.mubr.bf16.mxu0 0
  %6830 = vmatmul.mubr.bf16.gmra.mrb[0].mxu0 %v5957
  %v6831 = vpop.f32.mrb[0].mxu0
  %v6832 = vadd.f32 0.0, %v6831
  %v6833 = vpop.f32.mrb[0].mxu0
  %v6834 = vpop.f32.mrb[0].mxu0
  %v6835 = vadd.f32 0.0, %v6834
  %v6836 = vpop.f32.mrb[0].mxu0
  %6837 = vmatprep.mubr.bf16.mxu0 0
  %6838 = vmatmul.mubr.bf16.gmra.mrb[0].mxu0 %v5958
  %v6839 = vpop.f32.mrb[0].mxu0
  %v6840 = vadd.f32 0.0, %v6839
  %v6841 = vpop.f32.mrb[0].mxu0
  %v6842 = vpop.f32.mrb[0].mxu0
  %v6843 = vadd.f32 0.0, %v6842
  %v6844 = vpop.f32.mrb[0].mxu0
  %6845 = vmatprep.mubr.bf16.mxu0 0
  %6846 = vmatmul.mubr.bf16.gmra.mrb[0].mxu0 %v5959
  %v6847 = vpop.f32.mrb[0].mxu0
  %v6848 = vadd.f32 0.0, %v6847
  %v6849 = vpop.f32.mrb[0].mxu0
  %v6850 = vpop.f32.mrb[0].mxu0
  %v6851 = vadd.f32 0.0, %v6850
  %v6852 = vpop.f32.mrb[0].mxu0
  %6853 = vmatprep.mubr.bf16.mxu0 0
  %6854 = vmatmul.mubr.bf16.gmra.mrb[0].mxu0 %v5960
  %v6855 = vpop.f32.mrb[0].mxu0
  %v6856 = vadd.f32 0.0, %v6855
  %v6857 = vpop.f32.mrb[0].mxu0
  %v6858 = vpop.f32.mrb[0].mxu0
  %v6859 = vadd.f32 0.0, %v6858
  %v6860 = vpop.f32.mrb[0].mxu0
  %6861 = vmatprep.mubr.bf16.mxu0 0
  %6862 = vmatmul.mubr.bf16.gmra.mrb[0].mxu0 %v5961
  %v6863 = vpop.f32.mrb[0].mxu0
  %v6864 = vadd.f32 0.0, %v6863
  %v6865 = vpop.f32.mrb[0].mxu0
  %v6866 = vpop.f32.mrb[0].mxu0
  %v6867 = vadd.f32 0.0, %v6866
  %v6868 = vpop.f32.mrb[0].mxu0
  %6869 = vmatprep.mubr.bf16.mxu0 0
  %6870 = vmatmul.mubr.bf16.gmra.mrb[0].mxu0 %v5962
  %v6871 = vpop.f32.mrb[0].mxu0
  %v6872 = vadd.f32 0.0, %v6871
  %v6873 = vpop.f32.mrb[0].mxu0
  %v6874 = vpop.f32.mrb[0].mxu0
  %v6875 = vadd.f32 0.0, %v6874
  %v6876 = vpop.f32.mrb[0].mxu0
  %6877 = vdwg.mxu0
  %v6878 = vmax.f32 %v5080, %v6096
  %v6879 = vmax.f32 %v5081, %v6099
  %v6880 = vmax.f32 %v5082, %v6104
  %v6881 = vmax.f32 %v5083, %v6107
  %v6882 = vmax.f32 %v5084, %v6112
  %v6883 = vmax.f32 %v5085, %v6115
  %v6884 = vmax.f32 %v5086, %v6120
  %v6885 = vmax.f32 %v5087, %v6123
  %v6886 = vmax.f32 %v5088, %v6128
  %v6887 = vmax.f32 %v5089, %v6131
  %v6888 = vmax.f32 %v5090, %v6136
  %v6889 = vmax.f32 %v5091, %v6139
  %v6890 = vmax.f32 %v5092, %v6144
  %v6891 = vmax.f32 %v5093, %v6147
  %v6892 = vmax.f32 %v5094, %v6152
  %v6893 = vmax.f32 %v5095, %v6155
  %v6894 = vmax.f32 %v5096, %v6160
  %v6895 = vmax.f32 %v5097, %v6163
  %v6896 = vmax.f32 %v5098, %v6168
  %v6897 = vmax.f32 %v5099, %v6171
  %v6898 = vmax.f32 %v5100, %v6176
  %v6899 = vmax.f32 %v5101, %v6179
  %v6900 = vmax.f32 %v5102, %v6184
  %v6901 = vmax.f32 %v5103, %v6187
  %v6902 = vmax.f32 %v5104, %v6192
  %v6903 = vmax.f32 %v5105, %v6195
  %v6904 = vmax.f32 %v5106, %v6200
  %v6905 = vmax.f32 %v5107, %v6203
  %v6906 = vmax.f32 %v5108, %v6208
  %v6907 = vmax.f32 %v5109, %v6211
  %v6908 = vmax.f32 %v5110, %v6216
  %v6909 = vmax.f32 %v5111, %v6219
  %v6910 = vmax.f32 %v5112, %v6224
  %v6911 = vmax.f32 %v5113, %v6227
  %v6912 = vmax.f32 %v5114, %v6232
  %v6913 = vmax.f32 %v5115, %v6235
  %v6914 = vmax.f32 %v5116, %v6240
  %v6915 = vmax.f32 %v5117, %v6243
  %v6916 = vmax.f32 %v5118, %v6248
  %v6917 = vmax.f32 %v5119, %v6251
  %v6918 = vmax.f32 %v5120, %v6256
  %v6919 = vmax.f32 %v5121, %v6259
  %v6920 = vmax.f32 %v5122, %v6264
  %v6921 = vmax.f32 %v5123, %v6267
  %v6922 = vmax.f32 %v5124, %v6272
  %v6923 = vmax.f32 %v5125, %v6275
  %v6924 = vmax.f32 %v5126, %v6280
  %v6925 = vmax.f32 %v5127, %v6283
  %v6926 = vmax.f32 %v5128, %v6288
  %v6927 = vmax.f32 %v5129, %v6291
  %v6928 = vmax.f32 %v5130, %v6296
  %v6929 = vmax.f32 %v5131, %v6299
  %v6930 = vmax.f32 %v5132, %v6304
  %v6931 = vmax.f32 %v5133, %v6307
  %v6932 = vmax.f32 %v5134, %v6312
  %v6933 = vmax.f32 %v5135, %v6315
  %v6934 = vmax.f32 %v5136, %v6320
  %v6935 = vmax.f32 %v5137, %v6323
  %v6936 = vmax.f32 %v5138, %v6328
  %v6937 = vmax.f32 %v5139, %v6331
  %v6938 = vmax.f32 %v5140, %v6336
  %v6939 = vmax.f32 %v5141, %v6339
  %v6940 = vmax.f32 %v5142, %v6344
  %v6941 = vmax.f32 %v5143, %v6347
  %v6942 = vmax.f32 %v5144, %v6352
  %v6943 = vmax.f32 %v5145, %v6355
  %v6944 = vmax.f32 %v5146, %v6360
  %v6945 = vmax.f32 %v5147, %v6363
  %v6946 = vmax.f32 %v5148, %v6368
  %v6947 = vmax.f32 %v5149, %v6371
  %v6948 = vmax.f32 %v5150, %v6376
  %v6949 = vmax.f32 %v5151, %v6379
  %v6950 = vmax.f32 %v5152, %v6384
  %v6951 = vmax.f32 %v5153, %v6387
  %v6952 = vmax.f32 %v5154, %v6392
  %v6953 = vmax.f32 %v5155, %v6395
  %v6954 = vmax.f32 %v5156, %v6400
  %v6955 = vmax.f32 %v5157, %v6403
  %v6956 = vmax.f32 %v5158, %v6408
  %v6957 = vmax.f32 %v5159, %v6411
  %v6958 = vmax.f32 %v5160, %v6416
  %v6959 = vmax.f32 %v5161, %v6419
  %v6960 = vmax.f32 %v5162, %v6424
  %v6961 = vmax.f32 %v5163, %v6427
  %v6962 = vmax.f32 %v5164, %v6432
  %v6963 = vmax.f32 %v5165, %v6435
  %v6964 = vmax.f32 %v5166, %v6440
  %v6965 = vmax.f32 %v5167, %v6443
  %v6966 = vmax.f32 %v5168, %v6448
  %v6967 = vmax.f32 %v5169, %v6451
  %v6968 = vmax.f32 %v5170, %v6456
  %v6969 = vmax.f32 %v5171, %v6459
  %v6970 = vmax.f32 %v5172, %v6464
  %v6971 = vmax.f32 %v5173, %v6467
  %v6972 = vmax.f32 %v5174, %v6472
  %v6973 = vmax.f32 %v5175, %v6475
  %v6974 = vmax.f32 %v5176, %v6480
  %v6975 = vmax.f32 %v5177, %v6483
  %v6976 = vmax.f32 %v5178, %v6488
  %v6977 = vmax.f32 %v5179, %v6491
  %v6978 = vmax.f32 %v5180, %v6496
  %v6979 = vmax.f32 %v5181, %v6499
  %v6980 = vmax.f32 %v5182, %v6504
  %v6981 = vmax.f32 %v5183, %v6507
  %v6982 = vmax.f32 %v5184, %v6512
  %v6983 = vmax.f32 %v5185, %v6515
  %v6984 = vmax.f32 %v5186, %v6520
  %v6985 = vmax.f32 %v5187, %v6523
  %v6986 = vmax.f32 %v5188, %v6528
  %v6987 = vmax.f32 %v5189, %v6531
  %v6988 = vmax.f32 %v5190, %v6536
  %v6989 = vmax.f32 %v5191, %v6539
  %v6990 = vmax.f32 %v5192, %v6544
  %v6991 = vmax.f32 %v5193, %v6547
  %v6992 = vmax.f32 %v5194, %v6552
  %v6993 = vmax.f32 %v5195, %v6555
  %v6994 = vmax.f32 %v5196, %v6560
  %v6995 = vmax.f32 %v5197, %v6563
  %v6996 = vmax.f32 %v5198, %v6568
  %v6997 = vmax.f32 %v5199, %v6571
  %v6998 = vmax.f32 %v5200, %v6576
  %v6999 = vmax.f32 %v5201, %v6579
  %v7000 = vmax.f32 %v5202, %v6584
  %v7001 = vmax.f32 %v5203, %v6587
  %v7002 = vmax.f32 %v5204, %v6592
  %v7003 = vmax.f32 %v5205, %v6595
  %v7004 = vmax.f32 %v5206, %v6600
  %v7005 = vmax.f32 %v5207, %v6603
  %v7006 = vmax.f32 %v5208, %v6608
  %v7007 = vmax.f32 %v5209, %v6611
  %v7008 = vmax.f32 %v5210, %v6616
  %v7009 = vmax.f32 %v5211, %v6619
  %v7010 = vmax.f32 %v5212, %v6624
  %v7011 = vmax.f32 %v5213, %v6627
  %v7012 = vmax.f32 %v5214, %v6632
  %v7013 = vmax.f32 %v5215, %v6635
  %v7014 = vmax.f32 %v5216, %v6640
  %v7015 = vmax.f32 %v5217, %v6643
  %v7016 = vmax.f32 %v5218, %v6648
  %v7017 = vmax.f32 %v5219, %v6651
  %v7018 = vmax.f32 %v5220, %v6656
  %v7019 = vmax.f32 %v5221, %v6659
  %v7020 = vmax.f32 %v5222, %v6664
  %v7021 = vmax.f32 %v5223, %v6667
  %v7022 = vmax.f32 %v5224, %v6672
  %v7023 = vmax.f32 %v5225, %v6675
  %v7024 = vmax.f32 %v5226, %v6680
  %v7025 = vmax.f32 %v5227, %v6683
  %v7026 = vmax.f32 %v5228, %v6688
  %v7027 = vmax.f32 %v5229, %v6691
  %v7028 = vmax.f32 %v5230, %v6696
  %v7029 = vmax.f32 %v5231, %v6699
  %v7030 = vmax.f32 %v5232, %v6704
  %v7031 = vmax.f32 %v5233, %v6707
  %v7032 = vmax.f32 %v5234, %v6712
  %v7033 = vmax.f32 %v5235, %v6715
  %v7034 = vmax.f32 %v5236, %v6720
  %v7035 = vmax.f32 %v5237, %v6723
  %v7036 = vmax.f32 %v5238, %v6728
  %v7037 = vmax.f32 %v5239, %v6731
  %v7038 = vmax.f32 %v5240, %v6736
  %v7039 = vmax.f32 %v5241, %v6739
  %v7040 = vmax.f32 %v5242, %v6744
  %v7041 = vmax.f32 %v5243, %v6747
  %v7042 = vmax.f32 %v5244, %v6752
  %v7043 = vmax.f32 %v5245, %v6755
  %v7044 = vmax.f32 %v5246, %v6760
  %v7045 = vmax.f32 %v5247, %v6763
  %v7046 = vmax.f32 %v5248, %v6768
  %v7047 = vmax.f32 %v5249, %v6771
  %v7048 = vmax.f32 %v5250, %v6776
  %v7049 = vmax.f32 %v5251, %v6779
  %v7050 = vmax.f32 %v5252, %v6784
  %v7051 = vmax.f32 %v5253, %v6787
  %v7052 = vmax.f32 %v5254, %v6792
  %v7053 = vmax.f32 %v5255, %v6795
  %v7054 = vmax.f32 %v5256, %v6800
  %v7055 = vmax.f32 %v5257, %v6803
  %v7056 = vmax.f32 %v5258, %v6808
  %v7057 = vmax.f32 %v5259, %v6811
  %v7058 = vmax.f32 %v5260, %v6816
  %v7059 = vmax.f32 %v5261, %v6819
  %v7060 = vmax.f32 %v5262, %v6824
  %v7061 = vmax.f32 %v5263, %v6827
  %v7062 = vmax.f32 %v5264, %v6832
  %v7063 = vmax.f32 %v5265, %v6835
  %v7064 = vmax.f32 %v5266, %v6840
  %v7065 = vmax.f32 %v5267, %v6843
  %v7066 = vmax.f32 %v5268, %v6848
  %v7067 = vmax.f32 %v5269, %v6851
  %v7068 = vmax.f32 %v5270, %v6856
  %v7069 = vmax.f32 %v5271, %v6859
  %v7070 = vmax.f32 %v5272, %v6864
  %v7071 = vmax.f32 %v5273, %v6867
  %v7072 = vmax.f32 %v5274, %v6872
  %v7073 = vmax.f32 %v5275, %v6875
  %v7074 = vld [vmem:[%s2] sm:$0x1]
  %v7076 = vlaneseq
  %v7077 = vshrl.u32 %v7076, 7
  %v7078 = vsub.s32 0, %v7077
  %v7079 = vrot.slane %v7074, %v7078
  %v7081 = vadd.f32 %v6878, %v7079
  %v7082 = vadd.f32 %v6879, %v7079
  %v7083 = vadd.f32 %v6880, %v7079
  %v7084 = vadd.f32 %v6881, %v7079
  %v7085 = vadd.f32 %v6882, %v7079
  %v7086 = vadd.f32 %v6883, %v7079
  %v7087 = vadd.f32 %v6884, %v7079
  %v7088 = vadd.f32 %v6885, %v7079
  %v7089 = vadd.f32 %v6886, %v7079
  %v7090 = vadd.f32 %v6887, %v7079
  %v7091 = vadd.f32 %v6888, %v7079
  %v7092 = vadd.f32 %v6889, %v7079
  %v7093 = vadd.f32 %v6890, %v7079
  %v7094 = vadd.f32 %v6891, %v7079
  %v7095 = vadd.f32 %v6892, %v7079
  %v7096 = vadd.f32 %v6893, %v7079
  %v7097 = vadd.f32 %v6894, %v7079
  %v7098 = vadd.f32 %v6895, %v7079
  %v7099 = vadd.f32 %v6896, %v7079
  %v7100 = vadd.f32 %v6897, %v7079
  %v7101 = vadd.f32 %v6898, %v7079
  %v7102 = vadd.f32 %v6899, %v7079
  %v7103 = vadd.f32 %v6900, %v7079
  %v7104 = vadd.f32 %v6901, %v7079
  %v7105 = vadd.f32 %v6902, %v7079
  %v7106 = vadd.f32 %v6903, %v7079
  %v7107 = vadd.f32 %v6904, %v7079
  %v7108 = vadd.f32 %v6905, %v7079
  %v7109 = vadd.f32 %v6906, %v7079
  %v7110 = vadd.f32 %v6907, %v7079
  %v7111 = vadd.f32 %v6908, %v7079
  %v7112 = vadd.f32 %v6909, %v7079
  %v7113 = vadd.f32 %v6910, %v7079
  %v7114 = vadd.f32 %v6911, %v7079
  %v7115 = vadd.f32 %v6912, %v7079
  %v7116 = vadd.f32 %v6913, %v7079
  %v7117 = vadd.f32 %v6914, %v7079
  %v7118 = vadd.f32 %v6915, %v7079
  %v7119 = vadd.f32 %v6916, %v7079
  %v7120 = vadd.f32 %v6917, %v7079
  %v7121 = vadd.f32 %v6918, %v7079
  %v7122 = vadd.f32 %v6919, %v7079
  %v7123 = vadd.f32 %v6920, %v7079
  %v7124 = vadd.f32 %v6921, %v7079
  %v7125 = vadd.f32 %v6922, %v7079
  %v7126 = vadd.f32 %v6923, %v7079
  %v7127 = vadd.f32 %v6924, %v7079
  %v7128 = vadd.f32 %v6925, %v7079
  %v7129 = vadd.f32 %v6926, %v7079
  %v7130 = vadd.f32 %v6927, %v7079
  %v7131 = vadd.f32 %v6928, %v7079
  %v7132 = vadd.f32 %v6929, %v7079
  %v7133 = vadd.f32 %v6930, %v7079
  %v7134 = vadd.f32 %v6931, %v7079
  %v7135 = vadd.f32 %v6932, %v7079
  %v7136 = vadd.f32 %v6933, %v7079
  %v7137 = vadd.f32 %v6934, %v7079
  %v7138 = vadd.f32 %v6935, %v7079
  %v7139 = vadd.f32 %v6936, %v7079
  %v7140 = vadd.f32 %v6937, %v7079
  %v7141 = vadd.f32 %v6938, %v7079
  %v7142 = vadd.f32 %v6939, %v7079
  %v7143 = vadd.f32 %v6940, %v7079
  %v7144 = vadd.f32 %v6941, %v7079
  %v7145 = vadd.f32 %v6942, %v7079
  %v7146 = vadd.f32 %v6943, %v7079
  %v7147 = vadd.f32 %v6944, %v7079
  %v7148 = vadd.f32 %v6945, %v7079
  %v7149 = vadd.f32 %v6946, %v7079
  %v7150 = vadd.f32 %v6947, %v7079
  %v7151 = vadd.f32 %v6948, %v7079
  %v7152 = vadd.f32 %v6949, %v7079
  %v7153 = vadd.f32 %v6950, %v7079
  %v7154 = vadd.f32 %v6951, %v7079
  %v7155 = vadd.f32 %v6952, %v7079
  %v7156 = vadd.f32 %v6953, %v7079
  %v7157 = vadd.f32 %v6954, %v7079
  %v7158 = vadd.f32 %v6955, %v7079
  %v7159 = vadd.f32 %v6956, %v7079
  %v7160 = vadd.f32 %v6957, %v7079
  %v7161 = vadd.f32 %v6958, %v7079
  %v7162 = vadd.f32 %v6959, %v7079
  %v7163 = vadd.f32 %v6960, %v7079
  %v7164 = vadd.f32 %v6961, %v7079
  %v7165 = vadd.f32 %v6962, %v7079
  %v7166 = vadd.f32 %v6963, %v7079
  %v7167 = vadd.f32 %v6964, %v7079
  %v7168 = vadd.f32 %v6965, %v7079
  %v7169 = vadd.f32 %v6966, %v7079
  %v7170 = vadd.f32 %v6967, %v7079
  %v7171 = vadd.f32 %v6968, %v7079
  %v7172 = vadd.f32 %v6969, %v7079
  %v7173 = vadd.f32 %v6970, %v7079
  %v7174 = vadd.f32 %v6971, %v7079
  %v7175 = vadd.f32 %v6972, %v7079
  %v7176 = vadd.f32 %v6973, %v7079
  %v7177 = vadd.f32 %v6974, %v7079
  %v7178 = vadd.f32 %v6975, %v7079
  %v7179 = vadd.f32 %v6976, %v7079
  %v7180 = vadd.f32 %v6977, %v7079
  %v7181 = vadd.f32 %v6978, %v7079
  %v7182 = vadd.f32 %v6979, %v7079
  %v7183 = vadd.f32 %v6980, %v7079
  %v7184 = vadd.f32 %v6981, %v7079
  %v7185 = vadd.f32 %v6982, %v7079
  %v7186 = vadd.f32 %v6983, %v7079
  %v7187 = vadd.f32 %v6984, %v7079
  %v7188 = vadd.f32 %v6985, %v7079
  %v7189 = vadd.f32 %v6986, %v7079
  %v7190 = vadd.f32 %v6987, %v7079
  %v7191 = vadd.f32 %v6988, %v7079
  %v7192 = vadd.f32 %v6989, %v7079
  %v7193 = vadd.f32 %v6990, %v7079
  %v7194 = vadd.f32 %v6991, %v7079
  %v7195 = vadd.f32 %v6992, %v7079
  %v7196 = vadd.f32 %v6993, %v7079
  %v7197 = vadd.f32 %v6994, %v7079
  %v7198 = vadd.f32 %v6995, %v7079
  %v7199 = vadd.f32 %v6996, %v7079
  %v7200 = vadd.f32 %v6997, %v7079
  %v7201 = vadd.f32 %v6998, %v7079
  %v7202 = vadd.f32 %v6999, %v7079
  %v7203 = vadd.f32 %v7000, %v7079
  %v7204 = vadd.f32 %v7001, %v7079
  %v7205 = vadd.f32 %v7002, %v7079
  %v7206 = vadd.f32 %v7003, %v7079
  %v7207 = vadd.f32 %v7004, %v7079
  %v7208 = vadd.f32 %v7005, %v7079
  %v7209 = vadd.f32 %v7006, %v7079
  %v7210 = vadd.f32 %v7007, %v7079
  %v7211 = vadd.f32 %v7008, %v7079
  %v7212 = vadd.f32 %v7009, %v7079
  %v7213 = vadd.f32 %v7010, %v7079
  %v7214 = vadd.f32 %v7011, %v7079
  %v7215 = vadd.f32 %v7012, %v7079
  %v7216 = vadd.f32 %v7013, %v7079
  %v7217 = vadd.f32 %v7014, %v7079
  %v7218 = vadd.f32 %v7015, %v7079
  %v7219 = vadd.f32 %v7016, %v7079
  %v7220 = vadd.f32 %v7017, %v7079
  %v7221 = vadd.f32 %v7018, %v7079
  %v7222 = vadd.f32 %v7019, %v7079
  %v7223 = vadd.f32 %v7020, %v7079
  %v7224 = vadd.f32 %v7021, %v7079
  %v7225 = vadd.f32 %v7022, %v7079
  %v7226 = vadd.f32 %v7023, %v7079
  %v7227 = vadd.f32 %v7024, %v7079
  %v7228 = vadd.f32 %v7025, %v7079
  %v7229 = vadd.f32 %v7026, %v7079
  %v7230 = vadd.f32 %v7027, %v7079
  %v7231 = vadd.f32 %v7028, %v7079
  %v7232 = vadd.f32 %v7029, %v7079
  %v7233 = vadd.f32 %v7030, %v7079
  %v7234 = vadd.f32 %v7031, %v7079
  %v7235 = vadd.f32 %v7032, %v7079
  %v7236 = vadd.f32 %v7033, %v7079
  %v7237 = vadd.f32 %v7034, %v7079
  %v7238 = vadd.f32 %v7035, %v7079
  %v7239 = vadd.f32 %v7036, %v7079
  %v7240 = vadd.f32 %v7037, %v7079
  %v7241 = vadd.f32 %v7038, %v7079
  %v7242 = vadd.f32 %v7039, %v7079
  %v7243 = vadd.f32 %v7040, %v7079
  %v7244 = vadd.f32 %v7041, %v7079
  %v7245 = vadd.f32 %v7042, %v7079
  %v7246 = vadd.f32 %v7043, %v7079
  %v7247 = vadd.f32 %v7044, %v7079
  %v7248 = vadd.f32 %v7045, %v7079
  %v7249 = vadd.f32 %v7046, %v7079
  %v7250 = vadd.f32 %v7047, %v7079
  %v7251 = vadd.f32 %v7048, %v7079
  %v7252 = vadd.f32 %v7049, %v7079
  %v7253 = vadd.f32 %v7050, %v7079
  %v7254 = vadd.f32 %v7051, %v7079
  %v7255 = vadd.f32 %v7052, %v7079
  %v7256 = vadd.f32 %v7053, %v7079
  %v7257 = vadd.f32 %v7054, %v7079
  %v7258 = vadd.f32 %v7055, %v7079
  %v7259 = vadd.f32 %v7056, %v7079
  %v7260 = vadd.f32 %v7057, %v7079
  %v7261 = vadd.f32 %v7058, %v7079
  %v7262 = vadd.f32 %v7059, %v7079
  %v7263 = vadd.f32 %v7060, %v7079
  %v7264 = vadd.f32 %v7061, %v7079
  %v7265 = vadd.f32 %v7062, %v7079
  %v7266 = vadd.f32 %v7063, %v7079
  %v7267 = vadd.f32 %v7064, %v7079
  %v7268 = vadd.f32 %v7065, %v7079
  %v7269 = vadd.f32 %v7066, %v7079
  %v7270 = vadd.f32 %v7067, %v7079
  %v7271 = vadd.f32 %v7068, %v7079
  %v7272 = vadd.f32 %v7069, %v7079
  %v7273 = vadd.f32 %v7070, %v7079
  %v7274 = vadd.f32 %v7071, %v7079
  %v7275 = vadd.f32 %v7072, %v7079
  %v7276 = vadd.f32 %v7073, %v7079
  %v7277 = vmax.f32 %v7081, 0.0
  %v7278 = vmax.f32 %v7082, 0.0
  %v7279 = vmax.f32 %v7083, 0.0
  %v7280 = vmax.f32 %v7084, 0.0
  %v7281 = vmax.f32 %v7085, 0.0
  %v7282 = vmax.f32 %v7086, 0.0
  %v7283 = vmax.f32 %v7087, 0.0
  %v7284 = vmax.f32 %v7088, 0.0
  %v7285 = vmax.f32 %v7089, 0.0
  %v7286 = vmax.f32 %v7090, 0.0
  %v7287 = vmax.f32 %v7091, 0.0
  %v7288 = vmax.f32 %v7092, 0.0
  %v7289 = vmax.f32 %v7093, 0.0
  %v7290 = vmax.f32 %v7094, 0.0
  %v7291 = vmax.f32 %v7095, 0.0
  %v7292 = vmax.f32 %v7096, 0.0
  %v7293 = vmax.f32 %v7097, 0.0
  %v7294 = vmax.f32 %v7098, 0.0
  %v7295 = vmax.f32 %v7099, 0.0
  %v7296 = vmax.f32 %v7100, 0.0
  %v7297 = vmax.f32 %v7101, 0.0
  %v7298 = vmax.f32 %v7102, 0.0
  %v7299 = vmax.f32 %v7103, 0.0
  %v7300 = vmax.f32 %v7104, 0.0
  %v7301 = vmax.f32 %v7105, 0.0
  %v7302 = vmax.f32 %v7106, 0.0
  %v7303 = vmax.f32 %v7107, 0.0
  %v7304 = vmax.f32 %v7108, 0.0
  %v7305 = vmax.f32 %v7109, 0.0
  %v7306 = vmax.f32 %v7110, 0.0
  %v7307 = vmax.f32 %v7111, 0.0
  %v7308 = vmax.f32 %v7112, 0.0
  %v7309 = vmax.f32 %v7113, 0.0
  %v7310 = vmax.f32 %v7114, 0.0
  %v7311 = vmax.f32 %v7115, 0.0
  %v7312 = vmax.f32 %v7116, 0.0
  %v7313 = vmax.f32 %v7117, 0.0
  %v7314 = vmax.f32 %v7118, 0.0
  %v7315 = vmax.f32 %v7119, 0.0
  %v7316 = vmax.f32 %v7120, 0.0
  %v7317 = vmax.f32 %v7121, 0.0
  %v7318 = vmax.f32 %v7122, 0.0
  %v7319 = vmax.f32 %v7123, 0.0
  %v7320 = vmax.f32 %v7124, 0.0
  %v7321 = vmax.f32 %v7125, 0.0
  %v7322 = vmax.f32 %v7126, 0.0
  %v7323 = vmax.f32 %v7127, 0.0
  %v7324 = vmax.f32 %v7128, 0.0
  %v7325 = vmax.f32 %v7129, 0.0
  %v7326 = vmax.f32 %v7130, 0.0
  %v7327 = vmax.f32 %v7131, 0.0
  %v7328 = vmax.f32 %v7132, 0.0
  %v7329 = vmax.f32 %v7133, 0.0
  %v7330 = vmax.f32 %v7134, 0.0
  %v7331 = vmax.f32 %v7135, 0.0
  %v7332 = vmax.f32 %v7136, 0.0
  %v7333 = vmax.f32 %v7137, 0.0
  %v7334 = vmax.f32 %v7138, 0.0
  %v7335 = vmax.f32 %v7139, 0.0
  %v7336 = vmax.f32 %v7140, 0.0
  %v7337 = vmax.f32 %v7141, 0.0
  %v7338 = vmax.f32 %v7142, 0.0
  %v7339 = vmax.f32 %v7143, 0.0
  %v7340 = vmax.f32 %v7144, 0.0
  %v7341 = vmax.f32 %v7145, 0.0
  %v7342 = vmax.f32 %v7146, 0.0
  %v7343 = vmax.f32 %v7147, 0.0
  %v7344 = vmax.f32 %v7148, 0.0
  %v7345 = vmax.f32 %v7149, 0.0
  %v7346 = vmax.f32 %v7150, 0.0
  %v7347 = vmax.f32 %v7151, 0.0
  %v7348 = vmax.f32 %v7152, 0.0
  %v7349 = vmax.f32 %v7153, 0.0
  %v7350 = vmax.f32 %v7154, 0.0
  %v7351 = vmax.f32 %v7155, 0.0
  %v7352 = vmax.f32 %v7156, 0.0
  %v7353 = vmax.f32 %v7157, 0.0
  %v7354 = vmax.f32 %v7158, 0.0
  %v7355 = vmax.f32 %v7159, 0.0
  %v7356 = vmax.f32 %v7160, 0.0
  %v7357 = vmax.f32 %v7161, 0.0
  %v7358 = vmax.f32 %v7162, 0.0
  %v7359 = vmax.f32 %v7163, 0.0
  %v7360 = vmax.f32 %v7164, 0.0
  %v7361 = vmax.f32 %v7165, 0.0
  %v7362 = vmax.f32 %v7166, 0.0
  %v7363 = vmax.f32 %v7167, 0.0
  %v7364 = vmax.f32 %v7168, 0.0
  %v7365 = vmax.f32 %v7169, 0.0
  %v7366 = vmax.f32 %v7170, 0.0
  %v7367 = vmax.f32 %v7171, 0.0
  %v7368 = vmax.f32 %v7172, 0.0
  %v7369 = vmax.f32 %v7173, 0.0
  %v7370 = vmax.f32 %v7174, 0.0
  %v7371 = vmax.f32 %v7175, 0.0
  %v7372 = vmax.f32 %v7176, 0.0
  %v7373 = vmax.f32 %v7177, 0.0
  %v7374 = vmax.f32 %v7178, 0.0
  %v7375 = vmax.f32 %v7179, 0.0
  %v7376 = vmax.f32 %v7180, 0.0
  %v7377 = vmax.f32 %v7181, 0.0
  %v7378 = vmax.f32 %v7182, 0.0
  %v7379 = vmax.f32 %v7183, 0.0
  %v7380 = vmax.f32 %v7184, 0.0
  %v7381 = vmax.f32 %v7185, 0.0
  %v7382 = vmax.f32 %v7186, 0.0
  %v7383 = vmax.f32 %v7187, 0.0
  %v7384 = vmax.f32 %v7188, 0.0
  %v7385 = vmax.f32 %v7189, 0.0
  %v7386 = vmax.f32 %v7190, 0.0
  %v7387 = vmax.f32 %v7191, 0.0
  %v7388 = vmax.f32 %v7192, 0.0
  %v7389 = vmax.f32 %v7193, 0.0
  %v7390 = vmax.f32 %v7194, 0.0
  %v7391 = vmax.f32 %v7195, 0.0
  %v7392 = vmax.f32 %v7196, 0.0
  %v7393 = vmax.f32 %v7197, 0.0
  %v7394 = vmax.f32 %v7198, 0.0
  %v7395 = vmax.f32 %v7199, 0.0
  %v7396 = vmax.f32 %v7200, 0.0
  %v7397 = vmax.f32 %v7201, 0.0
  %v7398 = vmax.f32 %v7202, 0.0
  %v7399 = vmax.f32 %v7203, 0.0
  %v7400 = vmax.f32 %v7204, 0.0
  %v7401 = vmax.f32 %v7205, 0.0
  %v7402 = vmax.f32 %v7206, 0.0
  %v7403 = vmax.f32 %v7207, 0.0
  %v7404 = vmax.f32 %v7208, 0.0
  %v7405 = vmax.f32 %v7209, 0.0
  %v7406 = vmax.f32 %v7210, 0.0
  %v7407 = vmax.f32 %v7211, 0.0
  %v7408 = vmax.f32 %v7212, 0.0
  %v7409 = vmax.f32 %v7213, 0.0
  %v7410 = vmax.f32 %v7214, 0.0
  %v7411 = vmax.f32 %v7215, 0.0
  %v7412 = vmax.f32 %v7216, 0.0
  %v7413 = vmax.f32 %v7217, 0.0
  %v7414 = vmax.f32 %v7218, 0.0
  %v7415 = vmax.f32 %v7219, 0.0
  %v7416 = vmax.f32 %v7220, 0.0
  %v7417 = vmax.f32 %v7221, 0.0
  %v7418 = vmax.f32 %v7222, 0.0
  %v7419 = vmax.f32 %v7223, 0.0
  %v7420 = vmax.f32 %v7224, 0.0
  %v7421 = vmax.f32 %v7225, 0.0
  %v7422 = vmax.f32 %v7226, 0.0
  %v7423 = vmax.f32 %v7227, 0.0
  %v7424 = vmax.f32 %v7228, 0.0
  %v7425 = vmax.f32 %v7229, 0.0
  %v7426 = vmax.f32 %v7230, 0.0
  %v7427 = vmax.f32 %v7231, 0.0
  %v7428 = vmax.f32 %v7232, 0.0
  %v7429 = vmax.f32 %v7233, 0.0
  %v7430 = vmax.f32 %v7234, 0.0
  %v7431 = vmax.f32 %v7235, 0.0
  %v7432 = vmax.f32 %v7236, 0.0
  %v7433 = vmax.f32 %v7237, 0.0
  %v7434 = vmax.f32 %v7238, 0.0
  %v7435 = vmax.f32 %v7239, 0.0
  %v7436 = vmax.f32 %v7240, 0.0
  %v7437 = vmax.f32 %v7241, 0.0
  %v7438 = vmax.f32 %v7242, 0.0
  %v7439 = vmax.f32 %v7243, 0.0
  %v7440 = vmax.f32 %v7244, 0.0
  %v7441 = vmax.f32 %v7245, 0.0
  %v7442 = vmax.f32 %v7246, 0.0
  %v7443 = vmax.f32 %v7247, 0.0
  %v7444 = vmax.f32 %v7248, 0.0
  %v7445 = vmax.f32 %v7249, 0.0
  %v7446 = vmax.f32 %v7250, 0.0
  %v7447 = vmax.f32 %v7251, 0.0
  %v7448 = vmax.f32 %v7252, 0.0
  %v7449 = vmax.f32 %v7253, 0.0
  %v7450 = vmax.f32 %v7254, 0.0
  %v7451 = vmax.f32 %v7255, 0.0
  %v7452 = vmax.f32 %v7256, 0.0
  %v7453 = vmax.f32 %v7257, 0.0
  %v7454 = vmax.f32 %v7258, 0.0
  %v7455 = vmax.f32 %v7259, 0.0
  %v7456 = vmax.f32 %v7260, 0.0
  %v7457 = vmax.f32 %v7261, 0.0
  %v7458 = vmax.f32 %v7262, 0.0
  %v7459 = vmax.f32 %v7263, 0.0
  %v7460 = vmax.f32 %v7264, 0.0
  %v7461 = vmax.f32 %v7265, 0.0
  %v7462 = vmax.f32 %v7266, 0.0
  %v7463 = vmax.f32 %v7267, 0.0
  %v7464 = vmax.f32 %v7268, 0.0
  %v7465 = vmax.f32 %v7269, 0.0
  %v7466 = vmax.f32 %v7270, 0.0
  %v7467 = vmax.f32 %v7271, 0.0
  %v7468 = vmax.f32 %v7272, 0.0
  %v7469 = vmax.f32 %v7273, 0.0
  %v7470 = vmax.f32 %v7274, 0.0
  %v7471 = vmax.f32 %v7275, 0.0
  %v7472 = vmax.f32 %v7276, 0.0
  %v7473 = vpack.c.bf16 %v7278, %v7277
  %v7474 = vpack.c.bf16 %v7280, %v7279
  %v7475 = vpack.c.bf16 %v7282, %v7281
  %v7476 = vpack.c.bf16 %v7284, %v7283
  %v7477 = vpack.c.bf16 %v7286, %v7285
  %v7478 = vpack.c.bf16 %v7288, %v7287
  %v7479 = vpack.c.bf16 %v7290, %v7289
  %v7480 = vpack.c.bf16 %v7292, %v7291
  %v7481 = vpack.c.bf16 %v7294, %v7293
  %v7482 = vpack.c.bf16 %v7296, %v7295
  %v7483 = vpack.c.bf16 %v7298, %v7297
  %v7484 = vpack.c.bf16 %v7300, %v7299
  %v7485 = vpack.c.bf16 %v7302, %v7301
  %v7486 = vpack.c.bf16 %v7304, %v7303
  %v7487 = vpack.c.bf16 %v7306, %v7305
  %v7488 = vpack.c.bf16 %v7308, %v7307
  %v7489 = vpack.c.bf16 %v7310, %v7309
  %v7490 = vpack.c.bf16 %v7312, %v7311
  %v7491 = vpack.c.bf16 %v7314, %v7313
  %v7492 = vpack.c.bf16 %v7316, %v7315
  %v7493 = vpack.c.bf16 %v7318, %v7317
  %v7494 = vpack.c.bf16 %v7320, %v7319
  %v7495 = vpack.c.bf16 %v7322, %v7321
  %v7496 = vpack.c.bf16 %v7324, %v7323
  %v7497 = vpack.c.bf16 %v7326, %v7325
  %v7498 = vpack.c.bf16 %v7328, %v7327
  %v7499 = vpack.c.bf16 %v7330, %v7329
  %v7500 = vpack.c.bf16 %v7332, %v7331
  %v7501 = vpack.c.bf16 %v7334, %v7333
  %v7502 = vpack.c.bf16 %v7336, %v7335
  %v7503 = vpack.c.bf16 %v7338, %v7337
  %v7504 = vpack.c.bf16 %v7340, %v7339
  %v7505 = vpack.c.bf16 %v7342, %v7341
  %v7506 = vpack.c.bf16 %v7344, %v7343
  %v7507 = vpack.c.bf16 %v7346, %v7345
  %v7508 = vpack.c.bf16 %v7348, %v7347
  %v7509 = vpack.c.bf16 %v7350, %v7349
  %v7510 = vpack.c.bf16 %v7352, %v7351
  %v7511 = vpack.c.bf16 %v7354, %v7353
  %v7512 = vpack.c.bf16 %v7356, %v7355
  %v7513 = vpack.c.bf16 %v7358, %v7357
  %v7514 = vpack.c.bf16 %v7360, %v7359
  %v7515 = vpack.c.bf16 %v7362, %v7361
  %v7516 = vpack.c.bf16 %v7364, %v7363
  %v7517 = vpack.c.bf16 %v7366, %v7365
  %v7518 = vpack.c.bf16 %v7368, %v7367
  %v7519 = vpack.c.bf16 %v7370, %v7369
  %v7520 = vpack.c.bf16 %v7372, %v7371
  %v7521 = vpack.c.bf16 %v7374, %v7373
  %v7522 = vpack.c.bf16 %v7376, %v7375
  %v7523 = vpack.c.bf16 %v7378, %v7377
  %v7524 = vpack.c.bf16 %v7380, %v7379
  %v7525 = vpack.c.bf16 %v7382, %v7381
  %v7526 = vpack.c.bf16 %v7384, %v7383
  %v7527 = vpack.c.bf16 %v7386, %v7385
  %v7528 = vpack.c.bf16 %v7388, %v7387
  %v7529 = vpack.c.bf16 %v7390, %v7389
  %v7530 = vpack.c.bf16 %v7392, %v7391
  %v7531 = vpack.c.bf16 %v7394, %v7393
  %v7532 = vpack.c.bf16 %v7396, %v7395
  %v7533 = vpack.c.bf16 %v7398, %v7397
  %v7534 = vpack.c.bf16 %v7400, %v7399
  %v7535 = vpack.c.bf16 %v7402, %v7401
  %v7536 = vpack.c.bf16 %v7404, %v7403
  %v7537 = vpack.c.bf16 %v7406, %v7405
  %v7538 = vpack.c.bf16 %v7408, %v7407
  %v7539 = vpack.c.bf16 %v7410, %v7409
  %v7540 = vpack.c.bf16 %v7412, %v7411
  %v7541 = vpack.c.bf16 %v7414, %v7413
  %v7542 = vpack.c.bf16 %v7416, %v7415
  %v7543 = vpack.c.bf16 %v7418, %v7417
  %v7544 = vpack.c.bf16 %v7420, %v7419
  %v7545 = vpack.c.bf16 %v7422, %v7421
  %v7546 = vpack.c.bf16 %v7424, %v7423
  %v7547 = vpack.c.bf16 %v7426, %v7425
  %v7548 = vpack.c.bf16 %v7428, %v7427
  %v7549 = vpack.c.bf16 %v7430, %v7429
  %v7550 = vpack.c.bf16 %v7432, %v7431
  %v7551 = vpack.c.bf16 %v7434, %v7433
  %v7552 = vpack.c.bf16 %v7436, %v7435
  %v7553 = vpack.c.bf16 %v7438, %v7437
  %v7554 = vpack.c.bf16 %v7440, %v7439
  %v7555 = vpack.c.bf16 %v7442, %v7441
  %v7556 = vpack.c.bf16 %v7444, %v7443
  %v7557 = vpack.c.bf16 %v7446, %v7445
  %v7558 = vpack.c.bf16 %v7448, %v7447
  %v7559 = vpack.c.bf16 %v7450, %v7449
  %v7560 = vpack.c.bf16 %v7452, %v7451
  %v7561 = vpack.c.bf16 %v7454, %v7453
  %v7562 = vpack.c.bf16 %v7456, %v7455
  %v7563 = vpack.c.bf16 %v7458, %v7457
  %v7564 = vpack.c.bf16 %v7460, %v7459
  %v7565 = vpack.c.bf16 %v7462, %v7461
  %v7566 = vpack.c.bf16 %v7464, %v7463
  %v7567 = vpack.c.bf16 %v7466, %v7465
  %v7568 = vpack.c.bf16 %v7468, %v7467
  %v7569 = vpack.c.bf16 %v7470, %v7469
  %v7570 = vpack.c.bf16 %v7472, %v7471
  %v7669 = vunpack.c.l.b16 %v7473
  %v7670 = vunpack.c.h.b16 %v7473
  %v7671 = vunpack.c.l.b16 %v7474
  %v7672 = vunpack.c.h.b16 %v7474
  %v7673 = vunpack.c.l.b16 %v7475
  %v7674 = vunpack.c.h.b16 %v7475
  %v7675 = vunpack.c.l.b16 %v7476
  %v7676 = vunpack.c.h.b16 %v7476
  %v7677 = vunpack.c.l.b16 %v7477
  %v7678 = vunpack.c.h.b16 %v7477
  %v7679 = vunpack.c.l.b16 %v7478
  %v7680 = vunpack.c.h.b16 %v7478
  %v7681 = vunpack.c.l.b16 %v7479
  %v7682 = vunpack.c.h.b16 %v7479
  %v7683 = vunpack.c.l.b16 %v7480
  %v7684 = vunpack.c.h.b16 %v7480
  %v7685 = vunpack.c.l.b16 %v7481
  %v7686 = vunpack.c.h.b16 %v7481
  %v7687 = vunpack.c.l.b16 %v7482
  %v7688 = vunpack.c.h.b16 %v7482
  %v7689 = vunpack.c.l.b16 %v7483
  %v7690 = vunpack.c.h.b16 %v7483
  %v7691 = vunpack.c.l.b16 %v7484
  %v7692 = vunpack.c.h.b16 %v7484
  %v7693 = vunpack.c.l.b16 %v7485
  %v7694 = vunpack.c.h.b16 %v7485
  %v7695 = vunpack.c.l.b16 %v7486
  %v7696 = vunpack.c.h.b16 %v7486
  %v7697 = vunpack.c.l.b16 %v7487
  %v7698 = vunpack.c.h.b16 %v7487
  %v7699 = vunpack.c.l.b16 %v7488
  %v7700 = vunpack.c.h.b16 %v7488
  %v7701 = vunpack.c.l.b16 %v7489
  %v7702 = vunpack.c.h.b16 %v7489
  %v7703 = vunpack.c.l.b16 %v7490
  %v7704 = vunpack.c.h.b16 %v7490
  %v7705 = vunpack.c.l.b16 %v7491
  %v7706 = vunpack.c.h.b16 %v7491
  %v7707 = vunpack.c.l.b16 %v7492
  %v7708 = vunpack.c.h.b16 %v7492
  %v7709 = vunpack.c.l.b16 %v7493
  %v7710 = vunpack.c.h.b16 %v7493
  %v7711 = vunpack.c.l.b16 %v7494
  %v7712 = vunpack.c.h.b16 %v7494
  %v7713 = vunpack.c.l.b16 %v7495
  %v7714 = vunpack.c.h.b16 %v7495
  %v7715 = vunpack.c.l.b16 %v7496
  %v7716 = vunpack.c.h.b16 %v7496
  %v7717 = vunpack.c.l.b16 %v7497
  %v7718 = vunpack.c.h.b16 %v7497
  %v7719 = vunpack.c.l.b16 %v7498
  %v7720 = vunpack.c.h.b16 %v7498
  %v7721 = vunpack.c.l.b16 %v7499
  %v7722 = vunpack.c.h.b16 %v7499
  %v7723 = vunpack.c.l.b16 %v7500
  %v7724 = vunpack.c.h.b16 %v7500
  %v7725 = vunpack.c.l.b16 %v7501
  %v7726 = vunpack.c.h.b16 %v7501
  %v7727 = vunpack.c.l.b16 %v7502
  %v7728 = vunpack.c.h.b16 %v7502
  %v7729 = vunpack.c.l.b16 %v7503
  %v7730 = vunpack.c.h.b16 %v7503
  %v7731 = vunpack.c.l.b16 %v7504
  %v7732 = vunpack.c.h.b16 %v7504
  %v7733 = vunpack.c.l.b16 %v7505
  %v7734 = vunpack.c.h.b16 %v7505
  %v7735 = vunpack.c.l.b16 %v7506
  %v7736 = vunpack.c.h.b16 %v7506
  %v7737 = vunpack.c.l.b16 %v7507
  %v7738 = vunpack.c.h.b16 %v7507
  %v7739 = vunpack.c.l.b16 %v7508
  %v7740 = vunpack.c.h.b16 %v7508
  %v7741 = vunpack.c.l.b16 %v7509
  %v7742 = vunpack.c.h.b16 %v7509
  %v7743 = vunpack.c.l.b16 %v7510
  %v7744 = vunpack.c.h.b16 %v7510
  %v7745 = vunpack.c.l.b16 %v7511
  %v7746 = vunpack.c.h.b16 %v7511
  %v7747 = vunpack.c.l.b16 %v7512
  %v7748 = vunpack.c.h.b16 %v7512
  %v7749 = vunpack.c.l.b16 %v7513
  %v7750 = vunpack.c.h.b16 %v7513
  %v7751 = vunpack.c.l.b16 %v7514
  %v7752 = vunpack.c.h.b16 %v7514
  %v7753 = vunpack.c.l.b16 %v7515
  %v7754 = vunpack.c.h.b16 %v7515
  %v7755 = vunpack.c.l.b16 %v7516
  %v7756 = vunpack.c.h.b16 %v7516
  %v7757 = vunpack.c.l.b16 %v7517
  %v7758 = vunpack.c.h.b16 %v7517
  %v7759 = vunpack.c.l.b16 %v7518
  %v7760 = vunpack.c.h.b16 %v7518
  %v7761 = vunpack.c.l.b16 %v7519
  %v7762 = vunpack.c.h.b16 %v7519
  %v7763 = vunpack.c.l.b16 %v7520
  %v7764 = vunpack.c.h.b16 %v7520
  %v7765 = vunpack.c.l.b16 %v7521
  %v7766 = vunpack.c.h.b16 %v7521
  %v7767 = vunpack.c.l.b16 %v7522
  %v7768 = vunpack.c.h.b16 %v7522
  %v7769 = vunpack.c.l.b16 %v7523
  %v7770 = vunpack.c.h.b16 %v7523
  %v7771 = vunpack.c.l.b16 %v7524
  %v7772 = vunpack.c.h.b16 %v7524
  %v7773 = vunpack.c.l.b16 %v7525
  %v7774 = vunpack.c.h.b16 %v7525
  %v7775 = vunpack.c.l.b16 %v7526
  %v7776 = vunpack.c.h.b16 %v7526
  %v7777 = vunpack.c.l.b16 %v7527
  %v7778 = vunpack.c.h.b16 %v7527
  %v7779 = vunpack.c.l.b16 %v7528
  %v7780 = vunpack.c.h.b16 %v7528
  %v7781 = vunpack.c.l.b16 %v7529
  %v7782 = vunpack.c.h.b16 %v7529
  %v7783 = vunpack.c.l.b16 %v7530
  %v7784 = vunpack.c.h.b16 %v7530
  %v7785 = vunpack.c.l.b16 %v7531
  %v7786 = vunpack.c.h.b16 %v7531
  %v7787 = vunpack.c.l.b16 %v7532
  %v7788 = vunpack.c.h.b16 %v7532
  %v7789 = vunpack.c.l.b16 %v7533
  %v7790 = vunpack.c.h.b16 %v7533
  %v7791 = vunpack.c.l.b16 %v7534
  %v7792 = vunpack.c.h.b16 %v7534
  %v7793 = vunpack.c.l.b16 %v7535
  %v7794 = vunpack.c.h.b16 %v7535
  %v7795 = vunpack.c.l.b16 %v7536
  %v7796 = vunpack.c.h.b16 %v7536
  %v7797 = vunpack.c.l.b16 %v7537
  %v7798 = vunpack.c.h.b16 %v7537
  %v7799 = vunpack.c.l.b16 %v7538
  %v7800 = vunpack.c.h.b16 %v7538
  %v7801 = vunpack.c.l.b16 %v7539
  %v7802 = vunpack.c.h.b16 %v7539
  %v7803 = vunpack.c.l.b16 %v7540
  %v7804 = vunpack.c.h.b16 %v7540
  %v7805 = vunpack.c.l.b16 %v7541
  %v7806 = vunpack.c.h.b16 %v7541
  %v7807 = vunpack.c.l.b16 %v7542
  %v7808 = vunpack.c.h.b16 %v7542
  %v7809 = vunpack.c.l.b16 %v7543
  %v7810 = vunpack.c.h.b16 %v7543
  %v7811 = vunpack.c.l.b16 %v7544
  %v7812 = vunpack.c.h.b16 %v7544
  %v7813 = vunpack.c.l.b16 %v7545
  %v7814 = vunpack.c.h.b16 %v7545
  %v7815 = vunpack.c.l.b16 %v7546
  %v7816 = vunpack.c.h.b16 %v7546
  %v7817 = vunpack.c.l.b16 %v7547
  %v7818 = vunpack.c.h.b16 %v7547
  %v7819 = vunpack.c.l.b16 %v7548
  %v7820 = vunpack.c.h.b16 %v7548
  %v7821 = vunpack.c.l.b16 %v7549
  %v7822 = vunpack.c.h.b16 %v7549
  %v7823 = vunpack.c.l.b16 %v7550
  %v7824 = vunpack.c.h.b16 %v7550
  %v7825 = vunpack.c.l.b16 %v7551
  %v7826 = vunpack.c.h.b16 %v7551
  %v7827 = vunpack.c.l.b16 %v7552
  %v7828 = vunpack.c.h.b16 %v7552
  %v7829 = vunpack.c.l.b16 %v7553
  %v7830 = vunpack.c.h.b16 %v7553
  %v7831 = vunpack.c.l.b16 %v7554
  %v7832 = vunpack.c.h.b16 %v7554
  %v7833 = vunpack.c.l.b16 %v7555
  %v7834 = vunpack.c.h.b16 %v7555
  %v7835 = vunpack.c.l.b16 %v7556
  %v7836 = vunpack.c.h.b16 %v7556
  %v7837 = vunpack.c.l.b16 %v7557
  %v7838 = vunpack.c.h.b16 %v7557
  %v7839 = vunpack.c.l.b16 %v7558
  %v7840 = vunpack.c.h.b16 %v7558
  %v7841 = vunpack.c.l.b16 %v7559
  %v7842 = vunpack.c.h.b16 %v7559
  %v7843 = vunpack.c.l.b16 %v7560
  %v7844 = vunpack.c.h.b16 %v7560
  %v7845 = vunpack.c.l.b16 %v7561
  %v7846 = vunpack.c.h.b16 %v7561
  %v7847 = vunpack.c.l.b16 %v7562
  %v7848 = vunpack.c.h.b16 %v7562
  %v7849 = vunpack.c.l.b16 %v7563
  %v7850 = vunpack.c.h.b16 %v7563
  %v7851 = vunpack.c.l.b16 %v7564
  %v7852 = vunpack.c.h.b16 %v7564
  %v7853 = vunpack.c.l.b16 %v7565
  %v7854 = vunpack.c.h.b16 %v7565
  %v7855 = vunpack.c.l.b16 %v7566
  %v7856 = vunpack.c.h.b16 %v7566
  %v7857 = vunpack.c.l.b16 %v7567
  %v7858 = vunpack.c.h.b16 %v7567
  %v7859 = vunpack.c.l.b16 %v7568
  %v7860 = vunpack.c.h.b16 %v7568
  %v7861 = vunpack.c.l.b16 %v7569
  %v7862 = vunpack.c.h.b16 %v7569
  %v7863 = vunpack.c.l.b16 %v7570
  %v7864 = vunpack.c.h.b16 %v7570
  %v7865 = vpack.c.b16 %v7669, %v7669
  %v7866 = vpack.c.b16 %v7670, %v7670
  %v7867 = vpack.c.b16 %v7671, %v7671
  %v7868 = vpack.c.b16 %v7672, %v7672
  %v7869 = vpack.c.b16 %v7673, %v7673
  %v7870 = vpack.c.b16 %v7674, %v7674
  %v7871 = vpack.c.b16 %v7675, %v7675
  %v7872 = vpack.c.b16 %v7676, %v7676
  %v7873 = vpack.c.b16 %v7677, %v7677
  %v7874 = vpack.c.b16 %v7678, %v7678
  %v7875 = vpack.c.b16 %v7679, %v7679
  %v7876 = vpack.c.b16 %v7680, %v7680
  %v7877 = vpack.c.b16 %v7681, %v7681
  %v7878 = vpack.c.b16 %v7682, %v7682
  %v7879 = vpack.c.b16 %v7683, %v7683
  %v7880 = vpack.c.b16 %v7684, %v7684
  %v7881 = vpack.c.b16 %v7685, %v7685
  %v7882 = vpack.c.b16 %v7686, %v7686
  %v7883 = vpack.c.b16 %v7687, %v7687
  %v7884 = vpack.c.b16 %v7688, %v7688
  %v7885 = vpack.c.b16 %v7689, %v7689
  %v7886 = vpack.c.b16 %v7690, %v7690
  %v7887 = vpack.c.b16 %v7691, %v7691
  %v7888 = vpack.c.b16 %v7692, %v7692
  %v7889 = vpack.c.b16 %v7693, %v7693
  %v7890 = vpack.c.b16 %v7694, %v7694
  %v7891 = vpack.c.b16 %v7695, %v7695
  %v7892 = vpack.c.b16 %v7696, %v7696
  %v7893 = vpack.c.b16 %v7697, %v7697
  %v7894 = vpack.c.b16 %v7698, %v7698
  %v7895 = vpack.c.b16 %v7699, %v7699
  %v7896 = vpack.c.b16 %v7700, %v7700
  %v7897 = vpack.c.b16 %v7701, %v7701
  %v7898 = vpack.c.b16 %v7702, %v7702
  %v7899 = vpack.c.b16 %v7703, %v7703
  %v7900 = vpack.c.b16 %v7704, %v7704
  %v7901 = vpack.c.b16 %v7705, %v7705
  %v7902 = vpack.c.b16 %v7706, %v7706
  %v7903 = vpack.c.b16 %v7707, %v7707
  %v7904 = vpack.c.b16 %v7708, %v7708
  %v7905 = vpack.c.b16 %v7709, %v7709
  %v7906 = vpack.c.b16 %v7710, %v7710
  %v7907 = vpack.c.b16 %v7711, %v7711
  %v7908 = vpack.c.b16 %v7712, %v7712
  %v7909 = vpack.c.b16 %v7713, %v7713
  %v7910 = vpack.c.b16 %v7714, %v7714
  %v7911 = vpack.c.b16 %v7715, %v7715
  %v7912 = vpack.c.b16 %v7716, %v7716
  %v7913 = vpack.c.b16 %v7717, %v7717
  %v7914 = vpack.c.b16 %v7718, %v7718
  %v7915 = vpack.c.b16 %v7719, %v7719
  %v7916 = vpack.c.b16 %v7720, %v7720
  %v7917 = vpack.c.b16 %v7721, %v7721
  %v7918 = vpack.c.b16 %v7722, %v7722
  %v7919 = vpack.c.b16 %v7723, %v7723
  %v7920 = vpack.c.b16 %v7724, %v7724
  %v7921 = vpack.c.b16 %v7725, %v7725
  %v7922 = vpack.c.b16 %v7726, %v7726
  %v7923 = vpack.c.b16 %v7727, %v7727
  %v7924 = vpack.c.b16 %v7728, %v7728
  %v7925 = vpack.c.b16 %v7729, %v7729
  %v7926 = vpack.c.b16 %v7730, %v7730
  %v7927 = vpack.c.b16 %v7731, %v7731
  %v7928 = vpack.c.b16 %v7732, %v7732
  %v7929 = vpack.c.b16 %v7733, %v7733
  %v7930 = vpack.c.b16 %v7734, %v7734
  %v7931 = vpack.c.b16 %v7735, %v7735
  %v7932 = vpack.c.b16 %v7736, %v7736
  %v7933 = vpack.c.b16 %v7737, %v7737
  %v7934 = vpack.c.b16 %v7738, %v7738
  %v7935 = vpack.c.b16 %v7739, %v7739
  %v7936 = vpack.c.b16 %v7740, %v7740
  %v7937 = vpack.c.b16 %v7741, %v7741
  %v7938 = vpack.c.b16 %v7742, %v7742
  %v7939 = vpack.c.b16 %v7743, %v7743
  %v7940 = vpack.c.b16 %v7744, %v7744
  %v7941 = vpack.c.b16 %v7745, %v7745
  %v7942 = vpack.c.b16 %v7746, %v7746
  %v7943 = vpack.c.b16 %v7747, %v7747
  %v7944 = vpack.c.b16 %v7748, %v7748
  %v7945 = vpack.c.b16 %v7749, %v7749
  %v7946 = vpack.c.b16 %v7750, %v7750
  %v7947 = vpack.c.b16 %v7751, %v7751
  %v7948 = vpack.c.b16 %v7752, %v7752
  %v7949 = vpack.c.b16 %v7753, %v7753
  %v7950 = vpack.c.b16 %v7754, %v7754
  %v7951 = vpack.c.b16 %v7755, %v7755
  %v7952 = vpack.c.b16 %v7756, %v7756
  %v7953 = vpack.c.b16 %v7757, %v7757
  %v7954 = vpack.c.b16 %v7758, %v7758
  %v7955 = vpack.c.b16 %v7759, %v7759
  %v7956 = vpack.c.b16 %v7760, %v7760
  %v7957 = vpack.c.b16 %v7761, %v7761
  %v7958 = vpack.c.b16 %v7762, %v7762
  %v7959 = vpack.c.b16 %v7763, %v7763
  %v7960 = vpack.c.b16 %v7764, %v7764
  %v7961 = vpack.c.b16 %v7765, %v7765
  %v7962 = vpack.c.b16 %v7766, %v7766
  %v7963 = vpack.c.b16 %v7767, %v7767
  %v7964 = vpack.c.b16 %v7768, %v7768
  %v7965 = vpack.c.b16 %v7769, %v7769
  %v7966 = vpack.c.b16 %v7770, %v7770
  %v7967 = vpack.c.b16 %v7771, %v7771
  %v7968 = vpack.c.b16 %v7772, %v7772
  %v7969 = vpack.c.b16 %v7773, %v7773
  %v7970 = vpack.c.b16 %v7774, %v7774
  %v7971 = vpack.c.b16 %v7775, %v7775
  %v7972 = vpack.c.b16 %v7776, %v7776
  %v7973 = vpack.c.b16 %v7777, %v7777
  %v7974 = vpack.c.b16 %v7778, %v7778
  %v7975 = vpack.c.b16 %v7779, %v7779
  %v7976 = vpack.c.b16 %v7780, %v7780
  %v7977 = vpack.c.b16 %v7781, %v7781
  %v7978 = vpack.c.b16 %v7782, %v7782
  %v7979 = vpack.c.b16 %v7783, %v7783
  %v7980 = vpack.c.b16 %v7784, %v7784
  %v7981 = vpack.c.b16 %v7785, %v7785
  %v7982 = vpack.c.b16 %v7786, %v7786
  %v7983 = vpack.c.b16 %v7787, %v7787
  %v7984 = vpack.c.b16 %v7788, %v7788
  %v7985 = vpack.c.b16 %v7789, %v7789
  %v7986 = vpack.c.b16 %v7790, %v7790
  %v7987 = vpack.c.b16 %v7791, %v7791
  %v7988 = vpack.c.b16 %v7792, %v7792
  %v7989 = vpack.c.b16 %v7793, %v7793
  %v7990 = vpack.c.b16 %v7794, %v7794
  %v7991 = vpack.c.b16 %v7795, %v7795
  %v7992 = vpack.c.b16 %v7796, %v7796
  %v7993 = vpack.c.b16 %v7797, %v7797
  %v7994 = vpack.c.b16 %v7798, %v7798
  %v7995 = vpack.c.b16 %v7799, %v7799
  %v7996 = vpack.c.b16 %v7800, %v7800
  %v7997 = vpack.c.b16 %v7801, %v7801
  %v7998 = vpack.c.b16 %v7802, %v7802
  %v7999 = vpack.c.b16 %v7803, %v7803
  %v8000 = vpack.c.b16 %v7804, %v7804
  %v8001 = vpack.c.b16 %v7805, %v7805
  %v8002 = vpack.c.b16 %v7806, %v7806
  %v8003 = vpack.c.b16 %v7807, %v7807
  %v8004 = vpack.c.b16 %v7808, %v7808
  %v8005 = vpack.c.b16 %v7809, %v7809
  %v8006 = vpack.c.b16 %v7810, %v7810
  %v8007 = vpack.c.b16 %v7811, %v7811
  %v8008 = vpack.c.b16 %v7812, %v7812
  %v8009 = vpack.c.b16 %v7813, %v7813
  %v8010 = vpack.c.b16 %v7814, %v7814
  %v8011 = vpack.c.b16 %v7815, %v7815
  %v8012 = vpack.c.b16 %v7816, %v7816
  %v8013 = vpack.c.b16 %v7817, %v7817
  %v8014 = vpack.c.b16 %v7818, %v7818
  %v8015 = vpack.c.b16 %v7819, %v7819
  %v8016 = vpack.c.b16 %v7820, %v7820
  %v8017 = vpack.c.b16 %v7821, %v7821
  %v8018 = vpack.c.b16 %v7822, %v7822
  %v8019 = vpack.c.b16 %v7823, %v7823
  %v8020 = vpack.c.b16 %v7824, %v7824
  %v8021 = vpack.c.b16 %v7825, %v7825
  %v8022 = vpack.c.b16 %v7826, %v7826
  %v8023 = vpack.c.b16 %v7827, %v7827
  %v8024 = vpack.c.b16 %v7828, %v7828
  %v8025 = vpack.c.b16 %v7829, %v7829
  %v8026 = vpack.c.b16 %v7830, %v7830
  %v8027 = vpack.c.b16 %v7831, %v7831
  %v8028 = vpack.c.b16 %v7832, %v7832
  %v8029 = vpack.c.b16 %v7833, %v7833
  %v8030 = vpack.c.b16 %v7834, %v7834
  %v8031 = vpack.c.b16 %v7835, %v7835
  %v8032 = vpack.c.b16 %v7836, %v7836
  %v8033 = vpack.c.b16 %v7837, %v7837
  %v8034 = vpack.c.b16 %v7838, %v7838
  %v8035 = vpack.c.b16 %v7839, %v7839
  %v8036 = vpack.c.b16 %v7840, %v7840
  %v8037 = vpack.c.b16 %v7841, %v7841
  %v8038 = vpack.c.b16 %v7842, %v7842
  %v8039 = vpack.c.b16 %v7843, %v7843
  %v8040 = vpack.c.b16 %v7844, %v7844
  %v8041 = vpack.c.b16 %v7845, %v7845
  %v8042 = vpack.c.b16 %v7846, %v7846
  %v8043 = vpack.c.b16 %v7847, %v7847
  %v8044 = vpack.c.b16 %v7848, %v7848
  %v8045 = vpack.c.b16 %v7849, %v7849
  %v8046 = vpack.c.b16 %v7850, %v7850
  %v8047 = vpack.c.b16 %v7851, %v7851
  %v8048 = vpack.c.b16 %v7852, %v7852
  %v8049 = vpack.c.b16 %v7853, %v7853
  %v8050 = vpack.c.b16 %v7854, %v7854
  %v8051 = vpack.c.b16 %v7855, %v7855
  %v8052 = vpack.c.b16 %v7856, %v7856
  %v8053 = vpack.c.b16 %v7857, %v7857
  %v8054 = vpack.c.b16 %v7858, %v7858
  %v8055 = vpack.c.b16 %v7859, %v7859
  %v8056 = vpack.c.b16 %v7860, %v7860
  %v8057 = vpack.c.b16 %v7861, %v7861
  %v8058 = vpack.c.b16 %v7862, %v7862
  %v8059 = vpack.c.b16 %v7863, %v7863
  %v8060 = vpack.c.b16 %v7864, %v7864
  %vm8257 = vcmask 60416
  %8258 = vst.msk [vmem:[%s3] sm:$0xf] %vm8257, %v7865
  %8259 = vst.msk [vmem:[%s3 + $0x4] sm:$0xf] %vm8257, %v7866
  %8260 = vst.msk [vmem:[%s3 + $0x8] sm:$0xf] %vm8257, %v7867
  %8261 = vst.msk [vmem:[%s3 + $0xc] sm:$0xf] %vm8257, %v7868
  %8262 = vst.msk [vmem:[%s3 + $0x10] sm:$0xf] %vm8257, %v7869
  %8263 = vst.msk [vmem:[%s3 + $0x14] sm:$0xf] %vm8257, %v7870
  %8264 = vst.msk [vmem:[%s3 + $0x18] sm:$0xf] %vm8257, %v7871
  %8265 = vst.msk [vmem:[%s3 + $0x1c] sm:$0xf] %vm8257, %v7872
  %8266 = vst.msk [vmem:[%s3 + $0x20] sm:$0xf] %vm8257, %v7873
  %8267 = vst.msk [vmem:[%s3 + $0x24] sm:$0xf] %vm8257, %v7874
  %8268 = vst.msk [vmem:[%s3 + $0x28] sm:$0xf] %vm8257, %v7875
  %8269 = vst.msk [vmem:[%s3 + $0x2c] sm:$0xf] %vm8257, %v7876
  %8270 = vst.msk [vmem:[%s3 + $0x30] sm:$0xf] %vm8257, %v7877
  %8271 = vst.msk [vmem:[%s3 + $0x34] sm:$0xf] %vm8257, %v7878
  %8272 = vst.msk [vmem:[%s3 + $0x38] sm:$0xf] %vm8257, %v7879
  %8273 = vst.msk [vmem:[%s3 + $0x3c] sm:$0xf] %vm8257, %v7880
  %8274 = vst.msk [vmem:[%s3 + $0x40] sm:$0xf] %vm8257, %v7881
  %8275 = vst.msk [vmem:[%s3 + $0x44] sm:$0xf] %vm8257, %v7882
  %8276 = vst.msk [vmem:[%s3 + $0x48] sm:$0xf] %vm8257, %v7883
  %8277 = vst.msk [vmem:[%s3 + $0x4c] sm:$0xf] %vm8257, %v7884
  %8278 = vst.msk [vmem:[%s3 + $0x50] sm:$0xf] %vm8257, %v7885
  %8279 = vst.msk [vmem:[%s3 + $0x54] sm:$0xf] %vm8257, %v7886
  %8280 = vst.msk [vmem:[%s3 + $0x58] sm:$0xf] %vm8257, %v7887
  %8281 = vst.msk [vmem:[%s3 + $0x5c] sm:$0xf] %vm8257, %v7888
  %8282 = vst.msk [vmem:[%s3 + $0x60] sm:$0xf] %vm8257, %v7889
  %8283 = vst.msk [vmem:[%s3 + $0x64] sm:$0xf] %vm8257, %v7890
  %8284 = vst.msk [vmem:[%s3 + $0x68] sm:$0xf] %vm8257, %v7891
  %8285 = vst.msk [vmem:[%s3 + $0x6c] sm:$0xf] %vm8257, %v7892
  %8286 = vst.msk [vmem:[%s3 + $0x70] sm:$0xf] %vm8257, %v7893
  %8287 = vst.msk [vmem:[%s3 + $0x74] sm:$0xf] %vm8257, %v7894
  %8288 = vst.msk [vmem:[%s3 + $0x78] sm:$0xf] %vm8257, %v7895
  %8289 = vst.msk [vmem:[%s3 + $0x7c] sm:$0xf] %vm8257, %v7896
  %8290 = vst.msk [vmem:[%s3 + $0x80] sm:$0xf] %vm8257, %v7897
  %8291 = vst.msk [vmem:[%s3 + $0x84] sm:$0xf] %vm8257, %v7898
  %8292 = vst.msk [vmem:[%s3 + $0x88] sm:$0xf] %vm8257, %v7899
  %8293 = vst.msk [vmem:[%s3 + $0x8c] sm:$0xf] %vm8257, %v7900
  %8294 = vst.msk [vmem:[%s3 + $0x90] sm:$0xf] %vm8257, %v7901
  %8295 = vst.msk [vmem:[%s3 + $0x94] sm:$0xf] %vm8257, %v7902
  %8296 = vst.msk [vmem:[%s3 + $0x98] sm:$0xf] %vm8257, %v7903
  %8297 = vst.msk [vmem:[%s3 + $0x9c] sm:$0xf] %vm8257, %v7904
  %8298 = vst.msk [vmem:[%s3 + $0xa0] sm:$0xf] %vm8257, %v7905
  %8299 = vst.msk [vmem:[%s3 + $0xa4] sm:$0xf] %vm8257, %v7906
  %8300 = vst.msk [vmem:[%s3 + $0xa8] sm:$0xf] %vm8257, %v7907
  %8301 = vst.msk [vmem:[%s3 + $0xac] sm:$0xf] %vm8257, %v7908
  %8302 = vst.msk [vmem:[%s3 + $0xb0] sm:$0xf] %vm8257, %v7909
  %8303 = vst.msk [vmem:[%s3 + $0xb4] sm:$0xf] %vm8257, %v7910
  %8304 = vst.msk [vmem:[%s3 + $0xb8] sm:$0xf] %vm8257, %v7911
  %8305 = vst.msk [vmem:[%s3 + $0xbc] sm:$0xf] %vm8257, %v7912
  %8306 = vst.msk [vmem:[%s3 + $0xc0] sm:$0xf] %vm8257, %v7913
  %8307 = vst.msk [vmem:[%s3 + $0xc4] sm:$0xf] %vm8257, %v7914
  %8308 = vst.msk [vmem:[%s3 + $0xc8] sm:$0xf] %vm8257, %v7915
  %8309 = vst.msk [vmem:[%s3 + $0xcc] sm:$0xf] %vm8257, %v7916
  %8310 = vst.msk [vmem:[%s3 + $0xd0] sm:$0xf] %vm8257, %v7917
  %8311 = vst.msk [vmem:[%s3 + $0xd4] sm:$0xf] %vm8257, %v7918
  %8312 = vst.msk [vmem:[%s3 + $0xd8] sm:$0xf] %vm8257, %v7919
  %8313 = vst.msk [vmem:[%s3 + $0xdc] sm:$0xf] %vm8257, %v7920
  %8314 = vst.msk [vmem:[%s3 + $0xe0] sm:$0xf] %vm8257, %v7921
  %8315 = vst.msk [vmem:[%s3 + $0xe4] sm:$0xf] %vm8257, %v7922
  %8316 = vst.msk [vmem:[%s3 + $0xe8] sm:$0xf] %vm8257, %v7923
  %8317 = vst.msk [vmem:[%s3 + $0xec] sm:$0xf] %vm8257, %v7924
  %8318 = vst.msk [vmem:[%s3 + $0xf0] sm:$0xf] %vm8257, %v7925
  %8319 = vst.msk [vmem:[%s3 + $0xf4] sm:$0xf] %vm8257, %v7926
  %8320 = vst.msk [vmem:[%s3 + $0xf8] sm:$0xf] %vm8257, %v7927
  %8321 = vst.msk [vmem:[%s3 + $0xfc] sm:$0xf] %vm8257, %v7928
  %8322 = vst.msk [vmem:[%s3 + $0x100] sm:$0xf] %vm8257, %v7929
  %8323 = vst.msk [vmem:[%s3 + $0x104] sm:$0xf] %vm8257, %v7930
  %8324 = vst.msk [vmem:[%s3 + $0x108] sm:$0xf] %vm8257, %v7931
  %8325 = vst.msk [vmem:[%s3 + $0x10c] sm:$0xf] %vm8257, %v7932
  %8326 = vst.msk [vmem:[%s3 + $0x110] sm:$0xf] %vm8257, %v7933
  %8327 = vst.msk [vmem:[%s3 + $0x114] sm:$0xf] %vm8257, %v7934
  %8328 = vst.msk [vmem:[%s3 + $0x118] sm:$0xf] %vm8257, %v7935
  %8329 = vst.msk [vmem:[%s3 + $0x11c] sm:$0xf] %vm8257, %v7936
  %8330 = vst.msk [vmem:[%s3 + $0x120] sm:$0xf] %vm8257, %v7937
  %8331 = vst.msk [vmem:[%s3 + $0x124] sm:$0xf] %vm8257, %v7938
  %8332 = vst.msk [vmem:[%s3 + $0x128] sm:$0xf] %vm8257, %v7939
  %8333 = vst.msk [vmem:[%s3 + $0x12c] sm:$0xf] %vm8257, %v7940
  %8334 = vst.msk [vmem:[%s3 + $0x130] sm:$0xf] %vm8257, %v7941
  %8335 = vst.msk [vmem:[%s3 + $0x134] sm:$0xf] %vm8257, %v7942
  %8336 = vst.msk [vmem:[%s3 + $0x138] sm:$0xf] %vm8257, %v7943
  %8337 = vst.msk [vmem:[%s3 + $0x13c] sm:$0xf] %vm8257, %v7944
  %8338 = vst.msk [vmem:[%s3 + $0x140] sm:$0xf] %vm8257, %v7945
  %8339 = vst.msk [vmem:[%s3 + $0x144] sm:$0xf] %vm8257, %v7946
  %8340 = vst.msk [vmem:[%s3 + $0x148] sm:$0xf] %vm8257, %v7947
  %8341 = vst.msk [vmem:[%s3 + $0x14c] sm:$0xf] %vm8257, %v7948
  %8342 = vst.msk [vmem:[%s3 + $0x150] sm:$0xf] %vm8257, %v7949
  %8343 = vst.msk [vmem:[%s3 + $0x154] sm:$0xf] %vm8257, %v7950
  %8344 = vst.msk [vmem:[%s3 + $0x158] sm:$0xf] %vm8257, %v7951
  %8345 = vst.msk [vmem:[%s3 + $0x15c] sm:$0xf] %vm8257, %v7952
  %8346 = vst.msk [vmem:[%s3 + $0x160] sm:$0xf] %vm8257, %v7953
  %8347 = vst.msk [vmem:[%s3 + $0x164] sm:$0xf] %vm8257, %v7954
  %8348 = vst.msk [vmem:[%s3 + $0x168] sm:$0xf] %vm8257, %v7955
  %8349 = vst.msk [vmem:[%s3 + $0x16c] sm:$0xf] %vm8257, %v7956
  %8350 = vst.msk [vmem:[%s3 + $0x170] sm:$0xf] %vm8257, %v7957
  %8351 = vst.msk [vmem:[%s3 + $0x174] sm:$0xf] %vm8257, %v7958
  %8352 = vst.msk [vmem:[%s3 + $0x178] sm:$0xf] %vm8257, %v7959
  %8353 = vst.msk [vmem:[%s3 + $0x17c] sm:$0xf] %vm8257, %v7960
  %8354 = vst.msk [vmem:[%s3 + $0x180] sm:$0xf] %vm8257, %v7961
  %8355 = vst.msk [vmem:[%s3 + $0x184] sm:$0xf] %vm8257, %v7962
  %8356 = vst.msk [vmem:[%s3 + $0x188] sm:$0xf] %vm8257, %v7963
  %8357 = vst.msk [vmem:[%s3 + $0x18c] sm:$0xf] %vm8257, %v7964
  %8358 = vst.msk [vmem:[%s3 + $0x190] sm:$0xf] %vm8257, %v7965
  %8359 = vst.msk [vmem:[%s3 + $0x194] sm:$0xf] %vm8257, %v7966
  %8360 = vst.msk [vmem:[%s3 + $0x198] sm:$0xf] %vm8257, %v7967
  %8361 = vst.msk [vmem:[%s3 + $0x19c] sm:$0xf] %vm8257, %v7968
  %8362 = vst.msk [vmem:[%s3 + $0x1a0] sm:$0xf] %vm8257, %v7969
  %8363 = vst.msk [vmem:[%s3 + $0x1a4] sm:$0xf] %vm8257, %v7970
  %8364 = vst.msk [vmem:[%s3 + $0x1a8] sm:$0xf] %vm8257, %v7971
  %8365 = vst.msk [vmem:[%s3 + $0x1ac] sm:$0xf] %vm8257, %v7972
  %8366 = vst.msk [vmem:[%s3 + $0x1b0] sm:$0xf] %vm8257, %v7973
  %8367 = vst.msk [vmem:[%s3 + $0x1b4] sm:$0xf] %vm8257, %v7974
  %8368 = vst.msk [vmem:[%s3 + $0x1b8] sm:$0xf] %vm8257, %v7975
  %8369 = vst.msk [vmem:[%s3 + $0x1bc] sm:$0xf] %vm8257, %v7976
  %8370 = vst.msk [vmem:[%s3 + $0x1c0] sm:$0xf] %vm8257, %v7977
  %8371 = vst.msk [vmem:[%s3 + $0x1c4] sm:$0xf] %vm8257, %v7978
  %8372 = vst.msk [vmem:[%s3 + $0x1c8] sm:$0xf] %vm8257, %v7979
  %8373 = vst.msk [vmem:[%s3 + $0x1cc] sm:$0xf] %vm8257, %v7980
  %8374 = vst.msk [vmem:[%s3 + $0x1d0] sm:$0xf] %vm8257, %v7981
  %8375 = vst.msk [vmem:[%s3 + $0x1d4] sm:$0xf] %vm8257, %v7982
  %8376 = vst.msk [vmem:[%s3 + $0x1d8] sm:$0xf] %vm8257, %v7983
  %8377 = vst.msk [vmem:[%s3 + $0x1dc] sm:$0xf] %vm8257, %v7984
  %8378 = vst.msk [vmem:[%s3 + $0x1e0] sm:$0xf] %vm8257, %v7985
  %8379 = vst.msk [vmem:[%s3 + $0x1e4] sm:$0xf] %vm8257, %v7986
  %8380 = vst.msk [vmem:[%s3 + $0x1e8] sm:$0xf] %vm8257, %v7987
  %8381 = vst.msk [vmem:[%s3 + $0x1ec] sm:$0xf] %vm8257, %v7988
  %8382 = vst.msk [vmem:[%s3 + $0x1f0] sm:$0xf] %vm8257, %v7989
  %8383 = vst.msk [vmem:[%s3 + $0x1f4] sm:$0xf] %vm8257, %v7990
  %8384 = vst.msk [vmem:[%s3 + $0x1f8] sm:$0xf] %vm8257, %v7991
  %8385 = vst.msk [vmem:[%s3 + $0x1fc] sm:$0xf] %vm8257, %v7992
  %8386 = vst.msk [vmem:[%s3 + $0x200] sm:$0xf] %vm8257, %v7993
  %8387 = vst.msk [vmem:[%s3 + $0x204] sm:$0xf] %vm8257, %v7994
  %8388 = vst.msk [vmem:[%s3 + $0x208] sm:$0xf] %vm8257, %v7995
  %8389 = vst.msk [vmem:[%s3 + $0x20c] sm:$0xf] %vm8257, %v7996
  %8390 = vst.msk [vmem:[%s3 + $0x210] sm:$0xf] %vm8257, %v7997
  %8391 = vst.msk [vmem:[%s3 + $0x214] sm:$0xf] %vm8257, %v7998
  %8392 = vst.msk [vmem:[%s3 + $0x218] sm:$0xf] %vm8257, %v7999
  %8393 = vst.msk [vmem:[%s3 + $0x21c] sm:$0xf] %vm8257, %v8000
  %8394 = vst.msk [vmem:[%s3 + $0x220] sm:$0xf] %vm8257, %v8001
  %8395 = vst.msk [vmem:[%s3 + $0x224] sm:$0xf] %vm8257, %v8002
  %8396 = vst.msk [vmem:[%s3 + $0x228] sm:$0xf] %vm8257, %v8003
  %8397 = vst.msk [vmem:[%s3 + $0x22c] sm:$0xf] %vm8257, %v8004
  %8398 = vst.msk [vmem:[%s3 + $0x230] sm:$0xf] %vm8257, %v8005
  %8399 = vst.msk [vmem:[%s3 + $0x234] sm:$0xf] %vm8257, %v8006
  %8400 = vst.msk [vmem:[%s3 + $0x238] sm:$0xf] %vm8257, %v8007
  %8401 = vst.msk [vmem:[%s3 + $0x23c] sm:$0xf] %vm8257, %v8008
  %8402 = vst.msk [vmem:[%s3 + $0x240] sm:$0xf] %vm8257, %v8009
  %8403 = vst.msk [vmem:[%s3 + $0x244] sm:$0xf] %vm8257, %v8010
  %8404 = vst.msk [vmem:[%s3 + $0x248] sm:$0xf] %vm8257, %v8011
  %8405 = vst.msk [vmem:[%s3 + $0x24c] sm:$0xf] %vm8257, %v8012
  %8406 = vst.msk [vmem:[%s3 + $0x250] sm:$0xf] %vm8257, %v8013
  %8407 = vst.msk [vmem:[%s3 + $0x254] sm:$0xf] %vm8257, %v8014
  %8408 = vst.msk [vmem:[%s3 + $0x258] sm:$0xf] %vm8257, %v8015
  %8409 = vst.msk [vmem:[%s3 + $0x25c] sm:$0xf] %vm8257, %v8016
  %8410 = vst.msk [vmem:[%s3 + $0x260] sm:$0xf] %vm8257, %v8017
  %8411 = vst.msk [vmem:[%s3 + $0x264] sm:$0xf] %vm8257, %v8018
  %8412 = vst.msk [vmem:[%s3 + $0x268] sm:$0xf] %vm8257, %v8019
  %8413 = vst.msk [vmem:[%s3 + $0x26c] sm:$0xf] %vm8257, %v8020
  %8414 = vst.msk [vmem:[%s3 + $0x270] sm:$0xf] %vm8257, %v8021
  %8415 = vst.msk [vmem:[%s3 + $0x274] sm:$0xf] %vm8257, %v8022
  %8416 = vst.msk [vmem:[%s3 + $0x278] sm:$0xf] %vm8257, %v8023
  %8417 = vst.msk [vmem:[%s3 + $0x27c] sm:$0xf] %vm8257, %v8024
  %8418 = vst.msk [vmem:[%s3 + $0x280] sm:$0xf] %vm8257, %v8025
  %8419 = vst.msk [vmem:[%s3 + $0x284] sm:$0xf] %vm8257, %v8026
  %8420 = vst.msk [vmem:[%s3 + $0x288] sm:$0xf] %vm8257, %v8027
  %8421 = vst.msk [vmem:[%s3 + $0x28c] sm:$0xf] %vm8257, %v8028
  %8422 = vst.msk [vmem:[%s3 + $0x290] sm:$0xf] %vm8257, %v8029
  %8423 = vst.msk [vmem:[%s3 + $0x294] sm:$0xf] %vm8257, %v8030
  %8424 = vst.msk [vmem:[%s3 + $0x298] sm:$0xf] %vm8257, %v8031
  %8425 = vst.msk [vmem:[%s3 + $0x29c] sm:$0xf] %vm8257, %v8032
  %8426 = vst.msk [vmem:[%s3 + $0x2a0] sm:$0xf] %vm8257, %v8033
  %8427 = vst.msk [vmem:[%s3 + $0x2a4] sm:$0xf] %vm8257, %v8034
  %8428 = vst.msk [vmem:[%s3 + $0x2a8] sm:$0xf] %vm8257, %v8035
  %8429 = vst.msk [vmem:[%s3 + $0x2ac] sm:$0xf] %vm8257, %v8036
  %8430 = vst.msk [vmem:[%s3 + $0x2b0] sm:$0xf] %vm8257, %v8037
  %8431 = vst.msk [vmem:[%s3 + $0x2b4] sm:$0xf] %vm8257, %v8038
  %8432 = vst.msk [vmem:[%s3 + $0x2b8] sm:$0xf] %vm8257, %v8039
  %8433 = vst.msk [vmem:[%s3 + $0x2bc] sm:$0xf] %vm8257, %v8040
  %8434 = vst.msk [vmem:[%s3 + $0x2c0] sm:$0xf] %vm8257, %v8041
  %8435 = vst.msk [vmem:[%s3 + $0x2c4] sm:$0xf] %vm8257, %v8042
  %8436 = vst.msk [vmem:[%s3 + $0x2c8] sm:$0xf] %vm8257, %v8043
  %8437 = vst.msk [vmem:[%s3 + $0x2cc] sm:$0xf] %vm8257, %v8044
  %8438 = vst.msk [vmem:[%s3 + $0x2d0] sm:$0xf] %vm8257, %v8045
  %8439 = vst.msk [vmem:[%s3 + $0x2d4] sm:$0xf] %vm8257, %v8046
  %8440 = vst.msk [vmem:[%s3 + $0x2d8] sm:$0xf] %vm8257, %v8047
  %8441 = vst.msk [vmem:[%s3 + $0x2dc] sm:$0xf] %vm8257, %v8048
  %8442 = vst.msk [vmem:[%s3 + $0x2e0] sm:$0xf] %vm8257, %v8049
  %8443 = vst.msk [vmem:[%s3 + $0x2e4] sm:$0xf] %vm8257, %v8050
  %8444 = vst.msk [vmem:[%s3 + $0x2e8] sm:$0xf] %vm8257, %v8051
  %8445 = vst.msk [vmem:[%s3 + $0x2ec] sm:$0xf] %vm8257, %v8052
  %8446 = vst.msk [vmem:[%s3 + $0x2f0] sm:$0xf] %vm8257, %v8053
  %8447 = vst.msk [vmem:[%s3 + $0x2f4] sm:$0xf] %vm8257, %v8054
  %8448 = vst.msk [vmem:[%s3 + $0x2f8] sm:$0xf] %vm8257, %v8055
  %8449 = vst.msk [vmem:[%s3 + $0x2fc] sm:$0xf] %vm8257, %v8056
  %8450 = vst.msk [vmem:[%s3 + $0x300] sm:$0xf] %vm8257, %v8057
  %8451 = vst.msk [vmem:[%s3 + $0x304] sm:$0xf] %vm8257, %v8058
  %8452 = vst.msk [vmem:[%s3 + $0x308] sm:$0xf] %vm8257, %v8059
  %8453 = vst.msk [vmem:[%s3 + $0x30c] sm:$0xf] %vm8257, %v8060
  // Predicated region
  $region14: #{net_forward.3} parent=0 // pred_check
    _
  $region15: #{net_forward.3} parent=0 // pred_check_branch
    %8455 = sbr.rel (0) target = $region17
  $region16: #{net_forward.3} parent=0 // pred_region
    _
  $region17: #{net_forward.3} parent=0 // pred_fallthru
    _
  // Predicated region
  $region18: #{net_forward.3} parent=0 // pred_check
    _
  $region19: #{net_forward.3} parent=0 // pred_check_branch
    %8457 = sbr.rel (0) target = $region21
  $region20: #{net_forward.3} parent=0 // pred_region
    _
  $region21: #{net_forward.3} parent=0 // pred_fallthru
    _

// kernel: net_forward.4
$region0: #{net_forward.4}
  #allocation0 [shape = 'u32[]', space=smem, size = 0x4, offset = 0x4, fixed_abs, tag = 'smem constant byte address 0x4 - core index']
  #allocation1 [shape = 'u32[144,128]{1,0:T(1,128)}', space=vmem, size = 0x12000, scoped, tag = 'internal scratch']
  %s0 = inlined_call_operand.vmem [shape: bf16[4,200,256], index: 0, kind: input, shape index: {}]
  %s1 = inlined_call_operand.vmem [shape: bf16[256,128], index: 1, kind: input, shape index: {}]
  %s2 = inlined_call_operand.vmem [shape: f32[1,128], index: 2, kind: input, shape index: {}]
  %s3 = inlined_call_operand.vmem [shape: bf16[200,16], index: 3, kind: output, shape index: {}]
  %s4 = sld [smem:[#allocation0]]
  $region22: #{net_forward.4} parent=0
    _
  %s6 = ssub.s32 1, %s4
  %s7 = scalar_select 0, %s6, %s4
  // Predicated region
  $region2: #{net_forward.4} parent=0 // pred_check
    _
  $region3: #{net_forward.4} parent=0 // pred_check_branch
    %9 = sbr.rel (0) target = $region5
  $region4: #{net_forward.4} parent=0 // pred_region
    _
  $region5: #{net_forward.4} parent=0 // pred_fallthru
    _
  // Predicated region
  $region6: #{net_forward.4} parent=0 // pred_check
    _
  $region7: #{net_forward.4} parent=0 // pred_check_branch
    %11 = sbr.rel (0) target = $region9
  $region8: #{net_forward.4} parent=0 // pred_region
    _
  $region9: #{net_forward.4} parent=0 // pred_fallthru
    _
  // Predicated region
  $region10: #{net_forward.4} parent=0 // pred_check
    _
  $region11: #{net_forward.4} parent=0 // pred_check_branch
    %13 = sbr.rel (0) target = $region13
  $region12: #{net_forward.4} parent=0 // pred_region
    _
  $region13: #{net_forward.4} parent=0 // pred_fallthru
    _
  %v15 = vld [vmem:[%s1] sm:$0xf]
  %v16 = vld [vmem:[%s1 + $0x4] sm:$0xf]
  %v17 = vld [vmem:[%s1 + $0x8] sm:$0xf]
  %v18 = vld [vmem:[%s1 + $0xc] sm:$0xf]
  %v19 = vld [vmem:[%s1 + $0x10] sm:$0xf]
  %v20 = vld [vmem:[%s1 + $0x14] sm:$0xf]
  %v21 = vld [vmem:[%s1 + $0x18] sm:$0xf]
  %v22 = vld [vmem:[%s1 + $0x1c] sm:$0xf]
  %v23 = vld [vmem:[%s1 + $0x20] sm:$0xf]
  %v24 = vld [vmem:[%s1 + $0x24] sm:$0xf]
  %v25 = vld [vmem:[%s1 + $0x28] sm:$0xf]
  %v26 = vld [vmem:[%s1 + $0x2c] sm:$0xf]
  %v27 = vld [vmem:[%s1 + $0x30] sm:$0xf]
  %v28 = vld [vmem:[%s1 + $0x34] sm:$0xf]
  %v29 = vld [vmem:[%s1 + $0x38] sm:$0xf]
  %v30 = vld [vmem:[%s1 + $0x3c] sm:$0xf]
  %v31 = vld [vmem:[%s1 + $0x40] sm:$0xf]
  %v32 = vld [vmem:[%s1 + $0x44] sm:$0xf]
  %v33 = vld [vmem:[%s1 + $0x48] sm:$0xf]
  %v34 = vld [vmem:[%s1 + $0x4c] sm:$0xf]
  %v35 = vld [vmem:[%s1 + $0x50] sm:$0xf]
  %v36 = vld [vmem:[%s1 + $0x54] sm:$0xf]
  %v37 = vld [vmem:[%s1 + $0x58] sm:$0xf]
  %v38 = vld [vmem:[%s1 + $0x5c] sm:$0xf]
  %v39 = vld [vmem:[%s1 + $0x60] sm:$0xf]
  %v40 = vld [vmem:[%s1 + $0x64] sm:$0xf]
  %v41 = vld [vmem:[%s1 + $0x68] sm:$0xf]
  %v42 = vld [vmem:[%s1 + $0x6c] sm:$0xf]
  %v43 = vld [vmem:[%s1 + $0x70] sm:$0xf]
  %v44 = vld [vmem:[%s1 + $0x74] sm:$0xf]
  %v45 = vld [vmem:[%s1 + $0x78] sm:$0xf]
  %v46 = vld [vmem:[%s1 + $0x7c] sm:$0xf]
  %v47 = vld [vmem:[%s0] sm:$0xff]
  %v48 = vld [vmem:[%s0 + $0x8] sm:$0xff]
  %v49 = vld [vmem:[%s0 + $0x10] sm:$0xff]
  %v50 = vld [vmem:[%s0 + $0x18] sm:$0xff]
  %v51 = vld [vmem:[%s0 + $0x20] sm:$0xff]
  %v52 = vld [vmem:[%s0 + $0x28] sm:$0xff]
  %v53 = vld [vmem:[%s0 + $0x30] sm:$0xff]
  %v54 = vld [vmem:[%s0 + $0x38] sm:$0xff]
  %v55 = vld [vmem:[%s0 + $0x40] sm:$0xff]
  %v56 = vld [vmem:[%s0 + $0x48] sm:$0xff]
  %v57 = vld [vmem:[%s0 + $0x50] sm:$0xff]
  %v58 = vld [vmem:[%s0 + $0x58] sm:$0xff]
  %v59 = vld [vmem:[%s0 + $0x60] sm:$0xff]
  %v60 = vld [vmem:[%s0 + $0x68] sm:$0xff]
  %v61 = vld [vmem:[%s0 + $0x70] sm:$0xff]
  %v62 = vld [vmem:[%s0 + $0x78] sm:$0xff]
  %v63 = vld [vmem:[%s0 + $0x80] sm:$0xff]
  %v64 = vld [vmem:[%s0 + $0x88] sm:$0xff]
  %v65 = vld [vmem:[%s0 + $0x90] sm:$0xff]
  %v66 = vld [vmem:[%s0 + $0x98] sm:$0xff]
  %v67 = vld [vmem:[%s0 + $0xa0] sm:$0xff]
  %v68 = vld [vmem:[%s0 + $0xa8] sm:$0xff]
  %v69 = vld [vmem:[%s0 + $0xb0] sm:$0xff]
  %v70 = vld [vmem:[%s0 + $0xb8] sm:$0xff]
  %v71 = vld [vmem:[%s0 + $0xc0] sm:$0xff]
  %v97 = vunpack.c.l.b16 %v47
  %v98 = vunpack.c.h.b16 %v47
  %v99 = vunpack.c.l.b16 %v48
  %v100 = vunpack.c.h.b16 %v48
  %v101 = vunpack.c.l.b16 %v49
  %v102 = vunpack.c.h.b16 %v49
  %v103 = vunpack.c.l.b16 %v50
  %v104 = vunpack.c.h.b16 %v50
  %v105 = vunpack.c.l.b16 %v51
  %v106 = vunpack.c.h.b16 %v51
  %v107 = vunpack.c.l.b16 %v52
  %v108 = vunpack.c.h.b16 %v52
  %v109 = vunpack.c.l.b16 %v53
  %v110 = vunpack.c.h.b16 %v53
  %v111 = vunpack.c.l.b16 %v54
  %v112 = vunpack.c.h.b16 %v54
  %v113 = vunpack.c.l.b16 %v55
  %v114 = vunpack.c.h.b16 %v55
  %v115 = vunpack.c.l.b16 %v56
  %v116 = vunpack.c.h.b16 %v56
  %v117 = vunpack.c.l.b16 %v57
  %v118 = vunpack.c.h.b16 %v57
  %v119 = vunpack.c.l.b16 %v58
  %v120 = vunpack.c.h.b16 %v58
  %v121 = vunpack.c.l.b16 %v59
  %v122 = vunpack.c.h.b16 %v59
  %v123 = vunpack.c.l.b16 %v60
  %v124 = vunpack.c.h.b16 %v60
  %v125 = vunpack.c.l.b16 %v61
  %v126 = vunpack.c.h.b16 %v61
  %v127 = vunpack.c.l.b16 %v62
  %v128 = vunpack.c.h.b16 %v62
  %v129 = vunpack.c.l.b16 %v63
  %v130 = vunpack.c.h.b16 %v63
  %v131 = vunpack.c.l.b16 %v64
  %v132 = vunpack.c.h.b16 %v64
  %v133 = vunpack.c.l.b16 %v65
  %v134 = vunpack.c.h.b16 %v65
  %v135 = vunpack.c.l.b16 %v66
  %v136 = vunpack.c.h.b16 %v66
  %v137 = vunpack.c.l.b16 %v67
  %v138 = vunpack.c.h.b16 %v67
  %v139 = vunpack.c.l.b16 %v68
  %v140 = vunpack.c.h.b16 %v68
  %v141 = vunpack.c.l.b16 %v69
  %v142 = vunpack.c.h.b16 %v69
  %v143 = vunpack.c.l.b16 %v70
  %v144 = vunpack.c.h.b16 %v70
  %v145 = vunpack.c.l.b16 %v71
  %v146 = vunpack.c.h.b16 %v71
  %v147 = vpack.c.b16 %v99, %v97
  %v148 = vpack.c.b16 %v100, %v98
  %v149 = vpack.c.b16 %v103, %v101
  %v150 = vpack.c.b16 %v104, %v102
  %v151 = vpack.c.b16 %v107, %v105
  %v152 = vpack.c.b16 %v108, %v106
  %v153 = vpack.c.b16 %v111, %v109
  %v154 = vpack.c.b16 %v112, %v110
  %v155 = vpack.c.b16 %v115, %v113
  %v156 = vpack.c.b16 %v116, %v114
  %v157 = vpack.c.b16 %v119, %v117
  %v158 = vpack.c.b16 %v120, %v118
  %v159 = vpack.c.b16 %v123, %v121
  %v160 = vpack.c.b16 %v124, %v122
  %v161 = vpack.c.b16 %v127, %v125
  %v162 = vpack.c.b16 %v128, %v126
  %v163 = vpack.c.b16 %v131, %v129
  %v164 = vpack.c.b16 %v132, %v130
  %v165 = vpack.c.b16 %v135, %v133
  %v166 = vpack.c.b16 %v136, %v134
  %v167 = vpack.c.b16 %v139, %v137
  %v168 = vpack.c.b16 %v140, %v138
  %v169 = vpack.c.b16 %v143, %v141
  %v170 = vpack.c.b16 %v144, %v142
  %v171 = vpack.c.b16 %v145, %v145
  %v172 = vpack.c.b16 %v146, %v146
  %v231 = vunpack.c.l.b16 %v15
  %v232 = vunpack.c.l.b16 %v16
  %v233 = vunpack.c.l.b16 %v17
  %v234 = vunpack.c.l.b16 %v18
  %v235 = vunpack.c.l.b16 %v19
  %v236 = vunpack.c.l.b16 %v20
  %v237 = vunpack.c.l.b16 %v21
  %v238 = vunpack.c.l.b16 %v22
  %v239 = vunpack.c.l.b16 %v23
  %v240 = vunpack.c.l.b16 %v24
  %v241 = vunpack.c.l.b16 %v25
  %v242 = vunpack.c.l.b16 %v26
  %v243 = vunpack.c.l.b16 %v27
  %v244 = vunpack.c.l.b16 %v28
  %v245 = vunpack.c.l.b16 %v29
  %v246 = vunpack.c.l.b16 %v30
  %v247 = vunpack.c.l.b16 %v31
  %v248 = vunpack.c.l.b16 %v32
  %v249 = vunpack.c.l.b16 %v33
  %v250 = vunpack.c.l.b16 %v34
  %v251 = vunpack.c.l.b16 %v35
  %v252 = vunpack.c.l.b16 %v36
  %v253 = vunpack.c.l.b16 %v37
  %v254 = vunpack.c.l.b16 %v38
  %v255 = vunpack.c.l.b16 %v39
  %v256 = vunpack.c.l.b16 %v40
  %v257 = vunpack.c.l.b16 %v41
  %v258 = vunpack.c.l.b16 %v42
  %v259 = vunpack.c.l.b16 %v43
  %v260 = vunpack.c.l.b16 %v44
  %v261 = vunpack.c.l.b16 %v45
  %v262 = vunpack.c.l.b16 %v46
  %v263 = vpack.c.b16 %v232, %v231
  %v264 = vpack.c.b16 %v234, %v233
  %v265 = vpack.c.b16 %v236, %v235
  %v266 = vpack.c.b16 %v238, %v237
  %v267 = vpack.c.b16 %v240, %v239
  %v268 = vpack.c.b16 %v242, %v241
  %v269 = vpack.c.b16 %v244, %v243
  %v270 = vpack.c.b16 %v246, %v245
  %v271 = vpack.c.b16 %v248, %v247
  %v272 = vpack.c.b16 %v250, %v249
  %v273 = vpack.c.b16 %v252, %v251
  %v274 = vpack.c.b16 %v254, %v253
  %v275 = vpack.c.b16 %v256, %v255
  %v276 = vpack.c.b16 %v258, %v257
  %v277 = vpack.c.b16 %v260, %v259
  %v278 = vpack.c.b16 %v262, %v261
  %295 = vmatprep.subr.bf16.mxu0 0
  %296 = vmatpush1.bf16.msra.mxu0 %v263
  %297 = vmatprep.subr.bf16.mxu0 0
  %298 = vmatpush1.bf16.msra.mxu0 %v264
  %299 = vmatprep.subr.bf16.mxu0 0
  %300 = vmatpush1.bf16.msra.mxu0 %v265
  %301 = vmatprep.subr.bf16.mxu0 0
  %302 = vmatpush1.bf16.msra.mxu0 %v266
  %303 = vmatprep.subr.bf16.mxu0 0
  %304 = vmatpush1.bf16.msra.mxu0 %v267
  %305 = vmatprep.subr.bf16.mxu0 0
  %306 = vmatpush1.bf16.msra.mxu0 %v268
  %307 = vmatprep.subr.bf16.mxu0 0
  %308 = vmatpush1.bf16.msra.mxu0 %v269
  %309 = vmatprep.subr.bf16.mxu0 0
  %310 = vmatpush1.bf16.msra.mxu0 %v270
  %311 = vmatprep.subr.bf16.mxu0 0
  %312 = vmatpush1.bf16.msra.mxu0 %v271
  %313 = vmatprep.subr.bf16.mxu0 0
  %314 = vmatpush1.bf16.msra.mxu0 %v272
  %315 = vmatprep.subr.bf16.mxu0 0
  %316 = vmatpush1.bf16.msra.mxu0 %v273
  %317 = vmatprep.subr.bf16.mxu0 0
  %318 = vmatpush1.bf16.msra.mxu0 %v274
  %319 = vmatprep.subr.bf16.mxu0 0
  %320 = vmatpush1.bf16.msra.mxu0 %v275
  %321 = vmatprep.subr.bf16.mxu0 0
  %322 = vmatpush1.bf16.msra.mxu0 %v276
  %323 = vmatprep.subr.bf16.mxu0 0
  %324 = vmatpush1.bf16.msra.mxu0 %v277
  %325 = vmatprep.subr.bf16.mxu0 0
  %326 = vmatpush1.bf16.msra.mxu0 %v278
  %327 = vmatprep.mubr.bf16.mxu0 %v148
  %328 = vmatmul.mubr.bf16.gmra.mrb[0].mxu0 %v147
  %v329 = vpop.f32.mrb[0].mxu0
  %v330 = vadd.f32 0.0, %v329
  %v331 = vpop.f32.mrb[0].mxu0
  %v332 = vpop.f32.mrb[0].mxu0
  %v333 = vadd.f32 0.0, %v332
  %v334 = vpop.f32.mrb[0].mxu0
  %335 = vmatprep.mubr.bf16.mxu0 %v150
  %336 = vmatmul.mubr.bf16.gmra.mrb[0].mxu0 %v149
  %v337 = vpop.f32.mrb[0].mxu0
  %v338 = vadd.f32 0.0, %v337
  %v339 = vpop.f32.mrb[0].mxu0
  %v340 = vpop.f32.mrb[0].mxu0
  %v341 = vadd.f32 0.0, %v340
  %v342 = vpop.f32.mrb[0].mxu0
  %343 = vmatprep.mubr.bf16.mxu0 %v152
  %344 = vmatmul.mubr.bf16.gmra.mrb[0].mxu0 %v151
  %v345 = vpop.f32.mrb[0].mxu0
  %v346 = vadd.f32 0.0, %v345
  %v347 = vpop.f32.mrb[0].mxu0
  %v348 = vpop.f32.mrb[0].mxu0
  %v349 = vadd.f32 0.0, %v348
  %v350 = vpop.f32.mrb[0].mxu0
  %351 = vmatprep.mubr.bf16.mxu0 %v154
  %352 = vmatmul.mubr.bf16.gmra.mrb[0].mxu0 %v153
  %v353 = vpop.f32.mrb[0].mxu0
  %v354 = vadd.f32 0.0, %v353
  %v355 = vpop.f32.mrb[0].mxu0
  %v356 = vpop.f32.mrb[0].mxu0
  %v357 = vadd.f32 0.0, %v356
  %v358 = vpop.f32.mrb[0].mxu0
  %359 = vmatprep.mubr.bf16.mxu0 %v156
  %360 = vmatmul.mubr.bf16.gmra.mrb[0].mxu0 %v155
  %v361 = vpop.f32.mrb[0].mxu0
  %v362 = vadd.f32 0.0, %v361
  %v363 = vpop.f32.mrb[0].mxu0
  %v364 = vpop.f32.mrb[0].mxu0
  %v365 = vadd.f32 0.0, %v364
  %v366 = vpop.f32.mrb[0].mxu0
  %367 = vmatprep.mubr.bf16.mxu0 %v158
  %368 = vmatmul.mubr.bf16.gmra.mrb[0].mxu0 %v157
  %v369 = vpop.f32.mrb[0].mxu0
  %v370 = vadd.f32 0.0, %v369
  %v371 = vpop.f32.mrb[0].mxu0
  %v372 = vpop.f32.mrb[0].mxu0
  %v373 = vadd.f32 0.0, %v372
  %v374 = vpop.f32.mrb[0].mxu0
  %375 = vmatprep.mubr.bf16.mxu0 %v160
  %376 = vmatmul.mubr.bf16.gmra.mrb[0].mxu0 %v159
  %v377 = vpop.f32.mrb[0].mxu0
  %v378 = vadd.f32 0.0, %v377
  %v379 = vpop.f32.mrb[0].mxu0
  %v380 = vpop.f32.mrb[0].mxu0
  %v381 = vadd.f32 0.0, %v380
  %v382 = vpop.f32.mrb[0].mxu0
  %383 = vmatprep.mubr.bf16.mxu0 %v162
  %384 = vmatmul.mubr.bf16.gmra.mrb[0].mxu0 %v161
  %v385 = vpop.f32.mrb[0].mxu0
  %v386 = vadd.f32 0.0, %v385
  %v387 = vpop.f32.mrb[0].mxu0
  %v388 = vpop.f32.mrb[0].mxu0
  %v389 = vadd.f32 0.0, %v388
  %v390 = vpop.f32.mrb[0].mxu0
  %391 = vmatprep.mubr.bf16.mxu0 %v164
  %392 = vmatmul.mubr.bf16.gmra.mrb[0].mxu0 %v163
  %v393 = vpop.f32.mrb[0].mxu0
  %v394 = vadd.f32 0.0, %v393
  %v395 = vpop.f32.mrb[0].mxu0
  %v396 = vpop.f32.mrb[0].mxu0
  %v397 = vadd.f32 0.0, %v396
  %v398 = vpop.f32.mrb[0].mxu0
  %399 = vmatprep.mubr.bf16.mxu0 %v166
  %400 = vmatmul.mubr.bf16.gmra.mrb[0].mxu0 %v165
  %v401 = vpop.f32.mrb[0].mxu0
  %v402 = vadd.f32 0.0, %v401
  %v403 = vpop.f32.mrb[0].mxu0
  %v404 = vpop.f32.mrb[0].mxu0
  %v405 = vadd.f32 0.0, %v404
  %v406 = vpop.f32.mrb[0].mxu0
  %407 = vmatprep.mubr.bf16.mxu0 %v168
  %408 = vmatmul.mubr.bf16.gmra.mrb[0].mxu0 %v167
  %v409 = vpop.f32.mrb[0].mxu0
  %v410 = vadd.f32 0.0, %v409
  %v411 = vpop.f32.mrb[0].mxu0
  %v412 = vpop.f32.mrb[0].mxu0
  %v413 = vadd.f32 0.0, %v412
  %v414 = vpop.f32.mrb[0].mxu0
  %415 = vmatprep.mubr.bf16.mxu0 %v170
  %416 = vmatmul.mubr.bf16.gmra.mrb[0].mxu0 %v169
  %v417 = vpop.f32.mrb[0].mxu0
  %v418 = vadd.f32 0.0, %v417
  %v419 = vpop.f32.mrb[0].mxu0
  %v420 = vpop.f32.mrb[0].mxu0
  %v421 = vadd.f32 0.0, %v420
  %v422 = vpop.f32.mrb[0].mxu0
  %423 = vmatprep.mubr.bf16.mxu0 %v172
  %424 = vmatmul.mubr.bf16.gmra.mrb[0].mxu0 %v171
  %v425 = vpop.f32.mrb[0].mxu0
  %v426 = vadd.f32 0.0, %v425
  %v427 = vpop.f32.mrb[0].mxu0
  %v428 = vpop.f32.mrb[0].mxu0
  %v429 = vpop.f32.mrb[0].mxu0
  %430 = vdwg.mxu0
  %s431 = scalar_lea.vmem %s0, 200
  %v432 = vld [vmem:[%s431] sm:$0xff]
  %v433 = vld [vmem:[%s431 + $0x8] sm:$0xff]
  %v434 = vld [vmem:[%s431 + $0x10] sm:$0xff]
  %v435 = vld [vmem:[%s431 + $0x18] sm:$0xff]
  %v436 = vld [vmem:[%s431 + $0x20] sm:$0xff]
  %v437 = vld [vmem:[%s431 + $0x28] sm:$0xff]
  %v438 = vld [vmem:[%s431 + $0x30] sm:$0xff]
  %v439 = vld [vmem:[%s431 + $0x38] sm:$0xff]
  %v440 = vld [vmem:[%s431 + $0x40] sm:$0xff]
  %v441 = vld [vmem:[%s431 + $0x48] sm:$0xff]
  %v442 = vld [vmem:[%s431 + $0x50] sm:$0xff]
  %v443 = vld [vmem:[%s431 + $0x58] sm:$0xff]
  %v444 = vld [vmem:[%s431 + $0x60] sm:$0xff]
  %v445 = vld [vmem:[%s431 + $0x68] sm:$0xff]
  %v446 = vld [vmem:[%s431 + $0x70] sm:$0xff]
  %v447 = vld [vmem:[%s431 + $0x78] sm:$0xff]
  %v448 = vld [vmem:[%s431 + $0x80] sm:$0xff]
  %v449 = vld [vmem:[%s431 + $0x88] sm:$0xff]
  %v450 = vld [vmem:[%s431 + $0x90] sm:$0xff]
  %v451 = vld [vmem:[%s431 + $0x98] sm:$0xff]
  %v452 = vld [vmem:[%s431 + $0xa0] sm:$0xff]
  %v453 = vld [vmem:[%s431 + $0xa8] sm:$0xff]
  %v454 = vld [vmem:[%s431 + $0xb0] sm:$0xff]
  %v455 = vld [vmem:[%s431 + $0xb8] sm:$0xff]
  %v456 = vld [vmem:[%s431 + $0xc0] sm:$0xff]
  %v482 = vunpack.c.l.b16 %v432
  %v483 = vunpack.c.h.b16 %v432
  %v484 = vunpack.c.l.b16 %v433
  %v485 = vunpack.c.h.b16 %v433
  %v486 = vunpack.c.l.b16 %v434
  %v487 = vunpack.c.h.b16 %v434
  %v488 = vunpack.c.l.b16 %v435
  %v489 = vunpack.c.h.b16 %v435
  %v490 = vunpack.c.l.b16 %v436
  %v491 = vunpack.c.h.b16 %v436
  %v492 = vunpack.c.l.b16 %v437
  %v493 = vunpack.c.h.b16 %v437
  %v494 = vunpack.c.l.b16 %v438
  %v495 = vunpack.c.h.b16 %v438
  %v496 = vunpack.c.l.b16 %v439
  %v497 = vunpack.c.h.b16 %v439
  %v498 = vunpack.c.l.b16 %v440
  %v499 = vunpack.c.h.b16 %v440
  %v500 = vunpack.c.l.b16 %v441
  %v501 = vunpack.c.h.b16 %v441
  %v502 = vunpack.c.l.b16 %v442
  %v503 = vunpack.c.h.b16 %v442
  %v504 = vunpack.c.l.b16 %v443
  %v505 = vunpack.c.h.b16 %v443
  %v506 = vunpack.c.l.b16 %v444
  %v507 = vunpack.c.h.b16 %v444
  %v508 = vunpack.c.l.b16 %v445
  %v509 = vunpack.c.h.b16 %v445
  %v510 = vunpack.c.l.b16 %v446
  %v511 = vunpack.c.h.b16 %v446
  %v512 = vunpack.c.l.b16 %v447
  %v513 = vunpack.c.h.b16 %v447
  %v514 = vunpack.c.l.b16 %v448
  %v515 = vunpack.c.h.b16 %v448
  %v516 = vunpack.c.l.b16 %v449
  %v517 = vunpack.c.h.b16 %v449
  %v518 = vunpack.c.l.b16 %v450
  %v519 = vunpack.c.h.b16 %v450
  %v520 = vunpack.c.l.b16 %v451
  %v521 = vunpack.c.h.b16 %v451
  %v522 = vunpack.c.l.b16 %v452
  %v523 = vunpack.c.h.b16 %v452
  %v524 = vunpack.c.l.b16 %v453
  %v525 = vunpack.c.h.b16 %v453
  %v526 = vunpack.c.l.b16 %v454
  %v527 = vunpack.c.h.b16 %v454
  %v528 = vunpack.c.l.b16 %v455
  %v529 = vunpack.c.h.b16 %v455
  %v530 = vunpack.c.l.b16 %v456
  %v531 = vunpack.c.h.b16 %v456
  %v532 = vpack.c.b16 %v484, %v482
  %v533 = vpack.c.b16 %v485, %v483
  %v534 = vpack.c.b16 %v488, %v486
  %v535 = vpack.c.b16 %v489, %v487
  %v536 = vpack.c.b16 %v492, %v490
  %v537 = vpack.c.b16 %v493, %v491
  %v538 = vpack.c.b16 %v496, %v494
  %v539 = vpack.c.b16 %v497, %v495
  %v540 = vpack.c.b16 %v500, %v498
  %v541 = vpack.c.b16 %v501, %v499
  %v542 = vpack.c.b16 %v504, %v502
  %v543 = vpack.c.b16 %v505, %v503
  %v544 = vpack.c.b16 %v508, %v506
  %v545 = vpack.c.b16 %v509, %v507
  %v546 = vpack.c.b16 %v512, %v510
  %v547 = vpack.c.b16 %v513, %v511
  %v548 = vpack.c.b16 %v516, %v514
  %v549 = vpack.c.b16 %v517, %v515
  %v550 = vpack.c.b16 %v520, %v518
  %v551 = vpack.c.b16 %v521, %v519
  %v552 = vpack.c.b16 %v524, %v522
  %v553 = vpack.c.b16 %v525, %v523
  %v554 = vpack.c.b16 %v528, %v526
  %v555 = vpack.c.b16 %v529, %v527
  %v556 = vpack.c.b16 %v530, %v530
  %v557 = vpack.c.b16 %v531, %v531
  %584 = vmatprep.subr.bf16.mxu0 0
  %585 = vmatpush1.bf16.msra.mxu0 %v263
  %586 = vmatprep.subr.bf16.mxu0 0
  %587 = vmatpush1.bf16.msra.mxu0 %v264
  %588 = vmatprep.subr.bf16.mxu0 0
  %589 = vmatpush1.bf16.msra.mxu0 %v265
  %590 = vmatprep.subr.bf16.mxu0 0
  %591 = vmatpush1.bf16.msra.mxu0 %v266
  %592 = vmatprep.subr.bf16.mxu0 0
  %593 = vmatpush1.bf16.msra.mxu0 %v267
  %594 = vmatprep.subr.bf16.mxu0 0
  %595 = vmatpush1.bf16.msra.mxu0 %v268
  %596 = vmatprep.subr.bf16.mxu0 0
  %597 = vmatpush1.bf16.msra.mxu0 %v269
  %598 = vmatprep.subr.bf16.mxu0 0
  %599 = vmatpush1.bf16.msra.mxu0 %v270
  %600 = vmatprep.subr.bf16.mxu0 0
  %601 = vmatpush1.bf16.msra.mxu0 %v271
  %602 = vmatprep.subr.bf16.mxu0 0
  %603 = vmatpush1.bf16.msra.mxu0 %v272
  %604 = vmatprep.subr.bf16.mxu0 0
  %605 = vmatpush1.bf16.msra.mxu0 %v273
  %606 = vmatprep.subr.bf16.mxu0 0
  %607 = vmatpush1.bf16.msra.mxu0 %v274
  %608 = vmatprep.subr.bf16.mxu0 0
  %609 = vmatpush1.bf16.msra.mxu0 %v275
  %610 = vmatprep.subr.bf16.mxu0 0
  %611 = vmatpush1.bf16.msra.mxu0 %v276
  %612 = vmatprep.subr.bf16.mxu0 0
  %613 = vmatpush1.bf16.msra.mxu0 %v277
  %614 = vmatprep.subr.bf16.mxu0 0
  %615 = vmatpush1.bf16.msra.mxu0 %v278
  %616 = vmatprep.mubr.bf16.mxu0 %v533
  %617 = vmatmul.mubr.bf16.gmra.mrb[0].mxu0 %v532
  %v618 = vpop.f32.mrb[0].mxu0
  %v619 = vadd.f32 0.0, %v618
  %v620 = vpop.f32.mrb[0].mxu0
  %v621 = vpop.f32.mrb[0].mxu0
  %v622 = vadd.f32 0.0, %v621
  %v623 = vpop.f32.mrb[0].mxu0
  %624 = vmatprep.mubr.bf16.mxu0 %v535
  %625 = vmatmul.mubr.bf16.gmra.mrb[0].mxu0 %v534
  %v626 = vpop.f32.mrb[0].mxu0
  %v627 = vadd.f32 0.0, %v626
  %v628 = vpop.f32.mrb[0].mxu0
  %v629 = vpop.f32.mrb[0].mxu0
  %v630 = vadd.f32 0.0, %v629
  %v631 = vpop.f32.mrb[0].mxu0
  %632 = vmatprep.mubr.bf16.mxu0 %v537
  %633 = vmatmul.mubr.bf16.gmra.mrb[0].mxu0 %v536
  %v634 = vpop.f32.mrb[0].mxu0
  %v635 = vadd.f32 0.0, %v634
  %v636 = vpop.f32.mrb[0].mxu0
  %v637 = vpop.f32.mrb[0].mxu0
  %v638 = vadd.f32 0.0, %v637
  %v639 = vpop.f32.mrb[0].mxu0
  %640 = vmatprep.mubr.bf16.mxu0 %v539
  %641 = vmatmul.mubr.bf16.gmra.mrb[0].mxu0 %v538
  %v642 = vpop.f32.mrb[0].mxu0
  %v643 = vadd.f32 0.0, %v642
  %v644 = vpop.f32.mrb[0].mxu0
  %v645 = vpop.f32.mrb[0].mxu0
  %v646 = vadd.f32 0.0, %v645
  %v647 = vpop.f32.mrb[0].mxu0
  %648 = vmatprep.mubr.bf16.mxu0 %v541
  %649 = vmatmul.mubr.bf16.gmra.mrb[0].mxu0 %v540
  %v650 = vpop.f32.mrb[0].mxu0
  %v651 = vadd.f32 0.0, %v650
  %v652 = vpop.f32.mrb[0].mxu0
  %v653 = vpop.f32.mrb[0].mxu0
  %v654 = vadd.f32 0.0, %v653
  %v655 = vpop.f32.mrb[0].mxu0
  %656 = vmatprep.mubr.bf16.mxu0 %v543
  %657 = vmatmul.mubr.bf16.gmra.mrb[0].mxu0 %v542
  %v658 = vpop.f32.mrb[0].mxu0
  %v659 = vadd.f32 0.0, %v658
  %v660 = vpop.f32.mrb[0].mxu0
  %v661 = vpop.f32.mrb[0].mxu0
  %v662 = vadd.f32 0.0, %v661
  %v663 = vpop.f32.mrb[0].mxu0
  %664 = vmatprep.mubr.bf16.mxu0 %v545
  %665 = vmatmul.mubr.bf16.gmra.mrb[0].mxu0 %v544
  %v666 = vpop.f32.mrb[0].mxu0
  %v667 = vadd.f32 0.0, %v666
  %v668 = vpop.f32.mrb[0].mxu0
  %v669 = vpop.f32.mrb[0].mxu0
  %v670 = vadd.f32 0.0, %v669
  %v671 = vpop.f32.mrb[0].mxu0
  %672 = vmatprep.mubr.bf16.mxu0 %v547
  %673 = vmatmul.mubr.bf16.gmra.mrb[0].mxu0 %v546
  %v674 = vpop.f32.mrb[0].mxu0
  %v675 = vadd.f32 0.0, %v674
  %v676 = vpop.f32.mrb[0].mxu0
  %v677 = vpop.f32.mrb[0].mxu0
  %v678 = vadd.f32 0.0, %v677
  %v679 = vpop.f32.mrb[0].mxu0
  %680 = vmatprep.mubr.bf16.mxu0 %v549
  %681 = vmatmul.mubr.bf16.gmra.mrb[0].mxu0 %v548
  %v682 = vpop.f32.mrb[0].mxu0
  %v683 = vadd.f32 0.0, %v682
  %v684 = vpop.f32.mrb[0].mxu0
  %v685 = vpop.f32.mrb[0].mxu0
  %v686 = vadd.f32 0.0, %v685
  %v687 = vpop.f32.mrb[0].mxu0
  %688 = vmatprep.mubr.bf16.mxu0 %v551
  %689 = vmatmul.mubr.bf16.gmra.mrb[0].mxu0 %v550
  %v690 = vpop.f32.mrb[0].mxu0
  %v691 = vadd.f32 0.0, %v690
  %v692 = vpop.f32.mrb[0].mxu0
  %v693 = vpop.f32.mrb[0].mxu0
  %v694 = vadd.f32 0.0, %v693
  %v695 = vpop.f32.mrb[0].mxu0
  %696 = vmatprep.mubr.bf16.mxu0 %v553
  %697 = vmatmul.mubr.bf16.gmra.mrb[0].mxu0 %v552
  %v698 = vpop.f32.mrb[0].mxu0
  %v699 = vadd.f32 0.0, %v698
  %v700 = vpop.f32.mrb[0].mxu0
  %v701 = vpop.f32.mrb[0].mxu0
  %v702 = vadd.f32 0.0, %v701
  %v703 = vpop.f32.mrb[0].mxu0
  %704 = vmatprep.mubr.bf16.mxu0 %v555
  %705 = vmatmul.mubr.bf16.gmra.mrb[0].mxu0 %v554
  %v706 = vpop.f32.mrb[0].mxu0
  %v707 = vadd.f32 0.0, %v706
  %v708 = vpop.f32.mrb[0].mxu0
  %v709 = vpop.f32.mrb[0].mxu0
  %v710 = vadd.f32 0.0, %v709
  %v711 = vpop.f32.mrb[0].mxu0
  %712 = vmatprep.mubr.bf16.mxu0 %v557
  %713 = vmatmul.mubr.bf16.gmra.mrb[0].mxu0 %v556
  %v714 = vpop.f32.mrb[0].mxu0
  %v715 = vadd.f32 0.0, %v714
  %v716 = vpop.f32.mrb[0].mxu0
  %v717 = vpop.f32.mrb[0].mxu0
  %v718 = vpop.f32.mrb[0].mxu0
  %719 = vdwg.mxu0
  %v720 = vmax.f32 %v330, %v619
  %v721 = vmax.f32 %v333, %v622
  %v722 = vmax.f32 %v338, %v627
  %v723 = vmax.f32 %v341, %v630
  %v724 = vmax.f32 %v346, %v635
  %v725 = vmax.f32 %v349, %v638
  %v726 = vmax.f32 %v354, %v643
  %v727 = vmax.f32 %v357, %v646
  %v728 = vmax.f32 %v362, %v651
  %v729 = vmax.f32 %v365, %v654
  %v730 = vmax.f32 %v370, %v659
  %v731 = vmax.f32 %v373, %v662
  %v732 = vmax.f32 %v378, %v667
  %v733 = vmax.f32 %v381, %v670
  %v734 = vmax.f32 %v386, %v675
  %v735 = vmax.f32 %v389, %v678
  %v736 = vmax.f32 %v394, %v683
  %v737 = vmax.f32 %v397, %v686
  %v738 = vmax.f32 %v402, %v691
  %v739 = vmax.f32 %v405, %v694
  %v740 = vmax.f32 %v410, %v699
  %v741 = vmax.f32 %v413, %v702
  %v742 = vmax.f32 %v418, %v707
  %v743 = vmax.f32 %v421, %v710
  %v744 = vmax.f32 %v426, %v715
  %s745 = scalar_lea.vmem %s0, 400
  %v746 = vld [vmem:[%s745] sm:$0xff]
  %v747 = vld [vmem:[%s745 + $0x8] sm:$0xff]
  %v748 = vld [vmem:[%s745 + $0x10] sm:$0xff]
  %v749 = vld [vmem:[%s745 + $0x18] sm:$0xff]
  %v750 = vld [vmem:[%s745 + $0x20] sm:$0xff]
  %v751 = vld [vmem:[%s745 + $0x28] sm:$0xff]
  %v752 = vld [vmem:[%s745 + $0x30] sm:$0xff]
  %v753 = vld [vmem:[%s745 + $0x38] sm:$0xff]
  %v754 = vld [vmem:[%s745 + $0x40] sm:$0xff]
  %v755 = vld [vmem:[%s745 + $0x48] sm:$0xff]
  %v756 = vld [vmem:[%s745 + $0x50] sm:$0xff]
  %v757 = vld [vmem:[%s745 + $0x58] sm:$0xff]
  %v758 = vld [vmem:[%s745 + $0x60] sm:$0xff]
  %v759 = vld [vmem:[%s745 + $0x68] sm:$0xff]
  %v760 = vld [vmem:[%s745 + $0x70] sm:$0xff]
  %v761 = vld [vmem:[%s745 + $0x78] sm:$0xff]
  %v762 = vld [vmem:[%s745 + $0x80] sm:$0xff]
  %v763 = vld [vmem:[%s745 + $0x88] sm:$0xff]
  %v764 = vld [vmem:[%s745 + $0x90] sm:$0xff]
  %v765 = vld [vmem:[%s745 + $0x98] sm:$0xff]
  %v766 = vld [vmem:[%s745 + $0xa0] sm:$0xff]
  %v767 = vld [vmem:[%s745 + $0xa8] sm:$0xff]
  %v768 = vld [vmem:[%s745 + $0xb0] sm:$0xff]
  %v769 = vld [vmem:[%s745 + $0xb8] sm:$0xff]
  %v770 = vld [vmem:[%s745 + $0xc0] sm:$0xff]
  %v796 = vunpack.c.l.b16 %v746
  %v797 = vunpack.c.h.b16 %v746
  %v798 = vunpack.c.l.b16 %v747
  %v799 = vunpack.c.h.b16 %v747
  %v800 = vunpack.c.l.b16 %v748
  %v801 = vunpack.c.h.b16 %v748
  %v802 = vunpack.c.l.b16 %v749
  %v803 = vunpack.c.h.b16 %v749
  %v804 = vunpack.c.l.b16 %v750
  %v805 = vunpack.c.h.b16 %v750
  %v806 = vunpack.c.l.b16 %v751
  %v807 = vunpack.c.h.b16 %v751
  %v808 = vunpack.c.l.b16 %v752
  %v809 = vunpack.c.h.b16 %v752
  %v810 = vunpack.c.l.b16 %v753
  %v811 = vunpack.c.h.b16 %v753
  %v812 = vunpack.c.l.b16 %v754
  %v813 = vunpack.c.h.b16 %v754
  %v814 = vunpack.c.l.b16 %v755
  %v815 = vunpack.c.h.b16 %v755
  %v816 = vunpack.c.l.b16 %v756
  %v817 = vunpack.c.h.b16 %v756
  %v818 = vunpack.c.l.b16 %v757
  %v819 = vunpack.c.h.b16 %v757
  %v820 = vunpack.c.l.b16 %v758
  %v821 = vunpack.c.h.b16 %v758
  %v822 = vunpack.c.l.b16 %v759
  %v823 = vunpack.c.h.b16 %v759
  %v824 = vunpack.c.l.b16 %v760
  %v825 = vunpack.c.h.b16 %v760
  %v826 = vunpack.c.l.b16 %v761
  %v827 = vunpack.c.h.b16 %v761
  %v828 = vunpack.c.l.b16 %v762
  %v829 = vunpack.c.h.b16 %v762
  %v830 = vunpack.c.l.b16 %v763
  %v831 = vunpack.c.h.b16 %v763
  %v832 = vunpack.c.l.b16 %v764
  %v833 = vunpack.c.h.b16 %v764
  %v834 = vunpack.c.l.b16 %v765
  %v835 = vunpack.c.h.b16 %v765
  %v836 = vunpack.c.l.b16 %v766
  %v837 = vunpack.c.h.b16 %v766
  %v838 = vunpack.c.l.b16 %v767
  %v839 = vunpack.c.h.b16 %v767
  %v840 = vunpack.c.l.b16 %v768
  %v841 = vunpack.c.h.b16 %v768
  %v842 = vunpack.c.l.b16 %v769
  %v843 = vunpack.c.h.b16 %v769
  %v844 = vunpack.c.l.b16 %v770
  %v845 = vunpack.c.h.b16 %v770
  %v846 = vpack.c.b16 %v798, %v796
  %v847 = vpack.c.b16 %v799, %v797
  %v848 = vpack.c.b16 %v802, %v800
  %v849 = vpack.c.b16 %v803, %v801
  %v850 = vpack.c.b16 %v806, %v804
  %v851 = vpack.c.b16 %v807, %v805
  %v852 = vpack.c.b16 %v810, %v808
  %v853 = vpack.c.b16 %v811, %v809
  %v854 = vpack.c.b16 %v814, %v812
  %v855 = vpack.c.b16 %v815, %v813
  %v856 = vpack.c.b16 %v818, %v816
  %v857 = vpack.c.b16 %v819, %v817
  %v858 = vpack.c.b16 %v822, %v820
  %v859 = vpack.c.b16 %v823, %v821
  %v860 = vpack.c.b16 %v826, %v824
  %v861 = vpack.c.b16 %v827, %v825
  %v862 = vpack.c.b16 %v830, %v828
  %v863 = vpack.c.b16 %v831, %v829
  %v864 = vpack.c.b16 %v834, %v832
  %v865 = vpack.c.b16 %v835, %v833
  %v866 = vpack.c.b16 %v838, %v836
  %v867 = vpack.c.b16 %v839, %v837
  %v868 = vpack.c.b16 %v842, %v840
  %v869 = vpack.c.b16 %v843, %v841
  %v870 = vpack.c.b16 %v844, %v844
  %v871 = vpack.c.b16 %v845, %v845
  %898 = vmatprep.subr.bf16.mxu0 0
  %899 = vmatpush1.bf16.msra.mxu0 %v263
  %900 = vmatprep.subr.bf16.mxu0 0
  %901 = vmatpush1.bf16.msra.mxu0 %v264
  %902 = vmatprep.subr.bf16.mxu0 0
  %903 = vmatpush1.bf16.msra.mxu0 %v265
  %904 = vmatprep.subr.bf16.mxu0 0
  %905 = vmatpush1.bf16.msra.mxu0 %v266
  %906 = vmatprep.subr.bf16.mxu0 0
  %907 = vmatpush1.bf16.msra.mxu0 %v267
  %908 = vmatprep.subr.bf16.mxu0 0
  %909 = vmatpush1.bf16.msra.mxu0 %v268
  %910 = vmatprep.subr.bf16.mxu0 0
  %911 = vmatpush1.bf16.msra.mxu0 %v269
  %912 = vmatprep.subr.bf16.mxu0 0
  %913 = vmatpush1.bf16.msra.mxu0 %v270
  %914 = vmatprep.subr.bf16.mxu0 0
  %915 = vmatpush1.bf16.msra.mxu0 %v271
  %916 = vmatprep.subr.bf16.mxu0 0
  %917 = vmatpush1.bf16.msra.mxu0 %v272
  %918 = vmatprep.subr.bf16.mxu0 0
  %919 = vmatpush1.bf16.msra.mxu0 %v273
  %920 = vmatprep.subr.bf16.mxu0 0
  %921 = vmatpush1.bf16.msra.mxu0 %v274
  %922 = vmatprep.subr.bf16.mxu0 0
  %923 = vmatpush1.bf16.msra.mxu0 %v275
  %924 = vmatprep.subr.bf16.mxu0 0
  %925 = vmatpush1.bf16.msra.mxu0 %v276
  %926 = vmatprep.subr.bf16.mxu0 0
  %927 = vmatpush1.bf16.msra.mxu0 %v277
  %928 = vmatprep.subr.bf16.mxu0 0
  %929 = vmatpush1.bf16.msra.mxu0 %v278
  %930 = vmatprep.mubr.bf16.mxu0 %v847
  %931 = vmatmul.mubr.bf16.gmra.mrb[0].mxu0 %v846
  %v932 = vpop.f32.mrb[0].mxu0
  %v933 = vadd.f32 0.0, %v932
  %v934 = vpop.f32.mrb[0].mxu0
  %v935 = vpop.f32.mrb[0].mxu0
  %v936 = vadd.f32 0.0, %v935
  %v937 = vpop.f32.mrb[0].mxu0
  %938 = vmatprep.mubr.bf16.mxu0 %v849
  %939 = vmatmul.mubr.bf16.gmra.mrb[0].mxu0 %v848
  %v940 = vpop.f32.mrb[0].mxu0
  %v941 = vadd.f32 0.0, %v940
  %v942 = vpop.f32.mrb[0].mxu0
  %v943 = vpop.f32.mrb[0].mxu0
  %v944 = vadd.f32 0.0, %v943
  %v945 = vpop.f32.mrb[0].mxu0
  %946 = vmatprep.mubr.bf16.mxu0 %v851
  %947 = vmatmul.mubr.bf16.gmra.mrb[0].mxu0 %v850
  %v948 = vpop.f32.mrb[0].mxu0
  %v949 = vadd.f32 0.0, %v948
  %v950 = vpop.f32.mrb[0].mxu0
  %v951 = vpop.f32.mrb[0].mxu0
  %v952 = vadd.f32 0.0, %v951
  %v953 = vpop.f32.mrb[0].mxu0
  %954 = vmatprep.mubr.bf16.mxu0 %v853
  %955 = vmatmul.mubr.bf16.gmra.mrb[0].mxu0 %v852
  %v956 = vpop.f32.mrb[0].mxu0
  %v957 = vadd.f32 0.0, %v956
  %v958 = vpop.f32.mrb[0].mxu0
  %v959 = vpop.f32.mrb[0].mxu0
  %v960 = vadd.f32 0.0, %v959
  %v961 = vpop.f32.mrb[0].mxu0
  %962 = vmatprep.mubr.bf16.mxu0 %v855
  %963 = vmatmul.mubr.bf16.gmra.mrb[0].mxu0 %v854
  %v964 = vpop.f32.mrb[0].mxu0
  %v965 = vadd.f32 0.0, %v964
  %v966 = vpop.f32.mrb[0].mxu0
  %v967 = vpop.f32.mrb[0].mxu0
  %v968 = vadd.f32 0.0, %v967
  %v969 = vpop.f32.mrb[0].mxu0
  %970 = vmatprep.mubr.bf16.mxu0 %v857
  %971 = vmatmul.mubr.bf16.gmra.mrb[0].mxu0 %v856
  %v972 = vpop.f32.mrb[0].mxu0
  %v973 = vadd.f32 0.0, %v972
  %v974 = vpop.f32.mrb[0].mxu0
  %v975 = vpop.f32.mrb[0].mxu0
  %v976 = vadd.f32 0.0, %v975
  %v977 = vpop.f32.mrb[0].mxu0
  %978 = vmatprep.mubr.bf16.mxu0 %v859
  %979 = vmatmul.mubr.bf16.gmra.mrb[0].mxu0 %v858
  %v980 = vpop.f32.mrb[0].mxu0
  %v981 = vadd.f32 0.0, %v980
  %v982 = vpop.f32.mrb[0].mxu0
  %v983 = vpop.f32.mrb[0].mxu0
  %v984 = vadd.f32 0.0, %v983
  %v985 = vpop.f32.mrb[0].mxu0
  %986 = vmatprep.mubr.bf16.mxu0 %v861
  %987 = vmatmul.mubr.bf16.gmra.mrb[0].mxu0 %v860
  %v988 = vpop.f32.mrb[0].mxu0
  %v989 = vadd.f32 0.0, %v988
  %v990 = vpop.f32.mrb[0].mxu0
  %v991 = vpop.f32.mrb[0].mxu0
  %v992 = vadd.f32 0.0, %v991
  %v993 = vpop.f32.mrb[0].mxu0
  %994 = vmatprep.mubr.bf16.mxu0 %v863
  %995 = vmatmul.mubr.bf16.gmra.mrb[0].mxu0 %v862
  %v996 = vpop.f32.mrb[0].mxu0
  %v997 = vadd.f32 0.0, %v996
  %v998 = vpop.f32.mrb[0].mxu0
  %v999 = vpop.f32.mrb[0].mxu0
  %v1000 = vadd.f32 0.0, %v999
  %v1001 = vpop.f32.mrb[0].mxu0
  %1002 = vmatprep.mubr.bf16.mxu0 %v865
  %1003 = vmatmul.mubr.bf16.gmra.mrb[0].mxu0 %v864
  %v1004 = vpop.f32.mrb[0].mxu0
  %v1005 = vadd.f32 0.0, %v1004
  %v1006 = vpop.f32.mrb[0].mxu0
  %v1007 = vpop.f32.mrb[0].mxu0
  %v1008 = vadd.f32 0.0, %v1007
  %v1009 = vpop.f32.mrb[0].mxu0
  %1010 = vmatprep.mubr.bf16.mxu0 %v867
  %1011 = vmatmul.mubr.bf16.gmra.mrb[0].mxu0 %v866
  %v1012 = vpop.f32.mrb[0].mxu0
  %v1013 = vadd.f32 0.0, %v1012
  %v1014 = vpop.f32.mrb[0].mxu0
  %v1015 = vpop.f32.mrb[0].mxu0
  %v1016 = vadd.f32 0.0, %v1015
  %v1017 = vpop.f32.mrb[0].mxu0
  %1018 = vmatprep.mubr.bf16.mxu0 %v869
  %1019 = vmatmul.mubr.bf16.gmra.mrb[0].mxu0 %v868
  %v1020 = vpop.f32.mrb[0].mxu0
  %v1021 = vadd.f32 0.0, %v1020
  %v1022 = vpop.f32.mrb[0].mxu0
  %v1023 = vpop.f32.mrb[0].mxu0
  %v1024 = vadd.f32 0.0, %v1023
  %v1025 = vpop.f32.mrb[0].mxu0
  %1026 = vmatprep.mubr.bf16.mxu0 %v871
  %1027 = vmatmul.mubr.bf16.gmra.mrb[0].mxu0 %v870
  %v1028 = vpop.f32.mrb[0].mxu0
  %v1029 = vadd.f32 0.0, %v1028
  %v1030 = vpop.f32.mrb[0].mxu0
  %v1031 = vpop.f32.mrb[0].mxu0
  %v1032 = vpop.f32.mrb[0].mxu0
  %1033 = vdwg.mxu0
  %v1034 = vmax.f32 %v720, %v933
  %v1035 = vmax.f32 %v721, %v936
  %v1036 = vmax.f32 %v722, %v941
  %v1037 = vmax.f32 %v723, %v944
  %v1038 = vmax.f32 %v724, %v949
  %v1039 = vmax.f32 %v725, %v952
  %v1040 = vmax.f32 %v726, %v957
  %v1041 = vmax.f32 %v727, %v960
  %v1042 = vmax.f32 %v728, %v965
  %v1043 = vmax.f32 %v729, %v968
  %v1044 = vmax.f32 %v730, %v973
  %v1045 = vmax.f32 %v731, %v976
  %v1046 = vmax.f32 %v732, %v981
  %v1047 = vmax.f32 %v733, %v984
  %v1048 = vmax.f32 %v734, %v989
  %v1049 = vmax.f32 %v735, %v992
  %v1050 = vmax.f32 %v736, %v997
  %v1051 = vmax.f32 %v737, %v1000
  %v1052 = vmax.f32 %v738, %v1005
  %v1053 = vmax.f32 %v739, %v1008
  %v1054 = vmax.f32 %v740, %v1013
  %v1055 = vmax.f32 %v741, %v1016
  %v1056 = vmax.f32 %v742, %v1021
  %v1057 = vmax.f32 %v743, %v1024
  %v1058 = vmax.f32 %v744, %v1029
  %s1059 = scalar_lea.vmem %s0, 600
  %v1060 = vld [vmem:[%s1059] sm:$0xff]
  %v1061 = vld [vmem:[%s1059 + $0x8] sm:$0xff]
  %v1062 = vld [vmem:[%s1059 + $0x10] sm:$0xff]
  %v1063 = vld [vmem:[%s1059 + $0x18] sm:$0xff]
  %v1064 = vld [vmem:[%s1059 + $0x20] sm:$0xff]
  %v1065 = vld [vmem:[%s1059 + $0x28] sm:$0xff]
  %v1066 = vld [vmem:[%s1059 + $0x30] sm:$0xff]
  %v1067 = vld [vmem:[%s1059 + $0x38] sm:$0xff]
  %v1068 = vld [vmem:[%s1059 + $0x40] sm:$0xff]
  %v1069 = vld [vmem:[%s1059 + $0x48] sm:$0xff]
  %v1070 = vld [vmem:[%s1059 + $0x50] sm:$0xff]
  %v1071 = vld [vmem:[%s1059 + $0x58] sm:$0xff]
  %v1072 = vld [vmem:[%s1059 + $0x60] sm:$0xff]
  %v1073 = vld [vmem:[%s1059 + $0x68] sm:$0xff]
  %v1074 = vld [vmem:[%s1059 + $0x70] sm:$0xff]
  %v1075 = vld [vmem:[%s1059 + $0x78] sm:$0xff]
  %v1076 = vld [vmem:[%s1059 + $0x80] sm:$0xff]
  %v1077 = vld [vmem:[%s1059 + $0x88] sm:$0xff]
  %v1078 = vld [vmem:[%s1059 + $0x90] sm:$0xff]
  %v1079 = vld [vmem:[%s1059 + $0x98] sm:$0xff]
  %v1080 = vld [vmem:[%s1059 + $0xa0] sm:$0xff]
  %v1081 = vld [vmem:[%s1059 + $0xa8] sm:$0xff]
  %v1082 = vld [vmem:[%s1059 + $0xb0] sm:$0xff]
  %v1083 = vld [vmem:[%s1059 + $0xb8] sm:$0xff]
  %v1084 = vld [vmem:[%s1059 + $0xc0] sm:$0xff]
  %v1110 = vunpack.c.l.b16 %v1060
  %v1111 = vunpack.c.h.b16 %v1060
  %v1112 = vunpack.c.l.b16 %v1061
  %v1113 = vunpack.c.h.b16 %v1061
  %v1114 = vunpack.c.l.b16 %v1062
  %v1115 = vunpack.c.h.b16 %v1062
  %v1116 = vunpack.c.l.b16 %v1063
  %v1117 = vunpack.c.h.b16 %v1063
  %v1118 = vunpack.c.l.b16 %v1064
  %v1119 = vunpack.c.h.b16 %v1064
  %v1120 = vunpack.c.l.b16 %v1065
  %v1121 = vunpack.c.h.b16 %v1065
  %v1122 = vunpack.c.l.b16 %v1066
  %v1123 = vunpack.c.h.b16 %v1066
  %v1124 = vunpack.c.l.b16 %v1067
  %v1125 = vunpack.c.h.b16 %v1067
  %v1126 = vunpack.c.l.b16 %v1068
  %v1127 = vunpack.c.h.b16 %v1068
  %v1128 = vunpack.c.l.b16 %v1069
  %v1129 = vunpack.c.h.b16 %v1069
  %v1130 = vunpack.c.l.b16 %v1070
  %v1131 = vunpack.c.h.b16 %v1070
  %v1132 = vunpack.c.l.b16 %v1071
  %v1133 = vunpack.c.h.b16 %v1071
  %v1134 = vunpack.c.l.b16 %v1072
  %v1135 = vunpack.c.h.b16 %v1072
  %v1136 = vunpack.c.l.b16 %v1073
  %v1137 = vunpack.c.h.b16 %v1073
  %v1138 = vunpack.c.l.b16 %v1074
  %v1139 = vunpack.c.h.b16 %v1074
  %v1140 = vunpack.c.l.b16 %v1075
  %v1141 = vunpack.c.h.b16 %v1075
  %v1142 = vunpack.c.l.b16 %v1076
  %v1143 = vunpack.c.h.b16 %v1076
  %v1144 = vunpack.c.l.b16 %v1077
  %v1145 = vunpack.c.h.b16 %v1077
  %v1146 = vunpack.c.l.b16 %v1078
  %v1147 = vunpack.c.h.b16 %v1078
  %v1148 = vunpack.c.l.b16 %v1079
  %v1149 = vunpack.c.h.b16 %v1079
  %v1150 = vunpack.c.l.b16 %v1080
  %v1151 = vunpack.c.h.b16 %v1080
  %v1152 = vunpack.c.l.b16 %v1081
  %v1153 = vunpack.c.h.b16 %v1081
  %v1154 = vunpack.c.l.b16 %v1082
  %v1155 = vunpack.c.h.b16 %v1082
  %v1156 = vunpack.c.l.b16 %v1083
  %v1157 = vunpack.c.h.b16 %v1083
  %v1158 = vunpack.c.l.b16 %v1084
  %v1159 = vunpack.c.h.b16 %v1084
  %v1160 = vpack.c.b16 %v1112, %v1110
  %v1161 = vpack.c.b16 %v1113, %v1111
  %v1162 = vpack.c.b16 %v1116, %v1114
  %v1163 = vpack.c.b16 %v1117, %v1115
  %v1164 = vpack.c.b16 %v1120, %v1118
  %v1165 = vpack.c.b16 %v1121, %v1119
  %v1166 = vpack.c.b16 %v1124, %v1122
  %v1167 = vpack.c.b16 %v1125, %v1123
  %v1168 = vpack.c.b16 %v1128, %v1126
  %v1169 = vpack.c.b16 %v1129, %v1127
  %v1170 = vpack.c.b16 %v1132, %v1130
  %v1171 = vpack.c.b16 %v1133, %v1131
  %v1172 = vpack.c.b16 %v1136, %v1134
  %v1173 = vpack.c.b16 %v1137, %v1135
  %v1174 = vpack.c.b16 %v1140, %v1138
  %v1175 = vpack.c.b16 %v1141, %v1139
  %v1176 = vpack.c.b16 %v1144, %v1142
  %v1177 = vpack.c.b16 %v1145, %v1143
  %v1178 = vpack.c.b16 %v1148, %v1146
  %v1179 = vpack.c.b16 %v1149, %v1147
  %v1180 = vpack.c.b16 %v1152, %v1150
  %v1181 = vpack.c.b16 %v1153, %v1151
  %v1182 = vpack.c.b16 %v1156, %v1154
  %v1183 = vpack.c.b16 %v1157, %v1155
  %v1184 = vpack.c.b16 %v1158, %v1158
  %v1185 = vpack.c.b16 %v1159, %v1159
  %1212 = vmatprep.subr.bf16.mxu0 0
  %1213 = vmatpush1.bf16.msra.mxu0 %v263
  %1214 = vmatprep.subr.bf16.mxu0 0
  %1215 = vmatpush1.bf16.msra.mxu0 %v264
  %1216 = vmatprep.subr.bf16.mxu0 0
  %1217 = vmatpush1.bf16.msra.mxu0 %v265
  %1218 = vmatprep.subr.bf16.mxu0 0
  %1219 = vmatpush1.bf16.msra.mxu0 %v266
  %1220 = vmatprep.subr.bf16.mxu0 0
  %1221 = vmatpush1.bf16.msra.mxu0 %v267
  %1222 = vmatprep.subr.bf16.mxu0 0
  %1223 = vmatpush1.bf16.msra.mxu0 %v268
  %1224 = vmatprep.subr.bf16.mxu0 0
  %1225 = vmatpush1.bf16.msra.mxu0 %v269
  %1226 = vmatprep.subr.bf16.mxu0 0
  %1227 = vmatpush1.bf16.msra.mxu0 %v270
  %1228 = vmatprep.subr.bf16.mxu0 0
  %1229 = vmatpush1.bf16.msra.mxu0 %v271
  %1230 = vmatprep.subr.bf16.mxu0 0
  %1231 = vmatpush1.bf16.msra.mxu0 %v272
  %1232 = vmatprep.subr.bf16.mxu0 0
  %1233 = vmatpush1.bf16.msra.mxu0 %v273
  %1234 = vmatprep.subr.bf16.mxu0 0
  %1235 = vmatpush1.bf16.msra.mxu0 %v274
  %1236 = vmatprep.subr.bf16.mxu0 0
  %1237 = vmatpush1.bf16.msra.mxu0 %v275
  %1238 = vmatprep.subr.bf16.mxu0 0
  %1239 = vmatpush1.bf16.msra.mxu0 %v276
  %1240 = vmatprep.subr.bf16.mxu0 0
  %1241 = vmatpush1.bf16.msra.mxu0 %v277
  %1242 = vmatprep.subr.bf16.mxu0 0
  %1243 = vmatpush1.bf16.msra.mxu0 %v278
  %1244 = vmatprep.mubr.bf16.mxu0 %v1161
  %1245 = vmatmul.mubr.bf16.gmra.mrb[0].mxu0 %v1160
  %v1246 = vpop.f32.mrb[0].mxu0
  %v1247 = vadd.f32 0.0, %v1246
  %v1248 = vpop.f32.mrb[0].mxu0
  %v1249 = vpop.f32.mrb[0].mxu0
  %v1250 = vadd.f32 0.0, %v1249
  %v1251 = vpop.f32.mrb[0].mxu0
  %1252 = vmatprep.mubr.bf16.mxu0 %v1163
  %1253 = vmatmul.mubr.bf16.gmra.mrb[0].mxu0 %v1162
  %v1254 = vpop.f32.mrb[0].mxu0
  %v1255 = vadd.f32 0.0, %v1254
  %v1256 = vpop.f32.mrb[0].mxu0
  %v1257 = vpop.f32.mrb[0].mxu0
  %v1258 = vadd.f32 0.0, %v1257
  %v1259 = vpop.f32.mrb[0].mxu0
  %1260 = vmatprep.mubr.bf16.mxu0 %v1165
  %1261 = vmatmul.mubr.bf16.gmra.mrb[0].mxu0 %v1164
  %v1262 = vpop.f32.mrb[0].mxu0
  %v1263 = vadd.f32 0.0, %v1262
  %v1264 = vpop.f32.mrb[0].mxu0
  %v1265 = vpop.f32.mrb[0].mxu0
  %v1266 = vadd.f32 0.0, %v1265
  %v1267 = vpop.f32.mrb[0].mxu0
  %1268 = vmatprep.mubr.bf16.mxu0 %v1167
  %1269 = vmatmul.mubr.bf16.gmra.mrb[0].mxu0 %v1166
  %v1270 = vpop.f32.mrb[0].mxu0
  %v1271 = vadd.f32 0.0, %v1270
  %v1272 = vpop.f32.mrb[0].mxu0
  %v1273 = vpop.f32.mrb[0].mxu0
  %v1274 = vadd.f32 0.0, %v1273
  %v1275 = vpop.f32.mrb[0].mxu0
  %1276 = vmatprep.mubr.bf16.mxu0 %v1169
  %1277 = vmatmul.mubr.bf16.gmra.mrb[0].mxu0 %v1168
  %v1278 = vpop.f32.mrb[0].mxu0
  %v1279 = vadd.f32 0.0, %v1278
  %v1280 = vpop.f32.mrb[0].mxu0
  %v1281 = vpop.f32.mrb[0].mxu0
  %v1282 = vadd.f32 0.0, %v1281
  %v1283 = vpop.f32.mrb[0].mxu0
  %1284 = vmatprep.mubr.bf16.mxu0 %v1171
  %1285 = vmatmul.mubr.bf16.gmra.mrb[0].mxu0 %v1170
  %v1286 = vpop.f32.mrb[0].mxu0
  %v1287 = vadd.f32 0.0, %v1286
  %v1288 = vpop.f32.mrb[0].mxu0
  %v1289 = vpop.f32.mrb[0].mxu0
  %v1290 = vadd.f32 0.0, %v1289
  %v1291 = vpop.f32.mrb[0].mxu0
  %1292 = vmatprep.mubr.bf16.mxu0 %v1173
  %1293 = vmatmul.mubr.bf16.gmra.mrb[0].mxu0 %v1172
  %v1294 = vpop.f32.mrb[0].mxu0
  %v1295 = vadd.f32 0.0, %v1294
  %v1296 = vpop.f32.mrb[0].mxu0
  %v1297 = vpop.f32.mrb[0].mxu0
  %v1298 = vadd.f32 0.0, %v1297
  %v1299 = vpop.f32.mrb[0].mxu0
  %1300 = vmatprep.mubr.bf16.mxu0 %v1175
  %1301 = vmatmul.mubr.bf16.gmra.mrb[0].mxu0 %v1174
  %v1302 = vpop.f32.mrb[0].mxu0
  %v1303 = vadd.f32 0.0, %v1302
  %v1304 = vpop.f32.mrb[0].mxu0
  %v1305 = vpop.f32.mrb[0].mxu0
  %v1306 = vadd.f32 0.0, %v1305
  %v1307 = vpop.f32.mrb[0].mxu0
  %1308 = vmatprep.mubr.bf16.mxu0 %v1177
  %1309 = vmatmul.mubr.bf16.gmra.mrb[0].mxu0 %v1176
  %v1310 = vpop.f32.mrb[0].mxu0
  %v1311 = vadd.f32 0.0, %v1310
  %v1312 = vpop.f32.mrb[0].mxu0
  %v1313 = vpop.f32.mrb[0].mxu0
  %v1314 = vadd.f32 0.0, %v1313
  %v1315 = vpop.f32.mrb[0].mxu0
  %1316 = vmatprep.mubr.bf16.mxu0 %v1179
  %1317 = vmatmul.mubr.bf16.gmra.mrb[0].mxu0 %v1178
  %v1318 = vpop.f32.mrb[0].mxu0
  %v1319 = vadd.f32 0.0, %v1318
  %v1320 = vpop.f32.mrb[0].mxu0
  %v1321 = vpop.f32.mrb[0].mxu0
  %v1322 = vadd.f32 0.0, %v1321
  %v1323 = vpop.f32.mrb[0].mxu0
  %1324 = vmatprep.mubr.bf16.mxu0 %v1181
  %1325 = vmatmul.mubr.bf16.gmra.mrb[0].mxu0 %v1180
  %v1326 = vpop.f32.mrb[0].mxu0
  %v1327 = vadd.f32 0.0, %v1326
  %v1328 = vpop.f32.mrb[0].mxu0
  %v1329 = vpop.f32.mrb[0].mxu0
  %v1330 = vadd.f32 0.0, %v1329
  %v1331 = vpop.f32.mrb[0].mxu0
  %1332 = vmatprep.mubr.bf16.mxu0 %v1183
  %1333 = vmatmul.mubr.bf16.gmra.mrb[0].mxu0 %v1182
  %v1334 = vpop.f32.mrb[0].mxu0
  %v1335 = vadd.f32 0.0, %v1334
  %v1336 = vpop.f32.mrb[0].mxu0
  %v1337 = vpop.f32.mrb[0].mxu0
  %v1338 = vadd.f32 0.0, %v1337
  %v1339 = vpop.f32.mrb[0].mxu0
  %1340 = vmatprep.mubr.bf16.mxu0 %v1185
  %1341 = vmatmul.mubr.bf16.gmra.mrb[0].mxu0 %v1184
  %v1342 = vpop.f32.mrb[0].mxu0
  %v1343 = vadd.f32 0.0, %v1342
  %v1344 = vpop.f32.mrb[0].mxu0
  %v1345 = vpop.f32.mrb[0].mxu0
  %v1346 = vpop.f32.mrb[0].mxu0
  %1347 = vdwg.mxu0
  %v1348 = vmax.f32 %v1034, %v1247
  %v1349 = vmax.f32 %v1035, %v1250
  %v1350 = vmax.f32 %v1036, %v1255
  %v1351 = vmax.f32 %v1037, %v1258
  %v1352 = vmax.f32 %v1038, %v1263
  %v1353 = vmax.f32 %v1039, %v1266
  %v1354 = vmax.f32 %v1040, %v1271
  %v1355 = vmax.f32 %v1041, %v1274
  %v1356 = vmax.f32 %v1042, %v1279
  %v1357 = vmax.f32 %v1043, %v1282
  %v1358 = vmax.f32 %v1044, %v1287
  %v1359 = vmax.f32 %v1045, %v1290
  %v1360 = vmax.f32 %v1046, %v1295
  %v1361 = vmax.f32 %v1047, %v1298
  %v1362 = vmax.f32 %v1048, %v1303
  %v1363 = vmax.f32 %v1049, %v1306
  %v1364 = vmax.f32 %v1050, %v1311
  %v1365 = vmax.f32 %v1051, %v1314
  %v1366 = vmax.f32 %v1052, %v1319
  %v1367 = vmax.f32 %v1053, %v1322
  %v1368 = vmax.f32 %v1054, %v1327
  %v1369 = vmax.f32 %v1055, %v1330
  %v1370 = vmax.f32 %v1056, %v1335
  %v1371 = vmax.f32 %v1057, %v1338
  %v1372 = vmax.f32 %v1058, %v1343
  %v1373 = vld [vmem:[%s2] sm:$0x1]
  %v1375 = vlaneseq
  %v1376 = vshrl.u32 %v1375, 7
  %v1377 = vsub.s32 0, %v1376
  %v1378 = vrot.slane %v1373, %v1377
  %v1380 = vadd.f32 %v1348, %v1378
  %v1381 = vadd.f32 %v1349, %v1378
  %v1382 = vadd.f32 %v1350, %v1378
  %v1383 = vadd.f32 %v1351, %v1378
  %v1384 = vadd.f32 %v1352, %v1378
  %v1385 = vadd.f32 %v1353, %v1378
  %v1386 = vadd.f32 %v1354, %v1378
  %v1387 = vadd.f32 %v1355, %v1378
  %v1388 = vadd.f32 %v1356, %v1378
  %v1389 = vadd.f32 %v1357, %v1378
  %v1390 = vadd.f32 %v1358, %v1378
  %v1391 = vadd.f32 %v1359, %v1378
  %v1392 = vadd.f32 %v1360, %v1378
  %v1393 = vadd.f32 %v1361, %v1378
  %v1394 = vadd.f32 %v1362, %v1378
  %v1395 = vadd.f32 %v1363, %v1378
  %v1396 = vadd.f32 %v1364, %v1378
  %v1397 = vadd.f32 %v1365, %v1378
  %v1398 = vadd.f32 %v1366, %v1378
  %v1399 = vadd.f32 %v1367, %v1378
  %v1400 = vadd.f32 %v1368, %v1378
  %v1401 = vadd.f32 %v1369, %v1378
  %v1402 = vadd.f32 %v1370, %v1378
  %v1403 = vadd.f32 %v1371, %v1378
  %v1404 = vadd.f32 %v1372, %v1378
  %v1405 = vmax.f32 %v1380, 0.0
  %v1406 = vmax.f32 %v1381, 0.0
  %v1407 = vmax.f32 %v1382, 0.0
  %v1408 = vmax.f32 %v1383, 0.0
  %v1409 = vmax.f32 %v1384, 0.0
  %v1410 = vmax.f32 %v1385, 0.0
  %v1411 = vmax.f32 %v1386, 0.0
  %v1412 = vmax.f32 %v1387, 0.0
  %v1413 = vmax.f32 %v1388, 0.0
  %v1414 = vmax.f32 %v1389, 0.0
  %v1415 = vmax.f32 %v1390, 0.0
  %v1416 = vmax.f32 %v1391, 0.0
  %v1417 = vmax.f32 %v1392, 0.0
  %v1418 = vmax.f32 %v1393, 0.0
  %v1419 = vmax.f32 %v1394, 0.0
  %v1420 = vmax.f32 %v1395, 0.0
  %v1421 = vmax.f32 %v1396, 0.0
  %v1422 = vmax.f32 %v1397, 0.0
  %v1423 = vmax.f32 %v1398, 0.0
  %v1424 = vmax.f32 %v1399, 0.0
  %v1425 = vmax.f32 %v1400, 0.0
  %v1426 = vmax.f32 %v1401, 0.0
  %v1427 = vmax.f32 %v1402, 0.0
  %v1428 = vmax.f32 %v1403, 0.0
  %v1429 = vmax.f32 %v1404, 0.0
  %v1430 = vpack.c.bf16 %v1406, %v1405
  %v1431 = vpack.c.bf16 %v1408, %v1407
  %v1432 = vpack.c.bf16 %v1410, %v1409
  %v1433 = vpack.c.bf16 %v1412, %v1411
  %v1434 = vpack.c.bf16 %v1414, %v1413
  %v1435 = vpack.c.bf16 %v1416, %v1415
  %v1436 = vpack.c.bf16 %v1418, %v1417
  %v1437 = vpack.c.bf16 %v1420, %v1419
  %v1438 = vpack.c.bf16 %v1422, %v1421
  %v1439 = vpack.c.bf16 %v1424, %v1423
  %v1440 = vpack.c.bf16 %v1426, %v1425
  %v1441 = vpack.c.bf16 %v1428, %v1427
  %v1442 = vpack.c.bf16 %v1429, %v1429
  %v1456 = vunpack.c.l.b16 %v1430
  %v1457 = vunpack.c.h.b16 %v1430
  %v1458 = vunpack.c.l.b16 %v1431
  %v1459 = vunpack.c.h.b16 %v1431
  %v1460 = vunpack.c.l.b16 %v1432
  %v1461 = vunpack.c.h.b16 %v1432
  %v1462 = vunpack.c.l.b16 %v1433
  %v1463 = vunpack.c.h.b16 %v1433
  %v1464 = vunpack.c.l.b16 %v1434
  %v1465 = vunpack.c.h.b16 %v1434
  %v1466 = vunpack.c.l.b16 %v1435
  %v1467 = vunpack.c.h.b16 %v1435
  %v1468 = vunpack.c.l.b16 %v1436
  %v1469 = vunpack.c.h.b16 %v1436
  %v1470 = vunpack.c.l.b16 %v1437
  %v1471 = vunpack.c.h.b16 %v1437
  %v1472 = vunpack.c.l.b16 %v1438
  %v1473 = vunpack.c.h.b16 %v1438
  %v1474 = vunpack.c.l.b16 %v1439
  %v1475 = vunpack.c.h.b16 %v1439
  %v1476 = vunpack.c.l.b16 %v1440
  %v1477 = vunpack.c.h.b16 %v1440
  %v1478 = vunpack.c.l.b16 %v1441
  %v1479 = vunpack.c.h.b16 %v1441
  %v1480 = vunpack.c.l.b16 %v1442
  %v1481 = vpack.c.b16 %v1456, %v1456
  %v1482 = vpack.c.b16 %v1457, %v1457
  %v1483 = vpack.c.b16 %v1458, %v1458
  %v1484 = vpack.c.b16 %v1459, %v1459
  %v1485 = vpack.c.b16 %v1460, %v1460
  %v1486 = vpack.c.b16 %v1461, %v1461
  %v1487 = vpack.c.b16 %v1462, %v1462
  %v1488 = vpack.c.b16 %v1463, %v1463
  %v1489 = vpack.c.b16 %v1464, %v1464
  %v1490 = vpack.c.b16 %v1465, %v1465
  %v1491 = vpack.c.b16 %v1466, %v1466
  %v1492 = vpack.c.b16 %v1467, %v1467
  %v1493 = vpack.c.b16 %v1468, %v1468
  %v1494 = vpack.c.b16 %v1469, %v1469
  %v1495 = vpack.c.b16 %v1470, %v1470
  %v1496 = vpack.c.b16 %v1471, %v1471
  %v1497 = vpack.c.b16 %v1472, %v1472
  %v1498 = vpack.c.b16 %v1473, %v1473
  %v1499 = vpack.c.b16 %v1474, %v1474
  %v1500 = vpack.c.b16 %v1475, %v1475
  %v1501 = vpack.c.b16 %v1476, %v1476
  %v1502 = vpack.c.b16 %v1477, %v1477
  %v1503 = vpack.c.b16 %v1478, %v1478
  %v1504 = vpack.c.b16 %v1479, %v1479
  %v1505 = vpack.c.b16 %v1480, %v1480
  %vm1531 = vcmask 125952
  %1532 = vst.msk [vmem:[%s3] sm:$0xf] %vm1531, %v1481
  %1533 = vst.msk [vmem:[%s3 + $0x4] sm:$0xf] %vm1531, %v1482
  %1534 = vst.msk [vmem:[%s3 + $0x8] sm:$0xf] %vm1531, %v1483
  %1535 = vst.msk [vmem:[%s3 + $0xc] sm:$0xf] %vm1531, %v1484
  %1536 = vst.msk [vmem:[%s3 + $0x10] sm:$0xf] %vm1531, %v1485
  %1537 = vst.msk [vmem:[%s3 + $0x14] sm:$0xf] %vm1531, %v1486
  %1538 = vst.msk [vmem:[%s3 + $0x18] sm:$0xf] %vm1531, %v1487
  %1539 = vst.msk [vmem:[%s3 + $0x1c] sm:$0xf] %vm1531, %v1488
  %1540 = vst.msk [vmem:[%s3 + $0x20] sm:$0xf] %vm1531, %v1489
  %1541 = vst.msk [vmem:[%s3 + $0x24] sm:$0xf] %vm1531, %v1490
  %1542 = vst.msk [vmem:[%s3 + $0x28] sm:$0xf] %vm1531, %v1491
  %1543 = vst.msk [vmem:[%s3 + $0x2c] sm:$0xf] %vm1531, %v1492
  %1544 = vst.msk [vmem:[%s3 + $0x30] sm:$0xf] %vm1531, %v1493
  %1545 = vst.msk [vmem:[%s3 + $0x34] sm:$0xf] %vm1531, %v1494
  %1546 = vst.msk [vmem:[%s3 + $0x38] sm:$0xf] %vm1531, %v1495
  %1547 = vst.msk [vmem:[%s3 + $0x3c] sm:$0xf] %vm1531, %v1496
  %1548 = vst.msk [vmem:[%s3 + $0x40] sm:$0xf] %vm1531, %v1497
  %1549 = vst.msk [vmem:[%s3 + $0x44] sm:$0xf] %vm1531, %v1498
  %1550 = vst.msk [vmem:[%s3 + $0x48] sm:$0xf] %vm1531, %v1499
  %1551 = vst.msk [vmem:[%s3 + $0x4c] sm:$0xf] %vm1531, %v1500
  %1552 = vst.msk [vmem:[%s3 + $0x50] sm:$0xf] %vm1531, %v1501
  %1553 = vst.msk [vmem:[%s3 + $0x54] sm:$0xf] %vm1531, %v1502
  %1554 = vst.msk [vmem:[%s3 + $0x58] sm:$0xf] %vm1531, %v1503
  %1555 = vst.msk [vmem:[%s3 + $0x5c] sm:$0xf] %vm1531, %v1504
  %1556 = vst.msk [vmem:[%s3 + $0x60] sm:$0xf] %vm1531, %v1505
  // Predicated region
  $region14: #{net_forward.4} parent=0 // pred_check
    _
  $region15: #{net_forward.4} parent=0 // pred_check_branch
    %1558 = sbr.rel (0) target = $region17
  $region16: #{net_forward.4} parent=0 // pred_region
    _
  $region17: #{net_forward.4} parent=0 // pred_fallthru
    _
  // Predicated region
  $region18: #{net_forward.4} parent=0 // pred_check
    _
  $region19: #{net_forward.4} parent=0 // pred_check_branch
    %1560 = sbr.rel (0) target = $region21
  $region20: #{net_forward.4} parent=0 // pred_region
    _
  $region21: #{net_forward.4} parent=0 // pred_fallthru
    _

// kernel: net_forward.5
$region0: #{net_forward.5}
  #allocation0 [shape = 'u32[]', space=smem, size = 0x4, offset = 0x4, fixed_abs, tag = 'smem constant byte address 0x4 - core index']
  #allocation1 [shape = 'u32[144,128]{1,0:T(1,128)}', space=vmem, size = 0x12000, scoped, tag = 'internal scratch']
  %s0 = inlined_call_operand.vmem [shape: bf16[16,512], index: 0, kind: input, shape index: {}]
  %s1 = inlined_call_operand.vmem [shape: bf16[512,128], index: 1, kind: input, shape index: {}]
  %s2 = inlined_call_operand.vmem [shape: f32[1,128], index: 2, kind: input, shape index: {}]
  %s3 = inlined_call_operand.vmem [shape: bf16[128,128], index: 3, kind: input, shape index: {}]
  %s4 = inlined_call_operand.vmem [shape: f32[1,128], index: 4, kind: input, shape index: {}]
  %s5 = inlined_call_operand.vmem [shape: bf16[128,128], index: 5, kind: input, shape index: {}]
  %s6 = inlined_call_operand.vmem [shape: f32[1,128], index: 6, kind: input, shape index: {}]
  %s7 = inlined_call_operand.vmem [shape: f32[16,128], index: 7, kind: output, shape index: {}]
  %s8 = sld [smem:[#allocation0]]
  $region38: #{net_forward.5} parent=0
    _
  %s10 = ssub.s32 1, %s8
  %s11 = scalar_select 0, %s10, %s8
  // Predicated region
  $region2: #{net_forward.5} parent=0 // pred_check
    _
  $region3: #{net_forward.5} parent=0 // pred_check_branch
    %13 = sbr.rel (0) target = $region5
  $region4: #{net_forward.5} parent=0 // pred_region
    _
  $region5: #{net_forward.5} parent=0 // pred_fallthru
    _
  // Predicated region
  $region6: #{net_forward.5} parent=0 // pred_check
    _
  $region7: #{net_forward.5} parent=0 // pred_check_branch
    %15 = sbr.rel (0) target = $region9
  $region8: #{net_forward.5} parent=0 // pred_region
    _
  $region9: #{net_forward.5} parent=0 // pred_fallthru
    _
  // Predicated region
  $region10: #{net_forward.5} parent=0 // pred_check
    _
  $region11: #{net_forward.5} parent=0 // pred_check_branch
    %17 = sbr.rel (0) target = $region13
  $region12: #{net_forward.5} parent=0 // pred_region
    _
  $region13: #{net_forward.5} parent=0 // pred_fallthru
    _
  // Predicated region
  $region14: #{net_forward.5} parent=0 // pred_check
    _
  $region15: #{net_forward.5} parent=0 // pred_check_branch
    %19 = sbr.rel (0) target = $region17
  $region16: #{net_forward.5} parent=0 // pred_region
    _
  $region17: #{net_forward.5} parent=0 // pred_fallthru
    _
  // Predicated region
  $region18: #{net_forward.5} parent=0 // pred_check
    _
  $region19: #{net_forward.5} parent=0 // pred_check_branch
    %21 = sbr.rel (0) target = $region21
  $region20: #{net_forward.5} parent=0 // pred_region
    _
  $region21: #{net_forward.5} parent=0 // pred_fallthru
    _
  // Predicated region
  $region22: #{net_forward.5} parent=0 // pred_check
    _
  $region23: #{net_forward.5} parent=0 // pred_check_branch
    %23 = sbr.rel (0) target = $region25
  $region24: #{net_forward.5} parent=0 // pred_region
    _
  $region25: #{net_forward.5} parent=0 // pred_fallthru
    _
  // Predicated region
  $region26: #{net_forward.5} parent=0 // pred_check
    _
  $region27: #{net_forward.5} parent=0 // pred_check_branch
    %25 = sbr.rel (0) target = $region29
  $region28: #{net_forward.5} parent=0 // pred_region
    _
  $region29: #{net_forward.5} parent=0 // pred_fallthru
    _
  %v27 = vld [vmem:[%s0] sm:$0xff]
  %v28 = vld [vmem:[%s0 + $0x8] sm:$0xff]
  %v29 = vld [vmem:[%s0 + $0x10] sm:$0xff]
  %v30 = vld [vmem:[%s0 + $0x18] sm:$0xff]
  %v31 = vld [vmem:[%s1] sm:$0xf]
  %v32 = vld [vmem:[%s1 + $0x4] sm:$0xf]
  %v33 = vld [vmem:[%s1 + $0x8] sm:$0xf]
  %v34 = vld [vmem:[%s1 + $0xc] sm:$0xf]
  %v35 = vld [vmem:[%s1 + $0x10] sm:$0xf]
  %v36 = vld [vmem:[%s1 + $0x14] sm:$0xf]
  %v37 = vld [vmem:[%s1 + $0x18] sm:$0xf]
  %v38 = vld [vmem:[%s1 + $0x1c] sm:$0xf]
  %v39 = vld [vmem:[%s1 + $0x20] sm:$0xf]
  %v40 = vld [vmem:[%s1 + $0x24] sm:$0xf]
  %v41 = vld [vmem:[%s1 + $0x28] sm:$0xf]
  %v42 = vld [vmem:[%s1 + $0x2c] sm:$0xf]
  %v43 = vld [vmem:[%s1 + $0x30] sm:$0xf]
  %v44 = vld [vmem:[%s1 + $0x34] sm:$0xf]
  %v45 = vld [vmem:[%s1 + $0x38] sm:$0xf]
  %v46 = vld [vmem:[%s1 + $0x3c] sm:$0xf]
  %v47 = vld [vmem:[%s1 + $0x40] sm:$0xf]
  %v48 = vld [vmem:[%s1 + $0x44] sm:$0xf]
  %v49 = vld [vmem:[%s1 + $0x48] sm:$0xf]
  %v50 = vld [vmem:[%s1 + $0x4c] sm:$0xf]
  %v51 = vld [vmem:[%s1 + $0x50] sm:$0xf]
  %v52 = vld [vmem:[%s1 + $0x54] sm:$0xf]
  %v53 = vld [vmem:[%s1 + $0x58] sm:$0xf]
  %v54 = vld [vmem:[%s1 + $0x5c] sm:$0xf]
  %v55 = vld [vmem:[%s1 + $0x60] sm:$0xf]
  %v56 = vld [vmem:[%s1 + $0x64] sm:$0xf]
  %v57 = vld [vmem:[%s1 + $0x68] sm:$0xf]
  %v58 = vld [vmem:[%s1 + $0x6c] sm:$0xf]
  %v59 = vld [vmem:[%s1 + $0x70] sm:$0xf]
  %v60 = vld [vmem:[%s1 + $0x74] sm:$0xf]
  %v61 = vld [vmem:[%s1 + $0x78] sm:$0xf]
  %v62 = vld [vmem:[%s1 + $0x7c] sm:$0xf]
  %v63 = vld [vmem:[%s1 + $0x80] sm:$0xf]
  %v64 = vld [vmem:[%s1 + $0x84] sm:$0xf]
  %v65 = vld [vmem:[%s1 + $0x88] sm:$0xf]
  %v66 = vld [vmem:[%s1 + $0x8c] sm:$0xf]
  %v67 = vld [vmem:[%s1 + $0x90] sm:$0xf]
  %v68 = vld [vmem:[%s1 + $0x94] sm:$0xf]
  %v69 = vld [vmem:[%s1 + $0x98] sm:$0xf]
  %v70 = vld [vmem:[%s1 + $0x9c] sm:$0xf]
  %v71 = vld [vmem:[%s1 + $0xa0] sm:$0xf]
  %v72 = vld [vmem:[%s1 + $0xa4] sm:$0xf]
  %v73 = vld [vmem:[%s1 + $0xa8] sm:$0xf]
  %v74 = vld [vmem:[%s1 + $0xac] sm:$0xf]
  %v75 = vld [vmem:[%s1 + $0xb0] sm:$0xf]
  %v76 = vld [vmem:[%s1 + $0xb4] sm:$0xf]
  %v77 = vld [vmem:[%s1 + $0xb8] sm:$0xf]
  %v78 = vld [vmem:[%s1 + $0xbc] sm:$0xf]
  %v79 = vld [vmem:[%s1 + $0xc0] sm:$0xf]
  %v80 = vld [vmem:[%s1 + $0xc4] sm:$0xf]
  %v81 = vld [vmem:[%s1 + $0xc8] sm:$0xf]
  %v82 = vld [vmem:[%s1 + $0xcc] sm:$0xf]
  %v83 = vld [vmem:[%s1 + $0xd0] sm:$0xf]
  %v84 = vld [vmem:[%s1 + $0xd4] sm:$0xf]
  %v85 = vld [vmem:[%s1 + $0xd8] sm:$0xf]
  %v86 = vld [vmem:[%s1 + $0xdc] sm:$0xf]
  %v87 = vld [vmem:[%s1 + $0xe0] sm:$0xf]
  %v88 = vld [vmem:[%s1 + $0xe4] sm:$0xf]
  %v89 = vld [vmem:[%s1 + $0xe8] sm:$0xf]
  %v90 = vld [vmem:[%s1 + $0xec] sm:$0xf]
  %v91 = vld [vmem:[%s1 + $0xf0] sm:$0xf]
  %v92 = vld [vmem:[%s1 + $0xf4] sm:$0xf]
  %v93 = vld [vmem:[%s1 + $0xf8] sm:$0xf]
  %v94 = vld [vmem:[%s1 + $0xfc] sm:$0xf]
  %v95 = vld [vmem:[%s2] sm:$0x1]
  %v97 = vlaneseq
  %v98 = vshrl.u32 %v97, 7
  %v99 = vsub.s32 0, %v98
  %v100 = vrot.slane %v95, %v99
  %v106 = vunpack.c.l.b16 %v27
  %v107 = vunpack.c.h.b16 %v27
  %v108 = vunpack.c.l.b16 %v28
  %v109 = vunpack.c.h.b16 %v28
  %v110 = vunpack.c.l.b16 %v29
  %v111 = vunpack.c.h.b16 %v29
  %v112 = vunpack.c.l.b16 %v30
  %v113 = vunpack.c.h.b16 %v30
  %v114 = vpack.c.b16 %v110, %v106
  %v115 = vpack.c.b16 %v111, %v107
  %v116 = vpack.c.b16 %v112, %v108
  %v117 = vpack.c.b16 %v113, %v109
  %v186 = vunpack.c.l.b16 %v31
  %v187 = vunpack.c.l.b16 %v32
  %v188 = vunpack.c.l.b16 %v33
  %v189 = vunpack.c.l.b16 %v34
  %v190 = vunpack.c.l.b16 %v35
  %v191 = vunpack.c.l.b16 %v36
  %v192 = vunpack.c.l.b16 %v37
  %v193 = vunpack.c.l.b16 %v38
  %v194 = vunpack.c.l.b16 %v39
  %v195 = vunpack.c.l.b16 %v40
  %v196 = vunpack.c.l.b16 %v41
  %v197 = vunpack.c.l.b16 %v42
  %v198 = vunpack.c.l.b16 %v43
  %v199 = vunpack.c.l.b16 %v44
  %v200 = vunpack.c.l.b16 %v45
  %v201 = vunpack.c.l.b16 %v46
  %v202 = vunpack.c.l.b16 %v47
  %v203 = vunpack.c.l.b16 %v48
  %v204 = vunpack.c.l.b16 %v49
  %v205 = vunpack.c.l.b16 %v50
  %v206 = vunpack.c.l.b16 %v51
  %v207 = vunpack.c.l.b16 %v52
  %v208 = vunpack.c.l.b16 %v53
  %v209 = vunpack.c.l.b16 %v54
  %v210 = vunpack.c.l.b16 %v55
  %v211 = vunpack.c.l.b16 %v56
  %v212 = vunpack.c.l.b16 %v57
  %v213 = vunpack.c.l.b16 %v58
  %v214 = vunpack.c.l.b16 %v59
  %v215 = vunpack.c.l.b16 %v60
  %v216 = vunpack.c.l.b16 %v61
  %v217 = vunpack.c.l.b16 %v62
  %v218 = vunpack.c.l.b16 %v63
  %v219 = vunpack.c.l.b16 %v64
  %v220 = vunpack.c.l.b16 %v65
  %v221 = vunpack.c.l.b16 %v66
  %v222 = vunpack.c.l.b16 %v67
  %v223 = vunpack.c.l.b16 %v68
  %v224 = vunpack.c.l.b16 %v69
  %v225 = vunpack.c.l.b16 %v70
  %v226 = vunpack.c.l.b16 %v71
  %v227 = vunpack.c.l.b16 %v72
  %v228 = vunpack.c.l.b16 %v73
  %v229 = vunpack.c.l.b16 %v74
  %v230 = vunpack.c.l.b16 %v75
  %v231 = vunpack.c.l.b16 %v76
  %v232 = vunpack.c.l.b16 %v77
  %v233 = vunpack.c.l.b16 %v78
  %v234 = vunpack.c.l.b16 %v79
  %v235 = vunpack.c.l.b16 %v80
  %v236 = vunpack.c.l.b16 %v81
  %v237 = vunpack.c.l.b16 %v82
  %v238 = vunpack.c.l.b16 %v83
  %v239 = vunpack.c.l.b16 %v84
  %v240 = vunpack.c.l.b16 %v85
  %v241 = vunpack.c.l.b16 %v86
  %v242 = vunpack.c.l.b16 %v87
  %v243 = vunpack.c.l.b16 %v88
  %v244 = vunpack.c.l.b16 %v89
  %v245 = vunpack.c.l.b16 %v90
  %v246 = vunpack.c.l.b16 %v91
  %v247 = vunpack.c.l.b16 %v92
  %v248 = vunpack.c.l.b16 %v93
  %v249 = vunpack.c.l.b16 %v94
  %v250 = vpack.c.b16 %v187, %v186
  %v251 = vpack.c.b16 %v189, %v188
  %v252 = vpack.c.b16 %v191, %v190
  %v253 = vpack.c.b16 %v193, %v192
  %v254 = vpack.c.b16 %v195, %v194
  %v255 = vpack.c.b16 %v197, %v196
  %v256 = vpack.c.b16 %v199, %v198
  %v257 = vpack.c.b16 %v201, %v200
  %v258 = vpack.c.b16 %v203, %v202
  %v259 = vpack.c.b16 %v205, %v204
  %v260 = vpack.c.b16 %v207, %v206
  %v261 = vpack.c.b16 %v209, %v208
  %v262 = vpack.c.b16 %v211, %v210
  %v263 = vpack.c.b16 %v213, %v212
  %v264 = vpack.c.b16 %v215, %v214
  %v265 = vpack.c.b16 %v217, %v216
  %v266 = vpack.c.b16 %v219, %v218
  %v267 = vpack.c.b16 %v221, %v220
  %v268 = vpack.c.b16 %v223, %v222
  %v269 = vpack.c.b16 %v225, %v224
  %v270 = vpack.c.b16 %v227, %v226
  %v271 = vpack.c.b16 %v229, %v228
  %v272 = vpack.c.b16 %v231, %v230
  %v273 = vpack.c.b16 %v233, %v232
  %v274 = vpack.c.b16 %v235, %v234
  %v275 = vpack.c.b16 %v237, %v236
  %v276 = vpack.c.b16 %v239, %v238
  %v277 = vpack.c.b16 %v241, %v240
  %v278 = vpack.c.b16 %v243, %v242
  %v279 = vpack.c.b16 %v245, %v244
  %v280 = vpack.c.b16 %v247, %v246
  %v281 = vpack.c.b16 %v249, %v248
  %314 = vmatprep.subr.bf16.mxu0 0
  %315 = vmatpush1.bf16.msra.mxu0 %v250
  %316 = vmatprep.subr.bf16.mxu0 0
  %317 = vmatpush1.bf16.msra.mxu0 %v251
  %318 = vmatprep.subr.bf16.mxu0 0
  %319 = vmatpush1.bf16.msra.mxu0 %v252
  %320 = vmatprep.subr.bf16.mxu0 0
  %321 = vmatpush1.bf16.msra.mxu0 %v253
  %322 = vmatprep.subr.bf16.mxu0 0
  %323 = vmatpush1.bf16.msra.mxu0 %v254
  %324 = vmatprep.subr.bf16.mxu0 0
  %325 = vmatpush1.bf16.msra.mxu0 %v255
  %326 = vmatprep.subr.bf16.mxu0 0
  %327 = vmatpush1.bf16.msra.mxu0 %v256
  %328 = vmatprep.subr.bf16.mxu0 0
  %329 = vmatpush1.bf16.msra.mxu0 %v257
  %330 = vmatprep.subr.bf16.mxu0 0
  %331 = vmatpush1.bf16.msra.mxu0 %v258
  %332 = vmatprep.subr.bf16.mxu0 0
  %333 = vmatpush1.bf16.msra.mxu0 %v259
  %334 = vmatprep.subr.bf16.mxu0 0
  %335 = vmatpush1.bf16.msra.mxu0 %v260
  %336 = vmatprep.subr.bf16.mxu0 0
  %337 = vmatpush1.bf16.msra.mxu0 %v261
  %338 = vmatprep.subr.bf16.mxu0 0
  %339 = vmatpush1.bf16.msra.mxu0 %v262
  %340 = vmatprep.subr.bf16.mxu0 0
  %341 = vmatpush1.bf16.msra.mxu0 %v263
  %342 = vmatprep.subr.bf16.mxu0 0
  %343 = vmatpush1.bf16.msra.mxu0 %v264
  %344 = vmatprep.subr.bf16.mxu0 0
  %345 = vmatpush1.bf16.msra.mxu0 %v265
  %346 = vmatprep.mubr.bf16.mxu0 %v115
  %347 = vmatmul.mubr.bf16.gmra.mrb[0].mxu0 %v114
  %v348 = vpop.f32.mrb[0].mxu0
  %v349 = vadd.f32 %v100, %v348
  %v350 = vpop.f32.mrb[0].mxu0
  %v351 = vpop.f32.mrb[0].mxu0
  %v352 = vadd.f32 %v100, %v351
  %v353 = vpop.f32.mrb[0].mxu0
  %354 = vdwg.mxu0
  %355 = vmatprep.subr.bf16.mxu0 0
  %356 = vmatpush1.bf16.msra.mxu0 %v266
  %357 = vmatprep.subr.bf16.mxu0 0
  %358 = vmatpush1.bf16.msra.mxu0 %v267
  %359 = vmatprep.subr.bf16.mxu0 0
  %360 = vmatpush1.bf16.msra.mxu0 %v268
  %361 = vmatprep.subr.bf16.mxu0 0
  %362 = vmatpush1.bf16.msra.mxu0 %v269
  %363 = vmatprep.subr.bf16.mxu0 0
  %364 = vmatpush1.bf16.msra.mxu0 %v270
  %365 = vmatprep.subr.bf16.mxu0 0
  %366 = vmatpush1.bf16.msra.mxu0 %v271
  %367 = vmatprep.subr.bf16.mxu0 0
  %368 = vmatpush1.bf16.msra.mxu0 %v272
  %369 = vmatprep.subr.bf16.mxu0 0
  %370 = vmatpush1.bf16.msra.mxu0 %v273
  %371 = vmatprep.subr.bf16.mxu0 0
  %372 = vmatpush1.bf16.msra.mxu0 %v274
  %373 = vmatprep.subr.bf16.mxu0 0
  %374 = vmatpush1.bf16.msra.mxu0 %v275
  %375 = vmatprep.subr.bf16.mxu0 0
  %376 = vmatpush1.bf16.msra.mxu0 %v276
  %377 = vmatprep.subr.bf16.mxu0 0
  %378 = vmatpush1.bf16.msra.mxu0 %v277
  %379 = vmatprep.subr.bf16.mxu0 0
  %380 = vmatpush1.bf16.msra.mxu0 %v278
  %381 = vmatprep.subr.bf16.mxu0 0
  %382 = vmatpush1.bf16.msra.mxu0 %v279
  %383 = vmatprep.subr.bf16.mxu0 0
  %384 = vmatpush1.bf16.msra.mxu0 %v280
  %385 = vmatprep.subr.bf16.mxu0 0
  %386 = vmatpush1.bf16.msra.mxu0 %v281
  %387 = vmatprep.mubr.bf16.mxu0 %v117
  %388 = vmatmul.mubr.bf16.gmra.mrb[0].mxu0 %v116
  %v389 = vpop.f32.mrb[0].mxu0
  %v390 = vadd.f32 %v349, %v389
  %v391 = vpop.f32.mrb[0].mxu0
  %v392 = vpop.f32.mrb[0].mxu0
  %v393 = vadd.f32 %v352, %v392
  %v394 = vpop.f32.mrb[0].mxu0
  %395 = vdwg.mxu0
  %v396 = vmax.f32 %v390, 0.0
  %v397 = vmax.f32 %v393, 0.0
  %v398 = vpack.c.bf16 %v397, %v396
  %v399 = vld [vmem:[%s3] sm:$0xf]
  %v400 = vld [vmem:[%s3 + $0x4] sm:$0xf]
  %v401 = vld [vmem:[%s3 + $0x8] sm:$0xf]
  %v402 = vld [vmem:[%s3 + $0xc] sm:$0xf]
  %v403 = vld [vmem:[%s3 + $0x10] sm:$0xf]
  %v404 = vld [vmem:[%s3 + $0x14] sm:$0xf]
  %v405 = vld [vmem:[%s3 + $0x18] sm:$0xf]
  %v406 = vld [vmem:[%s3 + $0x1c] sm:$0xf]
  %v407 = vld [vmem:[%s3 + $0x20] sm:$0xf]
  %v408 = vld [vmem:[%s3 + $0x24] sm:$0xf]
  %v409 = vld [vmem:[%s3 + $0x28] sm:$0xf]
  %v410 = vld [vmem:[%s3 + $0x2c] sm:$0xf]
  %v411 = vld [vmem:[%s3 + $0x30] sm:$0xf]
  %v412 = vld [vmem:[%s3 + $0x34] sm:$0xf]
  %v413 = vld [vmem:[%s3 + $0x38] sm:$0xf]
  %v414 = vld [vmem:[%s3 + $0x3c] sm:$0xf]
  %v415 = vld [vmem:[%s4] sm:$0x1]
  %v417 = vlaneseq
  %v418 = vshrl.u32 %v417, 7
  %v419 = vsub.s32 0, %v418
  %v420 = vrot.slane %v415, %v419
  %v438 = vunpack.c.l.b16 %v399
  %v439 = vunpack.c.l.b16 %v400
  %v440 = vunpack.c.l.b16 %v401
  %v441 = vunpack.c.l.b16 %v402
  %v442 = vunpack.c.l.b16 %v403
  %v443 = vunpack.c.l.b16 %v404
  %v444 = vunpack.c.l.b16 %v405
  %v445 = vunpack.c.l.b16 %v406
  %v446 = vunpack.c.l.b16 %v407
  %v447 = vunpack.c.l.b16 %v408
  %v448 = vunpack.c.l.b16 %v409
  %v449 = vunpack.c.l.b16 %v410
  %v450 = vunpack.c.l.b16 %v411
  %v451 = vunpack.c.l.b16 %v412
  %v452 = vunpack.c.l.b16 %v413
  %v453 = vunpack.c.l.b16 %v414
  %v454 = vpack.c.b16 %v439, %v438
  %v455 = vpack.c.b16 %v441, %v440
  %v456 = vpack.c.b16 %v443, %v442
  %v457 = vpack.c.b16 %v445, %v444
  %v458 = vpack.c.b16 %v447, %v446
  %v459 = vpack.c.b16 %v449, %v448
  %v460 = vpack.c.b16 %v451, %v450
  %v461 = vpack.c.b16 %v453, %v452
  %470 = vmatprep.subr.bf16.mxu0 0
  %471 = vmatpush1.bf16.msra.mxu0 %v454
  %472 = vmatprep.subr.bf16.mxu0 0
  %473 = vmatpush1.bf16.msra.mxu0 %v455
  %474 = vmatprep.subr.bf16.mxu0 0
  %475 = vmatpush1.bf16.msra.mxu0 %v456
  %476 = vmatprep.subr.bf16.mxu0 0
  %477 = vmatpush1.bf16.msra.mxu0 %v457
  %478 = vmatprep.subr.bf16.mxu0 0
  %479 = vmatpush1.bf16.msra.mxu0 %v458
  %480 = vmatprep.subr.bf16.mxu0 0
  %481 = vmatpush1.bf16.msra.mxu0 %v459
  %482 = vmatprep.subr.bf16.mxu0 0
  %483 = vmatpush1.bf16.msra.mxu0 %v460
  %484 = vmatprep.subr.bf16.mxu0 0
  %485 = vmatpush1.bf16.msra.mxu0 %v461
  %486 = vmatprep.subr.bf16.mxu0 0
  %487 = vmatpush1.bf16.msra.mxu0 0
  %488 = vmatprep.subr.bf16.mxu0 0
  %489 = vmatpush1.bf16.msra.mxu0 0
  %490 = vmatprep.subr.bf16.mxu0 0
  %491 = vmatpush1.bf16.msra.mxu0 0
  %492 = vmatprep.subr.bf16.mxu0 0
  %493 = vmatpush1.bf16.msra.mxu0 0
  %494 = vmatprep.subr.bf16.mxu0 0
  %495 = vmatpush1.bf16.msra.mxu0 0
  %496 = vmatprep.subr.bf16.mxu0 0
  %497 = vmatpush1.bf16.msra.mxu0 0
  %498 = vmatprep.subr.bf16.mxu0 0
  %499 = vmatpush1.bf16.msra.mxu0 0
  %500 = vmatprep.subr.bf16.mxu0 0
  %501 = vmatpush1.bf16.msra.mxu0 0
  %502 = vmatprep.mubr.bf16.mxu0 0
  %503 = vmatmul.mubr.bf16.gmra.mrb[0].mxu0 %v398
  %v504 = vpop.f32.mrb[0].mxu0
  %v505 = vadd.f32 %v420, %v504
  %v506 = vpop.f32.mrb[0].mxu0
  %v507 = vpop.f32.mrb[0].mxu0
  %v508 = vadd.f32 %v420, %v507
  %v509 = vpop.f32.mrb[0].mxu0
  %510 = vdwg.mxu0
  %v511 = vmax.f32 %v505, 0.0
  %v512 = vmax.f32 %v508, 0.0
  %v513 = vpack.c.bf16 %v512, %v511
  %v514 = vld [vmem:[%s5] sm:$0xf]
  %v515 = vld [vmem:[%s5 + $0x4] sm:$0xf]
  %v516 = vld [vmem:[%s5 + $0x8] sm:$0xf]
  %v517 = vld [vmem:[%s5 + $0xc] sm:$0xf]
  %v518 = vld [vmem:[%s5 + $0x10] sm:$0xf]
  %v519 = vld [vmem:[%s5 + $0x14] sm:$0xf]
  %v520 = vld [vmem:[%s5 + $0x18] sm:$0xf]
  %v521 = vld [vmem:[%s5 + $0x1c] sm:$0xf]
  %v522 = vld [vmem:[%s5 + $0x20] sm:$0xf]
  %v523 = vld [vmem:[%s5 + $0x24] sm:$0xf]
  %v524 = vld [vmem:[%s5 + $0x28] sm:$0xf]
  %v525 = vld [vmem:[%s5 + $0x2c] sm:$0xf]
  %v526 = vld [vmem:[%s5 + $0x30] sm:$0xf]
  %v527 = vld [vmem:[%s5 + $0x34] sm:$0xf]
  %v528 = vld [vmem:[%s5 + $0x38] sm:$0xf]
  %v529 = vld [vmem:[%s5 + $0x3c] sm:$0xf]
  %v530 = vld [vmem:[%s6] sm:$0x1]
  %v532 = vlaneseq
  %v533 = vshrl.u32 %v532, 7
  %v534 = vsub.s32 0, %v533
  %v535 = vrot.slane %v530, %v534
  %v553 = vunpack.c.l.b16 %v514
  %v554 = vunpack.c.l.b16 %v515
  %v555 = vunpack.c.l.b16 %v516
  %v556 = vunpack.c.l.b16 %v517
  %v557 = vunpack.c.l.b16 %v518
  %v558 = vunpack.c.l.b16 %v519
  %v559 = vunpack.c.l.b16 %v520
  %v560 = vunpack.c.l.b16 %v521
  %v561 = vunpack.c.l.b16 %v522
  %v562 = vunpack.c.l.b16 %v523
  %v563 = vunpack.c.l.b16 %v524
  %v564 = vunpack.c.l.b16 %v525
  %v565 = vunpack.c.l.b16 %v526
  %v566 = vunpack.c.l.b16 %v527
  %v567 = vunpack.c.l.b16 %v528
  %v568 = vunpack.c.l.b16 %v529
  %v569 = vpack.c.b16 %v554, %v553
  %v570 = vpack.c.b16 %v556, %v555
  %v571 = vpack.c.b16 %v558, %v557
  %v572 = vpack.c.b16 %v560, %v559
  %v573 = vpack.c.b16 %v562, %v561
  %v574 = vpack.c.b16 %v564, %v563
  %v575 = vpack.c.b16 %v566, %v565
  %v576 = vpack.c.b16 %v568, %v567
  %585 = vmatprep.subr.bf16.mxu0 0
  %586 = vmatpush1.bf16.msra.mxu0 %v569
  %587 = vmatprep.subr.bf16.mxu0 0
  %588 = vmatpush1.bf16.msra.mxu0 %v570
  %589 = vmatprep.subr.bf16.mxu0 0
  %590 = vmatpush1.bf16.msra.mxu0 %v571
  %591 = vmatprep.subr.bf16.mxu0 0
  %592 = vmatpush1.bf16.msra.mxu0 %v572
  %593 = vmatprep.subr.bf16.mxu0 0
  %594 = vmatpush1.bf16.msra.mxu0 %v573
  %595 = vmatprep.subr.bf16.mxu0 0
  %596 = vmatpush1.bf16.msra.mxu0 %v574
  %597 = vmatprep.subr.bf16.mxu0 0
  %598 = vmatpush1.bf16.msra.mxu0 %v575
  %599 = vmatprep.subr.bf16.mxu0 0
  %600 = vmatpush1.bf16.msra.mxu0 %v576
  %601 = vmatprep.subr.bf16.mxu0 0
  %602 = vmatpush1.bf16.msra.mxu0 0
  %603 = vmatprep.subr.bf16.mxu0 0
  %604 = vmatpush1.bf16.msra.mxu0 0
  %605 = vmatprep.subr.bf16.mxu0 0
  %606 = vmatpush1.bf16.msra.mxu0 0
  %607 = vmatprep.subr.bf16.mxu0 0
  %608 = vmatpush1.bf16.msra.mxu0 0
  %609 = vmatprep.subr.bf16.mxu0 0
  %610 = vmatpush1.bf16.msra.mxu0 0
  %611 = vmatprep.subr.bf16.mxu0 0
  %612 = vmatpush1.bf16.msra.mxu0 0
  %613 = vmatprep.subr.bf16.mxu0 0
  %614 = vmatpush1.bf16.msra.mxu0 0
  %615 = vmatprep.subr.bf16.mxu0 0
  %616 = vmatpush1.bf16.msra.mxu0 0
  %617 = vmatprep.mubr.bf16.mxu0 0
  %618 = vmatmul.mubr.bf16.gmra.mrb[0].mxu0 %v513
  %v619 = vpop.f32.mrb[0].mxu0
  %v620 = vadd.f32 %v535, %v619
  %v621 = vpop.f32.mrb[0].mxu0
  %v622 = vpop.f32.mrb[0].mxu0
  %v623 = vadd.f32 %v535, %v622
  %v624 = vpop.f32.mrb[0].mxu0
  %625 = vdwg.mxu0
  %626 = vst [vmem:[%s7] sm:$0xff] %v620
  %627 = vst [vmem:[%s7 + $0x8] sm:$0xff] %v623
  // Predicated region
  $region30: #{net_forward.5} parent=0 // pred_check
    _
  $region31: #{net_forward.5} parent=0 // pred_check_branch
    %629 = sbr.rel (0) target = $region33
  $region32: #{net_forward.5} parent=0 // pred_region
    _
  $region33: #{net_forward.5} parent=0 // pred_fallthru
    _
  // Predicated region
  $region34: #{net_forward.5} parent=0 // pred_check
    _
  $region35: #{net_forward.5} parent=0 // pred_check_branch
    %631 = sbr.rel (0) target = $region37
  $region36: #{net_forward.5} parent=0 // pred_region
    _
  $region37: #{net_forward.5} parent=0 // pred_fallthru
    _

</llo_original>
